<compile_context>
chip_gen: v5e
topology: v5e:2x2
jax: 0.10.0
libtpu: 0.0.40
codegen_flags: <defaults>
</compile_context>

<pallas_src>
import jax
import jax.numpy as jnp
import numpy as np
from jax.experimental import pallas as pl
from jax.experimental.pallas import tpu as pltpu

LANES = 128      # lane-dense channel padding carried through every layer
CIN_PAD = 8      # sublane-friendly padding of the 3 RGB input channels


# --------------------------------------------------------------------------
# Pallas kernels
# --------------------------------------------------------------------------
def _matmul_bias_relu_kernel(a_ref, w_ref, b_ref, o_ref):
    # a:(M,K) bf16, w:(K,Np) bf16, b:(1,Np) f32 -> o:(M,Np) bf16
    acc = jnp.dot(a_ref[...], w_ref[...], preferred_element_type=jnp.float32)
    acc = acc + b_ref[...]                      # f32 epilogue (v5e-friendly)
    o_ref[...] = jnp.maximum(acc, 0.0).astype(o_ref.dtype)


def _pool_conv3_fc_kernel(x_ref, w3_ref, b3_ref, wfc_ref, bfc_ref, o_ref):
    # x:(B,14,14,128) bf16 conv2 output (channels already lane-padded)
    # w3:(49,128,128) bf16 one 128x128 tile per pooled (ph,pw) position
    # wfc:(128,128) bf16 (output lanes zero-padded 10->128), biases f32.
    B = x_ref.shape[0]
    acc = jnp.zeros((B, w3_ref.shape[-1]), jnp.float32)
    # fused 2x2 max-pool + 7x7 conv: each pooled position feeds one MXU tile.
    for ph in range(7):
        for pw in range(7):
            h0, w0 = 2 * ph, 2 * pw
            v = jnp.maximum(
                jnp.maximum(x_ref[:, h0, w0, :], x_ref[:, h0, w0 + 1, :]),
                jnp.maximum(x_ref[:, h0 + 1, w0, :], x_ref[:, h0 + 1, w0 + 1, :]),
            )
            acc = acc + jnp.dot(v, w3_ref[ph * 7 + pw],
                                preferred_element_type=jnp.float32)
    h3 = jnp.maximum(acc + b3_ref[...], 0.0)                 # (B,128) f32, ReLU
    out = jnp.dot(h3.astype(wfc_ref.dtype), wfc_ref[...],
                  preferred_element_type=jnp.float32) + bfc_ref[...]
    o_ref[...] = out                                          # (B,128) f32


# --------------------------------------------------------------------------
# Pallas wrappers
# --------------------------------------------------------------------------
_COMPILER_PARAMS = pltpu.CompilerParams(
    dimension_semantics=("arbitrary",),
    vmem_limit_bytes=32 * 1024 * 1024,
)


def matmul_bias_relu(a, w, b):
    """relu(a @ w + b). Operands are already padded/aligned and bf16 (weights
    prepared once at init); whole problem is a single VMEM block."""
    M, K = a.shape
    K2, Np = w.shape
    assert K == K2 and K % 8 == 0 and Np % LANES == 0
    cost = pl.CostEstimate(
        flops=2 * M * K * Np, transcendentals=0,
        bytes_accessed=a.size * 2 + w.size * 2 + b.size * 4 + M * Np * 2)
    return pl.pallas_call(
        _matmul_bias_relu_kernel,
        out_shape=jax.ShapeDtypeStruct((M, Np), jnp.bfloat16),
        grid=(1,),
        in_specs=[
            pl.BlockSpec((M, K), lambda i: (0, 0)),
            pl.BlockSpec((K, Np), lambda i: (0, 0)),
            pl.BlockSpec((1, Np), lambda i: (0, 0)),
        ],
        out_specs=pl.BlockSpec((M, Np), lambda i: (0, 0)),
        compiler_params=_COMPILER_PARAMS,
        cost_estimate=cost,
    )(a, w, b)


def pool_conv3_fc(y2_nhwc, w3, b3, wfc, bfc):
    """Fused MaxPool2d(2,2) + Conv2d(32->128, k=7) + flatten + Linear(128->10)."""
    B = y2_nhwc.shape[0]
    Np = wfc.shape[1]
    cost = pl.CostEstimate(
        flops=2 * B * (49 * LANES * LANES + LANES * Np), transcendentals=0,
        bytes_accessed=(y2_nhwc.size * 2 + w3.size * 2 + wfc.size * 2
                        + (b3.size + bfc.size) * 4 + B * Np * 4))
    return pl.pallas_call(
        _pool_conv3_fc_kernel,
        out_shape=jax.ShapeDtypeStruct((B, Np), jnp.float32),
        grid=(1,),
        in_specs=[
            pl.BlockSpec((B, 14, 14, LANES), lambda i: (0, 0, 0, 0)),
            pl.BlockSpec((49, LANES, LANES), lambda i: (0, 0, 0)),
            pl.BlockSpec((1, LANES), lambda i: (0, 0)),
            pl.BlockSpec((LANES, Np), lambda i: (0, 0)),
            pl.BlockSpec((1, Np), lambda i: (0, 0)),
        ],
        out_specs=pl.BlockSpec((B, Np), lambda i: (0, 0)),
        compiler_params=_COMPILER_PARAMS,
        cost_estimate=cost,
    )(y2_nhwc, w3, b3, wfc, bfc)


# --------------------------------------------------------------------------
# XLA glue: im2col (small at this scale; see TODO(synk) above)
# --------------------------------------------------------------------------
def _im2col(x_nhwc, kh, kw, stride):
    B, H, W, C = x_nhwc.shape
    Ho = (H - kh) // stride + 1
    Wo = (W - kw) // stride + 1
    cols = []
    for i in range(kh):
        for j in range(kw):
            cols.append(
                x_nhwc[:, i:i + stride * Ho:stride, j:j + stride * Wo:stride, :])
    col = jnp.concatenate(cols, axis=-1)                # (B, Ho, Wo, kh*kw*C)
    return col.reshape(B * Ho * Wo, kh * kw * C), (B, Ho, Wo)


# --------------------------------------------------------------------------
# Parameters (PyTorch-layout init) and one-time kernel-layout preparation
# --------------------------------------------------------------------------
def init_params(key):
    ks = jax.random.split(key, 8)

    def rnd(k, shape, fan_in):
        return jax.random.normal(k, shape, jnp.float32) / np.sqrt(fan_in)

    return {
        "cnn1_w": rnd(ks[0], (16, 3, 5, 5), 3 * 5 * 5),
        "cnn1_b": rnd(ks[1], (16,), 3 * 5 * 5),
        "cnn2_w": rnd(ks[2], (32, 16, 3, 3), 16 * 3 * 3),
        "cnn2_b": rnd(ks[3], (32,), 16 * 3 * 3),
        "cnn3_w": rnd(ks[4], (128, 32, 7, 7), 32 * 7 * 7),
        "cnn3_b": rnd(ks[5], (128,), 32 * 7 * 7),
        "fc_w": rnd(ks[6], (10, 128), 128),
        "fc_b": rnd(ks[7], (10,), 128),
    }


def _prep_conv_weight(w_oihw, cin_pad, cout_pad):
    Cout, Cin, kh, kw = w_oihw.shape
    w = jnp.transpose(w_oihw, (2, 3, 1, 0))             # (kh, kw, Cin, Cout)
    w = jnp.pad(w, ((0, 0), (0, 0), (0, cin_pad - Cin), (0, cout_pad - Cout)))
    return w.reshape(kh * kw * cin_pad, cout_pad).astype(jnp.bfloat16)


def _prep_bias(b, n_pad):
    return jnp.pad(b.astype(jnp.float32), (0, n_pad - b.shape[0])).reshape(1, n_pad)


def prepare_params(params):
    """One-time weight prep (hoisted out of the forward): flatten / transpose /
    zero-pad to the lane-dense layouts the kernels consume; bf16 matmul
    operands, f32 biases.  Zero padding is exact (padded channels stay 0)."""
    w3 = _prep_conv_weight(params["cnn3_w"], LANES, LANES)        # (49*128, 128)
    return {
        "w1": _prep_conv_weight(params["cnn1_w"], CIN_PAD, LANES),  # (200, 128)
        "b1": _prep_bias(params["cnn1_b"], LANES),
        "w2": _prep_conv_weight(params["cnn2_w"], LANES, LANES),    # (1152, 128)
        "b2": _prep_bias(params["cnn2_b"], LANES),
        "w3": w3.reshape(49, LANES, LANES),
        "b3": _prep_bias(params["cnn3_b"], LANES),
        "wfc": jnp.pad(params["fc_w"].T.astype(jnp.float32),
                       ((0, 0), (0, LANES - params["fc_w"].shape[0]))
                       ).astype(jnp.bfloat16),                      # (128, 128)
        "bfc": _prep_bias(params["fc_b"], LANES),
    }


# --------------------------------------------------------------------------
# Forward pass
# --------------------------------------------------------------------------
@jax.jit
def cnn_net_forward(prepped, x_nchw):
    B = x_nchw.shape[0]
    # NCHW -> NHWC, pad 3 input channels to 8 (aligned im2col K), cast bf16.
    x = jnp.transpose(x_nchw, (0, 2, 3, 1)).astype(jnp.bfloat16)
    x = jnp.pad(x, ((0, 0), (0, 0), (0, 0), (0, CIN_PAD - x.shape[-1])))

    # cnn1: 3->16 (lane-padded to 128), k=5, s=2, p=0, ReLU   (32x32 -> 14x14)
    col1, (_, H1, W1) = _im2col(x, 5, 5, 2)                     # (B*196, 200)
    y1 = matmul_bias_relu(col1, prepped["w1"], prepped["b1"])   # (B*196, 128) bf16

    # cnn2: 16->32 (both lane-padded), k=3, s=1, p=1, ReLU     (14x14 -> 14x14)
    y1 = y1.reshape(B, H1, W1, LANES)
    y1 = jnp.pad(y1, ((0, 0), (1, 1), (1, 1), (0, 0)))          # spatial zero-pad
    col2, _ = _im2col(y1, 3, 3, 1)                              # (B*196, 1152)
    y2 = matmul_bias_relu(col2, prepped["w2"], prepped["b2"])   # (B*196, 128) bf16

    # fused: maxpool(2,2) + cnn3(7x7 -> 1x1) + flatten + fc, single kernel
    y2 = y2.reshape(B, H1, W1, LANES)
    out = pool_conv3_fc(y2, prepped["w3"], prepped["b3"],
                        prepped["wfc"], prepped["bfc"])          # (B, 128) f32
    return out[:, :10]                                           # final slice only


# Pure-JAX f32 reference (numerical sanity check only).
def reference_forward(params, x_nchw):
    def conv(x, w, b, stride, padding):
        out = jax.lax.conv_general_dilated(
            x, w, window_strides=(stride, stride),
            padding=[(padding, padding), (padding, padding)],
            dimension_numbers=("NCHW", "OIHW", "NCHW"))
        return out + b.reshape(1, -1, 1, 1)

    x = jax.nn.relu(conv(x_nchw, params["cnn1_w"], params["cnn1_b"], 2, 0))
    x = jax.nn.relu(conv(x, params["cnn2_w"], params["cnn2_b"], 1, 1))
    x = jax.lax.reduce_window(x, -jnp.inf, jax.lax.max,
                              (1, 1, 2, 2), (1, 1, 2, 2), "VALID")
    x = jax.nn.relu(conv(x, params["cnn3_w"], params["cnn3_b"], 1, 0))
    x = x.reshape(x.shape[0], -1)
    return x @ params["fc_w"].T + params["fc_b"]


if __name__ == "__main__":
    key = jax.random.PRNGKey(0)
    pkey, xkey = jax.random.split(key)
    params = init_params(pkey)
    prepped = prepare_params(params)        # one-time, outside the jitted step
    # CnnNet's fc(128 -> 10) requires cnn3's output to be 1x1 spatial, which
    # implies 32x32 inputs (CIFAR). Small batch of 2.
    x = jax.random.normal(xkey, (2, 3, 32, 32), jnp.float32)

    out = jax.block_until_ready(cnn_net_forward(prepped, x))
    assert out.shape == (2, 10)

    ref = reference_forward(params, x)
    # bf16 MXU inputs with f32 accumulation -> slightly looser tolerance.
    np.testing.assert_allclose(np.asarray(out), np.asarray(ref),
                               rtol=5e-2, atol=5e-2)
    print("KERNEL_OK")
</pallas_src>

<mosaic_0001>
module attributes {stable_mosaic.version = 11 : i64} {
  func.func @_matmul_bias_relu_kernel(%arg0: i32, %arg1: memref<392x200xbf16, #tpu.memory_space<vmem>>, %arg2: memref<200x128xbf16, #tpu.memory_space<vmem>>, %arg3: memref<1x128xf32, #tpu.memory_space<vmem>>, %arg4: memref<392x128xbf16, #tpu.memory_space<vmem>>) attributes {dimension_semantics = [#tpu.dimension_semantics<arbitrary>], iteration_bounds = array<i64: 1>, scalar_prefetch = 0 : i64, scratch_operands = 0 : i64, tpu.core_type = #tpu.core_type<tc>, window_params = [{pipeline_mode = #tpu.pipeline_mode<synchronous>, transform_indices = @transform_0, window_bounds = array<i64: 392, 200>}, {pipeline_mode = #tpu.pipeline_mode<synchronous>, transform_indices = @transform_1, window_bounds = array<i64: 200, 128>}, {pipeline_mode = #tpu.pipeline_mode<synchronous>, transform_indices = @transform_2, window_bounds = array<i64: 1, 128>}, {pipeline_mode = #tpu.pipeline_mode<synchronous>, transform_indices = @transform_3, window_bounds = array<i64: 392, 128>}]} {
    %c0 = arith.constant 0 : index
    %c0_0 = arith.constant 0 : index
    %0 = vector.load %arg1[%c0, %c0_0] : memref<392x200xbf16, #tpu.memory_space<vmem>>, vector<392x200xbf16>
    %c0_1 = arith.constant 0 : index
    %c0_2 = arith.constant 0 : index
    %1 = vector.load %arg2[%c0_1, %c0_2] : memref<200x128xbf16, #tpu.memory_space<vmem>>, vector<200x128xbf16>
    %cst = arith.constant dense<0.000000e+00> : vector<392x128xf32>
    %2 = tpu.matmul %0, %1, %cst {dimension_numbers = #tpu.dot_dimension_numbers<[1], [0], [0], [1], [0, 0, 1, 1], [], []>} : vector<392x200xbf16>, vector<200x128xbf16>, vector<392x128xf32> -> vector<392x128xf32>
    %c0_3 = arith.constant 0 : index
    %c0_4 = arith.constant 0 : index
    %3 = vector.load %arg3[%c0_3, %c0_4] : memref<1x128xf32, #tpu.memory_space<vmem>>, vector<1x128xf32>
    %4 = vector.broadcast %3 : vector<1x128xf32> to vector<392x128xf32>
    %5 = arith.addf %2, %4 : vector<392x128xf32>
    %cst_5 = arith.constant 0.000000e+00 : f32
    %6 = vector.broadcast %cst_5 : f32 to vector<392x128xf32>
    %7 = arith.maximumf %5, %6 : vector<392x128xf32>
    %8 = arith.truncf %7 : vector<392x128xf32> to vector<392x128xbf16>
    %c0_6 = arith.constant 0 : index
    %c0_7 = arith.constant 0 : index
    %9 = vector.load %arg4[%c0_6, %c0_7] : memref<392x128xbf16, #tpu.memory_space<vmem>>, vector<392x128xbf16>
    tpu.vector_store %arg4[%c0_6, %c0_7], %8 {strides = array<i32>} : memref<392x128xbf16, #tpu.memory_space<vmem>>, vector<392x128xbf16>,
    return
  }
  func.func @transform_0(%arg0: i32) -> (i32, i32) {
    %c0_i32 = arith.constant 0 : i32
    %c0_i32_0 = arith.constant 0 : i32
    %c0_i32_1 = arith.constant 0 : i32
    return %c0_i32, %c0_i32_0 : i32, i32
  }
  func.func @transform_1(%arg0: i32) -> (i32, i32) {
    %c0_i32 = arith.constant 0 : i32
    %c0_i32_0 = arith.constant 0 : i32
    %c0_i32_1 = arith.constant 0 : i32
    return %c0_i32, %c0_i32_0 : i32, i32
  }
  func.func @transform_2(%arg0: i32) -> (i32, i32) {
    %c0_i32 = arith.constant 0 : i32
    %c0_i32_0 = arith.constant 0 : i32
    %c0_i32_1 = arith.constant 0 : i32
    return %c0_i32, %c0_i32_0 : i32, i32
  }
  func.func @transform_3(%arg0: i32) -> (i32, i32) {
    %c0_i32 = arith.constant 0 : i32
    %c0_i32_0 = arith.constant 0 : i32
    %c0_i32_1 = arith.constant 0 : i32
    return %c0_i32, %c0_i32_0 : i32, i32
  }
}

module attributes {stable_mosaic.version = 11 : i64} {
  func.func @_matmul_bias_relu_kernel(%arg0: i32, %arg1: memref<392x1152xbf16, #tpu.memory_space<vmem>>, %arg2: memref<1152x128xbf16, #tpu.memory_space<vmem>>, %arg3: memref<1x128xf32, #tpu.memory_space<vmem>>, %arg4: memref<392x128xbf16, #tpu.memory_space<vmem>>) attributes {dimension_semantics = [#tpu.dimension_semantics<arbitrary>], iteration_bounds = array<i64: 1>, scalar_prefetch = 0 : i64, scratch_operands = 0 : i64, tpu.core_type = #tpu.core_type<tc>, window_params = [{pipeline_mode = #tpu.pipeline_mode<synchronous>, transform_indices = @transform_0, window_bounds = array<i64: 392, 1152>}, {pipeline_mode = #tpu.pipeline_mode<synchronous>, transform_indices = @transform_1, window_bounds = array<i64: 1152, 128>}, {pipeline_mode = #tpu.pipeline_mode<synchronous>, transform_indices = @transform_2, window_bounds = array<i64: 1, 128>}, {pipeline_mode = #tpu.pipeline_mode<synchronous>, transform_indices = @transform_3, window_bounds = array<i64: 392, 128>}]} {
    %c0 = arith.constant 0 : index
    %c0_0 = arith.constant 0 : index
    %0 = vector.load %arg1[%c0, %c0_0] : memref<392x1152xbf16, #tpu.memory_space<vmem>>, vector<392x1152xbf16>
    %c0_1 = arith.constant 0 : index
    %c0_2 = arith.constant 0 : index
    %1 = vector.load %arg2[%c0_1, %c0_2] : memref<1152x128xbf16, #tpu.memory_space<vmem>>, vector<1152x128xbf16>
    %cst = arith.constant dense<0.000000e+00> : vector<392x128xf32>
    %2 = tpu.matmul %0, %1, %cst {dimension_numbers = #tpu.dot_dimension_numbers<[1], [0], [0], [1], [0, 0, 1, 1], [], []>} : vector<392x1152xbf16>, vector<1152x128xbf16>, vector<392x128xf32> -> vector<392x128xf32>
    %c0_3 = arith.constant 0 : index
    %c0_4 = arith.constant 0 : index
    %3 = vector.load %arg3[%c0_3, %c0_4] : memref<1x128xf32, #tpu.memory_space<vmem>>, vector<1x128xf32>
    %4 = vector.broadcast %3 : vector<1x128xf32> to vector<392x128xf32>
    %5 = arith.addf %2, %4 : vector<392x128xf32>
    %cst_5 = arith.constant 0.000000e+00 : f32
    %6 = vector.broadcast %cst_5 : f32 to vector<392x128xf32>
    %7 = arith.maximumf %5, %6 : vector<392x128xf32>
    %8 = arith.truncf %7 : vector<392x128xf32> to vector<392x128xbf16>
    %c0_6 = arith.constant 0 : index
    %c0_7 = arith.constant 0 : index
    %9 = vector.load %arg4[%c0_6, %c0_7] : memref<392x128xbf16, #tpu.memory_space<vmem>>, vector<392x128xbf16>
    tpu.vector_store %arg4[%c0_6, %c0_7], %8 {strides = array<i32>} : memref<392x128xbf16, #tpu.memory_space<vmem>>, vector<392x128xbf16>,
    return
  }
  func.func @transform_0(%arg0: i32) -> (i32, i32) {
    %c0_i32 = arith.constant 0 : i32
    %c0_i32_0 = arith.constant 0 : i32
    %c0_i32_1 = arith.constant 0 : i32
    return %c0_i32, %c0_i32_0 : i32, i32
  }
  func.func @transform_1(%arg0: i32) -> (i32, i32) {
    %c0_i32 = arith.constant 0 : i32
    %c0_i32_0 = arith.constant 0 : i32
    %c0_i32_1 = arith.constant 0 : i32
    return %c0_i32, %c0_i32_0 : i32, i32
  }
  func.func @transform_2(%arg0: i32) -> (i32, i32) {
    %c0_i32 = arith.constant 0 : i32
    %c0_i32_0 = arith.constant 0 : i32
    %c0_i32_1 = arith.constant 0 : i32
    return %c0_i32, %c0_i32_0 : i32, i32
  }
  func.func @transform_3(%arg0: i32) -> (i32, i32) {
    %c0_i32 = arith.constant 0 : i32
    %c0_i32_0 = arith.constant 0 : i32
    %c0_i32_1 = arith.constant 0 : i32
    return %c0_i32, %c0_i32_0 : i32, i32
  }
}

module attributes {stable_mosaic.version = 11 : i64} {
  func.func @_pool_conv3_fc_kernel(%arg0: i32, %arg1: memref<2x14x14x128xbf16, #tpu.memory_space<vmem>>, %arg2: memref<49x128x128xbf16, #tpu.memory_space<vmem>>, %arg3: memref<1x128xf32, #tpu.memory_space<vmem>>, %arg4: memref<128x128xbf16, #tpu.memory_space<vmem>>, %arg5: memref<1x128xf32, #tpu.memory_space<vmem>>, %arg6: memref<2x128xf32, #tpu.memory_space<vmem>>) attributes {dimension_semantics = [#tpu.dimension_semantics<arbitrary>], iteration_bounds = array<i64: 1>, scalar_prefetch = 0 : i64, scratch_operands = 0 : i64, tpu.core_type = #tpu.core_type<tc>, window_params = [{pipeline_mode = #tpu.pipeline_mode<synchronous>, transform_indices = @transform_0, window_bounds = array<i64: 2, 14, 14, 128>}, {pipeline_mode = #tpu.pipeline_mode<synchronous>, transform_indices = @transform_1, window_bounds = array<i64: 49, 128, 128>}, {pipeline_mode = #tpu.pipeline_mode<synchronous>, transform_indices = @transform_2, window_bounds = array<i64: 1, 128>}, {pipeline_mode = #tpu.pipeline_mode<synchronous>, transform_indices = @transform_3, window_bounds = array<i64: 128, 128>}, {pipeline_mode = #tpu.pipeline_mode<synchronous>, transform_indices = @transform_4, window_bounds = array<i64: 1, 128>}, {pipeline_mode = #tpu.pipeline_mode<synchronous>, transform_indices = @transform_5, window_bounds = array<i64: 2, 128>}]} {
    %cst = arith.constant 0.000000e+00 : f32
    %0 = vector.broadcast %cst : f32 to vector<2x128xf32>
    %c0 = arith.constant 0 : index
    %c0_0 = arith.constant 0 : index
    %c0_1 = arith.constant 0 : index
    %c0_2 = arith.constant 0 : index
    %1 = vector.load %arg1[%c0, %c0_0, %c0_1, %c0_2] : memref<2x14x14x128xbf16, #tpu.memory_space<vmem>>, vector<2x1x1x128xbf16>
    %2 = vector.shape_cast %1 : vector<2x1x1x128xbf16> to vector<2x128xbf16>
    %c0_3 = arith.constant 0 : index
    %c0_4 = arith.constant 0 : index
    %c1 = arith.constant 1 : index
    %c0_5 = arith.constant 0 : index
    %3 = vector.load %arg1[%c0_3, %c0_4, %c1, %c0_5] : memref<2x14x14x128xbf16, #tpu.memory_space<vmem>>, vector<2x1x1x128xbf16>
    %4 = vector.shape_cast %3 : vector<2x1x1x128xbf16> to vector<2x128xbf16>
    %5 = arith.maximumf %2, %4 : vector<2x128xbf16>
    %c0_6 = arith.constant 0 : index
    %c1_7 = arith.constant 1 : index
    %c0_8 = arith.constant 0 : index
    %c0_9 = arith.constant 0 : index
    %6 = vector.load %arg1[%c0_6, %c1_7, %c0_8, %c0_9] : memref<2x14x14x128xbf16, #tpu.memory_space<vmem>>, vector<2x1x1x128xbf16>
    %7 = vector.shape_cast %6 : vector<2x1x1x128xbf16> to vector<2x128xbf16>
    %c0_10 = arith.constant 0 : index
    %c1_11 = arith.constant 1 : index
    %c1_12 = arith.constant 1 : index
    %c0_13 = arith.constant 0 : index
    %8 = vector.load %arg1[%c0_10, %c1_11, %c1_12, %c0_13] : memref<2x14x14x128xbf16, #tpu.memory_space<vmem>>, vector<2x1x1x128xbf16>
    %9 = vector.shape_cast %8 : vector<2x1x1x128xbf16> to vector<2x128xbf16>
    %10 = arith.maximumf %7, %9 : vector<2x128xbf16>
    %11 = arith.maximumf %5, %10 : vector<2x128xbf16>
    %c0_14 = arith.constant 0 : index
    %c0_15 = arith.constant 0 : index
    %c0_16 = arith.constant 0 : index
    %12 = vector.load %arg2[%c0_14, %c0_15, %c0_16] : memref<49x128x128xbf16, #tpu.memory_space<vmem>>, vector<1x128x128xbf16>
    %13 = vector.shape_cast %12 : vector<1x128x128xbf16> to vector<128x128xbf16>
    %cst_17 = arith.constant dense<0.000000e+00> : vector<2x128xf32>
    %14 = tpu.matmul %11, %13, %cst_17 {dimension_numbers = #tpu.dot_dimension_numbers<[1], [0], [0], [1], [0, 0, 1, 1], [], []>} : vector<2x128xbf16>, vector<128x128xbf16>, vector<2x128xf32> -> vector<2x128xf32>
    %15 = arith.addf %0, %14 : vector<2x128xf32>
    %c0_18 = arith.constant 0 : index
    %c0_19 = arith.constant 0 : index
    %c2 = arith.constant 2 : index
    %c0_20 = arith.constant 0 : index
    %16 = vector.load %arg1[%c0_18, %c0_19, %c2, %c0_20] : memref<2x14x14x128xbf16, #tpu.memory_space<vmem>>, vector<2x1x1x128xbf16>
    %17 = vector.shape_cast %16 : vector<2x1x1x128xbf16> to vector<2x128xbf16>
    %c0_21 = arith.constant 0 : index
    %c0_22 = arith.constant 0 : index
    %c3 = arith.constant 3 : index
    %c0_23 = arith.constant 0 : index
    %18 = vector.load %arg1[%c0_21, %c0_22, %c3, %c0_23] : memref<2x14x14x128xbf16, #tpu.memory_space<vmem>>, vector<2x1x1x128xbf16>
    %19 = vector.shape_cast %18 : vector<2x1x1x128xbf16> to vector<2x128xbf16>
    %20 = arith.maximumf %17, %19 : vector<2x128xbf16>
    %c0_24 = arith.constant 0 : index
    %c1_25 = arith.constant 1 : index
    %c2_26 = arith.constant 2 : index
    %c0_27 = arith.constant 0 : index
    %21 = vector.load %arg1[%c0_24, %c1_25, %c2_26, %c0_27] : memref<2x14x14x128xbf16, #tpu.memory_space<vmem>>, vector<2x1x1x128xbf16>
    %22 = vector.shape_cast %21 : vector<2x1x1x128xbf16> to vector<2x128xbf16>
    %c0_28 = arith.constant 0 : index
    %c1_29 = arith.constant 1 : index
    %c3_30 = arith.constant 3 : index
    %c0_31 = arith.constant 0 : index
    %23 = vector.load %arg1[%c0_28, %c1_29, %c3_30, %c0_31] : memref<2x14x14x128xbf16, #tpu.memory_space<vmem>>, vector<2x1x1x128xbf16>
    %24 = vector.shape_cast %23 : vector<2x1x1x128xbf16> to vector<2x128xbf16>
    %25 = arith.maximumf %22, %24 : vector<2x128xbf16>
    %26 = arith.maximumf %20, %25 : vector<2x128xbf16>
    %c1_32 = arith.constant 1 : index
    %c0_33 = arith.constant 0 : index
    %c0_34 = arith.constant 0 : index
    %27 = vector.load %arg2[%c1_32, %c0_33, %c0_34] : memref<49x128x128xbf16, #tpu.memory_space<vmem>>, vector<1x128x128xbf16>
    %28 = vector.shape_cast %27 : vector<1x128x128xbf16> to vector<128x128xbf16>
    %cst_35 = arith.constant dense<0.000000e+00> : vector<2x128xf32>
    %29 = tpu.matmul %26, %28, %cst_35 {dimension_numbers = #tpu.dot_dimension_numbers<[1], [0], [0], [1], [0, 0, 1, 1], [], []>} : vector<2x128xbf16>, vector<128x128xbf16>, vector<2x128xf32> -> vector<2x128xf32>
    %30 = arith.addf %15, %29 : vector<2x128xf32>
    %c0_36 = arith.constant 0 : index
    %c0_37 = arith.constant 0 : index
    %c4 = arith.constant 4 : index
    %c0_38 = arith.constant 0 : index
    %31 = vector.load %arg1[%c0_36, %c0_37, %c4, %c0_38] : memref<2x14x14x128xbf16, #tpu.memory_space<vmem>>, vector<2x1x1x128xbf16>
    %32 = vector.shape_cast %31 : vector<2x1x1x128xbf16> to vector<2x128xbf16>
    %c0_39 = arith.constant 0 : index
    %c0_40 = arith.constant 0 : index
    %c5 = arith.constant 5 : index
    %c0_41 = arith.constant 0 : index
    %33 = vector.load %arg1[%c0_39, %c0_40, %c5, %c0_41] : memref<2x14x14x128xbf16, #tpu.memory_space<vmem>>, vector<2x1x1x128xbf16>
    %34 = vector.shape_cast %33 : vector<2x1x1x128xbf16> to vector<2x128xbf16>
    %35 = arith.maximumf %32, %34 : vector<2x128xbf16>
    %c0_42 = arith.constant 0 : index
    %c1_43 = arith.constant 1 : index
    %c4_44 = arith.constant 4 : index
    %c0_45 = arith.constant 0 : index
    %36 = vector.load %arg1[%c0_42, %c1_43, %c4_44, %c0_45] : memref<2x14x14x128xbf16, #tpu.memory_space<vmem>>, vector<2x1x1x128xbf16>
    %37 = vector.shape_cast %36 : vector<2x1x1x128xbf16> to vector<2x128xbf16>
    %c0_46 = arith.constant 0 : index
    %c1_47 = arith.constant 1 : index
    %c5_48 = arith.constant 5 : index
    %c0_49 = arith.constant 0 : index
    %38 = vector.load %arg1[%c0_46, %c1_47, %c5_48, %c0_49] : memref<2x14x14x128xbf16, #tpu.memory_space<vmem>>, vector<2x1x1x128xbf16>
    %39 = vector.shape_cast %38 : vector<2x1x1x128xbf16> to vector<2x128xbf16>
    %40 = arith.maximumf %37, %39 : vector<2x128xbf16>
    %41 = arith.maximumf %35, %40 : vector<2x128xbf16>
    %c2_50 = arith.constant 2 : index
    %c0_51 = arith.constant 0 : index
    %c0_52 = arith.constant 0 : index
    %42 = vector.load %arg2[%c2_50, %c0_51, %c0_52] : memref<49x128x128xbf16, #tpu.memory_space<vmem>>, vector<1x128x128xbf16>
    %43 = vector.shape_cast %42 : vector<1x128x128xbf16> to vector<128x128xbf16>
    %cst_53 = arith.constant dense<0.000000e+00> : vector<2x128xf32>
    %44 = tpu.matmul %41, %43, %cst_53 {dimension_numbers = #tpu.dot_dimension_numbers<[1], [0], [0], [1], [0, 0, 1, 1], [], []>} : vector<2x128xbf16>, vector<128x128xbf16>, vector<2x128xf32> -> vector<2x128xf32>
    %45 = arith.addf %30, %44 : vector<2x128xf32>
    %c0_54 = arith.constant 0 : index
    %c0_55 = arith.constant 0 : index
    %c6 = arith.constant 6 : index
    %c0_56 = arith.constant 0 : index
    %46 = vector.load %arg1[%c0_54, %c0_55, %c6, %c0_56] : memref<2x14x14x128xbf16, #tpu.memory_space<vmem>>, vector<2x1x1x128xbf16>
    %47 = vector.shape_cast %46 : vector<2x1x1x128xbf16> to vector<2x128xbf16>
    %c0_57 = arith.constant 0 : index
    %c0_58 = arith.constant 0 : index
    %c7 = arith.constant 7 : index
    %c0_59 = arith.constant 0 : index
    %48 = vector.load %arg1[%c0_57, %c0_58, %c7, %c0_59] : memref<2x14x14x128xbf16, #tpu.memory_space<vmem>>, vector<2x1x1x128xbf16>
    %49 = vector.shape_cast %48 : vector<2x1x1x128xbf16> to vector<2x128xbf16>
    %50 = arith.maximumf %47, %49 : vector<2x128xbf16>
    %c0_60 = arith.constant 0 : index
    %c1_61 = arith.constant 1 : index
    %c6_62 = arith.constant 6 : index
    %c0_63 = arith.constant 0 : index
    %51 = vector.load %arg1[%c0_60, %c1_61, %c6_62, %c0_63] : memref<2x14x14x128xbf16, #tpu.memory_space<vmem>>, vector<2x1x1x128xbf16>
    %52 = vector.shape_cast %51 : vector<2x1x1x128xbf16> to vector<2x128xbf16>
    %c0_64 = arith.constant 0 : index
    %c1_65 = arith.constant 1 : index
    %c7_66 = arith.constant 7 : index
    %c0_67 = arith.constant 0 : index
    %53 = vector.load %arg1[%c0_64, %c1_65, %c7_66, %c0_67] : memref<2x14x14x128xbf16, #tpu.memory_space<vmem>>, vector<2x1x1x128xbf16>
    %54 = vector.shape_cast %53 : vector<2x1x1x128xbf16> to vector<2x128xbf16>
    %55 = arith.maximumf %52, %54 : vector<2x128xbf16>
    %56 = arith.maximumf %50, %55 : vector<2x128xbf16>
    %c3_68 = arith.constant 3 : index
    %c0_69 = arith.constant 0 : index
    %c0_70 = arith.constant 0 : index
    %57 = vector.load %arg2[%c3_68, %c0_69, %c0_70] : memref<49x128x128xbf16, #tpu.memory_space<vmem>>, vector<1x128x128xbf16>
    %58 = vector.shape_cast %57 : vector<1x128x128xbf16> to vector<128x128xbf16>
    %cst_71 = arith.constant dense<0.000000e+00> : vector<2x128xf32>
    %59 = tpu.matmul %56, %58, %cst_71 {dimension_numbers = #tpu.dot_dimension_numbers<[1], [0], [0], [1], [0, 0, 1, 1], [], []>} : vector<2x128xbf16>, vector<128x128xbf16>, vector<2x128xf32> -> vector<2x128xf32>
    %60 = arith.addf %45, %59 : vector<2x128xf32>
    %c0_72 = arith.constant 0 : index
    %c0_73 = arith.constant 0 : index
    %c8 = arith.constant 8 : index
    %c0_74 = arith.constant 0 : index
    %61 = vector.load %arg1[%c0_72, %c0_73, %c8, %c0_74] : memref<2x14x14x128xbf16, #tpu.memory_space<vmem>>, vector<2x1x1x128xbf16>
    %62 = vector.shape_cast %61 : vector<2x1x1x128xbf16> to vector<2x128xbf16>
    %c0_75 = arith.constant 0 : index
    %c0_76 = arith.constant 0 : index
    %c9 = arith.constant 9 : index
    %c0_77 = arith.constant 0 : index
    %63 = vector.load %arg1[%c0_75, %c0_76, %c9, %c0_77] : memref<2x14x14x128xbf16, #tpu.memory_space<vmem>>, vector<2x1x1x128xbf16>
    %64 = vector.shape_cast %63 : vector<2x1x1x128xbf16> to vector<2x128xbf16>
    %65 = arith.maximumf %62, %64 : vector<2x128xbf16>
    %c0_78 = arith.constant 0 : index
    %c1_79 = arith.constant 1 : index
    %c8_80 = arith.constant 8 : index
    %c0_81 = arith.constant 0 : index
    %66 = vector.load %arg1[%c0_78, %c1_79, %c8_80, %c0_81] : memref<2x14x14x128xbf16, #tpu.memory_space<vmem>>, vector<2x1x1x128xbf16>
    %67 = vector.shape_cast %66 : vector<2x1x1x128xbf16> to vector<2x128xbf16>
    %c0_82 = arith.constant 0 : index
    %c1_83 = arith.constant 1 : index
    %c9_84 = arith.constant 9 : index
    %c0_85 = arith.constant 0 : index
    %68 = vector.load %arg1[%c0_82, %c1_83, %c9_84, %c0_85] : memref<2x14x14x128xbf16, #tpu.memory_space<vmem>>, vector<2x1x1x128xbf16>
    %69 = vector.shape_cast %68 : vector<2x1x1x128xbf16> to vector<2x128xbf16>
    %70 = arith.maximumf %67, %69 : vector<2x128xbf16>
    %71 = arith.maximumf %65, %70 : vector<2x128xbf16>
    %c4_86 = arith.constant 4 : index
    %c0_87 = arith.constant 0 : index
    %c0_88 = arith.constant 0 : index
    %72 = vector.load %arg2[%c4_86, %c0_87, %c0_88] : memref<49x128x128xbf16, #tpu.memory_space<vmem>>, vector<1x128x128xbf16>
    %73 = vector.shape_cast %72 : vector<1x128x128xbf16> to vector<128x128xbf16>
    %cst_89 = arith.constant dense<0.000000e+00> : vector<2x128xf32>
    %74 = tpu.matmul %71, %73, %cst_89 {dimension_numbers = #tpu.dot_dimension_numbers<[1], [0], [0], [1], [0, 0, 1, 1], [], []>} : vector<2x128xbf16>, vector<128x128xbf16>, vector<2x128xf32> -> vector<2x128xf32>
    %75 = arith.addf %60, %74 : vector<2x128xf32>
    %c0_90 = arith.constant 0 : index
    %c0_91 = arith.constant 0 : index
    %c10 = arith.constant 10 : index
    %c0_92 = arith.constant 0 : index
    %76 = vector.load %arg1[%c0_90, %c0_91, %c10, %c0_92] : memref<2x14x14x128xbf16, #tpu.memory_space<vmem>>, vector<2x1x1x128xbf16>
    %77 = vector.shape_cast %76 : vector<2x1x1x128xbf16> to vector<2x128xbf16>
    %c0_93 = arith.constant 0 : index
    %c0_94 = arith.constant 0 : index
    %c11 = arith.constant 11 : index
    %c0_95 = arith.constant 0 : index
    %78 = vector.load %arg1[%c0_93, %c0_94, %c11, %c0_95] : memref<2x14x14x128xbf16, #tpu.memory_space<vmem>>, vector<2x1x1x128xbf16>
    %79 = vector.shape_cast %78 : vector<2x1x1x128xbf16> to vector<2x128xbf16>
    %80 = arith.maximumf %77, %79 : vector<2x128xbf16>
    %c0_96 = arith.constant 0 : index
    %c1_97 = arith.constant 1 : index
    %c10_98 = arith.constant 10 : index
    %c0_99 = arith.constant 0 : index
    %81 = vector.load %arg1[%c0_96, %c1_97, %c10_98, %c0_99] : memref<2x14x14x128xbf16, #tpu.memory_space<vmem>>, vector<2x1x1x128xbf16>
    %82 = vector.shape_cast %81 : vector<2x1x1x128xbf16> to vector<2x128xbf16>
    %c0_100 = arith.constant 0 : index
    %c1_101 = arith.constant 1 : index
    %c11_102 = arith.constant 11 : index
    %c0_103 = arith.constant 0 : index
    %83 = vector.load %arg1[%c0_100, %c1_101, %c11_102, %c0_103] : memref<2x14x14x128xbf16, #tpu.memory_space<vmem>>, vector<2x1x1x128xbf16>
    %84 = vector.shape_cast %83 : vector<2x1x1x128xbf16> to vector<2x128xbf16>
    %85 = arith.maximumf %82, %84 : vector<2x128xbf16>
    %86 = arith.maximumf %80, %85 : vector<2x128xbf16>
    %c5_104 = arith.constant 5 : index
    %c0_105 = arith.constant 0 : index
    %c0_106 = arith.constant 0 : index
    %87 = vector.load %arg2[%c5_104, %c0_105, %c0_106] : memref<49x128x128xbf16, #tpu.memory_space<vmem>>, vector<1x128x128xbf16>
    %88 = vector.shape_cast %87 : vector<1x128x128xbf16> to vector<128x128xbf16>
    %cst_107 = arith.constant dense<0.000000e+00> : vector<2x128xf32>
    %89 = tpu.matmul %86, %88, %cst_107 {dimension_numbers = #tpu.dot_dimension_numbers<[1], [0], [0], [1], [0, 0, 1, 1], [], []>} : vector<2x128xbf16>, vector<128x128xbf16>, vector<2x128xf32> -> vector<2x128xf32>
    %90 = arith.addf %75, %89 : vector<2x128xf32>
    %c0_108 = arith.constant 0 : index
    %c0_109 = arith.constant 0 : index
    %c12 = arith.constant 12 : index
    %c0_110 = arith.constant 0 : index
    %91 = vector.load %arg1[%c0_108, %c0_109, %c12, %c0_110] : memref<2x14x14x128xbf16, #tpu.memory_space<vmem>>, vector<2x1x1x128xbf16>
    %92 = vector.shape_cast %91 : vector<2x1x1x128xbf16> to vector<2x128xbf16>
    %c0_111 = arith.constant 0 : index
    %c0_112 = arith.constant 0 : index
    %c13 = arith.constant 13 : index
    %c0_113 = arith.constant 0 : index
    %93 = vector.load %arg1[%c0_111, %c0_112, %c13, %c0_113] : memref<2x14x14x128xbf16, #tpu.memory_space<vmem>>, vector<2x1x1x128xbf16>
    %94 = vector.shape_cast %93 : vector<2x1x1x128xbf16> to vector<2x128xbf16>
    %95 = arith.maximumf %92, %94 : vector<2x128xbf16>
    %c0_114 = arith.constant 0 : index
    %c1_115 = arith.constant 1 : index
    %c12_116 = arith.constant 12 : index
    %c0_117 = arith.constant 0 : index
    %96 = vector.load %arg1[%c0_114, %c1_115, %c12_116, %c0_117] : memref<2x14x14x128xbf16, #tpu.memory_space<vmem>>, vector<2x1x1x128xbf16>
    %97 = vector.shape_cast %96 : vector<2x1x1x128xbf16> to vector<2x128xbf16>
    %c0_118 = arith.constant 0 : index
    %c1_119 = arith.constant 1 : index
    %c13_120 = arith.constant 13 : index
    %c0_121 = arith.constant 0 : index
    %98 = vector.load %arg1[%c0_118, %c1_119, %c13_120, %c0_121] : memref<2x14x14x128xbf16, #tpu.memory_space<vmem>>, vector<2x1x1x128xbf16>
    %99 = vector.shape_cast %98 : vector<2x1x1x128xbf16> to vector<2x128xbf16>
    %100 = arith.maximumf %97, %99 : vector<2x128xbf16>
    %101 = arith.maximumf %95, %100 : vector<2x128xbf16>
    %c6_122 = arith.constant 6 : index
    %c0_123 = arith.constant 0 : index
    %c0_124 = arith.constant 0 : index
    %102 = vector.load %arg2[%c6_122, %c0_123, %c0_124] : memref<49x128x128xbf16, #tpu.memory_space<vmem>>, vector<1x128x128xbf16>
    %103 = vector.shape_cast %102 : vector<1x128x128xbf16> to vector<128x128xbf16>
    %cst_125 = arith.constant dense<0.000000e+00> : vector<2x128xf32>
    %104 = tpu.matmul %101, %103, %cst_125 {dimension_numbers = #tpu.dot_dimension_numbers<[1], [0], [0], [1], [0, 0, 1, 1], [], []>} : vector<2x128xbf16>, vector<128x128xbf16>, vector<2x128xf32> -> vector<2x128xf32>
    %105 = arith.addf %90, %104 : vector<2x128xf32>
    %c0_126 = arith.constant 0 : index
    %c2_127 = arith.constant 2 : index
    %c0_128 = arith.constant 0 : index
    %c0_129 = arith.constant 0 : index
    %106 = vector.load %arg1[%c0_126, %c2_127, %c0_128, %c0_129] : memref<2x14x14x128xbf16, #tpu.memory_space<vmem>>, vector<2x1x1x128xbf16>
    %107 = vector.shape_cast %106 : vector<2x1x1x128xbf16> to vector<2x128xbf16>
    %c0_130 = arith.constant 0 : index
    %c2_131 = arith.constant 2 : index
    %c1_132 = arith.constant 1 : index
    %c0_133 = arith.constant 0 : index
    %108 = vector.load %arg1[%c0_130, %c2_131, %c1_132, %c0_133] : memref<2x14x14x128xbf16, #tpu.memory_space<vmem>>, vector<2x1x1x128xbf16>
    %109 = vector.shape_cast %108 : vector<2x1x1x128xbf16> to vector<2x128xbf16>
    %110 = arith.maximumf %107, %109 : vector<2x128xbf16>
    %c0_134 = arith.constant 0 : index
    %c3_135 = arith.constant 3 : index
    %c0_136 = arith.constant 0 : index
    %c0_137 = arith.constant 0 : index
    %111 = vector.load %arg1[%c0_134, %c3_135, %c0_136, %c0_137] : memref<2x14x14x128xbf16, #tpu.memory_space<vmem>>, vector<2x1x1x128xbf16>
    %112 = vector.shape_cast %111 : vector<2x1x1x128xbf16> to vector<2x128xbf16>
    %c0_138 = arith.constant 0 : index
    %c3_139 = arith.constant 3 : index
    %c1_140 = arith.constant 1 : index
    %c0_141 = arith.constant 0 : index
    %113 = vector.load %arg1[%c0_138, %c3_139, %c1_140, %c0_141] : memref<2x14x14x128xbf16, #tpu.memory_space<vmem>>, vector<2x1x1x128xbf16>
    %114 = vector.shape_cast %113 : vector<2x1x1x128xbf16> to vector<2x128xbf16>
    %115 = arith.maximumf %112, %114 : vector<2x128xbf16>
    %116 = arith.maximumf %110, %115 : vector<2x128xbf16>
    %c7_142 = arith.constant 7 : index
    %c0_143 = arith.constant 0 : index
    %c0_144 = arith.constant 0 : index
    %117 = vector.load %arg2[%c7_142, %c0_143, %c0_144] : memref<49x128x128xbf16, #tpu.memory_space<vmem>>, vector<1x128x128xbf16>
    %118 = vector.shape_cast %117 : vector<1x128x128xbf16> to vector<128x128xbf16>
    %cst_145 = arith.constant dense<0.000000e+00> : vector<2x128xf32>
    %119 = tpu.matmul %116, %118, %cst_145 {dimension_numbers = #tpu.dot_dimension_numbers<[1], [0], [0], [1], [0, 0, 1, 1], [], []>} : vector<2x128xbf16>, vector<128x128xbf16>, vector<2x128xf32> -> vector<2x128xf32>
    %120 = arith.addf %105, %119 : vector<2x128xf32>
    %c0_146 = arith.constant 0 : index
    %c2_147 = arith.constant 2 : index
    %c2_148 = arith.constant 2 : index
    %c0_149 = arith.constant 0 : index
    %121 = vector.load %arg1[%c0_146, %c2_147, %c2_148, %c0_149] : memref<2x14x14x128xbf16, #tpu.memory_space<vmem>>, vector<2x1x1x128xbf16>
    %122 = vector.shape_cast %121 : vector<2x1x1x128xbf16> to vector<2x128xbf16>
    %c0_150 = arith.constant 0 : index
    %c2_151 = arith.constant 2 : index
    %c3_152 = arith.constant 3 : index
    %c0_153 = arith.constant 0 : index
    %123 = vector.load %arg1[%c0_150, %c2_151, %c3_152, %c0_153] : memref<2x14x14x128xbf16, #tpu.memory_space<vmem>>, vector<2x1x1x128xbf16>
    %124 = vector.shape_cast %123 : vector<2x1x1x128xbf16> to vector<2x128xbf16>
    %125 = arith.maximumf %122, %124 : vector<2x128xbf16>
    %c0_154 = arith.constant 0 : index
    %c3_155 = arith.constant 3 : index
    %c2_156 = arith.constant 2 : index
    %c0_157 = arith.constant 0 : index
    %126 = vector.load %arg1[%c0_154, %c3_155, %c2_156, %c0_157] : memref<2x14x14x128xbf16, #tpu.memory_space<vmem>>, vector<2x1x1x128xbf16>
    %127 = vector.shape_cast %126 : vector<2x1x1x128xbf16> to vector<2x128xbf16>
    %c0_158 = arith.constant 0 : index
    %c3_159 = arith.constant 3 : index
    %c3_160 = arith.constant 3 : index
    %c0_161 = arith.constant 0 : index
    %128 = vector.load %arg1[%c0_158, %c3_159, %c3_160, %c0_161] : memref<2x14x14x128xbf16, #tpu.memory_space<vmem>>, vector<2x1x1x128xbf16>
    %129 = vector.shape_cast %128 : vector<2x1x1x128xbf16> to vector<2x128xbf16>
    %130 = arith.maximumf %127, %129 : vector<2x128xbf16>
    %131 = arith.maximumf %125, %130 : vector<2x128xbf16>
    %c8_162 = arith.constant 8 : index
    %c0_163 = arith.constant 0 : index
    %c0_164 = arith.constant 0 : index
    %132 = vector.load %arg2[%c8_162, %c0_163, %c0_164] : memref<49x128x128xbf16, #tpu.memory_space<vmem>>, vector<1x128x128xbf16>
    %133 = vector.shape_cast %132 : vector<1x128x128xbf16> to vector<128x128xbf16>
    %cst_165 = arith.constant dense<0.000000e+00> : vector<2x128xf32>
    %134 = tpu.matmul %131, %133, %cst_165 {dimension_numbers = #tpu.dot_dimension_numbers<[1], [0], [0], [1], [0, 0, 1, 1], [], []>} : vector<2x128xbf16>, vector<128x128xbf16>, vector<2x128xf32> -> vector<2x128xf32>
    %135 = arith.addf %120, %134 : vector<2x128xf32>
    %c0_166 = arith.constant 0 : index
    %c2_167 = arith.constant 2 : index
    %c4_168 = arith.constant 4 : index
    %c0_169 = arith.constant 0 : index
    %136 = vector.load %arg1[%c0_166, %c2_167, %c4_168, %c0_169] : memref<2x14x14x128xbf16, #tpu.memory_space<vmem>>, vector<2x1x1x128xbf16>
    %137 = vector.shape_cast %136 : vector<2x1x1x128xbf16> to vector<2x128xbf16>
    %c0_170 = arith.constant 0 : index
    %c2_171 = arith.constant 2 : index
    %c5_172 = arith.constant 5 : index
    %c0_173 = arith.constant 0 : index
    %138 = vector.load %arg1[%c0_170, %c2_171, %c5_172, %c0_173] : memref<2x14x14x128xbf16, #tpu.memory_space<vmem>>, vector<2x1x1x128xbf16>
    %139 = vector.shape_cast %138 : vector<2x1x1x128xbf16> to vector<2x128xbf16>
    %140 = arith.maximumf %137, %139 : vector<2x128xbf16>
    %c0_174 = arith.constant 0 : index
    %c3_175 = arith.constant 3 : index
    %c4_176 = arith.constant 4 : index
    %c0_177 = arith.constant 0 : index
    %141 = vector.load %arg1[%c0_174, %c3_175, %c4_176, %c0_177] : memref<2x14x14x128xbf16, #tpu.memory_space<vmem>>, vector<2x1x1x128xbf16>
    %142 = vector.shape_cast %141 : vector<2x1x1x128xbf16> to vector<2x128xbf16>
    %c0_178 = arith.constant 0 : index
    %c3_179 = arith.constant 3 : index
    %c5_180 = arith.constant 5 : index
    %c0_181 = arith.constant 0 : index
    %143 = vector.load %arg1[%c0_178, %c3_179, %c5_180, %c0_181] : memref<2x14x14x128xbf16, #tpu.memory_space<vmem>>, vector<2x1x1x128xbf16>
    %144 = vector.shape_cast %143 : vector<2x1x1x128xbf16> to vector<2x128xbf16>
    %145 = arith.maximumf %142, %144 : vector<2x128xbf16>
    %146 = arith.maximumf %140, %145 : vector<2x128xbf16>
    %c9_182 = arith.constant 9 : index
    %c0_183 = arith.constant 0 : index
    %c0_184 = arith.constant 0 : index
    %147 = vector.load %arg2[%c9_182, %c0_183, %c0_184] : memref<49x128x128xbf16, #tpu.memory_space<vmem>>, vector<1x128x128xbf16>
    %148 = vector.shape_cast %147 : vector<1x128x128xbf16> to vector<128x128xbf16>
    %cst_185 = arith.constant dense<0.000000e+00> : vector<2x128xf32>
    %149 = tpu.matmul %146, %148, %cst_185 {dimension_numbers = #tpu.dot_dimension_numbers<[1], [0], [0], [1], [0, 0, 1, 1], [], []>} : vector<2x128xbf16>, vector<128x128xbf16>, vector<2x128xf32> -> vector<2x128xf32>
    %150 = arith.addf %135, %149 : vector<2x128xf32>
    %c0_186 = arith.constant 0 : index
    %c2_187 = arith.constant 2 : index
    %c6_188 = arith.constant 6 : index
    %c0_189 = arith.constant 0 : index
    %151 = vector.load %arg1[%c0_186, %c2_187, %c6_188, %c0_189] : memref<2x14x14x128xbf16, #tpu.memory_space<vmem>>, vector<2x1x1x128xbf16>
    %152 = vector.shape_cast %151 : vector<2x1x1x128xbf16> to vector<2x128xbf16>
    %c0_190 = arith.constant 0 : index
    %c2_191 = arith.constant 2 : index
    %c7_192 = arith.constant 7 : index
    %c0_193 = arith.constant 0 : index
    %153 = vector.load %arg1[%c0_190, %c2_191, %c7_192, %c0_193] : memref<2x14x14x128xbf16, #tpu.memory_space<vmem>>, vector<2x1x1x128xbf16>
    %154 = vector.shape_cast %153 : vector<2x1x1x128xbf16> to vector<2x128xbf16>
    %155 = arith.maximumf %152, %154 : vector<2x128xbf16>
    %c0_194 = arith.constant 0 : index
    %c3_195 = arith.constant 3 : index
    %c6_196 = arith.constant 6 : index
    %c0_197 = arith.constant 0 : index
    %156 = vector.load %arg1[%c0_194, %c3_195, %c6_196, %c0_197] : memref<2x14x14x128xbf16, #tpu.memory_space<vmem>>, vector<2x1x1x128xbf16>
    %157 = vector.shape_cast %156 : vector<2x1x1x128xbf16> to vector<2x128xbf16>
    %c0_198 = arith.constant 0 : index
    %c3_199 = arith.constant 3 : index
    %c7_200 = arith.constant 7 : index
    %c0_201 = arith.constant 0 : index
    %158 = vector.load %arg1[%c0_198, %c3_199, %c7_200, %c0_201] : memref<2x14x14x128xbf16, #tpu.memory_space<vmem>>, vector<2x1x1x128xbf16>
    %159 = vector.shape_cast %158 : vector<2x1x1x128xbf16> to vector<2x128xbf16>
    %160 = arith.maximumf %157, %159 : vector<2x128xbf16>
    %161 = arith.maximumf %155, %160 : vector<2x128xbf16>
    %c10_202 = arith.constant 10 : index
    %c0_203 = arith.constant 0 : index
    %c0_204 = arith.constant 0 : index
    %162 = vector.load %arg2[%c10_202, %c0_203, %c0_204] : memref<49x128x128xbf16, #tpu.memory_space<vmem>>, vector<1x128x128xbf16>
    %163 = vector.shape_cast %162 : vector<1x128x128xbf16> to vector<128x128xbf16>
    %cst_205 = arith.constant dense<0.000000e+00> : vector<2x128xf32>
    %164 = tpu.matmul %161, %163, %cst_205 {dimension_numbers = #tpu.dot_dimension_numbers<[1], [0], [0], [1], [0, 0, 1, 1], [], []>} : vector<2x128xbf16>, vector<128x128xbf16>, vector<2x128xf32> -> vector<2x128xf32>
    %165 = arith.addf %150, %164 : vector<2x128xf32>
    %c0_206 = arith.constant 0 : index
    %c2_207 = arith.constant 2 : index
    %c8_208 = arith.constant 8 : index
    %c0_209 = arith.constant 0 : index
    %166 = vector.load %arg1[%c0_206, %c2_207, %c8_208, %c0_209] : memref<2x14x14x128xbf16, #tpu.memory_space<vmem>>, vector<2x1x1x128xbf16>
    %167 = vector.shape_cast %166 : vector<2x1x1x128xbf16> to vector<2x128xbf16>
    %c0_210 = arith.constant 0 : index
    %c2_211 = arith.constant 2 : index
    %c9_212 = arith.constant 9 : index
    %c0_213 = arith.constant 0 : index
    %168 = vector.load %arg1[%c0_210, %c2_211, %c9_212, %c0_213] : memref<2x14x14x128xbf16, #tpu.memory_space<vmem>>, vector<2x1x1x128xbf16>
    %169 = vector.shape_cast %168 : vector<2x1x1x128xbf16> to vector<2x128xbf16>
    %170 = arith.maximumf %167, %169 : vector<2x128xbf16>
    %c0_214 = arith.constant 0 : index
    %c3_215 = arith.constant 3 : index
    %c8_216 = arith.constant 8 : index
    %c0_217 = arith.constant 0 : index
    %171 = vector.load %arg1[%c0_214, %c3_215, %c8_216, %c0_217] : memref<2x14x14x128xbf16, #tpu.memory_space<vmem>>, vector<2x1x1x128xbf16>
    %172 = vector.shape_cast %171 : vector<2x1x1x128xbf16> to vector<2x128xbf16>
    %c0_218 = arith.constant 0 : index
    %c3_219 = arith.constant 3 : index
    %c9_220 = arith.constant 9 : index
    %c0_221 = arith.constant 0 : index
    %173 = vector.load %arg1[%c0_218, %c3_219, %c9_220, %c0_221] : memref<2x14x14x128xbf16, #tpu.memory_space<vmem>>, vector<2x1x1x128xbf16>
    %174 = vector.shape_cast %173 : vector<2x1x1x128xbf16> to vector<2x128xbf16>
    %175 = arith.maximumf %172, %174 : vector<2x128xbf16>
    %176 = arith.maximumf %170, %175 : vector<2x128xbf16>
    %c11_222 = arith.constant 11 : index
    %c0_223 = arith.constant 0 : index
    %c0_224 = arith.constant 0 : index
    %177 = vector.load %arg2[%c11_222, %c0_223, %c0_224] : memref<49x128x128xbf16, #tpu.memory_space<vmem>>, vector<1x128x128xbf16>
    %178 = vector.shape_cast %177 : vector<1x128x128xbf16> to vector<128x128xbf16>
    %cst_225 = arith.constant dense<0.000000e+00> : vector<2x128xf32>
    %179 = tpu.matmul %176, %178, %cst_225 {dimension_numbers = #tpu.dot_dimension_numbers<[1], [0], [0], [1], [0, 0, 1, 1], [], []>} : vector<2x128xbf16>, vector<128x128xbf16>, vector<2x128xf32> -> vector<2x128xf32>
    %180 = arith.addf %165, %179 : vector<2x128xf32>
    %c0_226 = arith.constant 0 : index
    %c2_227 = arith.constant 2 : index
    %c10_228 = arith.constant 10 : index
    %c0_229 = arith.constant 0 : index
    %181 = vector.load %arg1[%c0_226, %c2_227, %c10_228, %c0_229] : memref<2x14x14x128xbf16, #tpu.memory_space<vmem>>, vector<2x1x1x128xbf16>
    %182 = vector.shape_cast %181 : vector<2x1x1x128xbf16> to vector<2x128xbf16>
    %c0_230 = arith.constant 0 : index
    %c2_231 = arith.constant 2 : index
    %c11_232 = arith.constant 11 : index
    %c0_233 = arith.constant 0 : index
    %183 = vector.load %arg1[%c0_230, %c2_231, %c11_232, %c0_233] : memref<2x14x14x128xbf16, #tpu.memory_space<vmem>>, vector<2x1x1x128xbf16>
    %184 = vector.shape_cast %183 : vector<2x1x1x128xbf16> to vector<2x128xbf16>
    %185 = arith.maximumf %182, %184 : vector<2x128xbf16>
    %c0_234 = arith.constant 0 : index
    %c3_235 = arith.constant 3 : index
    %c10_236 = arith.constant 10 : index
    %c0_237 = arith.constant 0 : index
    %186 = vector.load %arg1[%c0_234, %c3_235, %c10_236, %c0_237] : memref<2x14x14x128xbf16, #tpu.memory_space<vmem>>, vector<2x1x1x128xbf16>
    %187 = vector.shape_cast %186 : vector<2x1x1x128xbf16> to vector<2x128xbf16>
    %c0_238 = arith.constant 0 : index
    %c3_239 = arith.constant 3 : index
    %c11_240 = arith.constant 11 : index
    %c0_241 = arith.constant 0 : index
    %188 = vector.load %arg1[%c0_238, %c3_239, %c11_240, %c0_241] : memref<2x14x14x128xbf16, #tpu.memory_space<vmem>>, vector<2x1x1x128xbf16>
    %189 = vector.shape_cast %188 : vector<2x1x1x128xbf16> to vector<2x128xbf16>
    %190 = arith.maximumf %187, %189 : vector<2x128xbf16>
    %191 = arith.maximumf %185, %190 : vector<2x128xbf16>
    %c12_242 = arith.constant 12 : index
    %c0_243 = arith.constant 0 : index
    %c0_244 = arith.constant 0 : index
    %192 = vector.load %arg2[%c12_242, %c0_243, %c0_244] : memref<49x128x128xbf16, #tpu.memory_space<vmem>>, vector<1x128x128xbf16>
    %193 = vector.shape_cast %192 : vector<1x128x128xbf16> to vector<128x128xbf16>
    %cst_245 = arith.constant dense<0.000000e+00> : vector<2x128xf32>
    %194 = tpu.matmul %191, %193, %cst_245 {dimension_numbers = #tpu.dot_dimension_numbers<[1], [0], [0], [1], [0, 0, 1, 1], [], []>} : vector<2x128xbf16>, vector<128x128xbf16>, vector<2x128xf32> -> vector<2x128xf32>
    %195 = arith.addf %180, %194 : vector<2x128xf32>
    %c0_246 = arith.constant 0 : index
    %c2_247 = arith.constant 2 : index
    %c12_248 = arith.constant 12 : index
    %c0_249 = arith.constant 0 : index
    %196 = vector.load %arg1[%c0_246, %c2_247, %c12_248, %c0_249] : memref<2x14x14x128xbf16, #tpu.memory_space<vmem>>, vector<2x1x1x128xbf16>
    %197 = vector.shape_cast %196 : vector<2x1x1x128xbf16> to vector<2x128xbf16>
    %c0_250 = arith.constant 0 : index
    %c2_251 = arith.constant 2 : index
    %c13_252 = arith.constant 13 : index
    %c0_253 = arith.constant 0 : index
    %198 = vector.load %arg1[%c0_250, %c2_251, %c13_252, %c0_253] : memref<2x14x14x128xbf16, #tpu.memory_space<vmem>>, vector<2x1x1x128xbf16>
    %199 = vector.shape_cast %198 : vector<2x1x1x128xbf16> to vector<2x128xbf16>
    %200 = arith.maximumf %197, %199 : vector<2x128xbf16>
    %c0_254 = arith.constant 0 : index
    %c3_255 = arith.constant 3 : index
    %c12_256 = arith.constant 12 : index
    %c0_257 = arith.constant 0 : index
    %201 = vector.load %arg1[%c0_254, %c3_255, %c12_256, %c0_257] : memref<2x14x14x128xbf16, #tpu.memory_space<vmem>>, vector<2x1x1x128xbf16>
    %202 = vector.shape_cast %201 : vector<2x1x1x128xbf16> to vector<2x128xbf16>
    %c0_258 = arith.constant 0 : index
    %c3_259 = arith.constant 3 : index
    %c13_260 = arith.constant 13 : index
    %c0_261 = arith.constant 0 : index
    %203 = vector.load %arg1[%c0_258, %c3_259, %c13_260, %c0_261] : memref<2x14x14x128xbf16, #tpu.memory_space<vmem>>, vector<2x1x1x128xbf16>
    %204 = vector.shape_cast %203 : vector<2x1x1x128xbf16> to vector<2x128xbf16>
    %205 = arith.maximumf %202, %204 : vector<2x128xbf16>
    %206 = arith.maximumf %200, %205 : vector<2x128xbf16>
    %c13_262 = arith.constant 13 : index
    %c0_263 = arith.constant 0 : index
    %c0_264 = arith.constant 0 : index
    %207 = vector.load %arg2[%c13_262, %c0_263, %c0_264] : memref<49x128x128xbf16, #tpu.memory_space<vmem>>, vector<1x128x128xbf16>
    %208 = vector.shape_cast %207 : vector<1x128x128xbf16> to vector<128x128xbf16>
    %cst_265 = arith.constant dense<0.000000e+00> : vector<2x128xf32>
    %209 = tpu.matmul %206, %208, %cst_265 {dimension_numbers = #tpu.dot_dimension_numbers<[1], [0], [0], [1], [0, 0, 1, 1], [], []>} : vector<2x128xbf16>, vector<128x128xbf16>, vector<2x128xf32> -> vector<2x128xf32>
    %210 = arith.addf %195, %209 : vector<2x128xf32>
    %c0_266 = arith.constant 0 : index
    %c4_267 = arith.constant 4 : index
    %c0_268 = arith.constant 0 : index
    %c0_269 = arith.constant 0 : index
    %211 = vector.load %arg1[%c0_266, %c4_267, %c0_268, %c0_269] : memref<2x14x14x128xbf16, #tpu.memory_space<vmem>>, vector<2x1x1x128xbf16>
    %212 = vector.shape_cast %211 : vector<2x1x1x128xbf16> to vector<2x128xbf16>
    %c0_270 = arith.constant 0 : index
    %c4_271 = arith.constant 4 : index
    %c1_272 = arith.constant 1 : index
    %c0_273 = arith.constant 0 : index
    %213 = vector.load %arg1[%c0_270, %c4_271, %c1_272, %c0_273] : memref<2x14x14x128xbf16, #tpu.memory_space<vmem>>, vector<2x1x1x128xbf16>
    %214 = vector.shape_cast %213 : vector<2x1x1x128xbf16> to vector<2x128xbf16>
    %215 = arith.maximumf %212, %214 : vector<2x128xbf16>
    %c0_274 = arith.constant 0 : index
    %c5_275 = arith.constant 5 : index
    %c0_276 = arith.constant 0 : index
    %c0_277 = arith.constant 0 : index
    %216 = vector.load %arg1[%c0_274, %c5_275, %c0_276, %c0_277] : memref<2x14x14x128xbf16, #tpu.memory_space<vmem>>, vector<2x1x1x128xbf16>
    %217 = vector.shape_cast %216 : vector<2x1x1x128xbf16> to vector<2x128xbf16>
    %c0_278 = arith.constant 0 : index
    %c5_279 = arith.constant 5 : index
    %c1_280 = arith.constant 1 : index
    %c0_281 = arith.constant 0 : index
    %218 = vector.load %arg1[%c0_278, %c5_279, %c1_280, %c0_281] : memref<2x14x14x128xbf16, #tpu.memory_space<vmem>>, vector<2x1x1x128xbf16>
    %219 = vector.shape_cast %218 : vector<2x1x1x128xbf16> to vector<2x128xbf16>
    %220 = arith.maximumf %217, %219 : vector<2x128xbf16>
    %221 = arith.maximumf %215, %220 : vector<2x128xbf16>
    %c14 = arith.constant 14 : index
    %c0_282 = arith.constant 0 : index
    %c0_283 = arith.constant 0 : index
    %222 = vector.load %arg2[%c14, %c0_282, %c0_283] : memref<49x128x128xbf16, #tpu.memory_space<vmem>>, vector<1x128x128xbf16>
    %223 = vector.shape_cast %222 : vector<1x128x128xbf16> to vector<128x128xbf16>
    %cst_284 = arith.constant dense<0.000000e+00> : vector<2x128xf32>
    %224 = tpu.matmul %221, %223, %cst_284 {dimension_numbers = #tpu.dot_dimension_numbers<[1], [0], [0], [1], [0, 0, 1, 1], [], []>} : vector<2x128xbf16>, vector<128x128xbf16>, vector<2x128xf32> -> vector<2x128xf32>
    %225 = arith.addf %210, %224 : vector<2x128xf32>
    %c0_285 = arith.constant 0 : index
    %c4_286 = arith.constant 4 : index
    %c2_287 = arith.constant 2 : index
    %c0_288 = arith.constant 0 : index
    %226 = vector.load %arg1[%c0_285, %c4_286, %c2_287, %c0_288] : memref<2x14x14x128xbf16, #tpu.memory_space<vmem>>, vector<2x1x1x128xbf16>
    %227 = vector.shape_cast %226 : vector<2x1x1x128xbf16> to vector<2x128xbf16>
    %c0_289 = arith.constant 0 : index
    %c4_290 = arith.constant 4 : index
    %c3_291 = arith.constant 3 : index
    %c0_292 = arith.constant 0 : index
    %228 = vector.load %arg1[%c0_289, %c4_290, %c3_291, %c0_292] : memref<2x14x14x128xbf16, #tpu.memory_space<vmem>>, vector<2x1x1x128xbf16>
    %229 = vector.shape_cast %228 : vector<2x1x1x128xbf16> to vector<2x128xbf16>
    %230 = arith.maximumf %227, %229 : vector<2x128xbf16>
    %c0_293 = arith.constant 0 : index
    %c5_294 = arith.constant 5 : index
    %c2_295 = arith.constant 2 : index
    %c0_296 = arith.constant 0 : index
    %231 = vector.load %arg1[%c0_293, %c5_294, %c2_295, %c0_296] : memref<2x14x14x128xbf16, #tpu.memory_space<vmem>>, vector<2x1x1x128xbf16>
    %232 = vector.shape_cast %231 : vector<2x1x1x128xbf16> to vector<2x128xbf16>
    %c0_297 = arith.constant 0 : index
    %c5_298 = arith.constant 5 : index
    %c3_299 = arith.constant 3 : index
    %c0_300 = arith.constant 0 : index
    %233 = vector.load %arg1[%c0_297, %c5_298, %c3_299, %c0_300] : memref<2x14x14x128xbf16, #tpu.memory_space<vmem>>, vector<2x1x1x128xbf16>
    %234 = vector.shape_cast %233 : vector<2x1x1x128xbf16> to vector<2x128xbf16>
    %235 = arith.maximumf %232, %234 : vector<2x128xbf16>
    %236 = arith.maximumf %230, %235 : vector<2x128xbf16>
    %c15 = arith.constant 15 : index
    %c0_301 = arith.constant 0 : index
    %c0_302 = arith.constant 0 : index
    %237 = vector.load %arg2[%c15, %c0_301, %c0_302] : memref<49x128x128xbf16, #tpu.memory_space<vmem>>, vector<1x128x128xbf16>
    %238 = vector.shape_cast %237 : vector<1x128x128xbf16> to vector<128x128xbf16>
    %cst_303 = arith.constant dense<0.000000e+00> : vector<2x128xf32>
    %239 = tpu.matmul %236, %238, %cst_303 {dimension_numbers = #tpu.dot_dimension_numbers<[1], [0], [0], [1], [0, 0, 1, 1], [], []>} : vector<2x128xbf16>, vector<128x128xbf16>, vector<2x128xf32> -> vector<2x128xf32>
    %240 = arith.addf %225, %239 : vector<2x128xf32>
    %c0_304 = arith.constant 0 : index
    %c4_305 = arith.constant 4 : index
    %c4_306 = arith.constant 4 : index
    %c0_307 = arith.constant 0 : index
    %241 = vector.load %arg1[%c0_304, %c4_305, %c4_306, %c0_307] : memref<2x14x14x128xbf16, #tpu.memory_space<vmem>>, vector<2x1x1x128xbf16>
    %242 = vector.shape_cast %241 : vector<2x1x1x128xbf16> to vector<2x128xbf16>
    %c0_308 = arith.constant 0 : index
    %c4_309 = arith.constant 4 : index
    %c5_310 = arith.constant 5 : index
    %c0_311 = arith.constant 0 : index
    %243 = vector.load %arg1[%c0_308, %c4_309, %c5_310, %c0_311] : memref<2x14x14x128xbf16, #tpu.memory_space<vmem>>, vector<2x1x1x128xbf16>
    %244 = vector.shape_cast %243 : vector<2x1x1x128xbf16> to vector<2x128xbf16>
    %245 = arith.maximumf %242, %244 : vector<2x128xbf16>
    %c0_312 = arith.constant 0 : index
    %c5_313 = arith.constant 5 : index
    %c4_314 = arith.constant 4 : index
    %c0_315 = arith.constant 0 : index
    %246 = vector.load %arg1[%c0_312, %c5_313, %c4_314, %c0_315] : memref<2x14x14x128xbf16, #tpu.memory_space<vmem>>, vector<2x1x1x128xbf16>
    %247 = vector.shape_cast %246 : vector<2x1x1x128xbf16> to vector<2x128xbf16>
    %c0_316 = arith.constant 0 : index
    %c5_317 = arith.constant 5 : index
    %c5_318 = arith.constant 5 : index
    %c0_319 = arith.constant 0 : index
    %248 = vector.load %arg1[%c0_316, %c5_317, %c5_318, %c0_319] : memref<2x14x14x128xbf16, #tpu.memory_space<vmem>>, vector<2x1x1x128xbf16>
    %249 = vector.shape_cast %248 : vector<2x1x1x128xbf16> to vector<2x128xbf16>
    %250 = arith.maximumf %247, %249 : vector<2x128xbf16>
    %251 = arith.maximumf %245, %250 : vector<2x128xbf16>
    %c16 = arith.constant 16 : index
    %c0_320 = arith.constant 0 : index
    %c0_321 = arith.constant 0 : index
    %252 = vector.load %arg2[%c16, %c0_320, %c0_321] : memref<49x128x128xbf16, #tpu.memory_space<vmem>>, vector<1x128x128xbf16>
    %253 = vector.shape_cast %252 : vector<1x128x128xbf16> to vector<128x128xbf16>
    %cst_322 = arith.constant dense<0.000000e+00> : vector<2x128xf32>
    %254 = tpu.matmul %251, %253, %cst_322 {dimension_numbers = #tpu.dot_dimension_numbers<[1], [0], [0], [1], [0, 0, 1, 1], [], []>} : vector<2x128xbf16>, vector<128x128xbf16>, vector<2x128xf32> -> vector<2x128xf32>
    %255 = arith.addf %240, %254 : vector<2x128xf32>
    %c0_323 = arith.constant 0 : index
    %c4_324 = arith.constant 4 : index
    %c6_325 = arith.constant 6 : index
    %c0_326 = arith.constant 0 : index
    %256 = vector.load %arg1[%c0_323, %c4_324, %c6_325, %c0_326] : memref<2x14x14x128xbf16, #tpu.memory_space<vmem>>, vector<2x1x1x128xbf16>
    %257 = vector.shape_cast %256 : vector<2x1x1x128xbf16> to vector<2x128xbf16>
    %c0_327 = arith.constant 0 : index
    %c4_328 = arith.constant 4 : index
    %c7_329 = arith.constant 7 : index
    %c0_330 = arith.constant 0 : index
    %258 = vector.load %arg1[%c0_327, %c4_328, %c7_329, %c0_330] : memref<2x14x14x128xbf16, #tpu.memory_space<vmem>>, vector<2x1x1x128xbf16>
    %259 = vector.shape_cast %258 : vector<2x1x1x128xbf16> to vector<2x128xbf16>
    %260 = arith.maximumf %257, %259 : vector<2x128xbf16>
    %c0_331 = arith.constant 0 : index
    %c5_332 = arith.constant 5 : index
    %c6_333 = arith.constant 6 : index
    %c0_334 = arith.constant 0 : index
    %261 = vector.load %arg1[%c0_331, %c5_332, %c6_333, %c0_334] : memref<2x14x14x128xbf16, #tpu.memory_space<vmem>>, vector<2x1x1x128xbf16>
    %262 = vector.shape_cast %261 : vector<2x1x1x128xbf16> to vector<2x128xbf16>
    %c0_335 = arith.constant 0 : index
    %c5_336 = arith.constant 5 : index
    %c7_337 = arith.constant 7 : index
    %c0_338 = arith.constant 0 : index
    %263 = vector.load %arg1[%c0_335, %c5_336, %c7_337, %c0_338] : memref<2x14x14x128xbf16, #tpu.memory_space<vmem>>, vector<2x1x1x128xbf16>
    %264 = vector.shape_cast %263 : vector<2x1x1x128xbf16> to vector<2x128xbf16>
    %265 = arith.maximumf %262, %264 : vector<2x128xbf16>
    %266 = arith.maximumf %260, %265 : vector<2x128xbf16>
    %c17 = arith.constant 17 : index
    %c0_339 = arith.constant 0 : index
    %c0_340 = arith.constant 0 : index
    %267 = vector.load %arg2[%c17, %c0_339, %c0_340] : memref<49x128x128xbf16, #tpu.memory_space<vmem>>, vector<1x128x128xbf16>
    %268 = vector.shape_cast %267 : vector<1x128x128xbf16> to vector<128x128xbf16>
    %cst_341 = arith.constant dense<0.000000e+00> : vector<2x128xf32>
    %269 = tpu.matmul %266, %268, %cst_341 {dimension_numbers = #tpu.dot_dimension_numbers<[1], [0], [0], [1], [0, 0, 1, 1], [], []>} : vector<2x128xbf16>, vector<128x128xbf16>, vector<2x128xf32> -> vector<2x128xf32>
    %270 = arith.addf %255, %269 : vector<2x128xf32>
    %c0_342 = arith.constant 0 : index
    %c4_343 = arith.constant 4 : index
    %c8_344 = arith.constant 8 : index
    %c0_345 = arith.constant 0 : index
    %271 = vector.load %arg1[%c0_342, %c4_343, %c8_344, %c0_345] : memref<2x14x14x128xbf16, #tpu.memory_space<vmem>>, vector<2x1x1x128xbf16>
    %272 = vector.shape_cast %271 : vector<2x1x1x128xbf16> to vector<2x128xbf16>
    %c0_346 = arith.constant 0 : index
    %c4_347 = arith.constant 4 : index
    %c9_348 = arith.constant 9 : index
    %c0_349 = arith.constant 0 : index
    %273 = vector.load %arg1[%c0_346, %c4_347, %c9_348, %c0_349] : memref<2x14x14x128xbf16, #tpu.memory_space<vmem>>, vector<2x1x1x128xbf16>
    %274 = vector.shape_cast %273 : vector<2x1x1x128xbf16> to vector<2x128xbf16>
    %275 = arith.maximumf %272, %274 : vector<2x128xbf16>
    %c0_350 = arith.constant 0 : index
    %c5_351 = arith.constant 5 : index
    %c8_352 = arith.constant 8 : index
    %c0_353 = arith.constant 0 : index
    %276 = vector.load %arg1[%c0_350, %c5_351, %c8_352, %c0_353] : memref<2x14x14x128xbf16, #tpu.memory_space<vmem>>, vector<2x1x1x128xbf16>
    %277 = vector.shape_cast %276 : vector<2x1x1x128xbf16> to vector<2x128xbf16>
    %c0_354 = arith.constant 0 : index
    %c5_355 = arith.constant 5 : index
    %c9_356 = arith.constant 9 : index
    %c0_357 = arith.constant 0 : index
    %278 = vector.load %arg1[%c0_354, %c5_355, %c9_356, %c0_357] : memref<2x14x14x128xbf16, #tpu.memory_space<vmem>>, vector<2x1x1x128xbf16>
    %279 = vector.shape_cast %278 : vector<2x1x1x128xbf16> to vector<2x128xbf16>
    %280 = arith.maximumf %277, %279 : vector<2x128xbf16>
    %281 = arith.maximumf %275, %280 : vector<2x128xbf16>
    %c18 = arith.constant 18 : index
    %c0_358 = arith.constant 0 : index
    %c0_359 = arith.constant 0 : index
    %282 = vector.load %arg2[%c18, %c0_358, %c0_359] : memref<49x128x128xbf16, #tpu.memory_space<vmem>>, vector<1x128x128xbf16>
    %283 = vector.shape_cast %282 : vector<1x128x128xbf16> to vector<128x128xbf16>
    %cst_360 = arith.constant dense<0.000000e+00> : vector<2x128xf32>
    %284 = tpu.matmul %281, %283, %cst_360 {dimension_numbers = #tpu.dot_dimension_numbers<[1], [0], [0], [1], [0, 0, 1, 1], [], []>} : vector<2x128xbf16>, vector<128x128xbf16>, vector<2x128xf32> -> vector<2x128xf32>
    %285 = arith.addf %270, %284 : vector<2x128xf32>
    %c0_361 = arith.constant 0 : index
    %c4_362 = arith.constant 4 : index
    %c10_363 = arith.constant 10 : index
    %c0_364 = arith.constant 0 : index
    %286 = vector.load %arg1[%c0_361, %c4_362, %c10_363, %c0_364] : memref<2x14x14x128xbf16, #tpu.memory_space<vmem>>, vector<2x1x1x128xbf16>
    %287 = vector.shape_cast %286 : vector<2x1x1x128xbf16> to vector<2x128xbf16>
    %c0_365 = arith.constant 0 : index
    %c4_366 = arith.constant 4 : index
    %c11_367 = arith.constant 11 : index
    %c0_368 = arith.constant 0 : index
    %288 = vector.load %arg1[%c0_365, %c4_366, %c11_367, %c0_368] : memref<2x14x14x128xbf16, #tpu.memory_space<vmem>>, vector<2x1x1x128xbf16>
    %289 = vector.shape_cast %288 : vector<2x1x1x128xbf16> to vector<2x128xbf16>
    %290 = arith.maximumf %287, %289 : vector<2x128xbf16>
    %c0_369 = arith.constant 0 : index
    %c5_370 = arith.constant 5 : index
    %c10_371 = arith.constant 10 : index
    %c0_372 = arith.constant 0 : index
    %291 = vector.load %arg1[%c0_369, %c5_370, %c10_371, %c0_372] : memref<2x14x14x128xbf16, #tpu.memory_space<vmem>>, vector<2x1x1x128xbf16>
    %292 = vector.shape_cast %291 : vector<2x1x1x128xbf16> to vector<2x128xbf16>
    %c0_373 = arith.constant 0 : index
    %c5_374 = arith.constant 5 : index
    %c11_375 = arith.constant 11 : index
    %c0_376 = arith.constant 0 : index
    %293 = vector.load %arg1[%c0_373, %c5_374, %c11_375, %c0_376] : memref<2x14x14x128xbf16, #tpu.memory_space<vmem>>, vector<2x1x1x128xbf16>
    %294 = vector.shape_cast %293 : vector<2x1x1x128xbf16> to vector<2x128xbf16>
    %295 = arith.maximumf %292, %294 : vector<2x128xbf16>
    %296 = arith.maximumf %290, %295 : vector<2x128xbf16>
    %c19 = arith.constant 19 : index
    %c0_377 = arith.constant 0 : index
    %c0_378 = arith.constant 0 : index
    %297 = vector.load %arg2[%c19, %c0_377, %c0_378] : memref<49x128x128xbf16, #tpu.memory_space<vmem>>, vector<1x128x128xbf16>
    %298 = vector.shape_cast %297 : vector<1x128x128xbf16> to vector<128x128xbf16>
    %cst_379 = arith.constant dense<0.000000e+00> : vector<2x128xf32>
    %299 = tpu.matmul %296, %298, %cst_379 {dimension_numbers = #tpu.dot_dimension_numbers<[1], [0], [0], [1], [0, 0, 1, 1], [], []>} : vector<2x128xbf16>, vector<128x128xbf16>, vector<2x128xf32> -> vector<2x128xf32>
    %300 = arith.addf %285, %299 : vector<2x128xf32>
    %c0_380 = arith.constant 0 : index
    %c4_381 = arith.constant 4 : index
    %c12_382 = arith.constant 12 : index
    %c0_383 = arith.constant 0 : index
    %301 = vector.load %arg1[%c0_380, %c4_381, %c12_382, %c0_383] : memref<2x14x14x128xbf16, #tpu.memory_space<vmem>>, vector<2x1x1x128xbf16>
    %302 = vector.shape_cast %301 : vector<2x1x1x128xbf16> to vector<2x128xbf16>
    %c0_384 = arith.constant 0 : index
    %c4_385 = arith.constant 4 : index
    %c13_386 = arith.constant 13 : index
    %c0_387 = arith.constant 0 : index
    %303 = vector.load %arg1[%c0_384, %c4_385, %c13_386, %c0_387] : memref<2x14x14x128xbf16, #tpu.memory_space<vmem>>, vector<2x1x1x128xbf16>
    %304 = vector.shape_cast %303 : vector<2x1x1x128xbf16> to vector<2x128xbf16>
    %305 = arith.maximumf %302, %304 : vector<2x128xbf16>
    %c0_388 = arith.constant 0 : index
    %c5_389 = arith.constant 5 : index
    %c12_390 = arith.constant 12 : index
    %c0_391 = arith.constant 0 : index
    %306 = vector.load %arg1[%c0_388, %c5_389, %c12_390, %c0_391] : memref<2x14x14x128xbf16, #tpu.memory_space<vmem>>, vector<2x1x1x128xbf16>
    %307 = vector.shape_cast %306 : vector<2x1x1x128xbf16> to vector<2x128xbf16>
    %c0_392 = arith.constant 0 : index
    %c5_393 = arith.constant 5 : index
    %c13_394 = arith.constant 13 : index
    %c0_395 = arith.constant 0 : index
    %308 = vector.load %arg1[%c0_392, %c5_393, %c13_394, %c0_395] : memref<2x14x14x128xbf16, #tpu.memory_space<vmem>>, vector<2x1x1x128xbf16>
    %309 = vector.shape_cast %308 : vector<2x1x1x128xbf16> to vector<2x128xbf16>
    %310 = arith.maximumf %307, %309 : vector<2x128xbf16>
    %311 = arith.maximumf %305, %310 : vector<2x128xbf16>
    %c20 = arith.constant 20 : index
    %c0_396 = arith.constant 0 : index
    %c0_397 = arith.constant 0 : index
    %312 = vector.load %arg2[%c20, %c0_396, %c0_397] : memref<49x128x128xbf16, #tpu.memory_space<vmem>>, vector<1x128x128xbf16>
    %313 = vector.shape_cast %312 : vector<1x128x128xbf16> to vector<128x128xbf16>
    %cst_398 = arith.constant dense<0.000000e+00> : vector<2x128xf32>
    %314 = tpu.matmul %311, %313, %cst_398 {dimension_numbers = #tpu.dot_dimension_numbers<[1], [0], [0], [1], [0, 0, 1, 1], [], []>} : vector<2x128xbf16>, vector<128x128xbf16>, vector<2x128xf32> -> vector<2x128xf32>
    %315 = arith.addf %300, %314 : vector<2x128xf32>
    %c0_399 = arith.constant 0 : index
    %c6_400 = arith.constant 6 : index
    %c0_401 = arith.constant 0 : index
    %c0_402 = arith.constant 0 : index
    %316 = vector.load %arg1[%c0_399, %c6_400, %c0_401, %c0_402] : memref<2x14x14x128xbf16, #tpu.memory_space<vmem>>, vector<2x1x1x128xbf16>
    %317 = vector.shape_cast %316 : vector<2x1x1x128xbf16> to vector<2x128xbf16>
    %c0_403 = arith.constant 0 : index
    %c6_404 = arith.constant 6 : index
    %c1_405 = arith.constant 1 : index
    %c0_406 = arith.constant 0 : index
    %318 = vector.load %arg1[%c0_403, %c6_404, %c1_405, %c0_406] : memref<2x14x14x128xbf16, #tpu.memory_space<vmem>>, vector<2x1x1x128xbf16>
    %319 = vector.shape_cast %318 : vector<2x1x1x128xbf16> to vector<2x128xbf16>
    %320 = arith.maximumf %317, %319 : vector<2x128xbf16>
    %c0_407 = arith.constant 0 : index
    %c7_408 = arith.constant 7 : index
    %c0_409 = arith.constant 0 : index
    %c0_410 = arith.constant 0 : index
    %321 = vector.load %arg1[%c0_407, %c7_408, %c0_409, %c0_410] : memref<2x14x14x128xbf16, #tpu.memory_space<vmem>>, vector<2x1x1x128xbf16>
    %322 = vector.shape_cast %321 : vector<2x1x1x128xbf16> to vector<2x128xbf16>
    %c0_411 = arith.constant 0 : index
    %c7_412 = arith.constant 7 : index
    %c1_413 = arith.constant 1 : index
    %c0_414 = arith.constant 0 : index
    %323 = vector.load %arg1[%c0_411, %c7_412, %c1_413, %c0_414] : memref<2x14x14x128xbf16, #tpu.memory_space<vmem>>, vector<2x1x1x128xbf16>
    %324 = vector.shape_cast %323 : vector<2x1x1x128xbf16> to vector<2x128xbf16>
    %325 = arith.maximumf %322, %324 : vector<2x128xbf16>
    %326 = arith.maximumf %320, %325 : vector<2x128xbf16>
    %c21 = arith.constant 21 : index
    %c0_415 = arith.constant 0 : index
    %c0_416 = arith.constant 0 : index
    %327 = vector.load %arg2[%c21, %c0_415, %c0_416] : memref<49x128x128xbf16, #tpu.memory_space<vmem>>, vector<1x128x128xbf16>
    %328 = vector.shape_cast %327 : vector<1x128x128xbf16> to vector<128x128xbf16>
    %cst_417 = arith.constant dense<0.000000e+00> : vector<2x128xf32>
    %329 = tpu.matmul %326, %328, %cst_417 {dimension_numbers = #tpu.dot_dimension_numbers<[1], [0], [0], [1], [0, 0, 1, 1], [], []>} : vector<2x128xbf16>, vector<128x128xbf16>, vector<2x128xf32> -> vector<2x128xf32>
    %330 = arith.addf %315, %329 : vector<2x128xf32>
    %c0_418 = arith.constant 0 : index
    %c6_419 = arith.constant 6 : index
    %c2_420 = arith.constant 2 : index
    %c0_421 = arith.constant 0 : index
    %331 = vector.load %arg1[%c0_418, %c6_419, %c2_420, %c0_421] : memref<2x14x14x128xbf16, #tpu.memory_space<vmem>>, vector<2x1x1x128xbf16>
    %332 = vector.shape_cast %331 : vector<2x1x1x128xbf16> to vector<2x128xbf16>
    %c0_422 = arith.constant 0 : index
    %c6_423 = arith.constant 6 : index
    %c3_424 = arith.constant 3 : index
    %c0_425 = arith.constant 0 : index
    %333 = vector.load %arg1[%c0_422, %c6_423, %c3_424, %c0_425] : memref<2x14x14x128xbf16, #tpu.memory_space<vmem>>, vector<2x1x1x128xbf16>
    %334 = vector.shape_cast %333 : vector<2x1x1x128xbf16> to vector<2x128xbf16>
    %335 = arith.maximumf %332, %334 : vector<2x128xbf16>
    %c0_426 = arith.constant 0 : index
    %c7_427 = arith.constant 7 : index
    %c2_428 = arith.constant 2 : index
    %c0_429 = arith.constant 0 : index
    %336 = vector.load %arg1[%c0_426, %c7_427, %c2_428, %c0_429] : memref<2x14x14x128xbf16, #tpu.memory_space<vmem>>, vector<2x1x1x128xbf16>
    %337 = vector.shape_cast %336 : vector<2x1x1x128xbf16> to vector<2x128xbf16>
    %c0_430 = arith.constant 0 : index
    %c7_431 = arith.constant 7 : index
    %c3_432 = arith.constant 3 : index
    %c0_433 = arith.constant 0 : index
    %338 = vector.load %arg1[%c0_430, %c7_431, %c3_432, %c0_433] : memref<2x14x14x128xbf16, #tpu.memory_space<vmem>>, vector<2x1x1x128xbf16>
    %339 = vector.shape_cast %338 : vector<2x1x1x128xbf16> to vector<2x128xbf16>
    %340 = arith.maximumf %337, %339 : vector<2x128xbf16>
    %341 = arith.maximumf %335, %340 : vector<2x128xbf16>
    %c22 = arith.constant 22 : index
    %c0_434 = arith.constant 0 : index
    %c0_435 = arith.constant 0 : index
    %342 = vector.load %arg2[%c22, %c0_434, %c0_435] : memref<49x128x128xbf16, #tpu.memory_space<vmem>>, vector<1x128x128xbf16>
    %343 = vector.shape_cast %342 : vector<1x128x128xbf16> to vector<128x128xbf16>
    %cst_436 = arith.constant dense<0.000000e+00> : vector<2x128xf32>
    %344 = tpu.matmul %341, %343, %cst_436 {dimension_numbers = #tpu.dot_dimension_numbers<[1], [0], [0], [1], [0, 0, 1, 1], [], []>} : vector<2x128xbf16>, vector<128x128xbf16>, vector<2x128xf32> -> vector<2x128xf32>
    %345 = arith.addf %330, %344 : vector<2x128xf32>
    %c0_437 = arith.constant 0 : index
    %c6_438 = arith.constant 6 : index
    %c4_439 = arith.constant 4 : index
    %c0_440 = arith.constant 0 : index
    %346 = vector.load %arg1[%c0_437, %c6_438, %c4_439, %c0_440] : memref<2x14x14x128xbf16, #tpu.memory_space<vmem>>, vector<2x1x1x128xbf16>
    %347 = vector.shape_cast %346 : vector<2x1x1x128xbf16> to vector<2x128xbf16>
    %c0_441 = arith.constant 0 : index
    %c6_442 = arith.constant 6 : index
    %c5_443 = arith.constant 5 : index
    %c0_444 = arith.constant 0 : index
    %348 = vector.load %arg1[%c0_441, %c6_442, %c5_443, %c0_444] : memref<2x14x14x128xbf16, #tpu.memory_space<vmem>>, vector<2x1x1x128xbf16>
    %349 = vector.shape_cast %348 : vector<2x1x1x128xbf16> to vector<2x128xbf16>
    %350 = arith.maximumf %347, %349 : vector<2x128xbf16>
    %c0_445 = arith.constant 0 : index
    %c7_446 = arith.constant 7 : index
    %c4_447 = arith.constant 4 : index
    %c0_448 = arith.constant 0 : index
    %351 = vector.load %arg1[%c0_445, %c7_446, %c4_447, %c0_448] : memref<2x14x14x128xbf16, #tpu.memory_space<vmem>>, vector<2x1x1x128xbf16>
    %352 = vector.shape_cast %351 : vector<2x1x1x128xbf16> to vector<2x128xbf16>
    %c0_449 = arith.constant 0 : index
    %c7_450 = arith.constant 7 : index
    %c5_451 = arith.constant 5 : index
    %c0_452 = arith.constant 0 : index
    %353 = vector.load %arg1[%c0_449, %c7_450, %c5_451, %c0_452] : memref<2x14x14x128xbf16, #tpu.memory_space<vmem>>, vector<2x1x1x128xbf16>
    %354 = vector.shape_cast %353 : vector<2x1x1x128xbf16> to vector<2x128xbf16>
    %355 = arith.maximumf %352, %354 : vector<2x128xbf16>
    %356 = arith.maximumf %350, %355 : vector<2x128xbf16>
    %c23 = arith.constant 23 : index
    %c0_453 = arith.constant 0 : index
    %c0_454 = arith.constant 0 : index
    %357 = vector.load %arg2[%c23, %c0_453, %c0_454] : memref<49x128x128xbf16, #tpu.memory_space<vmem>>, vector<1x128x128xbf16>
    %358 = vector.shape_cast %357 : vector<1x128x128xbf16> to vector<128x128xbf16>
    %cst_455 = arith.constant dense<0.000000e+00> : vector<2x128xf32>
    %359 = tpu.matmul %356, %358, %cst_455 {dimension_numbers = #tpu.dot_dimension_numbers<[1], [0], [0], [1], [0, 0, 1, 1], [], []>} : vector<2x128xbf16>, vector<128x128xbf16>, vector<2x128xf32> -> vector<2x128xf32>
    %360 = arith.addf %345, %359 : vector<2x128xf32>
    %c0_456 = arith.constant 0 : index
    %c6_457 = arith.constant 6 : index
    %c6_458 = arith.constant 6 : index
    %c0_459 = arith.constant 0 : index
    %361 = vector.load %arg1[%c0_456, %c6_457, %c6_458, %c0_459] : memref<2x14x14x128xbf16, #tpu.memory_space<vmem>>, vector<2x1x1x128xbf16>
    %362 = vector.shape_cast %361 : vector<2x1x1x128xbf16> to vector<2x128xbf16>
    %c0_460 = arith.constant 0 : index
    %c6_461 = arith.constant 6 : index
    %c7_462 = arith.constant 7 : index
    %c0_463 = arith.constant 0 : index
    %363 = vector.load %arg1[%c0_460, %c6_461, %c7_462, %c0_463] : memref<2x14x14x128xbf16, #tpu.memory_space<vmem>>, vector<2x1x1x128xbf16>
    %364 = vector.shape_cast %363 : vector<2x1x1x128xbf16> to vector<2x128xbf16>
    %365 = arith.maximumf %362, %364 : vector<2x128xbf16>
    %c0_464 = arith.constant 0 : index
    %c7_465 = arith.constant 7 : index
    %c6_466 = arith.constant 6 : index
    %c0_467 = arith.constant 0 : index
    %366 = vector.load %arg1[%c0_464, %c7_465, %c6_466, %c0_467] : memref<2x14x14x128xbf16, #tpu.memory_space<vmem>>, vector<2x1x1x128xbf16>
    %367 = vector.shape_cast %366 : vector<2x1x1x128xbf16> to vector<2x128xbf16>
    %c0_468 = arith.constant 0 : index
    %c7_469 = arith.constant 7 : index
    %c7_470 = arith.constant 7 : index
    %c0_471 = arith.constant 0 : index
    %368 = vector.load %arg1[%c0_468, %c7_469, %c7_470, %c0_471] : memref<2x14x14x128xbf16, #tpu.memory_space<vmem>>, vector<2x1x1x128xbf16>
    %369 = vector.shape_cast %368 : vector<2x1x1x128xbf16> to vector<2x128xbf16>
    %370 = arith.maximumf %367, %369 : vector<2x128xbf16>
    %371 = arith.maximumf %365, %370 : vector<2x128xbf16>
    %c24 = arith.constant 24 : index
    %c0_472 = arith.constant 0 : index
    %c0_473 = arith.constant 0 : index
    %372 = vector.load %arg2[%c24, %c0_472, %c0_473] : memref<49x128x128xbf16, #tpu.memory_space<vmem>>, vector<1x128x128xbf16>
    %373 = vector.shape_cast %372 : vector<1x128x128xbf16> to vector<128x128xbf16>
    %cst_474 = arith.constant dense<0.000000e+00> : vector<2x128xf32>
    %374 = tpu.matmul %371, %373, %cst_474 {dimension_numbers = #tpu.dot_dimension_numbers<[1], [0], [0], [1], [0, 0, 1, 1], [], []>} : vector<2x128xbf16>, vector<128x128xbf16>, vector<2x128xf32> -> vector<2x128xf32>
    %375 = arith.addf %360, %374 : vector<2x128xf32>
    %c0_475 = arith.constant 0 : index
    %c6_476 = arith.constant 6 : index
    %c8_477 = arith.constant 8 : index
    %c0_478 = arith.constant 0 : index
    %376 = vector.load %arg1[%c0_475, %c6_476, %c8_477, %c0_478] : memref<2x14x14x128xbf16, #tpu.memory_space<vmem>>, vector<2x1x1x128xbf16>
    %377 = vector.shape_cast %376 : vector<2x1x1x128xbf16> to vector<2x128xbf16>
    %c0_479 = arith.constant 0 : index
    %c6_480 = arith.constant 6 : index
    %c9_481 = arith.constant 9 : index
    %c0_482 = arith.constant 0 : index
    %378 = vector.load %arg1[%c0_479, %c6_480, %c9_481, %c0_482] : memref<2x14x14x128xbf16, #tpu.memory_space<vmem>>, vector<2x1x1x128xbf16>
    %379 = vector.shape_cast %378 : vector<2x1x1x128xbf16> to vector<2x128xbf16>
    %380 = arith.maximumf %377, %379 : vector<2x128xbf16>
    %c0_483 = arith.constant 0 : index
    %c7_484 = arith.constant 7 : index
    %c8_485 = arith.constant 8 : index
    %c0_486 = arith.constant 0 : index
    %381 = vector.load %arg1[%c0_483, %c7_484, %c8_485, %c0_486] : memref<2x14x14x128xbf16, #tpu.memory_space<vmem>>, vector<2x1x1x128xbf16>
    %382 = vector.shape_cast %381 : vector<2x1x1x128xbf16> to vector<2x128xbf16>
    %c0_487 = arith.constant 0 : index
    %c7_488 = arith.constant 7 : index
    %c9_489 = arith.constant 9 : index
    %c0_490 = arith.constant 0 : index
    %383 = vector.load %arg1[%c0_487, %c7_488, %c9_489, %c0_490] : memref<2x14x14x128xbf16, #tpu.memory_space<vmem>>, vector<2x1x1x128xbf16>
    %384 = vector.shape_cast %383 : vector<2x1x1x128xbf16> to vector<2x128xbf16>
    %385 = arith.maximumf %382, %384 : vector<2x128xbf16>
    %386 = arith.maximumf %380, %385 : vector<2x128xbf16>
    %c25 = arith.constant 25 : index
    %c0_491 = arith.constant 0 : index
    %c0_492 = arith.constant 0 : index
    %387 = vector.load %arg2[%c25, %c0_491, %c0_492] : memref<49x128x128xbf16, #tpu.memory_space<vmem>>, vector<1x128x128xbf16>
    %388 = vector.shape_cast %387 : vector<1x128x128xbf16> to vector<128x128xbf16>
    %cst_493 = arith.constant dense<0.000000e+00> : vector<2x128xf32>
    %389 = tpu.matmul %386, %388, %cst_493 {dimension_numbers = #tpu.dot_dimension_numbers<[1], [0], [0], [1], [0, 0, 1, 1], [], []>} : vector<2x128xbf16>, vector<128x128xbf16>, vector<2x128xf32> -> vector<2x128xf32>
    %390 = arith.addf %375, %389 : vector<2x128xf32>
    %c0_494 = arith.constant 0 : index
    %c6_495 = arith.constant 6 : index
    %c10_496 = arith.constant 10 : index
    %c0_497 = arith.constant 0 : index
    %391 = vector.load %arg1[%c0_494, %c6_495, %c10_496, %c0_497] : memref<2x14x14x128xbf16, #tpu.memory_space<vmem>>, vector<2x1x1x128xbf16>
    %392 = vector.shape_cast %391 : vector<2x1x1x128xbf16> to vector<2x128xbf16>
    %c0_498 = arith.constant 0 : index
    %c6_499 = arith.constant 6 : index
    %c11_500 = arith.constant 11 : index
    %c0_501 = arith.constant 0 : index
    %393 = vector.load %arg1[%c0_498, %c6_499, %c11_500, %c0_501] : memref<2x14x14x128xbf16, #tpu.memory_space<vmem>>, vector<2x1x1x128xbf16>
    %394 = vector.shape_cast %393 : vector<2x1x1x128xbf16> to vector<2x128xbf16>
    %395 = arith.maximumf %392, %394 : vector<2x128xbf16>
    %c0_502 = arith.constant 0 : index
    %c7_503 = arith.constant 7 : index
    %c10_504 = arith.constant 10 : index
    %c0_505 = arith.constant 0 : index
    %396 = vector.load %arg1[%c0_502, %c7_503, %c10_504, %c0_505] : memref<2x14x14x128xbf16, #tpu.memory_space<vmem>>, vector<2x1x1x128xbf16>
    %397 = vector.shape_cast %396 : vector<2x1x1x128xbf16> to vector<2x128xbf16>
    %c0_506 = arith.constant 0 : index
    %c7_507 = arith.constant 7 : index
    %c11_508 = arith.constant 11 : index
    %c0_509 = arith.constant 0 : index
    %398 = vector.load %arg1[%c0_506, %c7_507, %c11_508, %c0_509] : memref<2x14x14x128xbf16, #tpu.memory_space<vmem>>, vector<2x1x1x128xbf16>
    %399 = vector.shape_cast %398 : vector<2x1x1x128xbf16> to vector<2x128xbf16>
    %400 = arith.maximumf %397, %399 : vector<2x128xbf16>
    %401 = arith.maximumf %395, %400 : vector<2x128xbf16>
    %c26 = arith.constant 26 : index
    %c0_510 = arith.constant 0 : index
    %c0_511 = arith.constant 0 : index
    %402 = vector.load %arg2[%c26, %c0_510, %c0_511] : memref<49x128x128xbf16, #tpu.memory_space<vmem>>, vector<1x128x128xbf16>
    %403 = vector.shape_cast %402 : vector<1x128x128xbf16> to vector<128x128xbf16>
    %cst_512 = arith.constant dense<0.000000e+00> : vector<2x128xf32>
    %404 = tpu.matmul %401, %403, %cst_512 {dimension_numbers = #tpu.dot_dimension_numbers<[1], [0], [0], [1], [0, 0, 1, 1], [], []>} : vector<2x128xbf16>, vector<128x128xbf16>, vector<2x128xf32> -> vector<2x128xf32>
    %405 = arith.addf %390, %404 : vector<2x128xf32>
    %c0_513 = arith.constant 0 : index
    %c6_514 = arith.constant 6 : index
    %c12_515 = arith.constant 12 : index
    %c0_516 = arith.constant 0 : index
    %406 = vector.load %arg1[%c0_513, %c6_514, %c12_515, %c0_516] : memref<2x14x14x128xbf16, #tpu.memory_space<vmem>>, vector<2x1x1x128xbf16>
    %407 = vector.shape_cast %406 : vector<2x1x1x128xbf16> to vector<2x128xbf16>
    %c0_517 = arith.constant 0 : index
    %c6_518 = arith.constant 6 : index
    %c13_519 = arith.constant 13 : index
    %c0_520 = arith.constant 0 : index
    %408 = vector.load %arg1[%c0_517, %c6_518, %c13_519, %c0_520] : memref<2x14x14x128xbf16, #tpu.memory_space<vmem>>, vector<2x1x1x128xbf16>
    %409 = vector.shape_cast %408 : vector<2x1x1x128xbf16> to vector<2x128xbf16>
    %410 = arith.maximumf %407, %409 : vector<2x128xbf16>
    %c0_521 = arith.constant 0 : index
    %c7_522 = arith.constant 7 : index
    %c12_523 = arith.constant 12 : index
    %c0_524 = arith.constant 0 : index
    %411 = vector.load %arg1[%c0_521, %c7_522, %c12_523, %c0_524] : memref<2x14x14x128xbf16, #tpu.memory_space<vmem>>, vector<2x1x1x128xbf16>
    %412 = vector.shape_cast %411 : vector<2x1x1x128xbf16> to vector<2x128xbf16>
    %c0_525 = arith.constant 0 : index
    %c7_526 = arith.constant 7 : index
    %c13_527 = arith.constant 13 : index
    %c0_528 = arith.constant 0 : index
    %413 = vector.load %arg1[%c0_525, %c7_526, %c13_527, %c0_528] : memref<2x14x14x128xbf16, #tpu.memory_space<vmem>>, vector<2x1x1x128xbf16>
    %414 = vector.shape_cast %413 : vector<2x1x1x128xbf16> to vector<2x128xbf16>
    %415 = arith.maximumf %412, %414 : vector<2x128xbf16>
    %416 = arith.maximumf %410, %415 : vector<2x128xbf16>
    %c27 = arith.constant 27 : index
    %c0_529 = arith.constant 0 : index
    %c0_530 = arith.constant 0 : index
    %417 = vector.load %arg2[%c27, %c0_529, %c0_530] : memref<49x128x128xbf16, #tpu.memory_space<vmem>>, vector<1x128x128xbf16>
    %418 = vector.shape_cast %417 : vector<1x128x128xbf16> to vector<128x128xbf16>
    %cst_531 = arith.constant dense<0.000000e+00> : vector<2x128xf32>
    %419 = tpu.matmul %416, %418, %cst_531 {dimension_numbers = #tpu.dot_dimension_numbers<[1], [0], [0], [1], [0, 0, 1, 1], [], []>} : vector<2x128xbf16>, vector<128x128xbf16>, vector<2x128xf32> -> vector<2x128xf32>
    %420 = arith.addf %405, %419 : vector<2x128xf32>
    %c0_532 = arith.constant 0 : index
    %c8_533 = arith.constant 8 : index
    %c0_534 = arith.constant 0 : index
    %c0_535 = arith.constant 0 : index
    %421 = vector.load %arg1[%c0_532, %c8_533, %c0_534, %c0_535] : memref<2x14x14x128xbf16, #tpu.memory_space<vmem>>, vector<2x1x1x128xbf16>
    %422 = vector.shape_cast %421 : vector<2x1x1x128xbf16> to vector<2x128xbf16>
    %c0_536 = arith.constant 0 : index
    %c8_537 = arith.constant 8 : index
    %c1_538 = arith.constant 1 : index
    %c0_539 = arith.constant 0 : index
    %423 = vector.load %arg1[%c0_536, %c8_537, %c1_538, %c0_539] : memref<2x14x14x128xbf16, #tpu.memory_space<vmem>>, vector<2x1x1x128xbf16>
    %424 = vector.shape_cast %423 : vector<2x1x1x128xbf16> to vector<2x128xbf16>
    %425 = arith.maximumf %422, %424 : vector<2x128xbf16>
    %c0_540 = arith.constant 0 : index
    %c9_541 = arith.constant 9 : index
    %c0_542 = arith.constant 0 : index
    %c0_543 = arith.constant 0 : index
    %426 = vector.load %arg1[%c0_540, %c9_541, %c0_542, %c0_543] : memref<2x14x14x128xbf16, #tpu.memory_space<vmem>>, vector<2x1x1x128xbf16>
    %427 = vector.shape_cast %426 : vector<2x1x1x128xbf16> to vector<2x128xbf16>
    %c0_544 = arith.constant 0 : index
    %c9_545 = arith.constant 9 : index
    %c1_546 = arith.constant 1 : index
    %c0_547 = arith.constant 0 : index
    %428 = vector.load %arg1[%c0_544, %c9_545, %c1_546, %c0_547] : memref<2x14x14x128xbf16, #tpu.memory_space<vmem>>, vector<2x1x1x128xbf16>
    %429 = vector.shape_cast %428 : vector<2x1x1x128xbf16> to vector<2x128xbf16>
    %430 = arith.maximumf %427, %429 : vector<2x128xbf16>
    %431 = arith.maximumf %425, %430 : vector<2x128xbf16>
    %c28 = arith.constant 28 : index
    %c0_548 = arith.constant 0 : index
    %c0_549 = arith.constant 0 : index
    %432 = vector.load %arg2[%c28, %c0_548, %c0_549] : memref<49x128x128xbf16, #tpu.memory_space<vmem>>, vector<1x128x128xbf16>
    %433 = vector.shape_cast %432 : vector<1x128x128xbf16> to vector<128x128xbf16>
    %cst_550 = arith.constant dense<0.000000e+00> : vector<2x128xf32>
    %434 = tpu.matmul %431, %433, %cst_550 {dimension_numbers = #tpu.dot_dimension_numbers<[1], [0], [0], [1], [0, 0, 1, 1], [], []>} : vector<2x128xbf16>, vector<128x128xbf16>, vector<2x128xf32> -> vector<2x128xf32>
    %435 = arith.addf %420, %434 : vector<2x128xf32>
    %c0_551 = arith.constant 0 : index
    %c8_552 = arith.constant 8 : index
    %c2_553 = arith.constant 2 : index
    %c0_554 = arith.constant 0 : index
    %436 = vector.load %arg1[%c0_551, %c8_552, %c2_553, %c0_554] : memref<2x14x14x128xbf16, #tpu.memory_space<vmem>>, vector<2x1x1x128xbf16>
    %437 = vector.shape_cast %436 : vector<2x1x1x128xbf16> to vector<2x128xbf16>
    %c0_555 = arith.constant 0 : index
    %c8_556 = arith.constant 8 : index
    %c3_557 = arith.constant 3 : index
    %c0_558 = arith.constant 0 : index
    %438 = vector.load %arg1[%c0_555, %c8_556, %c3_557, %c0_558] : memref<2x14x14x128xbf16, #tpu.memory_space<vmem>>, vector<2x1x1x128xbf16>
    %439 = vector.shape_cast %438 : vector<2x1x1x128xbf16> to vector<2x128xbf16>
    %440 = arith.maximumf %437, %439 : vector<2x128xbf16>
    %c0_559 = arith.constant 0 : index
    %c9_560 = arith.constant 9 : index
    %c2_561 = arith.constant 2 : index
    %c0_562 = arith.constant 0 : index
    %441 = vector.load %arg1[%c0_559, %c9_560, %c2_561, %c0_562] : memref<2x14x14x128xbf16, #tpu.memory_space<vmem>>, vector<2x1x1x128xbf16>
    %442 = vector.shape_cast %441 : vector<2x1x1x128xbf16> to vector<2x128xbf16>
    %c0_563 = arith.constant 0 : index
    %c9_564 = arith.constant 9 : index
    %c3_565 = arith.constant 3 : index
    %c0_566 = arith.constant 0 : index
    %443 = vector.load %arg1[%c0_563, %c9_564, %c3_565, %c0_566] : memref<2x14x14x128xbf16, #tpu.memory_space<vmem>>, vector<2x1x1x128xbf16>
    %444 = vector.shape_cast %443 : vector<2x1x1x128xbf16> to vector<2x128xbf16>
    %445 = arith.maximumf %442, %444 : vector<2x128xbf16>
    %446 = arith.maximumf %440, %445 : vector<2x128xbf16>
    %c29 = arith.constant 29 : index
    %c0_567 = arith.constant 0 : index
    %c0_568 = arith.constant 0 : index
    %447 = vector.load %arg2[%c29, %c0_567, %c0_568] : memref<49x128x128xbf16, #tpu.memory_space<vmem>>, vector<1x128x128xbf16>
    %448 = vector.shape_cast %447 : vector<1x128x128xbf16> to vector<128x128xbf16>
    %cst_569 = arith.constant dense<0.000000e+00> : vector<2x128xf32>
    %449 = tpu.matmul %446, %448, %cst_569 {dimension_numbers = #tpu.dot_dimension_numbers<[1], [0], [0], [1], [0, 0, 1, 1], [], []>} : vector<2x128xbf16>, vector<128x128xbf16>, vector<2x128xf32> -> vector<2x128xf32>
    %450 = arith.addf %435, %449 : vector<2x128xf32>
    %c0_570 = arith.constant 0 : index
    %c8_571 = arith.constant 8 : index
    %c4_572 = arith.constant 4 : index
    %c0_573 = arith.constant 0 : index
    %451 = vector.load %arg1[%c0_570, %c8_571, %c4_572, %c0_573] : memref<2x14x14x128xbf16, #tpu.memory_space<vmem>>, vector<2x1x1x128xbf16>
    %452 = vector.shape_cast %451 : vector<2x1x1x128xbf16> to vector<2x128xbf16>
    %c0_574 = arith.constant 0 : index
    %c8_575 = arith.constant 8 : index
    %c5_576 = arith.constant 5 : index
    %c0_577 = arith.constant 0 : index
    %453 = vector.load %arg1[%c0_574, %c8_575, %c5_576, %c0_577] : memref<2x14x14x128xbf16, #tpu.memory_space<vmem>>, vector<2x1x1x128xbf16>
    %454 = vector.shape_cast %453 : vector<2x1x1x128xbf16> to vector<2x128xbf16>
    %455 = arith.maximumf %452, %454 : vector<2x128xbf16>
    %c0_578 = arith.constant 0 : index
    %c9_579 = arith.constant 9 : index
    %c4_580 = arith.constant 4 : index
    %c0_581 = arith.constant 0 : index
    %456 = vector.load %arg1[%c0_578, %c9_579, %c4_580, %c0_581] : memref<2x14x14x128xbf16, #tpu.memory_space<vmem>>, vector<2x1x1x128xbf16>
    %457 = vector.shape_cast %456 : vector<2x1x1x128xbf16> to vector<2x128xbf16>
    %c0_582 = arith.constant 0 : index
    %c9_583 = arith.constant 9 : index
    %c5_584 = arith.constant 5 : index
    %c0_585 = arith.constant 0 : index
    %458 = vector.load %arg1[%c0_582, %c9_583, %c5_584, %c0_585] : memref<2x14x14x128xbf16, #tpu.memory_space<vmem>>, vector<2x1x1x128xbf16>
    %459 = vector.shape_cast %458 : vector<2x1x1x128xbf16> to vector<2x128xbf16>
    %460 = arith.maximumf %457, %459 : vector<2x128xbf16>
    %461 = arith.maximumf %455, %460 : vector<2x128xbf16>
    %c30 = arith.constant 30 : index
    %c0_586 = arith.constant 0 : index
    %c0_587 = arith.constant 0 : index
    %462 = vector.load %arg2[%c30, %c0_586, %c0_587] : memref<49x128x128xbf16, #tpu.memory_space<vmem>>, vector<1x128x128xbf16>
    %463 = vector.shape_cast %462 : vector<1x128x128xbf16> to vector<128x128xbf16>
    %cst_588 = arith.constant dense<0.000000e+00> : vector<2x128xf32>
    %464 = tpu.matmul %461, %463, %cst_588 {dimension_numbers = #tpu.dot_dimension_numbers<[1], [0], [0], [1], [0, 0, 1, 1], [], []>} : vector<2x128xbf16>, vector<128x128xbf16>, vector<2x128xf32> -> vector<2x128xf32>
    %465 = arith.addf %450, %464 : vector<2x128xf32>
    %c0_589 = arith.constant 0 : index
    %c8_590 = arith.constant 8 : index
    %c6_591 = arith.constant 6 : index
    %c0_592 = arith.constant 0 : index
    %466 = vector.load %arg1[%c0_589, %c8_590, %c6_591, %c0_592] : memref<2x14x14x128xbf16, #tpu.memory_space<vmem>>, vector<2x1x1x128xbf16>
    %467 = vector.shape_cast %466 : vector<2x1x1x128xbf16> to vector<2x128xbf16>
    %c0_593 = arith.constant 0 : index
    %c8_594 = arith.constant 8 : index
    %c7_595 = arith.constant 7 : index
    %c0_596 = arith.constant 0 : index
    %468 = vector.load %arg1[%c0_593, %c8_594, %c7_595, %c0_596] : memref<2x14x14x128xbf16, #tpu.memory_space<vmem>>, vector<2x1x1x128xbf16>
    %469 = vector.shape_cast %468 : vector<2x1x1x128xbf16> to vector<2x128xbf16>
    %470 = arith.maximumf %467, %469 : vector<2x128xbf16>
    %c0_597 = arith.constant 0 : index
    %c9_598 = arith.constant 9 : index
    %c6_599 = arith.constant 6 : index
    %c0_600 = arith.constant 0 : index
    %471 = vector.load %arg1[%c0_597, %c9_598, %c6_599, %c0_600] : memref<2x14x14x128xbf16, #tpu.memory_space<vmem>>, vector<2x1x1x128xbf16>
    %472 = vector.shape_cast %471 : vector<2x1x1x128xbf16> to vector<2x128xbf16>
    %c0_601 = arith.constant 0 : index
    %c9_602 = arith.constant 9 : index
    %c7_603 = arith.constant 7 : index
    %c0_604 = arith.constant 0 : index
    %473 = vector.load %arg1[%c0_601, %c9_602, %c7_603, %c0_604] : memref<2x14x14x128xbf16, #tpu.memory_space<vmem>>, vector<2x1x1x128xbf16>
    %474 = vector.shape_cast %473 : vector<2x1x1x128xbf16> to vector<2x128xbf16>
    %475 = arith.maximumf %472, %474 : vector<2x128xbf16>
    %476 = arith.maximumf %470, %475 : vector<2x128xbf16>
    %c31 = arith.constant 31 : index
    %c0_605 = arith.constant 0 : index
    %c0_606 = arith.constant 0 : index
    %477 = vector.load %arg2[%c31, %c0_605, %c0_606] : memref<49x128x128xbf16, #tpu.memory_space<vmem>>, vector<1x128x128xbf16>
    %478 = vector.shape_cast %477 : vector<1x128x128xbf16> to vector<128x128xbf16>
    %cst_607 = arith.constant dense<0.000000e+00> : vector<2x128xf32>
    %479 = tpu.matmul %476, %478, %cst_607 {dimension_numbers = #tpu.dot_dimension_numbers<[1], [0], [0], [1], [0, 0, 1, 1], [], []>} : vector<2x128xbf16>, vector<128x128xbf16>, vector<2x128xf32> -> vector<2x128xf32>
    %480 = arith.addf %465, %479 : vector<2x128xf32>
    %c0_608 = arith.constant 0 : index
    %c8_609 = arith.constant 8 : index
    %c8_610 = arith.constant 8 : index
    %c0_611 = arith.constant 0 : index
    %481 = vector.load %arg1[%c0_608, %c8_609, %c8_610, %c0_611] : memref<2x14x14x128xbf16, #tpu.memory_space<vmem>>, vector<2x1x1x128xbf16>
    %482 = vector.shape_cast %481 : vector<2x1x1x128xbf16> to vector<2x128xbf16>
    %c0_612 = arith.constant 0 : index
    %c8_613 = arith.constant 8 : index
    %c9_614 = arith.constant 9 : index
    %c0_615 = arith.constant 0 : index
    %483 = vector.load %arg1[%c0_612, %c8_613, %c9_614, %c0_615] : memref<2x14x14x128xbf16, #tpu.memory_space<vmem>>, vector<2x1x1x128xbf16>
    %484 = vector.shape_cast %483 : vector<2x1x1x128xbf16> to vector<2x128xbf16>
    %485 = arith.maximumf %482, %484 : vector<2x128xbf16>
    %c0_616 = arith.constant 0 : index
    %c9_617 = arith.constant 9 : index
    %c8_618 = arith.constant 8 : index
    %c0_619 = arith.constant 0 : index
    %486 = vector.load %arg1[%c0_616, %c9_617, %c8_618, %c0_619] : memref<2x14x14x128xbf16, #tpu.memory_space<vmem>>, vector<2x1x1x128xbf16>
    %487 = vector.shape_cast %486 : vector<2x1x1x128xbf16> to vector<2x128xbf16>
    %c0_620 = arith.constant 0 : index
    %c9_621 = arith.constant 9 : index
    %c9_622 = arith.constant 9 : index
    %c0_623 = arith.constant 0 : index
    %488 = vector.load %arg1[%c0_620, %c9_621, %c9_622, %c0_623] : memref<2x14x14x128xbf16, #tpu.memory_space<vmem>>, vector<2x1x1x128xbf16>
    %489 = vector.shape_cast %488 : vector<2x1x1x128xbf16> to vector<2x128xbf16>
    %490 = arith.maximumf %487, %489 : vector<2x128xbf16>
    %491 = arith.maximumf %485, %490 : vector<2x128xbf16>
    %c32 = arith.constant 32 : index
    %c0_624 = arith.constant 0 : index
    %c0_625 = arith.constant 0 : index
    %492 = vector.load %arg2[%c32, %c0_624, %c0_625] : memref<49x128x128xbf16, #tpu.memory_space<vmem>>, vector<1x128x128xbf16>
    %493 = vector.shape_cast %492 : vector<1x128x128xbf16> to vector<128x128xbf16>
    %cst_626 = arith.constant dense<0.000000e+00> : vector<2x128xf32>
    %494 = tpu.matmul %491, %493, %cst_626 {dimension_numbers = #tpu.dot_dimension_numbers<[1], [0], [0], [1], [0, 0, 1, 1], [], []>} : vector<2x128xbf16>, vector<128x128xbf16>, vector<2x128xf32> -> vector<2x128xf32>
    %495 = arith.addf %480, %494 : vector<2x128xf32>
    %c0_627 = arith.constant 0 : index
    %c8_628 = arith.constant 8 : index
    %c10_629 = arith.constant 10 : index
    %c0_630 = arith.constant 0 : index
    %496 = vector.load %arg1[%c0_627, %c8_628, %c10_629, %c0_630] : memref<2x14x14x128xbf16, #tpu.memory_space<vmem>>, vector<2x1x1x128xbf16>
    %497 = vector.shape_cast %496 : vector<2x1x1x128xbf16> to vector<2x128xbf16>
    %c0_631 = arith.constant 0 : index
    %c8_632 = arith.constant 8 : index
    %c11_633 = arith.constant 11 : index
    %c0_634 = arith.constant 0 : index
    %498 = vector.load %arg1[%c0_631, %c8_632, %c11_633, %c0_634] : memref<2x14x14x128xbf16, #tpu.memory_space<vmem>>, vector<2x1x1x128xbf16>
    %499 = vector.shape_cast %498 : vector<2x1x1x128xbf16> to vector<2x128xbf16>
    %500 = arith.maximumf %497, %499 : vector<2x128xbf16>
    %c0_635 = arith.constant 0 : index
    %c9_636 = arith.constant 9 : index
    %c10_637 = arith.constant 10 : index
    %c0_638 = arith.constant 0 : index
    %501 = vector.load %arg1[%c0_635, %c9_636, %c10_637, %c0_638] : memref<2x14x14x128xbf16, #tpu.memory_space<vmem>>, vector<2x1x1x128xbf16>
    %502 = vector.shape_cast %501 : vector<2x1x1x128xbf16> to vector<2x128xbf16>
    %c0_639 = arith.constant 0 : index
    %c9_640 = arith.constant 9 : index
    %c11_641 = arith.constant 11 : index
    %c0_642 = arith.constant 0 : index
    %503 = vector.load %arg1[%c0_639, %c9_640, %c11_641, %c0_642] : memref<2x14x14x128xbf16, #tpu.memory_space<vmem>>, vector<2x1x1x128xbf16>
    %504 = vector.shape_cast %503 : vector<2x1x1x128xbf16> to vector<2x128xbf16>
    %505 = arith.maximumf %502, %504 : vector<2x128xbf16>
    %506 = arith.maximumf %500, %505 : vector<2x128xbf16>
    %c33 = arith.constant 33 : index
    %c0_643 = arith.constant 0 : index
    %c0_644 = arith.constant 0 : index
    %507 = vector.load %arg2[%c33, %c0_643, %c0_644] : memref<49x128x128xbf16, #tpu.memory_space<vmem>>, vector<1x128x128xbf16>
    %508 = vector.shape_cast %507 : vector<1x128x128xbf16> to vector<128x128xbf16>
    %cst_645 = arith.constant dense<0.000000e+00> : vector<2x128xf32>
    %509 = tpu.matmul %506, %508, %cst_645 {dimension_numbers = #tpu.dot_dimension_numbers<[1], [0], [0], [1], [0, 0, 1, 1], [], []>} : vector<2x128xbf16>, vector<128x128xbf16>, vector<2x128xf32> -> vector<2x128xf32>
    %510 = arith.addf %495, %509 : vector<2x128xf32>
    %c0_646 = arith.constant 0 : index
    %c8_647 = arith.constant 8 : index
    %c12_648 = arith.constant 12 : index
    %c0_649 = arith.constant 0 : index
    %511 = vector.load %arg1[%c0_646, %c8_647, %c12_648, %c0_649] : memref<2x14x14x128xbf16, #tpu.memory_space<vmem>>, vector<2x1x1x128xbf16>
    %512 = vector.shape_cast %511 : vector<2x1x1x128xbf16> to vector<2x128xbf16>
    %c0_650 = arith.constant 0 : index
    %c8_651 = arith.constant 8 : index
    %c13_652 = arith.constant 13 : index
    %c0_653 = arith.constant 0 : index
    %513 = vector.load %arg1[%c0_650, %c8_651, %c13_652, %c0_653] : memref<2x14x14x128xbf16, #tpu.memory_space<vmem>>, vector<2x1x1x128xbf16>
    %514 = vector.shape_cast %513 : vector<2x1x1x128xbf16> to vector<2x128xbf16>
    %515 = arith.maximumf %512, %514 : vector<2x128xbf16>
    %c0_654 = arith.constant 0 : index
    %c9_655 = arith.constant 9 : index
    %c12_656 = arith.constant 12 : index
    %c0_657 = arith.constant 0 : index
    %516 = vector.load %arg1[%c0_654, %c9_655, %c12_656, %c0_657] : memref<2x14x14x128xbf16, #tpu.memory_space<vmem>>, vector<2x1x1x128xbf16>
    %517 = vector.shape_cast %516 : vector<2x1x1x128xbf16> to vector<2x128xbf16>
    %c0_658 = arith.constant 0 : index
    %c9_659 = arith.constant 9 : index
    %c13_660 = arith.constant 13 : index
    %c0_661 = arith.constant 0 : index
    %518 = vector.load %arg1[%c0_658, %c9_659, %c13_660, %c0_661] : memref<2x14x14x128xbf16, #tpu.memory_space<vmem>>, vector<2x1x1x128xbf16>
    %519 = vector.shape_cast %518 : vector<2x1x1x128xbf16> to vector<2x128xbf16>
    %520 = arith.maximumf %517, %519 : vector<2x128xbf16>
    %521 = arith.maximumf %515, %520 : vector<2x128xbf16>
    %c34 = arith.constant 34 : index
    %c0_662 = arith.constant 0 : index
    %c0_663 = arith.constant 0 : index
    %522 = vector.load %arg2[%c34, %c0_662, %c0_663] : memref<49x128x128xbf16, #tpu.memory_space<vmem>>, vector<1x128x128xbf16>
    %523 = vector.shape_cast %522 : vector<1x128x128xbf16> to vector<128x128xbf16>
    %cst_664 = arith.constant dense<0.000000e+00> : vector<2x128xf32>
    %524 = tpu.matmul %521, %523, %cst_664 {dimension_numbers = #tpu.dot_dimension_numbers<[1], [0], [0], [1], [0, 0, 1, 1], [], []>} : vector<2x128xbf16>, vector<128x128xbf16>, vector<2x128xf32> -> vector<2x128xf32>
    %525 = arith.addf %510, %524 : vector<2x128xf32>
    %c0_665 = arith.constant 0 : index
    %c10_666 = arith.constant 10 : index
    %c0_667 = arith.constant 0 : index
    %c0_668 = arith.constant 0 : index
    %526 = vector.load %arg1[%c0_665, %c10_666, %c0_667, %c0_668] : memref<2x14x14x128xbf16, #tpu.memory_space<vmem>>, vector<2x1x1x128xbf16>
    %527 = vector.shape_cast %526 : vector<2x1x1x128xbf16> to vector<2x128xbf16>
    %c0_669 = arith.constant 0 : index
    %c10_670 = arith.constant 10 : index
    %c1_671 = arith.constant 1 : index
    %c0_672 = arith.constant 0 : index
    %528 = vector.load %arg1[%c0_669, %c10_670, %c1_671, %c0_672] : memref<2x14x14x128xbf16, #tpu.memory_space<vmem>>, vector<2x1x1x128xbf16>
    %529 = vector.shape_cast %528 : vector<2x1x1x128xbf16> to vector<2x128xbf16>
    %530 = arith.maximumf %527, %529 : vector<2x128xbf16>
    %c0_673 = arith.constant 0 : index
    %c11_674 = arith.constant 11 : index
    %c0_675 = arith.constant 0 : index
    %c0_676 = arith.constant 0 : index
    %531 = vector.load %arg1[%c0_673, %c11_674, %c0_675, %c0_676] : memref<2x14x14x128xbf16, #tpu.memory_space<vmem>>, vector<2x1x1x128xbf16>
    %532 = vector.shape_cast %531 : vector<2x1x1x128xbf16> to vector<2x128xbf16>
    %c0_677 = arith.constant 0 : index
    %c11_678 = arith.constant 11 : index
    %c1_679 = arith.constant 1 : index
    %c0_680 = arith.constant 0 : index
    %533 = vector.load %arg1[%c0_677, %c11_678, %c1_679, %c0_680] : memref<2x14x14x128xbf16, #tpu.memory_space<vmem>>, vector<2x1x1x128xbf16>
    %534 = vector.shape_cast %533 : vector<2x1x1x128xbf16> to vector<2x128xbf16>
    %535 = arith.maximumf %532, %534 : vector<2x128xbf16>
    %536 = arith.maximumf %530, %535 : vector<2x128xbf16>
    %c35 = arith.constant 35 : index
    %c0_681 = arith.constant 0 : index
    %c0_682 = arith.constant 0 : index
    %537 = vector.load %arg2[%c35, %c0_681, %c0_682] : memref<49x128x128xbf16, #tpu.memory_space<vmem>>, vector<1x128x128xbf16>
    %538 = vector.shape_cast %537 : vector<1x128x128xbf16> to vector<128x128xbf16>
    %cst_683 = arith.constant dense<0.000000e+00> : vector<2x128xf32>
    %539 = tpu.matmul %536, %538, %cst_683 {dimension_numbers = #tpu.dot_dimension_numbers<[1], [0], [0], [1], [0, 0, 1, 1], [], []>} : vector<2x128xbf16>, vector<128x128xbf16>, vector<2x128xf32> -> vector<2x128xf32>
    %540 = arith.addf %525, %539 : vector<2x128xf32>
    %c0_684 = arith.constant 0 : index
    %c10_685 = arith.constant 10 : index
    %c2_686 = arith.constant 2 : index
    %c0_687 = arith.constant 0 : index
    %541 = vector.load %arg1[%c0_684, %c10_685, %c2_686, %c0_687] : memref<2x14x14x128xbf16, #tpu.memory_space<vmem>>, vector<2x1x1x128xbf16>
    %542 = vector.shape_cast %541 : vector<2x1x1x128xbf16> to vector<2x128xbf16>
    %c0_688 = arith.constant 0 : index
    %c10_689 = arith.constant 10 : index
    %c3_690 = arith.constant 3 : index
    %c0_691 = arith.constant 0 : index
    %543 = vector.load %arg1[%c0_688, %c10_689, %c3_690, %c0_691] : memref<2x14x14x128xbf16, #tpu.memory_space<vmem>>, vector<2x1x1x128xbf16>
    %544 = vector.shape_cast %543 : vector<2x1x1x128xbf16> to vector<2x128xbf16>
    %545 = arith.maximumf %542, %544 : vector<2x128xbf16>
    %c0_692 = arith.constant 0 : index
    %c11_693 = arith.constant 11 : index
    %c2_694 = arith.constant 2 : index
    %c0_695 = arith.constant 0 : index
    %546 = vector.load %arg1[%c0_692, %c11_693, %c2_694, %c0_695] : memref<2x14x14x128xbf16, #tpu.memory_space<vmem>>, vector<2x1x1x128xbf16>
    %547 = vector.shape_cast %546 : vector<2x1x1x128xbf16> to vector<2x128xbf16>
    %c0_696 = arith.constant 0 : index
    %c11_697 = arith.constant 11 : index
    %c3_698 = arith.constant 3 : index
    %c0_699 = arith.constant 0 : index
    %548 = vector.load %arg1[%c0_696, %c11_697, %c3_698, %c0_699] : memref<2x14x14x128xbf16, #tpu.memory_space<vmem>>, vector<2x1x1x128xbf16>
    %549 = vector.shape_cast %548 : vector<2x1x1x128xbf16> to vector<2x128xbf16>
    %550 = arith.maximumf %547, %549 : vector<2x128xbf16>
    %551 = arith.maximumf %545, %550 : vector<2x128xbf16>
    %c36 = arith.constant 36 : index
    %c0_700 = arith.constant 0 : index
    %c0_701 = arith.constant 0 : index
    %552 = vector.load %arg2[%c36, %c0_700, %c0_701] : memref<49x128x128xbf16, #tpu.memory_space<vmem>>, vector<1x128x128xbf16>
    %553 = vector.shape_cast %552 : vector<1x128x128xbf16> to vector<128x128xbf16>
    %cst_702 = arith.constant dense<0.000000e+00> : vector<2x128xf32>
    %554 = tpu.matmul %551, %553, %cst_702 {dimension_numbers = #tpu.dot_dimension_numbers<[1], [0], [0], [1], [0, 0, 1, 1], [], []>} : vector<2x128xbf16>, vector<128x128xbf16>, vector<2x128xf32> -> vector<2x128xf32>
    %555 = arith.addf %540, %554 : vector<2x128xf32>
    %c0_703 = arith.constant 0 : index
    %c10_704 = arith.constant 10 : index
    %c4_705 = arith.constant 4 : index
    %c0_706 = arith.constant 0 : index
    %556 = vector.load %arg1[%c0_703, %c10_704, %c4_705, %c0_706] : memref<2x14x14x128xbf16, #tpu.memory_space<vmem>>, vector<2x1x1x128xbf16>
    %557 = vector.shape_cast %556 : vector<2x1x1x128xbf16> to vector<2x128xbf16>
    %c0_707 = arith.constant 0 : index
    %c10_708 = arith.constant 10 : index
    %c5_709 = arith.constant 5 : index
    %c0_710 = arith.constant 0 : index
    %558 = vector.load %arg1[%c0_707, %c10_708, %c5_709, %c0_710] : memref<2x14x14x128xbf16, #tpu.memory_space<vmem>>, vector<2x1x1x128xbf16>
    %559 = vector.shape_cast %558 : vector<2x1x1x128xbf16> to vector<2x128xbf16>
    %560 = arith.maximumf %557, %559 : vector<2x128xbf16>
    %c0_711 = arith.constant 0 : index
    %c11_712 = arith.constant 11 : index
    %c4_713 = arith.constant 4 : index
    %c0_714 = arith.constant 0 : index
    %561 = vector.load %arg1[%c0_711, %c11_712, %c4_713, %c0_714] : memref<2x14x14x128xbf16, #tpu.memory_space<vmem>>, vector<2x1x1x128xbf16>
    %562 = vector.shape_cast %561 : vector<2x1x1x128xbf16> to vector<2x128xbf16>
    %c0_715 = arith.constant 0 : index
    %c11_716 = arith.constant 11 : index
    %c5_717 = arith.constant 5 : index
    %c0_718 = arith.constant 0 : index
    %563 = vector.load %arg1[%c0_715, %c11_716, %c5_717, %c0_718] : memref<2x14x14x128xbf16, #tpu.memory_space<vmem>>, vector<2x1x1x128xbf16>
    %564 = vector.shape_cast %563 : vector<2x1x1x128xbf16> to vector<2x128xbf16>
    %565 = arith.maximumf %562, %564 : vector<2x128xbf16>
    %566 = arith.maximumf %560, %565 : vector<2x128xbf16>
    %c37 = arith.constant 37 : index
    %c0_719 = arith.constant 0 : index
    %c0_720 = arith.constant 0 : index
    %567 = vector.load %arg2[%c37, %c0_719, %c0_720] : memref<49x128x128xbf16, #tpu.memory_space<vmem>>, vector<1x128x128xbf16>
    %568 = vector.shape_cast %567 : vector<1x128x128xbf16> to vector<128x128xbf16>
    %cst_721 = arith.constant dense<0.000000e+00> : vector<2x128xf32>
    %569 = tpu.matmul %566, %568, %cst_721 {dimension_numbers = #tpu.dot_dimension_numbers<[1], [0], [0], [1], [0, 0, 1, 1], [], []>} : vector<2x128xbf16>, vector<128x128xbf16>, vector<2x128xf32> -> vector<2x128xf32>
    %570 = arith.addf %555, %569 : vector<2x128xf32>
    %c0_722 = arith.constant 0 : index
    %c10_723 = arith.constant 10 : index
    %c6_724 = arith.constant 6 : index
    %c0_725 = arith.constant 0 : index
    %571 = vector.load %arg1[%c0_722, %c10_723, %c6_724, %c0_725] : memref<2x14x14x128xbf16, #tpu.memory_space<vmem>>, vector<2x1x1x128xbf16>
    %572 = vector.shape_cast %571 : vector<2x1x1x128xbf16> to vector<2x128xbf16>
    %c0_726 = arith.constant 0 : index
    %c10_727 = arith.constant 10 : index
    %c7_728 = arith.constant 7 : index
    %c0_729 = arith.constant 0 : index
    %573 = vector.load %arg1[%c0_726, %c10_727, %c7_728, %c0_729] : memref<2x14x14x128xbf16, #tpu.memory_space<vmem>>, vector<2x1x1x128xbf16>
    %574 = vector.shape_cast %573 : vector<2x1x1x128xbf16> to vector<2x128xbf16>
    %575 = arith.maximumf %572, %574 : vector<2x128xbf16>
    %c0_730 = arith.constant 0 : index
    %c11_731 = arith.constant 11 : index
    %c6_732 = arith.constant 6 : index
    %c0_733 = arith.constant 0 : index
    %576 = vector.load %arg1[%c0_730, %c11_731, %c6_732, %c0_733] : memref<2x14x14x128xbf16, #tpu.memory_space<vmem>>, vector<2x1x1x128xbf16>
    %577 = vector.shape_cast %576 : vector<2x1x1x128xbf16> to vector<2x128xbf16>
    %c0_734 = arith.constant 0 : index
    %c11_735 = arith.constant 11 : index
    %c7_736 = arith.constant 7 : index
    %c0_737 = arith.constant 0 : index
    %578 = vector.load %arg1[%c0_734, %c11_735, %c7_736, %c0_737] : memref<2x14x14x128xbf16, #tpu.memory_space<vmem>>, vector<2x1x1x128xbf16>
    %579 = vector.shape_cast %578 : vector<2x1x1x128xbf16> to vector<2x128xbf16>
    %580 = arith.maximumf %577, %579 : vector<2x128xbf16>
    %581 = arith.maximumf %575, %580 : vector<2x128xbf16>
    %c38 = arith.constant 38 : index
    %c0_738 = arith.constant 0 : index
    %c0_739 = arith.constant 0 : index
    %582 = vector.load %arg2[%c38, %c0_738, %c0_739] : memref<49x128x128xbf16, #tpu.memory_space<vmem>>, vector<1x128x128xbf16>
    %583 = vector.shape_cast %582 : vector<1x128x128xbf16> to vector<128x128xbf16>
    %cst_740 = arith.constant dense<0.000000e+00> : vector<2x128xf32>
    %584 = tpu.matmul %581, %583, %cst_740 {dimension_numbers = #tpu.dot_dimension_numbers<[1], [0], [0], [1], [0, 0, 1, 1], [], []>} : vector<2x128xbf16>, vector<128x128xbf16>, vector<2x128xf32> -> vector<2x128xf32>
    %585 = arith.addf %570, %584 : vector<2x128xf32>
    %c0_741 = arith.constant 0 : index
    %c10_742 = arith.constant 10 : index
    %c8_743 = arith.constant 8 : index
    %c0_744 = arith.constant 0 : index
    %586 = vector.load %arg1[%c0_741, %c10_742, %c8_743, %c0_744] : memref<2x14x14x128xbf16, #tpu.memory_space<vmem>>, vector<2x1x1x128xbf16>
    %587 = vector.shape_cast %586 : vector<2x1x1x128xbf16> to vector<2x128xbf16>
    %c0_745 = arith.constant 0 : index
    %c10_746 = arith.constant 10 : index
    %c9_747 = arith.constant 9 : index
    %c0_748 = arith.constant 0 : index
    %588 = vector.load %arg1[%c0_745, %c10_746, %c9_747, %c0_748] : memref<2x14x14x128xbf16, #tpu.memory_space<vmem>>, vector<2x1x1x128xbf16>
    %589 = vector.shape_cast %588 : vector<2x1x1x128xbf16> to vector<2x128xbf16>
    %590 = arith.maximumf %587, %589 : vector<2x128xbf16>
    %c0_749 = arith.constant 0 : index
    %c11_750 = arith.constant 11 : index
    %c8_751 = arith.constant 8 : index
    %c0_752 = arith.constant 0 : index
    %591 = vector.load %arg1[%c0_749, %c11_750, %c8_751, %c0_752] : memref<2x14x14x128xbf16, #tpu.memory_space<vmem>>, vector<2x1x1x128xbf16>
    %592 = vector.shape_cast %591 : vector<2x1x1x128xbf16> to vector<2x128xbf16>
    %c0_753 = arith.constant 0 : index
    %c11_754 = arith.constant 11 : index
    %c9_755 = arith.constant 9 : index
    %c0_756 = arith.constant 0 : index
    %593 = vector.load %arg1[%c0_753, %c11_754, %c9_755, %c0_756] : memref<2x14x14x128xbf16, #tpu.memory_space<vmem>>, vector<2x1x1x128xbf16>
    %594 = vector.shape_cast %593 : vector<2x1x1x128xbf16> to vector<2x128xbf16>
    %595 = arith.maximumf %592, %594 : vector<2x128xbf16>
    %596 = arith.maximumf %590, %595 : vector<2x128xbf16>
    %c39 = arith.constant 39 : index
    %c0_757 = arith.constant 0 : index
    %c0_758 = arith.constant 0 : index
    %597 = vector.load %arg2[%c39, %c0_757, %c0_758] : memref<49x128x128xbf16, #tpu.memory_space<vmem>>, vector<1x128x128xbf16>
    %598 = vector.shape_cast %597 : vector<1x128x128xbf16> to vector<128x128xbf16>
    %cst_759 = arith.constant dense<0.000000e+00> : vector<2x128xf32>
    %599 = tpu.matmul %596, %598, %cst_759 {dimension_numbers = #tpu.dot_dimension_numbers<[1], [0], [0], [1], [0, 0, 1, 1], [], []>} : vector<2x128xbf16>, vector<128x128xbf16>, vector<2x128xf32> -> vector<2x128xf32>
    %600 = arith.addf %585, %599 : vector<2x128xf32>
    %c0_760 = arith.constant 0 : index
    %c10_761 = arith.constant 10 : index
    %c10_762 = arith.constant 10 : index
    %c0_763 = arith.constant 0 : index
    %601 = vector.load %arg1[%c0_760, %c10_761, %c10_762, %c0_763] : memref<2x14x14x128xbf16, #tpu.memory_space<vmem>>, vector<2x1x1x128xbf16>
    %602 = vector.shape_cast %601 : vector<2x1x1x128xbf16> to vector<2x128xbf16>
    %c0_764 = arith.constant 0 : index
    %c10_765 = arith.constant 10 : index
    %c11_766 = arith.constant 11 : index
    %c0_767 = arith.constant 0 : index
    %603 = vector.load %arg1[%c0_764, %c10_765, %c11_766, %c0_767] : memref<2x14x14x128xbf16, #tpu.memory_space<vmem>>, vector<2x1x1x128xbf16>
    %604 = vector.shape_cast %603 : vector<2x1x1x128xbf16> to vector<2x128xbf16>
    %605 = arith.maximumf %602, %604 : vector<2x128xbf16>
    %c0_768 = arith.constant 0 : index
    %c11_769 = arith.constant 11 : index
    %c10_770 = arith.constant 10 : index
    %c0_771 = arith.constant 0 : index
    %606 = vector.load %arg1[%c0_768, %c11_769, %c10_770, %c0_771] : memref<2x14x14x128xbf16, #tpu.memory_space<vmem>>, vector<2x1x1x128xbf16>
    %607 = vector.shape_cast %606 : vector<2x1x1x128xbf16> to vector<2x128xbf16>
    %c0_772 = arith.constant 0 : index
    %c11_773 = arith.constant 11 : index
    %c11_774 = arith.constant 11 : index
    %c0_775 = arith.constant 0 : index
    %608 = vector.load %arg1[%c0_772, %c11_773, %c11_774, %c0_775] : memref<2x14x14x128xbf16, #tpu.memory_space<vmem>>, vector<2x1x1x128xbf16>
    %609 = vector.shape_cast %608 : vector<2x1x1x128xbf16> to vector<2x128xbf16>
    %610 = arith.maximumf %607, %609 : vector<2x128xbf16>
    %611 = arith.maximumf %605, %610 : vector<2x128xbf16>
    %c40 = arith.constant 40 : index
    %c0_776 = arith.constant 0 : index
    %c0_777 = arith.constant 0 : index
    %612 = vector.load %arg2[%c40, %c0_776, %c0_777] : memref<49x128x128xbf16, #tpu.memory_space<vmem>>, vector<1x128x128xbf16>
    %613 = vector.shape_cast %612 : vector<1x128x128xbf16> to vector<128x128xbf16>
    %cst_778 = arith.constant dense<0.000000e+00> : vector<2x128xf32>
    %614 = tpu.matmul %611, %613, %cst_778 {dimension_numbers = #tpu.dot_dimension_numbers<[1], [0], [0], [1], [0, 0, 1, 1], [], []>} : vector<2x128xbf16>, vector<128x128xbf16>, vector<2x128xf32> -> vector<2x128xf32>
    %615 = arith.addf %600, %614 : vector<2x128xf32>
    %c0_779 = arith.constant 0 : index
    %c10_780 = arith.constant 10 : index
    %c12_781 = arith.constant 12 : index
    %c0_782 = arith.constant 0 : index
    %616 = vector.load %arg1[%c0_779, %c10_780, %c12_781, %c0_782] : memref<2x14x14x128xbf16, #tpu.memory_space<vmem>>, vector<2x1x1x128xbf16>
    %617 = vector.shape_cast %616 : vector<2x1x1x128xbf16> to vector<2x128xbf16>
    %c0_783 = arith.constant 0 : index
    %c10_784 = arith.constant 10 : index
    %c13_785 = arith.constant 13 : index
    %c0_786 = arith.constant 0 : index
    %618 = vector.load %arg1[%c0_783, %c10_784, %c13_785, %c0_786] : memref<2x14x14x128xbf16, #tpu.memory_space<vmem>>, vector<2x1x1x128xbf16>
    %619 = vector.shape_cast %618 : vector<2x1x1x128xbf16> to vector<2x128xbf16>
    %620 = arith.maximumf %617, %619 : vector<2x128xbf16>
    %c0_787 = arith.constant 0 : index
    %c11_788 = arith.constant 11 : index
    %c12_789 = arith.constant 12 : index
    %c0_790 = arith.constant 0 : index
    %621 = vector.load %arg1[%c0_787, %c11_788, %c12_789, %c0_790] : memref<2x14x14x128xbf16, #tpu.memory_space<vmem>>, vector<2x1x1x128xbf16>
    %622 = vector.shape_cast %621 : vector<2x1x1x128xbf16> to vector<2x128xbf16>
    %c0_791 = arith.constant 0 : index
    %c11_792 = arith.constant 11 : index
    %c13_793 = arith.constant 13 : index
    %c0_794 = arith.constant 0 : index
    %623 = vector.load %arg1[%c0_791, %c11_792, %c13_793, %c0_794] : memref<2x14x14x128xbf16, #tpu.memory_space<vmem>>, vector<2x1x1x128xbf16>
    %624 = vector.shape_cast %623 : vector<2x1x1x128xbf16> to vector<2x128xbf16>
    %625 = arith.maximumf %622, %624 : vector<2x128xbf16>
    %626 = arith.maximumf %620, %625 : vector<2x128xbf16>
    %c41 = arith.constant 41 : index
    %c0_795 = arith.constant 0 : index
    %c0_796 = arith.constant 0 : index
    %627 = vector.load %arg2[%c41, %c0_795, %c0_796] : memref<49x128x128xbf16, #tpu.memory_space<vmem>>, vector<1x128x128xbf16>
    %628 = vector.shape_cast %627 : vector<1x128x128xbf16> to vector<128x128xbf16>
    %cst_797 = arith.constant dense<0.000000e+00> : vector<2x128xf32>
    %629 = tpu.matmul %626, %628, %cst_797 {dimension_numbers = #tpu.dot_dimension_numbers<[1], [0], [0], [1], [0, 0, 1, 1], [], []>} : vector<2x128xbf16>, vector<128x128xbf16>, vector<2x128xf32> -> vector<2x128xf32>
    %630 = arith.addf %615, %629 : vector<2x128xf32>
    %c0_798 = arith.constant 0 : index
    %c12_799 = arith.constant 12 : index
    %c0_800 = arith.constant 0 : index
    %c0_801 = arith.constant 0 : index
    %631 = vector.load %arg1[%c0_798, %c12_799, %c0_800, %c0_801] : memref<2x14x14x128xbf16, #tpu.memory_space<vmem>>, vector<2x1x1x128xbf16>
    %632 = vector.shape_cast %631 : vector<2x1x1x128xbf16> to vector<2x128xbf16>
    %c0_802 = arith.constant 0 : index
    %c12_803 = arith.constant 12 : index
    %c1_804 = arith.constant 1 : index
    %c0_805 = arith.constant 0 : index
    %633 = vector.load %arg1[%c0_802, %c12_803, %c1_804, %c0_805] : memref<2x14x14x128xbf16, #tpu.memory_space<vmem>>, vector<2x1x1x128xbf16>
    %634 = vector.shape_cast %633 : vector<2x1x1x128xbf16> to vector<2x128xbf16>
    %635 = arith.maximumf %632, %634 : vector<2x128xbf16>
    %c0_806 = arith.constant 0 : index
    %c13_807 = arith.constant 13 : index
    %c0_808 = arith.constant 0 : index
    %c0_809 = arith.constant 0 : index
    %636 = vector.load %arg1[%c0_806, %c13_807, %c0_808, %c0_809] : memref<2x14x14x128xbf16, #tpu.memory_space<vmem>>, vector<2x1x1x128xbf16>
    %637 = vector.shape_cast %636 : vector<2x1x1x128xbf16> to vector<2x128xbf16>
    %c0_810 = arith.constant 0 : index
    %c13_811 = arith.constant 13 : index
    %c1_812 = arith.constant 1 : index
    %c0_813 = arith.constant 0 : index
    %638 = vector.load %arg1[%c0_810, %c13_811, %c1_812, %c0_813] : memref<2x14x14x128xbf16, #tpu.memory_space<vmem>>, vector<2x1x1x128xbf16>
    %639 = vector.shape_cast %638 : vector<2x1x1x128xbf16> to vector<2x128xbf16>
    %640 = arith.maximumf %637, %639 : vector<2x128xbf16>
    %641 = arith.maximumf %635, %640 : vector<2x128xbf16>
    %c42 = arith.constant 42 : index
    %c0_814 = arith.constant 0 : index
    %c0_815 = arith.constant 0 : index
    %642 = vector.load %arg2[%c42, %c0_814, %c0_815] : memref<49x128x128xbf16, #tpu.memory_space<vmem>>, vector<1x128x128xbf16>
    %643 = vector.shape_cast %642 : vector<1x128x128xbf16> to vector<128x128xbf16>
    %cst_816 = arith.constant dense<0.000000e+00> : vector<2x128xf32>
    %644 = tpu.matmul %641, %643, %cst_816 {dimension_numbers = #tpu.dot_dimension_numbers<[1], [0], [0], [1], [0, 0, 1, 1], [], []>} : vector<2x128xbf16>, vector<128x128xbf16>, vector<2x128xf32> -> vector<2x128xf32>
    %645 = arith.addf %630, %644 : vector<2x128xf32>
    %c0_817 = arith.constant 0 : index
    %c12_818 = arith.constant 12 : index
    %c2_819 = arith.constant 2 : index
    %c0_820 = arith.constant 0 : index
    %646 = vector.load %arg1[%c0_817, %c12_818, %c2_819, %c0_820] : memref<2x14x14x128xbf16, #tpu.memory_space<vmem>>, vector<2x1x1x128xbf16>
    %647 = vector.shape_cast %646 : vector<2x1x1x128xbf16> to vector<2x128xbf16>
    %c0_821 = arith.constant 0 : index
    %c12_822 = arith.constant 12 : index
    %c3_823 = arith.constant 3 : index
    %c0_824 = arith.constant 0 : index
    %648 = vector.load %arg1[%c0_821, %c12_822, %c3_823, %c0_824] : memref<2x14x14x128xbf16, #tpu.memory_space<vmem>>, vector<2x1x1x128xbf16>
    %649 = vector.shape_cast %648 : vector<2x1x1x128xbf16> to vector<2x128xbf16>
    %650 = arith.maximumf %647, %649 : vector<2x128xbf16>
    %c0_825 = arith.constant 0 : index
    %c13_826 = arith.constant 13 : index
    %c2_827 = arith.constant 2 : index
    %c0_828 = arith.constant 0 : index
    %651 = vector.load %arg1[%c0_825, %c13_826, %c2_827, %c0_828] : memref<2x14x14x128xbf16, #tpu.memory_space<vmem>>, vector<2x1x1x128xbf16>
    %652 = vector.shape_cast %651 : vector<2x1x1x128xbf16> to vector<2x128xbf16>
    %c0_829 = arith.constant 0 : index
    %c13_830 = arith.constant 13 : index
    %c3_831 = arith.constant 3 : index
    %c0_832 = arith.constant 0 : index
    %653 = vector.load %arg1[%c0_829, %c13_830, %c3_831, %c0_832] : memref<2x14x14x128xbf16, #tpu.memory_space<vmem>>, vector<2x1x1x128xbf16>
    %654 = vector.shape_cast %653 : vector<2x1x1x128xbf16> to vector<2x128xbf16>
    %655 = arith.maximumf %652, %654 : vector<2x128xbf16>
    %656 = arith.maximumf %650, %655 : vector<2x128xbf16>
    %c43 = arith.constant 43 : index
    %c0_833 = arith.constant 0 : index
    %c0_834 = arith.constant 0 : index
    %657 = vector.load %arg2[%c43, %c0_833, %c0_834] : memref<49x128x128xbf16, #tpu.memory_space<vmem>>, vector<1x128x128xbf16>
    %658 = vector.shape_cast %657 : vector<1x128x128xbf16> to vector<128x128xbf16>
    %cst_835 = arith.constant dense<0.000000e+00> : vector<2x128xf32>
    %659 = tpu.matmul %656, %658, %cst_835 {dimension_numbers = #tpu.dot_dimension_numbers<[1], [0], [0], [1], [0, 0, 1, 1], [], []>} : vector<2x128xbf16>, vector<128x128xbf16>, vector<2x128xf32> -> vector<2x128xf32>
    %660 = arith.addf %645, %659 : vector<2x128xf32>
    %c0_836 = arith.constant 0 : index
    %c12_837 = arith.constant 12 : index
    %c4_838 = arith.constant 4 : index
    %c0_839 = arith.constant 0 : index
    %661 = vector.load %arg1[%c0_836, %c12_837, %c4_838, %c0_839] : memref<2x14x14x128xbf16, #tpu.memory_space<vmem>>, vector<2x1x1x128xbf16>
    %662 = vector.shape_cast %661 : vector<2x1x1x128xbf16> to vector<2x128xbf16>
    %c0_840 = arith.constant 0 : index
    %c12_841 = arith.constant 12 : index
    %c5_842 = arith.constant 5 : index
    %c0_843 = arith.constant 0 : index
    %663 = vector.load %arg1[%c0_840, %c12_841, %c5_842, %c0_843] : memref<2x14x14x128xbf16, #tpu.memory_space<vmem>>, vector<2x1x1x128xbf16>
    %664 = vector.shape_cast %663 : vector<2x1x1x128xbf16> to vector<2x128xbf16>
    %665 = arith.maximumf %662, %664 : vector<2x128xbf16>
    %c0_844 = arith.constant 0 : index
    %c13_845 = arith.constant 13 : index
    %c4_846 = arith.constant 4 : index
    %c0_847 = arith.constant 0 : index
    %666 = vector.load %arg1[%c0_844, %c13_845, %c4_846, %c0_847] : memref<2x14x14x128xbf16, #tpu.memory_space<vmem>>, vector<2x1x1x128xbf16>
    %667 = vector.shape_cast %666 : vector<2x1x1x128xbf16> to vector<2x128xbf16>
    %c0_848 = arith.constant 0 : index
    %c13_849 = arith.constant 13 : index
    %c5_850 = arith.constant 5 : index
    %c0_851 = arith.constant 0 : index
    %668 = vector.load %arg1[%c0_848, %c13_849, %c5_850, %c0_851] : memref<2x14x14x128xbf16, #tpu.memory_space<vmem>>, vector<2x1x1x128xbf16>
    %669 = vector.shape_cast %668 : vector<2x1x1x128xbf16> to vector<2x128xbf16>
    %670 = arith.maximumf %667, %669 : vector<2x128xbf16>
    %671 = arith.maximumf %665, %670 : vector<2x128xbf16>
    %c44 = arith.constant 44 : index
    %c0_852 = arith.constant 0 : index
    %c0_853 = arith.constant 0 : index
    %672 = vector.load %arg2[%c44, %c0_852, %c0_853] : memref<49x128x128xbf16, #tpu.memory_space<vmem>>, vector<1x128x128xbf16>
    %673 = vector.shape_cast %672 : vector<1x128x128xbf16> to vector<128x128xbf16>
    %cst_854 = arith.constant dense<0.000000e+00> : vector<2x128xf32>
    %674 = tpu.matmul %671, %673, %cst_854 {dimension_numbers = #tpu.dot_dimension_numbers<[1], [0], [0], [1], [0, 0, 1, 1], [], []>} : vector<2x128xbf16>, vector<128x128xbf16>, vector<2x128xf32> -> vector<2x128xf32>
    %675 = arith.addf %660, %674 : vector<2x128xf32>
    %c0_855 = arith.constant 0 : index
    %c12_856 = arith.constant 12 : index
    %c6_857 = arith.constant 6 : index
    %c0_858 = arith.constant 0 : index
    %676 = vector.load %arg1[%c0_855, %c12_856, %c6_857, %c0_858] : memref<2x14x14x128xbf16, #tpu.memory_space<vmem>>, vector<2x1x1x128xbf16>
    %677 = vector.shape_cast %676 : vector<2x1x1x128xbf16> to vector<2x128xbf16>
    %c0_859 = arith.constant 0 : index
    %c12_860 = arith.constant 12 : index
    %c7_861 = arith.constant 7 : index
    %c0_862 = arith.constant 0 : index
    %678 = vector.load %arg1[%c0_859, %c12_860, %c7_861, %c0_862] : memref<2x14x14x128xbf16, #tpu.memory_space<vmem>>, vector<2x1x1x128xbf16>
    %679 = vector.shape_cast %678 : vector<2x1x1x128xbf16> to vector<2x128xbf16>
    %680 = arith.maximumf %677, %679 : vector<2x128xbf16>
    %c0_863 = arith.constant 0 : index
    %c13_864 = arith.constant 13 : index
    %c6_865 = arith.constant 6 : index
    %c0_866 = arith.constant 0 : index
    %681 = vector.load %arg1[%c0_863, %c13_864, %c6_865, %c0_866] : memref<2x14x14x128xbf16, #tpu.memory_space<vmem>>, vector<2x1x1x128xbf16>
    %682 = vector.shape_cast %681 : vector<2x1x1x128xbf16> to vector<2x128xbf16>
    %c0_867 = arith.constant 0 : index
    %c13_868 = arith.constant 13 : index
    %c7_869 = arith.constant 7 : index
    %c0_870 = arith.constant 0 : index
    %683 = vector.load %arg1[%c0_867, %c13_868, %c7_869, %c0_870] : memref<2x14x14x128xbf16, #tpu.memory_space<vmem>>, vector<2x1x1x128xbf16>
    %684 = vector.shape_cast %683 : vector<2x1x1x128xbf16> to vector<2x128xbf16>
    %685 = arith.maximumf %682, %684 : vector<2x128xbf16>
    %686 = arith.maximumf %680, %685 : vector<2x128xbf16>
    %c45 = arith.constant 45 : index
    %c0_871 = arith.constant 0 : index
    %c0_872 = arith.constant 0 : index
    %687 = vector.load %arg2[%c45, %c0_871, %c0_872] : memref<49x128x128xbf16, #tpu.memory_space<vmem>>, vector<1x128x128xbf16>
    %688 = vector.shape_cast %687 : vector<1x128x128xbf16> to vector<128x128xbf16>
    %cst_873 = arith.constant dense<0.000000e+00> : vector<2x128xf32>
    %689 = tpu.matmul %686, %688, %cst_873 {dimension_numbers = #tpu.dot_dimension_numbers<[1], [0], [0], [1], [0, 0, 1, 1], [], []>} : vector<2x128xbf16>, vector<128x128xbf16>, vector<2x128xf32> -> vector<2x128xf32>
    %690 = arith.addf %675, %689 : vector<2x128xf32>
    %c0_874 = arith.constant 0 : index
    %c12_875 = arith.constant 12 : index
    %c8_876 = arith.constant 8 : index
    %c0_877 = arith.constant 0 : index
    %691 = vector.load %arg1[%c0_874, %c12_875, %c8_876, %c0_877] : memref<2x14x14x128xbf16, #tpu.memory_space<vmem>>, vector<2x1x1x128xbf16>
    %692 = vector.shape_cast %691 : vector<2x1x1x128xbf16> to vector<2x128xbf16>
    %c0_878 = arith.constant 0 : index
    %c12_879 = arith.constant 12 : index
    %c9_880 = arith.constant 9 : index
    %c0_881 = arith.constant 0 : index
    %693 = vector.load %arg1[%c0_878, %c12_879, %c9_880, %c0_881] : memref<2x14x14x128xbf16, #tpu.memory_space<vmem>>, vector<2x1x1x128xbf16>
    %694 = vector.shape_cast %693 : vector<2x1x1x128xbf16> to vector<2x128xbf16>
    %695 = arith.maximumf %692, %694 : vector<2x128xbf16>
    %c0_882 = arith.constant 0 : index
    %c13_883 = arith.constant 13 : index
    %c8_884 = arith.constant 8 : index
    %c0_885 = arith.constant 0 : index
    %696 = vector.load %arg1[%c0_882, %c13_883, %c8_884, %c0_885] : memref<2x14x14x128xbf16, #tpu.memory_space<vmem>>, vector<2x1x1x128xbf16>
    %697 = vector.shape_cast %696 : vector<2x1x1x128xbf16> to vector<2x128xbf16>
    %c0_886 = arith.constant 0 : index
    %c13_887 = arith.constant 13 : index
    %c9_888 = arith.constant 9 : index
    %c0_889 = arith.constant 0 : index
    %698 = vector.load %arg1[%c0_886, %c13_887, %c9_888, %c0_889] : memref<2x14x14x128xbf16, #tpu.memory_space<vmem>>, vector<2x1x1x128xbf16>
    %699 = vector.shape_cast %698 : vector<2x1x1x128xbf16> to vector<2x128xbf16>
    %700 = arith.maximumf %697, %699 : vector<2x128xbf16>
    %701 = arith.maximumf %695, %700 : vector<2x128xbf16>
    %c46 = arith.constant 46 : index
    %c0_890 = arith.constant 0 : index
    %c0_891 = arith.constant 0 : index
    %702 = vector.load %arg2[%c46, %c0_890, %c0_891] : memref<49x128x128xbf16, #tpu.memory_space<vmem>>, vector<1x128x128xbf16>
    %703 = vector.shape_cast %702 : vector<1x128x128xbf16> to vector<128x128xbf16>
    %cst_892 = arith.constant dense<0.000000e+00> : vector<2x128xf32>
    %704 = tpu.matmul %701, %703, %cst_892 {dimension_numbers = #tpu.dot_dimension_numbers<[1], [0], [0], [1], [0, 0, 1, 1], [], []>} : vector<2x128xbf16>, vector<128x128xbf16>, vector<2x128xf32> -> vector<2x128xf32>
    %705 = arith.addf %690, %704 : vector<2x128xf32>
    %c0_893 = arith.constant 0 : index
    %c12_894 = arith.constant 12 : index
    %c10_895 = arith.constant 10 : index
    %c0_896 = arith.constant 0 : index
    %706 = vector.load %arg1[%c0_893, %c12_894, %c10_895, %c0_896] : memref<2x14x14x128xbf16, #tpu.memory_space<vmem>>, vector<2x1x1x128xbf16>
    %707 = vector.shape_cast %706 : vector<2x1x1x128xbf16> to vector<2x128xbf16>
    %c0_897 = arith.constant 0 : index
    %c12_898 = arith.constant 12 : index
    %c11_899 = arith.constant 11 : index
    %c0_900 = arith.constant 0 : index
    %708 = vector.load %arg1[%c0_897, %c12_898, %c11_899, %c0_900] : memref<2x14x14x128xbf16, #tpu.memory_space<vmem>>, vector<2x1x1x128xbf16>
    %709 = vector.shape_cast %708 : vector<2x1x1x128xbf16> to vector<2x128xbf16>
    %710 = arith.maximumf %707, %709 : vector<2x128xbf16>
    %c0_901 = arith.constant 0 : index
    %c13_902 = arith.constant 13 : index
    %c10_903 = arith.constant 10 : index
    %c0_904 = arith.constant 0 : index
    %711 = vector.load %arg1[%c0_901, %c13_902, %c10_903, %c0_904] : memref<2x14x14x128xbf16, #tpu.memory_space<vmem>>, vector<2x1x1x128xbf16>
    %712 = vector.shape_cast %711 : vector<2x1x1x128xbf16> to vector<2x128xbf16>
    %c0_905 = arith.constant 0 : index
    %c13_906 = arith.constant 13 : index
    %c11_907 = arith.constant 11 : index
    %c0_908 = arith.constant 0 : index
    %713 = vector.load %arg1[%c0_905, %c13_906, %c11_907, %c0_908] : memref<2x14x14x128xbf16, #tpu.memory_space<vmem>>, vector<2x1x1x128xbf16>
    %714 = vector.shape_cast %713 : vector<2x1x1x128xbf16> to vector<2x128xbf16>
    %715 = arith.maximumf %712, %714 : vector<2x128xbf16>
    %716 = arith.maximumf %710, %715 : vector<2x128xbf16>
    %c47 = arith.constant 47 : index
    %c0_909 = arith.constant 0 : index
    %c0_910 = arith.constant 0 : index
    %717 = vector.load %arg2[%c47, %c0_909, %c0_910] : memref<49x128x128xbf16, #tpu.memory_space<vmem>>, vector<1x128x128xbf16>
    %718 = vector.shape_cast %717 : vector<1x128x128xbf16> to vector<128x128xbf16>
    %cst_911 = arith.constant dense<0.000000e+00> : vector<2x128xf32>
    %719 = tpu.matmul %716, %718, %cst_911 {dimension_numbers = #tpu.dot_dimension_numbers<[1], [0], [0], [1], [0, 0, 1, 1], [], []>} : vector<2x128xbf16>, vector<128x128xbf16>, vector<2x128xf32> -> vector<2x128xf32>
    %720 = arith.addf %705, %719 : vector<2x128xf32>
    %c0_912 = arith.constant 0 : index
    %c12_913 = arith.constant 12 : index
    %c12_914 = arith.constant 12 : index
    %c0_915 = arith.constant 0 : index
    %721 = vector.load %arg1[%c0_912, %c12_913, %c12_914, %c0_915] : memref<2x14x14x128xbf16, #tpu.memory_space<vmem>>, vector<2x1x1x128xbf16>
    %722 = vector.shape_cast %721 : vector<2x1x1x128xbf16> to vector<2x128xbf16>
    %c0_916 = arith.constant 0 : index
    %c12_917 = arith.constant 12 : index
    %c13_918 = arith.constant 13 : index
    %c0_919 = arith.constant 0 : index
    %723 = vector.load %arg1[%c0_916, %c12_917, %c13_918, %c0_919] : memref<2x14x14x128xbf16, #tpu.memory_space<vmem>>, vector<2x1x1x128xbf16>
    %724 = vector.shape_cast %723 : vector<2x1x1x128xbf16> to vector<2x128xbf16>
    %725 = arith.maximumf %722, %724 : vector<2x128xbf16>
    %c0_920 = arith.constant 0 : index
    %c13_921 = arith.constant 13 : index
    %c12_922 = arith.constant 12 : index
    %c0_923 = arith.constant 0 : index
    %726 = vector.load %arg1[%c0_920, %c13_921, %c12_922, %c0_923] : memref<2x14x14x128xbf16, #tpu.memory_space<vmem>>, vector<2x1x1x128xbf16>
    %727 = vector.shape_cast %726 : vector<2x1x1x128xbf16> to vector<2x128xbf16>
    %c0_924 = arith.constant 0 : index
    %c13_925 = arith.constant 13 : index
    %c13_926 = arith.constant 13 : index
    %c0_927 = arith.constant 0 : index
    %728 = vector.load %arg1[%c0_924, %c13_925, %c13_926, %c0_927] : memref<2x14x14x128xbf16, #tpu.memory_space<vmem>>, vector<2x1x1x128xbf16>
    %729 = vector.shape_cast %728 : vector<2x1x1x128xbf16> to vector<2x128xbf16>
    %730 = arith.maximumf %727, %729 : vector<2x128xbf16>
    %731 = arith.maximumf %725, %730 : vector<2x128xbf16>
    %c48 = arith.constant 48 : index
    %c0_928 = arith.constant 0 : index
    %c0_929 = arith.constant 0 : index
    %732 = vector.load %arg2[%c48, %c0_928, %c0_929] : memref<49x128x128xbf16, #tpu.memory_space<vmem>>, vector<1x128x128xbf16>
    %733 = vector.shape_cast %732 : vector<1x128x128xbf16> to vector<128x128xbf16>
    %cst_930 = arith.constant dense<0.000000e+00> : vector<2x128xf32>
    %734 = tpu.matmul %731, %733, %cst_930 {dimension_numbers = #tpu.dot_dimension_numbers<[1], [0], [0], [1], [0, 0, 1, 1], [], []>} : vector<2x128xbf16>, vector<128x128xbf16>, vector<2x128xf32> -> vector<2x128xf32>
    %735 = arith.addf %720, %734 : vector<2x128xf32>
    %c0_931 = arith.constant 0 : index
    %c0_932 = arith.constant 0 : index
    %736 = vector.load %arg3[%c0_931, %c0_932] : memref<1x128xf32, #tpu.memory_space<vmem>>, vector<1x128xf32>
    %737 = vector.broadcast %736 : vector<1x128xf32> to vector<2x128xf32>
    %738 = arith.addf %735, %737 : vector<2x128xf32>
    %cst_933 = arith.constant 0.000000e+00 : f32
    %739 = vector.broadcast %cst_933 : f32 to vector<2x128xf32>
    %740 = arith.maximumf %738, %739 : vector<2x128xf32>
    %741 = arith.truncf %740 : vector<2x128xf32> to vector<2x128xbf16>
    %c0_934 = arith.constant 0 : index
    %c0_935 = arith.constant 0 : index
    %742 = vector.load %arg4[%c0_934, %c0_935] : memref<128x128xbf16, #tpu.memory_space<vmem>>, vector<128x128xbf16>
    %cst_936 = arith.constant dense<0.000000e+00> : vector<2x128xf32>
    %743 = tpu.matmul %741, %742, %cst_936 {dimension_numbers = #tpu.dot_dimension_numbers<[1], [0], [0], [1], [0, 0, 1, 1], [], []>} : vector<2x128xbf16>, vector<128x128xbf16>, vector<2x128xf32> -> vector<2x128xf32>
    %c0_937 = arith.constant 0 : index
    %c0_938 = arith.constant 0 : index
    %744 = vector.load %arg5[%c0_937, %c0_938] : memref<1x128xf32, #tpu.memory_space<vmem>>, vector<1x128xf32>
    %745 = vector.broadcast %744 : vector<1x128xf32> to vector<2x128xf32>
    %746 = arith.addf %743, %745 : vector<2x128xf32>
    %c0_939 = arith.constant 0 : index
    %c0_940 = arith.constant 0 : index
    %747 = vector.load %arg6[%c0_939, %c0_940] : memref<2x128xf32, #tpu.memory_space<vmem>>, vector<2x128xf32>
    tpu.vector_store %arg6[%c0_939, %c0_940], %746 {strides = array<i32>} : memref<2x128xf32, #tpu.memory_space<vmem>>, vector<2x128xf32>,
    return
  }
  func.func @transform_0(%arg0: i32) -> (i32, i32, i32, i32) {
    %c0_i32 = arith.constant 0 : i32
    %c0_i32_0 = arith.constant 0 : i32
    %c0_i32_1 = arith.constant 0 : i32
    %c0_i32_2 = arith.constant 0 : i32
    %c0_i32_3 = arith.constant 0 : i32
    return %c0_i32, %c0_i32_0, %c0_i32_1, %c0_i32_2 : i32, i32, i32, i32
  }
  func.func @transform_1(%arg0: i32) -> (i32, i32, i32) {
    %c0_i32 = arith.constant 0 : i32
    %c0_i32_0 = arith.constant 0 : i32
    %c0_i32_1 = arith.constant 0 : i32
    %c0_i32_2 = arith.constant 0 : i32
    return %c0_i32, %c0_i32_0, %c0_i32_1 : i32, i32, i32
  }
  func.func @transform_2(%arg0: i32) -> (i32, i32) {
    %c0_i32 = arith.constant 0 : i32
    %c0_i32_0 = arith.constant 0 : i32
    %c0_i32_1 = arith.constant 0 : i32
    return %c0_i32, %c0_i32_0 : i32, i32
  }
  func.func @transform_3(%arg0: i32) -> (i32, i32) {
    %c0_i32 = arith.constant 0 : i32
    %c0_i32_0 = arith.constant 0 : i32
    %c0_i32_1 = arith.constant 0 : i32
    return %c0_i32, %c0_i32_0 : i32, i32
  }
  func.func @transform_4(%arg0: i32) -> (i32, i32) {
    %c0_i32 = arith.constant 0 : i32
    %c0_i32_0 = arith.constant 0 : i32
    %c0_i32_1 = arith.constant 0 : i32
    return %c0_i32, %c0_i32_0 : i32, i32
  }
  func.func @transform_5(%arg0: i32) -> (i32, i32) {
    %c0_i32 = arith.constant 0 : i32
    %c0_i32_0 = arith.constant 0 : i32
    %c0_i32_1 = arith.constant 0 : i32
    return %c0_i32, %c0_i32_0 : i32, i32
  }
}

</mosaic_0001>

<llo_original>
// kernel: cnn_net_forward.3
$region0: #{cnn_net_forward.3}
  #allocation0 [shape = 'u32[]', space=smem, size = 0x4, offset = 0x4, fixed_abs, tag = 'smem constant byte address 0x4 - core index']
  #allocation1 [shape = 'u32[72,128]{1,0:T(1,128)}', space=vmem, size = 0x9000, scoped, tag = 'internal scratch']
  %s0 = inlined_call_operand.vmem [shape: bf16[392,200], index: 0, kind: input, shape index: {}]
  %s1 = inlined_call_operand.vmem [shape: bf16[200,128], index: 1, kind: input, shape index: {}]
  %s2 = inlined_call_operand.vmem [shape: f32[1,128], index: 2, kind: input, shape index: {}]
  %s3 = inlined_call_operand.vmem [shape: bf16[392,128], index: 3, kind: output, shape index: {}]
  %s4 = sld [smem:[#allocation0]]
  $region22: #{cnn_net_forward.3} parent=0
    _
  %s6 = ssub.s32 1, %s4
  %s7 = scalar_select 0, %s6, %s4
  // Predicated region
  $region2: #{cnn_net_forward.3} parent=0 // pred_check
    _
  $region3: #{cnn_net_forward.3} parent=0 // pred_check_branch
    %9 = sbr.rel (0) target = $region5
  $region4: #{cnn_net_forward.3} parent=0 // pred_region
    _
  $region5: #{cnn_net_forward.3} parent=0 // pred_fallthru
    _
  // Predicated region
  $region6: #{cnn_net_forward.3} parent=0 // pred_check
    _
  $region7: #{cnn_net_forward.3} parent=0 // pred_check_branch
    %11 = sbr.rel (0) target = $region9
  $region8: #{cnn_net_forward.3} parent=0 // pred_region
    _
  $region9: #{cnn_net_forward.3} parent=0 // pred_fallthru
    _
  // Predicated region
  $region10: #{cnn_net_forward.3} parent=0 // pred_check
    _
  $region11: #{cnn_net_forward.3} parent=0 // pred_check_branch
    %13 = sbr.rel (0) target = $region13
  $region12: #{cnn_net_forward.3} parent=0 // pred_region
    _
  $region13: #{cnn_net_forward.3} parent=0 // pred_fallthru
    _
  %v15 = vld [vmem:[%s0] sm:$0xff]
  %v16 = vld [vmem:[%s0 + $0x8] sm:$0xff]
  %v17 = vld [vmem:[%s0 + $0x10] sm:$0xff]
  %v18 = vld [vmem:[%s0 + $0x18] sm:$0xff]
  %v19 = vld [vmem:[%s0 + $0x20] sm:$0xff]
  %v20 = vld [vmem:[%s0 + $0x28] sm:$0xff]
  %v21 = vld [vmem:[%s0 + $0x30] sm:$0xff]
  %v22 = vld [vmem:[%s0 + $0x38] sm:$0xff]
  %v23 = vld [vmem:[%s0 + $0x40] sm:$0xff]
  %v24 = vld [vmem:[%s0 + $0x48] sm:$0xff]
  %v25 = vld [vmem:[%s0 + $0x50] sm:$0xff]
  %v26 = vld [vmem:[%s0 + $0x58] sm:$0xff]
  %v27 = vld [vmem:[%s0 + $0x60] sm:$0xff]
  %v28 = vld [vmem:[%s0 + $0x68] sm:$0xff]
  %v29 = vld [vmem:[%s0 + $0x70] sm:$0xff]
  %v30 = vld [vmem:[%s0 + $0x78] sm:$0xff]
  %v31 = vld [vmem:[%s0 + $0x80] sm:$0xff]
  %v32 = vld [vmem:[%s0 + $0x88] sm:$0xff]
  %v33 = vld [vmem:[%s0 + $0x90] sm:$0xff]
  %v34 = vld [vmem:[%s0 + $0x98] sm:$0xff]
  %v35 = vld [vmem:[%s0 + $0xa0] sm:$0xff]
  %v36 = vld [vmem:[%s0 + $0xa8] sm:$0xff]
  %v37 = vld [vmem:[%s0 + $0xb0] sm:$0xff]
  %v38 = vld [vmem:[%s0 + $0xb8] sm:$0xff]
  %v39 = vld [vmem:[%s0 + $0xc0] sm:$0xff]
  %v40 = vld [vmem:[%s0 + $0xc8] sm:$0xff]
  %v41 = vld [vmem:[%s0 + $0xd0] sm:$0xff]
  %v42 = vld [vmem:[%s0 + $0xd8] sm:$0xff]
  %v43 = vld [vmem:[%s0 + $0xe0] sm:$0xff]
  %v44 = vld [vmem:[%s0 + $0xe8] sm:$0xff]
  %v45 = vld [vmem:[%s0 + $0xf0] sm:$0xff]
  %v46 = vld [vmem:[%s0 + $0xf8] sm:$0xff]
  %v47 = vld [vmem:[%s0 + $0x100] sm:$0xff]
  %v48 = vld [vmem:[%s0 + $0x108] sm:$0xff]
  %v49 = vld [vmem:[%s0 + $0x110] sm:$0xff]
  %v50 = vld [vmem:[%s0 + $0x118] sm:$0xff]
  %v51 = vld [vmem:[%s0 + $0x120] sm:$0xff]
  %v52 = vld [vmem:[%s0 + $0x128] sm:$0xff]
  %v53 = vld [vmem:[%s0 + $0x130] sm:$0xff]
  %v54 = vld [vmem:[%s0 + $0x138] sm:$0xff]
  %v55 = vld [vmem:[%s0 + $0x140] sm:$0xff]
  %v56 = vld [vmem:[%s0 + $0x148] sm:$0xff]
  %v57 = vld [vmem:[%s0 + $0x150] sm:$0xff]
  %v58 = vld [vmem:[%s0 + $0x158] sm:$0xff]
  %v59 = vld [vmem:[%s0 + $0x160] sm:$0xff]
  %v60 = vld [vmem:[%s0 + $0x168] sm:$0xff]
  %v61 = vld [vmem:[%s0 + $0x170] sm:$0xff]
  %v62 = vld [vmem:[%s0 + $0x178] sm:$0xff]
  %v63 = vld [vmem:[%s0 + $0x180] sm:$0xff]
  %v64 = vld [vmem:[%s1] sm:$0xf]
  %v65 = vld [vmem:[%s1 + $0x4] sm:$0xf]
  %v66 = vld [vmem:[%s1 + $0x8] sm:$0xf]
  %v67 = vld [vmem:[%s1 + $0xc] sm:$0xf]
  %v68 = vld [vmem:[%s1 + $0x10] sm:$0xf]
  %v69 = vld [vmem:[%s1 + $0x14] sm:$0xf]
  %v70 = vld [vmem:[%s1 + $0x18] sm:$0xf]
  %v71 = vld [vmem:[%s1 + $0x1c] sm:$0xf]
  %v72 = vld [vmem:[%s1 + $0x20] sm:$0xf]
  %v73 = vld [vmem:[%s1 + $0x24] sm:$0xf]
  %v74 = vld [vmem:[%s1 + $0x28] sm:$0xf]
  %v75 = vld [vmem:[%s1 + $0x2c] sm:$0xf]
  %v76 = vld [vmem:[%s1 + $0x30] sm:$0xf]
  %v77 = vld [vmem:[%s1 + $0x34] sm:$0xf]
  %v78 = vld [vmem:[%s1 + $0x38] sm:$0xf]
  %v79 = vld [vmem:[%s1 + $0x3c] sm:$0xf]
  %v80 = vld [vmem:[%s1 + $0x40] sm:$0xf]
  %v81 = vld [vmem:[%s1 + $0x44] sm:$0xf]
  %v82 = vld [vmem:[%s1 + $0x48] sm:$0xf]
  %v83 = vld [vmem:[%s1 + $0x4c] sm:$0xf]
  %v84 = vld [vmem:[%s1 + $0x50] sm:$0xf]
  %v85 = vld [vmem:[%s1 + $0x54] sm:$0xf]
  %v86 = vld [vmem:[%s1 + $0x58] sm:$0xf]
  %v87 = vld [vmem:[%s1 + $0x5c] sm:$0xf]
  %v88 = vld [vmem:[%s1 + $0x60] sm:$0xf]
  %v89 = vld [vmem:[%s2] sm:$0x1]
  %v91 = vperm.slane %v89, 0
  %v142 = vunpack.c.l.b16 %v15
  %v143 = vunpack.c.h.b16 %v15
  %v144 = vunpack.c.l.b16 %v16
  %v145 = vunpack.c.h.b16 %v16
  %v146 = vunpack.c.l.b16 %v17
  %v147 = vunpack.c.h.b16 %v17
  %v148 = vunpack.c.l.b16 %v18
  %v149 = vunpack.c.h.b16 %v18
  %v150 = vunpack.c.l.b16 %v19
  %v151 = vunpack.c.h.b16 %v19
  %v152 = vunpack.c.l.b16 %v20
  %v153 = vunpack.c.h.b16 %v20
  %v154 = vunpack.c.l.b16 %v21
  %v155 = vunpack.c.h.b16 %v21
  %v156 = vunpack.c.l.b16 %v22
  %v157 = vunpack.c.h.b16 %v22
  %v158 = vunpack.c.l.b16 %v23
  %v159 = vunpack.c.h.b16 %v23
  %v160 = vunpack.c.l.b16 %v24
  %v161 = vunpack.c.h.b16 %v24
  %v162 = vunpack.c.l.b16 %v25
  %v163 = vunpack.c.h.b16 %v25
  %v164 = vunpack.c.l.b16 %v26
  %v165 = vunpack.c.h.b16 %v26
  %v166 = vunpack.c.l.b16 %v27
  %v167 = vunpack.c.h.b16 %v27
  %v168 = vunpack.c.l.b16 %v28
  %v169 = vunpack.c.h.b16 %v28
  %v170 = vunpack.c.l.b16 %v29
  %v171 = vunpack.c.h.b16 %v29
  %v172 = vunpack.c.l.b16 %v30
  %v173 = vunpack.c.h.b16 %v30
  %v174 = vunpack.c.l.b16 %v31
  %v175 = vunpack.c.h.b16 %v31
  %v176 = vunpack.c.l.b16 %v32
  %v177 = vunpack.c.h.b16 %v32
  %v178 = vunpack.c.l.b16 %v33
  %v179 = vunpack.c.h.b16 %v33
  %v180 = vunpack.c.l.b16 %v34
  %v181 = vunpack.c.h.b16 %v34
  %v182 = vunpack.c.l.b16 %v35
  %v183 = vunpack.c.h.b16 %v35
  %v184 = vunpack.c.l.b16 %v36
  %v185 = vunpack.c.h.b16 %v36
  %v186 = vunpack.c.l.b16 %v37
  %v187 = vunpack.c.h.b16 %v37
  %v188 = vunpack.c.l.b16 %v38
  %v189 = vunpack.c.h.b16 %v38
  %v190 = vunpack.c.l.b16 %v39
  %v191 = vunpack.c.h.b16 %v39
  %v192 = vunpack.c.l.b16 %v40
  %v193 = vunpack.c.h.b16 %v40
  %v194 = vunpack.c.l.b16 %v41
  %v195 = vunpack.c.h.b16 %v41
  %v196 = vunpack.c.l.b16 %v42
  %v197 = vunpack.c.h.b16 %v42
  %v198 = vunpack.c.l.b16 %v43
  %v199 = vunpack.c.h.b16 %v43
  %v200 = vunpack.c.l.b16 %v44
  %v201 = vunpack.c.h.b16 %v44
  %v202 = vunpack.c.l.b16 %v45
  %v203 = vunpack.c.h.b16 %v45
  %v204 = vunpack.c.l.b16 %v46
  %v205 = vunpack.c.h.b16 %v46
  %v206 = vunpack.c.l.b16 %v47
  %v207 = vunpack.c.h.b16 %v47
  %v208 = vunpack.c.l.b16 %v48
  %v209 = vunpack.c.h.b16 %v48
  %v210 = vunpack.c.l.b16 %v49
  %v211 = vunpack.c.h.b16 %v49
  %v212 = vunpack.c.l.b16 %v50
  %v213 = vunpack.c.h.b16 %v50
  %v214 = vunpack.c.l.b16 %v51
  %v215 = vunpack.c.h.b16 %v51
  %v216 = vunpack.c.l.b16 %v52
  %v217 = vunpack.c.h.b16 %v52
  %v218 = vunpack.c.l.b16 %v53
  %v219 = vunpack.c.h.b16 %v53
  %v220 = vunpack.c.l.b16 %v54
  %v221 = vunpack.c.h.b16 %v54
  %v222 = vunpack.c.l.b16 %v55
  %v223 = vunpack.c.h.b16 %v55
  %v224 = vunpack.c.l.b16 %v56
  %v225 = vunpack.c.h.b16 %v56
  %v226 = vunpack.c.l.b16 %v57
  %v227 = vunpack.c.h.b16 %v57
  %v228 = vunpack.c.l.b16 %v58
  %v229 = vunpack.c.h.b16 %v58
  %v230 = vunpack.c.l.b16 %v59
  %v231 = vunpack.c.h.b16 %v59
  %v232 = vunpack.c.l.b16 %v60
  %v233 = vunpack.c.h.b16 %v60
  %v234 = vunpack.c.l.b16 %v61
  %v235 = vunpack.c.h.b16 %v61
  %v236 = vunpack.c.l.b16 %v62
  %v237 = vunpack.c.h.b16 %v62
  %v238 = vunpack.c.l.b16 %v63
  %v239 = vunpack.c.h.b16 %v63
  %v240 = vpack.c.b16 %v144, %v142
  %v241 = vpack.c.b16 %v145, %v143
  %v242 = vpack.c.b16 %v148, %v146
  %v243 = vpack.c.b16 %v149, %v147
  %v244 = vpack.c.b16 %v152, %v150
  %v245 = vpack.c.b16 %v153, %v151
  %v246 = vpack.c.b16 %v156, %v154
  %v247 = vpack.c.b16 %v157, %v155
  %v248 = vpack.c.b16 %v160, %v158
  %v249 = vpack.c.b16 %v161, %v159
  %v250 = vpack.c.b16 %v164, %v162
  %v251 = vpack.c.b16 %v165, %v163
  %v252 = vpack.c.b16 %v168, %v166
  %v253 = vpack.c.b16 %v169, %v167
  %v254 = vpack.c.b16 %v172, %v170
  %v255 = vpack.c.b16 %v173, %v171
  %v256 = vpack.c.b16 %v176, %v174
  %v257 = vpack.c.b16 %v177, %v175
  %v258 = vpack.c.b16 %v180, %v178
  %v259 = vpack.c.b16 %v181, %v179
  %v260 = vpack.c.b16 %v184, %v182
  %v261 = vpack.c.b16 %v185, %v183
  %v262 = vpack.c.b16 %v188, %v186
  %v263 = vpack.c.b16 %v189, %v187
  %v264 = vpack.c.b16 %v192, %v190
  %v265 = vpack.c.b16 %v193, %v191
  %v266 = vpack.c.b16 %v196, %v194
  %v267 = vpack.c.b16 %v197, %v195
  %v268 = vpack.c.b16 %v200, %v198
  %v269 = vpack.c.b16 %v201, %v199
  %v270 = vpack.c.b16 %v204, %v202
  %v271 = vpack.c.b16 %v205, %v203
  %v272 = vpack.c.b16 %v208, %v206
  %v273 = vpack.c.b16 %v209, %v207
  %v274 = vpack.c.b16 %v212, %v210
  %v275 = vpack.c.b16 %v213, %v211
  %v276 = vpack.c.b16 %v216, %v214
  %v277 = vpack.c.b16 %v217, %v215
  %v278 = vpack.c.b16 %v220, %v218
  %v279 = vpack.c.b16 %v221, %v219
  %v280 = vpack.c.b16 %v224, %v222
  %v281 = vpack.c.b16 %v225, %v223
  %v282 = vpack.c.b16 %v228, %v226
  %v283 = vpack.c.b16 %v229, %v227
  %v284 = vpack.c.b16 %v232, %v230
  %v285 = vpack.c.b16 %v233, %v231
  %v286 = vpack.c.b16 %v236, %v234
  %v287 = vpack.c.b16 %v237, %v235
  %v288 = vpack.c.b16 %v238, %v238
  %v289 = vpack.c.b16 %v239, %v239
  %v340 = vunpack.c.l.b16 %v64
  %v341 = vunpack.c.l.b16 %v65
  %v342 = vunpack.c.l.b16 %v66
  %v343 = vunpack.c.l.b16 %v67
  %v344 = vunpack.c.l.b16 %v68
  %v345 = vunpack.c.l.b16 %v69
  %v346 = vunpack.c.l.b16 %v70
  %v347 = vunpack.c.l.b16 %v71
  %v348 = vunpack.c.l.b16 %v72
  %v349 = vunpack.c.l.b16 %v73
  %v350 = vunpack.c.l.b16 %v74
  %v351 = vunpack.c.l.b16 %v75
  %v352 = vunpack.c.l.b16 %v76
  %v353 = vunpack.c.l.b16 %v77
  %v354 = vunpack.c.l.b16 %v78
  %v355 = vunpack.c.l.b16 %v79
  %v356 = vunpack.c.l.b16 %v80
  %v357 = vunpack.c.l.b16 %v81
  %v358 = vunpack.c.l.b16 %v82
  %v359 = vunpack.c.l.b16 %v83
  %v360 = vunpack.c.l.b16 %v84
  %v361 = vunpack.c.l.b16 %v85
  %v362 = vunpack.c.l.b16 %v86
  %v363 = vunpack.c.l.b16 %v87
  %v364 = vunpack.c.l.b16 %v88
  %v365 = vpack.c.b16 %v341, %v340
  %v366 = vpack.c.b16 %v343, %v342
  %v367 = vpack.c.b16 %v345, %v344
  %v368 = vpack.c.b16 %v347, %v346
  %v369 = vpack.c.b16 %v349, %v348
  %v370 = vpack.c.b16 %v351, %v350
  %v371 = vpack.c.b16 %v353, %v352
  %v372 = vpack.c.b16 %v355, %v354
  %v373 = vpack.c.b16 %v357, %v356
  %v374 = vpack.c.b16 %v359, %v358
  %v375 = vpack.c.b16 %v361, %v360
  %v376 = vpack.c.b16 %v363, %v362
  %v377 = vpack.c.b16 %v364, %v364
  %vm390 = vcmask 588800
  %v392 = vsel %vm390, %v241, 0
  %v395 = vsel %vm390, %v243, 0
  %v398 = vsel %vm390, %v245, 0
  %v401 = vsel %vm390, %v247, 0
  %v404 = vsel %vm390, %v249, 0
  %v407 = vsel %vm390, %v251, 0
  %v410 = vsel %vm390, %v253, 0
  %v413 = vsel %vm390, %v255, 0
  %v416 = vsel %vm390, %v257, 0
  %v419 = vsel %vm390, %v259, 0
  %v422 = vsel %vm390, %v261, 0
  %v425 = vsel %vm390, %v263, 0
  %v428 = vsel %vm390, %v265, 0
  %v431 = vsel %vm390, %v267, 0
  %v434 = vsel %vm390, %v269, 0
  %v437 = vsel %vm390, %v271, 0
  %v440 = vsel %vm390, %v273, 0
  %v443 = vsel %vm390, %v275, 0
  %v446 = vsel %vm390, %v277, 0
  %v449 = vsel %vm390, %v279, 0
  %v452 = vsel %vm390, %v281, 0
  %v455 = vsel %vm390, %v283, 0
  %v458 = vsel %vm390, %v285, 0
  %v461 = vsel %vm390, %v287, 0
  %v464 = vsel %vm390, %v289, 0
  %vm466 = vcmask 1043456
  %v468 = vsel %vm466, %v377, 0
  %470 = vmatpush.bf16.msra.mxu0 %v372
  %471 = vmatpush.bf16.msra.mxu0 %v371
  %472 = vmatpush.bf16.msra.mxu0 %v370
  %473 = vmatpush.bf16.msra.mxu0 %v369
  %474 = vmatpush.bf16.msra.mxu0 %v368
  %475 = vmatpush.bf16.msra.mxu0 %v367
  %476 = vmatpush.bf16.msra.mxu0 %v366
  %477 = vmatpush.bf16.msra.mxu0 %v365
  %478 = vmatmul.bf16.gmra.mxu0 %v240
  %v479 = vpop.f32.mrf.mxu0
  %v480 = vadd.f32 %v91, %v479
  %v481 = vpop.f32.mrf.mxu0
  %v482 = vadd.f32 %v91, %v481
  %483 = vmatmul.bf16.gmra.mxu0 %v242
  %v484 = vpop.f32.mrf.mxu0
  %v485 = vadd.f32 %v91, %v484
  %v486 = vpop.f32.mrf.mxu0
  %v487 = vadd.f32 %v91, %v486
  %488 = vmatmul.bf16.gmra.mxu0 %v244
  %v489 = vpop.f32.mrf.mxu0
  %v490 = vadd.f32 %v91, %v489
  %v491 = vpop.f32.mrf.mxu0
  %v492 = vadd.f32 %v91, %v491
  %493 = vmatmul.bf16.gmra.mxu0 %v246
  %v494 = vpop.f32.mrf.mxu0
  %v495 = vadd.f32 %v91, %v494
  %v496 = vpop.f32.mrf.mxu0
  %v497 = vadd.f32 %v91, %v496
  %498 = vmatmul.bf16.gmra.mxu0 %v248
  %v499 = vpop.f32.mrf.mxu0
  %v500 = vadd.f32 %v91, %v499
  %v501 = vpop.f32.mrf.mxu0
  %v502 = vadd.f32 %v91, %v501
  %503 = vmatmul.bf16.gmra.mxu0 %v250
  %v504 = vpop.f32.mrf.mxu0
  %v505 = vadd.f32 %v91, %v504
  %v506 = vpop.f32.mrf.mxu0
  %v507 = vadd.f32 %v91, %v506
  %508 = vmatmul.bf16.gmra.mxu0 %v252
  %v509 = vpop.f32.mrf.mxu0
  %v510 = vadd.f32 %v91, %v509
  %v511 = vpop.f32.mrf.mxu0
  %v512 = vadd.f32 %v91, %v511
  %513 = vmatmul.bf16.gmra.mxu0 %v254
  %v514 = vpop.f32.mrf.mxu0
  %v515 = vadd.f32 %v91, %v514
  %v516 = vpop.f32.mrf.mxu0
  %v517 = vadd.f32 %v91, %v516
  %518 = vmatmul.bf16.gmra.mxu0 %v256
  %v519 = vpop.f32.mrf.mxu0
  %v520 = vadd.f32 %v91, %v519
  %v521 = vpop.f32.mrf.mxu0
  %v522 = vadd.f32 %v91, %v521
  %523 = vmatmul.bf16.gmra.mxu0 %v258
  %v524 = vpop.f32.mrf.mxu0
  %v525 = vadd.f32 %v91, %v524
  %v526 = vpop.f32.mrf.mxu0
  %v527 = vadd.f32 %v91, %v526
  %528 = vmatmul.bf16.gmra.mxu0 %v260
  %v529 = vpop.f32.mrf.mxu0
  %v530 = vadd.f32 %v91, %v529
  %v531 = vpop.f32.mrf.mxu0
  %v532 = vadd.f32 %v91, %v531
  %533 = vmatmul.bf16.gmra.mxu0 %v262
  %v534 = vpop.f32.mrf.mxu0
  %v535 = vadd.f32 %v91, %v534
  %v536 = vpop.f32.mrf.mxu0
  %v537 = vadd.f32 %v91, %v536
  %538 = vmatmul.bf16.gmra.mxu0 %v264
  %v539 = vpop.f32.mrf.mxu0
  %v540 = vadd.f32 %v91, %v539
  %v541 = vpop.f32.mrf.mxu0
  %v542 = vadd.f32 %v91, %v541
  %543 = vmatmul.bf16.gmra.mxu0 %v266
  %v544 = vpop.f32.mrf.mxu0
  %v545 = vadd.f32 %v91, %v544
  %v546 = vpop.f32.mrf.mxu0
  %v547 = vadd.f32 %v91, %v546
  %548 = vmatmul.bf16.gmra.mxu0 %v268
  %v549 = vpop.f32.mrf.mxu0
  %v550 = vadd.f32 %v91, %v549
  %v551 = vpop.f32.mrf.mxu0
  %v552 = vadd.f32 %v91, %v551
  %553 = vmatmul.bf16.gmra.mxu0 %v270
  %v554 = vpop.f32.mrf.mxu0
  %v555 = vadd.f32 %v91, %v554
  %v556 = vpop.f32.mrf.mxu0
  %v557 = vadd.f32 %v91, %v556
  %558 = vmatmul.bf16.gmra.mxu0 %v272
  %v559 = vpop.f32.mrf.mxu0
  %v560 = vadd.f32 %v91, %v559
  %v561 = vpop.f32.mrf.mxu0
  %v562 = vadd.f32 %v91, %v561
  %563 = vmatmul.bf16.gmra.mxu0 %v274
  %v564 = vpop.f32.mrf.mxu0
  %v565 = vadd.f32 %v91, %v564
  %v566 = vpop.f32.mrf.mxu0
  %v567 = vadd.f32 %v91, %v566
  %568 = vmatmul.bf16.gmra.mxu0 %v276
  %v569 = vpop.f32.mrf.mxu0
  %v570 = vadd.f32 %v91, %v569
  %v571 = vpop.f32.mrf.mxu0
  %v572 = vadd.f32 %v91, %v571
  %573 = vmatmul.bf16.gmra.mxu0 %v278
  %v574 = vpop.f32.mrf.mxu0
  %v575 = vadd.f32 %v91, %v574
  %v576 = vpop.f32.mrf.mxu0
  %v577 = vadd.f32 %v91, %v576
  %578 = vmatmul.bf16.gmra.mxu0 %v280
  %v579 = vpop.f32.mrf.mxu0
  %v580 = vadd.f32 %v91, %v579
  %v581 = vpop.f32.mrf.mxu0
  %v582 = vadd.f32 %v91, %v581
  %583 = vmatmul.bf16.gmra.mxu0 %v282
  %v584 = vpop.f32.mrf.mxu0
  %v585 = vadd.f32 %v91, %v584
  %v586 = vpop.f32.mrf.mxu0
  %v587 = vadd.f32 %v91, %v586
  %588 = vmatmul.bf16.gmra.mxu0 %v284
  %v589 = vpop.f32.mrf.mxu0
  %v590 = vadd.f32 %v91, %v589
  %v591 = vpop.f32.mrf.mxu0
  %v592 = vadd.f32 %v91, %v591
  %593 = vmatmul.bf16.gmra.mxu0 %v286
  %v594 = vpop.f32.mrf.mxu0
  %v595 = vadd.f32 %v91, %v594
  %v596 = vpop.f32.mrf.mxu0
  %v597 = vadd.f32 %v91, %v596
  %598 = vmatmul.bf16.gmra.mxu0 %v288
  %v599 = vpop.f32.mrf.mxu0
  %v600 = vadd.f32 %v91, %v599
  %v601 = vpop.f32.mrf.mxu0
  %602 = vdwg.mxu0
  %603 = vmatpush.bf16.msra.mxu0 0
  %604 = vmatpush.bf16.msra.mxu0 0
  %605 = vmatpush.bf16.msra.mxu0 0
  %606 = vmatpush.bf16.msra.mxu0 %v468
  %607 = vmatpush.bf16.msra.mxu0 %v376
  %608 = vmatpush.bf16.msra.mxu0 %v375
  %609 = vmatpush.bf16.msra.mxu0 %v374
  %610 = vmatpush.bf16.msra.mxu0 %v373
  %611 = vmatmul.bf16.gmra.mxu0 %v392
  %v612 = vpop.f32.mrf.mxu0
  %v613 = vadd.f32 %v480, %v612
  %v614 = vpop.f32.mrf.mxu0
  %v615 = vadd.f32 %v482, %v614
  %616 = vmatmul.bf16.gmra.mxu0 %v395
  %v617 = vpop.f32.mrf.mxu0
  %v618 = vadd.f32 %v485, %v617
  %v619 = vpop.f32.mrf.mxu0
  %v620 = vadd.f32 %v487, %v619
  %621 = vmatmul.bf16.gmra.mxu0 %v398
  %v622 = vpop.f32.mrf.mxu0
  %v623 = vadd.f32 %v490, %v622
  %v624 = vpop.f32.mrf.mxu0
  %v625 = vadd.f32 %v492, %v624
  %626 = vmatmul.bf16.gmra.mxu0 %v401
  %v627 = vpop.f32.mrf.mxu0
  %v628 = vadd.f32 %v495, %v627
  %v629 = vpop.f32.mrf.mxu0
  %v630 = vadd.f32 %v497, %v629
  %631 = vmatmul.bf16.gmra.mxu0 %v404
  %v632 = vpop.f32.mrf.mxu0
  %v633 = vadd.f32 %v500, %v632
  %v634 = vpop.f32.mrf.mxu0
  %v635 = vadd.f32 %v502, %v634
  %636 = vmatmul.bf16.gmra.mxu0 %v407
  %v637 = vpop.f32.mrf.mxu0
  %v638 = vadd.f32 %v505, %v637
  %v639 = vpop.f32.mrf.mxu0
  %v640 = vadd.f32 %v507, %v639
  %641 = vmatmul.bf16.gmra.mxu0 %v410
  %v642 = vpop.f32.mrf.mxu0
  %v643 = vadd.f32 %v510, %v642
  %v644 = vpop.f32.mrf.mxu0
  %v645 = vadd.f32 %v512, %v644
  %646 = vmatmul.bf16.gmra.mxu0 %v413
  %v647 = vpop.f32.mrf.mxu0
  %v648 = vadd.f32 %v515, %v647
  %v649 = vpop.f32.mrf.mxu0
  %v650 = vadd.f32 %v517, %v649
  %651 = vmatmul.bf16.gmra.mxu0 %v416
  %v652 = vpop.f32.mrf.mxu0
  %v653 = vadd.f32 %v520, %v652
  %v654 = vpop.f32.mrf.mxu0
  %v655 = vadd.f32 %v522, %v654
  %656 = vmatmul.bf16.gmra.mxu0 %v419
  %v657 = vpop.f32.mrf.mxu0
  %v658 = vadd.f32 %v525, %v657
  %v659 = vpop.f32.mrf.mxu0
  %v660 = vadd.f32 %v527, %v659
  %661 = vmatmul.bf16.gmra.mxu0 %v422
  %v662 = vpop.f32.mrf.mxu0
  %v663 = vadd.f32 %v530, %v662
  %v664 = vpop.f32.mrf.mxu0
  %v665 = vadd.f32 %v532, %v664
  %666 = vmatmul.bf16.gmra.mxu0 %v425
  %v667 = vpop.f32.mrf.mxu0
  %v668 = vadd.f32 %v535, %v667
  %v669 = vpop.f32.mrf.mxu0
  %v670 = vadd.f32 %v537, %v669
  %671 = vmatmul.bf16.gmra.mxu0 %v428
  %v672 = vpop.f32.mrf.mxu0
  %v673 = vadd.f32 %v540, %v672
  %v674 = vpop.f32.mrf.mxu0
  %v675 = vadd.f32 %v542, %v674
  %676 = vmatmul.bf16.gmra.mxu0 %v431
  %v677 = vpop.f32.mrf.mxu0
  %v678 = vadd.f32 %v545, %v677
  %v679 = vpop.f32.mrf.mxu0
  %v680 = vadd.f32 %v547, %v679
  %681 = vmatmul.bf16.gmra.mxu0 %v434
  %v682 = vpop.f32.mrf.mxu0
  %v683 = vadd.f32 %v550, %v682
  %v684 = vpop.f32.mrf.mxu0
  %v685 = vadd.f32 %v552, %v684
  %686 = vmatmul.bf16.gmra.mxu0 %v437
  %v687 = vpop.f32.mrf.mxu0
  %v688 = vadd.f32 %v555, %v687
  %v689 = vpop.f32.mrf.mxu0
  %v690 = vadd.f32 %v557, %v689
  %691 = vmatmul.bf16.gmra.mxu0 %v440
  %v692 = vpop.f32.mrf.mxu0
  %v693 = vadd.f32 %v560, %v692
  %v694 = vpop.f32.mrf.mxu0
  %v695 = vadd.f32 %v562, %v694
  %696 = vmatmul.bf16.gmra.mxu0 %v443
  %v697 = vpop.f32.mrf.mxu0
  %v698 = vadd.f32 %v565, %v697
  %v699 = vpop.f32.mrf.mxu0
  %v700 = vadd.f32 %v567, %v699
  %701 = vmatmul.bf16.gmra.mxu0 %v446
  %v702 = vpop.f32.mrf.mxu0
  %v703 = vadd.f32 %v570, %v702
  %v704 = vpop.f32.mrf.mxu0
  %v705 = vadd.f32 %v572, %v704
  %706 = vmatmul.bf16.gmra.mxu0 %v449
  %v707 = vpop.f32.mrf.mxu0
  %v708 = vadd.f32 %v575, %v707
  %v709 = vpop.f32.mrf.mxu0
  %v710 = vadd.f32 %v577, %v709
  %711 = vmatmul.bf16.gmra.mxu0 %v452
  %v712 = vpop.f32.mrf.mxu0
  %v713 = vadd.f32 %v580, %v712
  %v714 = vpop.f32.mrf.mxu0
  %v715 = vadd.f32 %v582, %v714
  %716 = vmatmul.bf16.gmra.mxu0 %v455
  %v717 = vpop.f32.mrf.mxu0
  %v718 = vadd.f32 %v585, %v717
  %v719 = vpop.f32.mrf.mxu0
  %v720 = vadd.f32 %v587, %v719
  %721 = vmatmul.bf16.gmra.mxu0 %v458
  %v722 = vpop.f32.mrf.mxu0
  %v723 = vadd.f32 %v590, %v722
  %v724 = vpop.f32.mrf.mxu0
  %v725 = vadd.f32 %v592, %v724
  %726 = vmatmul.bf16.gmra.mxu0 %v461
  %v727 = vpop.f32.mrf.mxu0
  %v728 = vadd.f32 %v595, %v727
  %v729 = vpop.f32.mrf.mxu0
  %v730 = vadd.f32 %v597, %v729
  %731 = vmatmul.bf16.gmra.mxu0 %v464
  %v732 = vpop.f32.mrf.mxu0
  %v733 = vadd.f32 %v600, %v732
  %v734 = vpop.f32.mrf.mxu0
  %735 = vdwg.mxu0
  %v736 = vmax.f32 %v613, 0.0
  %v737 = vmax.f32 %v615, 0.0
  %v738 = vmax.f32 %v618, 0.0
  %v739 = vmax.f32 %v620, 0.0
  %v740 = vmax.f32 %v623, 0.0
  %v741 = vmax.f32 %v625, 0.0
  %v742 = vmax.f32 %v628, 0.0
  %v743 = vmax.f32 %v630, 0.0
  %v744 = vmax.f32 %v633, 0.0
  %v745 = vmax.f32 %v635, 0.0
  %v746 = vmax.f32 %v638, 0.0
  %v747 = vmax.f32 %v640, 0.0
  %v748 = vmax.f32 %v643, 0.0
  %v749 = vmax.f32 %v645, 0.0
  %v750 = vmax.f32 %v648, 0.0
  %v751 = vmax.f32 %v650, 0.0
  %v752 = vmax.f32 %v653, 0.0
  %v753 = vmax.f32 %v655, 0.0
  %v754 = vmax.f32 %v658, 0.0
  %v755 = vmax.f32 %v660, 0.0
  %v756 = vmax.f32 %v663, 0.0
  %v757 = vmax.f32 %v665, 0.0
  %v758 = vmax.f32 %v668, 0.0
  %v759 = vmax.f32 %v670, 0.0
  %v760 = vmax.f32 %v673, 0.0
  %v761 = vmax.f32 %v675, 0.0
  %v762 = vmax.f32 %v678, 0.0
  %v763 = vmax.f32 %v680, 0.0
  %v764 = vmax.f32 %v683, 0.0
  %v765 = vmax.f32 %v685, 0.0
  %v766 = vmax.f32 %v688, 0.0
  %v767 = vmax.f32 %v690, 0.0
  %v768 = vmax.f32 %v693, 0.0
  %v769 = vmax.f32 %v695, 0.0
  %v770 = vmax.f32 %v698, 0.0
  %v771 = vmax.f32 %v700, 0.0
  %v772 = vmax.f32 %v703, 0.0
  %v773 = vmax.f32 %v705, 0.0
  %v774 = vmax.f32 %v708, 0.0
  %v775 = vmax.f32 %v710, 0.0
  %v776 = vmax.f32 %v713, 0.0
  %v777 = vmax.f32 %v715, 0.0
  %v778 = vmax.f32 %v718, 0.0
  %v779 = vmax.f32 %v720, 0.0
  %v780 = vmax.f32 %v723, 0.0
  %v781 = vmax.f32 %v725, 0.0
  %v782 = vmax.f32 %v728, 0.0
  %v783 = vmax.f32 %v730, 0.0
  %v784 = vmax.f32 %v733, 0.0
  %v785 = vpack.c.bf16 %v736, %v736
  %v786 = vpack.c.bf16 %v737, %v737
  %v787 = vpack.c.bf16 %v738, %v738
  %v788 = vpack.c.bf16 %v739, %v739
  %v789 = vpack.c.bf16 %v740, %v740
  %v790 = vpack.c.bf16 %v741, %v741
  %v791 = vpack.c.bf16 %v742, %v742
  %v792 = vpack.c.bf16 %v743, %v743
  %v793 = vpack.c.bf16 %v744, %v744
  %v794 = vpack.c.bf16 %v745, %v745
  %v795 = vpack.c.bf16 %v746, %v746
  %v796 = vpack.c.bf16 %v747, %v747
  %v797 = vpack.c.bf16 %v748, %v748
  %v798 = vpack.c.bf16 %v749, %v749
  %v799 = vpack.c.bf16 %v750, %v750
  %v800 = vpack.c.bf16 %v751, %v751
  %v801 = vpack.c.bf16 %v752, %v752
  %v802 = vpack.c.bf16 %v753, %v753
  %v803 = vpack.c.bf16 %v754, %v754
  %v804 = vpack.c.bf16 %v755, %v755
  %v805 = vpack.c.bf16 %v756, %v756
  %v806 = vpack.c.bf16 %v757, %v757
  %v807 = vpack.c.bf16 %v758, %v758
  %v808 = vpack.c.bf16 %v759, %v759
  %v809 = vpack.c.bf16 %v760, %v760
  %v810 = vpack.c.bf16 %v761, %v761
  %v811 = vpack.c.bf16 %v762, %v762
  %v812 = vpack.c.bf16 %v763, %v763
  %v813 = vpack.c.bf16 %v764, %v764
  %v814 = vpack.c.bf16 %v765, %v765
  %v815 = vpack.c.bf16 %v766, %v766
  %v816 = vpack.c.bf16 %v767, %v767
  %v817 = vpack.c.bf16 %v768, %v768
  %v818 = vpack.c.bf16 %v769, %v769
  %v819 = vpack.c.bf16 %v770, %v770
  %v820 = vpack.c.bf16 %v771, %v771
  %v821 = vpack.c.bf16 %v772, %v772
  %v822 = vpack.c.bf16 %v773, %v773
  %v823 = vpack.c.bf16 %v774, %v774
  %v824 = vpack.c.bf16 %v775, %v775
  %v825 = vpack.c.bf16 %v776, %v776
  %v826 = vpack.c.bf16 %v777, %v777
  %v827 = vpack.c.bf16 %v778, %v778
  %v828 = vpack.c.bf16 %v779, %v779
  %v829 = vpack.c.bf16 %v780, %v780
  %v830 = vpack.c.bf16 %v781, %v781
  %v831 = vpack.c.bf16 %v782, %v782
  %v832 = vpack.c.bf16 %v783, %v783
  %v833 = vpack.c.bf16 %v784, %v784
  %834 = vst [vmem:[%s3] sm:$0xf] %v785
  %835 = vst [vmem:[%s3 + $0x4] sm:$0xf] %v786
  %836 = vst [vmem:[%s3 + $0x8] sm:$0xf] %v787
  %837 = vst [vmem:[%s3 + $0xc] sm:$0xf] %v788
  %838 = vst [vmem:[%s3 + $0x10] sm:$0xf] %v789
  %839 = vst [vmem:[%s3 + $0x14] sm:$0xf] %v790
  %840 = vst [vmem:[%s3 + $0x18] sm:$0xf] %v791
  %841 = vst [vmem:[%s3 + $0x1c] sm:$0xf] %v792
  %842 = vst [vmem:[%s3 + $0x20] sm:$0xf] %v793
  %843 = vst [vmem:[%s3 + $0x24] sm:$0xf] %v794
  %844 = vst [vmem:[%s3 + $0x28] sm:$0xf] %v795
  %845 = vst [vmem:[%s3 + $0x2c] sm:$0xf] %v796
  %846 = vst [vmem:[%s3 + $0x30] sm:$0xf] %v797
  %847 = vst [vmem:[%s3 + $0x34] sm:$0xf] %v798
  %848 = vst [vmem:[%s3 + $0x38] sm:$0xf] %v799
  %849 = vst [vmem:[%s3 + $0x3c] sm:$0xf] %v800
  %850 = vst [vmem:[%s3 + $0x40] sm:$0xf] %v801
  %851 = vst [vmem:[%s3 + $0x44] sm:$0xf] %v802
  %852 = vst [vmem:[%s3 + $0x48] sm:$0xf] %v803
  %853 = vst [vmem:[%s3 + $0x4c] sm:$0xf] %v804
  %854 = vst [vmem:[%s3 + $0x50] sm:$0xf] %v805
  %855 = vst [vmem:[%s3 + $0x54] sm:$0xf] %v806
  %856 = vst [vmem:[%s3 + $0x58] sm:$0xf] %v807
  %857 = vst [vmem:[%s3 + $0x5c] sm:$0xf] %v808
  %858 = vst [vmem:[%s3 + $0x60] sm:$0xf] %v809
  %859 = vst [vmem:[%s3 + $0x64] sm:$0xf] %v810
  %860 = vst [vmem:[%s3 + $0x68] sm:$0xf] %v811
  %861 = vst [vmem:[%s3 + $0x6c] sm:$0xf] %v812
  %862 = vst [vmem:[%s3 + $0x70] sm:$0xf] %v813
  %863 = vst [vmem:[%s3 + $0x74] sm:$0xf] %v814
  %864 = vst [vmem:[%s3 + $0x78] sm:$0xf] %v815
  %865 = vst [vmem:[%s3 + $0x7c] sm:$0xf] %v816
  %866 = vst [vmem:[%s3 + $0x80] sm:$0xf] %v817
  %867 = vst [vmem:[%s3 + $0x84] sm:$0xf] %v818
  %868 = vst [vmem:[%s3 + $0x88] sm:$0xf] %v819
  %869 = vst [vmem:[%s3 + $0x8c] sm:$0xf] %v820
  %870 = vst [vmem:[%s3 + $0x90] sm:$0xf] %v821
  %871 = vst [vmem:[%s3 + $0x94] sm:$0xf] %v822
  %872 = vst [vmem:[%s3 + $0x98] sm:$0xf] %v823
  %873 = vst [vmem:[%s3 + $0x9c] sm:$0xf] %v824
  %874 = vst [vmem:[%s3 + $0xa0] sm:$0xf] %v825
  %875 = vst [vmem:[%s3 + $0xa4] sm:$0xf] %v826
  %876 = vst [vmem:[%s3 + $0xa8] sm:$0xf] %v827
  %877 = vst [vmem:[%s3 + $0xac] sm:$0xf] %v828
  %878 = vst [vmem:[%s3 + $0xb0] sm:$0xf] %v829
  %879 = vst [vmem:[%s3 + $0xb4] sm:$0xf] %v830
  %880 = vst [vmem:[%s3 + $0xb8] sm:$0xf] %v831
  %881 = vst [vmem:[%s3 + $0xbc] sm:$0xf] %v832
  %882 = vst [vmem:[%s3 + $0xc0] sm:$0xf] %v833
  // Predicated region
  $region14: #{cnn_net_forward.3} parent=0 // pred_check
    _
  $region15: #{cnn_net_forward.3} parent=0 // pred_check_branch
    %884 = sbr.rel (0) target = $region17
  $region16: #{cnn_net_forward.3} parent=0 // pred_region
    _
  $region17: #{cnn_net_forward.3} parent=0 // pred_fallthru
    _
  // Predicated region
  $region18: #{cnn_net_forward.3} parent=0 // pred_check
    _
  $region19: #{cnn_net_forward.3} parent=0 // pred_check_branch
    %886 = sbr.rel (0) target = $region21
  $region20: #{cnn_net_forward.3} parent=0 // pred_region
    _
  $region21: #{cnn_net_forward.3} parent=0 // pred_fallthru
    _

// kernel: cnn_net_forward.4
$region0: #{cnn_net_forward.4}
  #allocation0 [shape = 'u32[]', space=smem, size = 0x4, offset = 0x4, fixed_abs, tag = 'smem constant byte address 0x4 - core index']
  #allocation1 [shape = 'u32[72,128]{1,0:T(1,128)}', space=vmem, size = 0x9000, scoped, tag = 'internal scratch']
  %s0 = inlined_call_operand.vmem [shape: bf16[392,1152], index: 0, kind: input, shape index: {}]
  %s1 = inlined_call_operand.vmem [shape: bf16[1152,128], index: 1, kind: input, shape index: {}]
  %s2 = inlined_call_operand.vmem [shape: f32[1,128], index: 2, kind: input, shape index: {}]
  %s3 = inlined_call_operand.vmem [shape: bf16[392,128], index: 3, kind: output, shape index: {}]
  %s4 = sld [smem:[#allocation0]]
  $region22: #{cnn_net_forward.4} parent=0
    _
  %s6 = ssub.s32 1, %s4
  %s7 = scalar_select 0, %s6, %s4
  // Predicated region
  $region2: #{cnn_net_forward.4} parent=0 // pred_check
    _
  $region3: #{cnn_net_forward.4} parent=0 // pred_check_branch
    %9 = sbr.rel (0) target = $region5
  $region4: #{cnn_net_forward.4} parent=0 // pred_region
    _
  $region5: #{cnn_net_forward.4} parent=0 // pred_fallthru
    _
  // Predicated region
  $region6: #{cnn_net_forward.4} parent=0 // pred_check
    _
  $region7: #{cnn_net_forward.4} parent=0 // pred_check_branch
    %11 = sbr.rel (0) target = $region9
  $region8: #{cnn_net_forward.4} parent=0 // pred_region
    _
  $region9: #{cnn_net_forward.4} parent=0 // pred_fallthru
    _
  // Predicated region
  $region10: #{cnn_net_forward.4} parent=0 // pred_check
    _
  $region11: #{cnn_net_forward.4} parent=0 // pred_check_branch
    %13 = sbr.rel (0) target = $region13
  $region12: #{cnn_net_forward.4} parent=0 // pred_region
    _
  $region13: #{cnn_net_forward.4} parent=0 // pred_fallthru
    _
  %v14 = vld [vmem:[%s0] sm:$0xff]
  %v15 = vld [vmem:[%s0 + $0x8] sm:$0xff]
  %v16 = vld [vmem:[%s0 + $0x10] sm:$0xff]
  %v17 = vld [vmem:[%s0 + $0x18] sm:$0xff]
  %v18 = vld [vmem:[%s0 + $0x20] sm:$0xf]
  %v19 = vld [vmem:[%s0 + $0x24] sm:$0xff]
  %v20 = vld [vmem:[%s0 + $0x2c] sm:$0xff]
  %v21 = vld [vmem:[%s0 + $0x34] sm:$0xff]
  %v22 = vld [vmem:[%s0 + $0x3c] sm:$0xff]
  %v23 = vld [vmem:[%s0 + $0x44] sm:$0xf]
  %v24 = vld [vmem:[%s0 + $0x48] sm:$0xff]
  %v25 = vld [vmem:[%s0 + $0x50] sm:$0xff]
  %v26 = vld [vmem:[%s0 + $0x58] sm:$0xff]
  %v27 = vld [vmem:[%s0 + $0x60] sm:$0xff]
  %v28 = vld [vmem:[%s0 + $0x68] sm:$0xf]
  %v29 = vld [vmem:[%s0 + $0x6c] sm:$0xff]
  %v30 = vld [vmem:[%s0 + $0x74] sm:$0xff]
  %v31 = vld [vmem:[%s0 + $0x7c] sm:$0xff]
  %v32 = vld [vmem:[%s0 + $0x84] sm:$0xff]
  %v33 = vld [vmem:[%s0 + $0x8c] sm:$0xf]
  %v34 = vld [vmem:[%s0 + $0x90] sm:$0xff]
  %v35 = vld [vmem:[%s0 + $0x98] sm:$0xff]
  %v36 = vld [vmem:[%s0 + $0xa0] sm:$0xff]
  %v37 = vld [vmem:[%s0 + $0xa8] sm:$0xff]
  %v38 = vld [vmem:[%s0 + $0xb0] sm:$0xf]
  %v39 = vld [vmem:[%s0 + $0xb4] sm:$0xff]
  %v40 = vld [vmem:[%s0 + $0xbc] sm:$0xff]
  %v41 = vld [vmem:[%s0 + $0xc4] sm:$0xff]
  %v42 = vld [vmem:[%s0 + $0xcc] sm:$0xff]
  %v43 = vld [vmem:[%s0 + $0xd4] sm:$0xf]
  %v44 = vld [vmem:[%s0 + $0xd8] sm:$0xff]
  %v45 = vld [vmem:[%s0 + $0xe0] sm:$0xff]
  %v46 = vld [vmem:[%s0 + $0xe8] sm:$0xff]
  %v47 = vld [vmem:[%s0 + $0xf0] sm:$0xff]
  %v48 = vld [vmem:[%s0 + $0xf8] sm:$0xf]
  %v49 = vld [vmem:[%s0 + $0xfc] sm:$0xff]
  %v50 = vld [vmem:[%s0 + $0x104] sm:$0xff]
  %v51 = vld [vmem:[%s0 + $0x10c] sm:$0xff]
  %v52 = vld [vmem:[%s0 + $0x114] sm:$0xff]
  %v53 = vld [vmem:[%s0 + $0x11c] sm:$0xf]
  %v54 = vld [vmem:[%s0 + $0x120] sm:$0xff]
  %v55 = vld [vmem:[%s0 + $0x128] sm:$0xff]
  %v56 = vld [vmem:[%s0 + $0x130] sm:$0xff]
  %v57 = vld [vmem:[%s0 + $0x138] sm:$0xff]
  %v58 = vld [vmem:[%s0 + $0x140] sm:$0xf]
  %v59 = vld [vmem:[%s0 + $0x144] sm:$0xff]
  %v60 = vld [vmem:[%s0 + $0x14c] sm:$0xff]
  %v61 = vld [vmem:[%s0 + $0x154] sm:$0xff]
  %v62 = vld [vmem:[%s0 + $0x15c] sm:$0xff]
  %v63 = vld [vmem:[%s0 + $0x164] sm:$0xf]
  %v64 = vld [vmem:[%s0 + $0x168] sm:$0xff]
  %v65 = vld [vmem:[%s0 + $0x170] sm:$0xff]
  %v66 = vld [vmem:[%s0 + $0x178] sm:$0xff]
  %v67 = vld [vmem:[%s0 + $0x180] sm:$0xff]
  %v68 = vld [vmem:[%s0 + $0x188] sm:$0xf]
  %v69 = vld [vmem:[%s0 + $0x18c] sm:$0xff]
  %v70 = vld [vmem:[%s0 + $0x194] sm:$0xff]
  %v71 = vld [vmem:[%s0 + $0x19c] sm:$0xff]
  %v72 = vld [vmem:[%s0 + $0x1a4] sm:$0xff]
  %v73 = vld [vmem:[%s0 + $0x1ac] sm:$0xf]
  %v74 = vld [vmem:[%s0 + $0x1b0] sm:$0xff]
  %v75 = vld [vmem:[%s0 + $0x1b8] sm:$0xff]
  %v76 = vld [vmem:[%s0 + $0x1c0] sm:$0xff]
  %v77 = vld [vmem:[%s0 + $0x1c8] sm:$0xff]
  %v78 = vld [vmem:[%s0 + $0x1d0] sm:$0xf]
  %v79 = vld [vmem:[%s0 + $0x1d4] sm:$0xff]
  %v80 = vld [vmem:[%s0 + $0x1dc] sm:$0xff]
  %v81 = vld [vmem:[%s0 + $0x1e4] sm:$0xff]
  %v82 = vld [vmem:[%s0 + $0x1ec] sm:$0xff]
  %v83 = vld [vmem:[%s0 + $0x1f4] sm:$0xf]
  %v84 = vld [vmem:[%s0 + $0x1f8] sm:$0xff]
  %v85 = vld [vmem:[%s0 + $0x200] sm:$0xff]
  %v86 = vld [vmem:[%s0 + $0x208] sm:$0xff]
  %v87 = vld [vmem:[%s0 + $0x210] sm:$0xff]
  %v88 = vld [vmem:[%s0 + $0x218] sm:$0xf]
  %v89 = vld [vmem:[%s0 + $0x21c] sm:$0xff]
  %v90 = vld [vmem:[%s0 + $0x224] sm:$0xff]
  %v91 = vld [vmem:[%s0 + $0x22c] sm:$0xff]
  %v92 = vld [vmem:[%s0 + $0x234] sm:$0xff]
  %v93 = vld [vmem:[%s0 + $0x23c] sm:$0xf]
  %v94 = vld [vmem:[%s0 + $0x240] sm:$0xff]
  %v95 = vld [vmem:[%s0 + $0x248] sm:$0xff]
  %v96 = vld [vmem:[%s0 + $0x250] sm:$0xff]
  %v97 = vld [vmem:[%s0 + $0x258] sm:$0xff]
  %v98 = vld [vmem:[%s0 + $0x260] sm:$0xf]
  %v99 = vld [vmem:[%s0 + $0x264] sm:$0xff]
  %v100 = vld [vmem:[%s0 + $0x26c] sm:$0xff]
  %v101 = vld [vmem:[%s0 + $0x274] sm:$0xff]
  %v102 = vld [vmem:[%s0 + $0x27c] sm:$0xff]
  %v103 = vld [vmem:[%s0 + $0x284] sm:$0xf]
  %v104 = vld [vmem:[%s0 + $0x288] sm:$0xff]
  %v105 = vld [vmem:[%s0 + $0x290] sm:$0xff]
  %v106 = vld [vmem:[%s0 + $0x298] sm:$0xff]
  %v107 = vld [vmem:[%s0 + $0x2a0] sm:$0xff]
  %v108 = vld [vmem:[%s0 + $0x2a8] sm:$0xf]
  %v109 = vld [vmem:[%s0 + $0x2ac] sm:$0xff]
  %v110 = vld [vmem:[%s0 + $0x2b4] sm:$0xff]
  %v111 = vld [vmem:[%s0 + $0x2bc] sm:$0xff]
  %v112 = vld [vmem:[%s0 + $0x2c4] sm:$0xff]
  %v113 = vld [vmem:[%s0 + $0x2cc] sm:$0xf]
  %v114 = vld [vmem:[%s0 + $0x2d0] sm:$0xff]
  %v115 = vld [vmem:[%s0 + $0x2d8] sm:$0xff]
  %v116 = vld [vmem:[%s0 + $0x2e0] sm:$0xff]
  %v117 = vld [vmem:[%s0 + $0x2e8] sm:$0xff]
  %v118 = vld [vmem:[%s0 + $0x2f0] sm:$0xf]
  %v119 = vld [vmem:[%s0 + $0x2f4] sm:$0xff]
  %v120 = vld [vmem:[%s0 + $0x2fc] sm:$0xff]
  %v121 = vld [vmem:[%s0 + $0x304] sm:$0xff]
  %v122 = vld [vmem:[%s0 + $0x30c] sm:$0xff]
  %v123 = vld [vmem:[%s0 + $0x314] sm:$0xf]
  %v124 = vld [vmem:[%s0 + $0x318] sm:$0xff]
  %v125 = vld [vmem:[%s0 + $0x320] sm:$0xff]
  %v126 = vld [vmem:[%s0 + $0x328] sm:$0xff]
  %v127 = vld [vmem:[%s0 + $0x330] sm:$0xff]
  %v128 = vld [vmem:[%s0 + $0x338] sm:$0xf]
  %v129 = vld [vmem:[%s0 + $0x33c] sm:$0xff]
  %v130 = vld [vmem:[%s0 + $0x344] sm:$0xff]
  %v131 = vld [vmem:[%s0 + $0x34c] sm:$0xff]
  %v132 = vld [vmem:[%s0 + $0x354] sm:$0xff]
  %v133 = vld [vmem:[%s0 + $0x35c] sm:$0xf]
  %v134 = vld [vmem:[%s0 + $0x360] sm:$0xff]
  %v135 = vld [vmem:[%s0 + $0x368] sm:$0xff]
  %v136 = vld [vmem:[%s0 + $0x370] sm:$0xff]
  %v137 = vld [vmem:[%s0 + $0x378] sm:$0xff]
  %v138 = vld [vmem:[%s0 + $0x380] sm:$0xf]
  %v139 = vld [vmem:[%s0 + $0x384] sm:$0xff]
  %v140 = vld [vmem:[%s0 + $0x38c] sm:$0xff]
  %v141 = vld [vmem:[%s0 + $0x394] sm:$0xff]
  %v142 = vld [vmem:[%s0 + $0x39c] sm:$0xff]
  %v143 = vld [vmem:[%s0 + $0x3a4] sm:$0xf]
  %v144 = vld [vmem:[%s0 + $0x3a8] sm:$0xff]
  %v145 = vld [vmem:[%s0 + $0x3b0] sm:$0xff]
  %v146 = vld [vmem:[%s0 + $0x3b8] sm:$0xff]
  %v147 = vld [vmem:[%s0 + $0x3c0] sm:$0xff]
  %v148 = vld [vmem:[%s0 + $0x3c8] sm:$0xf]
  %v149 = vld [vmem:[%s0 + $0x3cc] sm:$0xff]
  %v150 = vld [vmem:[%s0 + $0x3d4] sm:$0xff]
  %v151 = vld [vmem:[%s0 + $0x3dc] sm:$0xff]
  %v152 = vld [vmem:[%s0 + $0x3e4] sm:$0xff]
  %v153 = vld [vmem:[%s0 + $0x3ec] sm:$0xf]
  %v154 = vld [vmem:[%s0 + $0x3f0] sm:$0xff]
  %v155 = vld [vmem:[%s0 + $0x3f8] sm:$0xff]
  %v156 = vld [vmem:[%s0 + $0x400] sm:$0xff]
  %v157 = vld [vmem:[%s0 + $0x408] sm:$0xff]
  %v158 = vld [vmem:[%s0 + $0x410] sm:$0xf]
  %v159 = vld [vmem:[%s0 + $0x414] sm:$0xff]
  %v160 = vld [vmem:[%s0 + $0x41c] sm:$0xff]
  %v161 = vld [vmem:[%s0 + $0x424] sm:$0xff]
  %v162 = vld [vmem:[%s0 + $0x42c] sm:$0xff]
  %v163 = vld [vmem:[%s0 + $0x434] sm:$0xf]
  %v164 = vld [vmem:[%s0 + $0x438] sm:$0xff]
  %v165 = vld [vmem:[%s0 + $0x440] sm:$0xff]
  %v166 = vld [vmem:[%s0 + $0x448] sm:$0xff]
  %v167 = vld [vmem:[%s0 + $0x450] sm:$0xff]
  %v168 = vld [vmem:[%s0 + $0x458] sm:$0xf]
  %v169 = vld [vmem:[%s0 + $0x45c] sm:$0xff]
  %v170 = vld [vmem:[%s0 + $0x464] sm:$0xff]
  %v171 = vld [vmem:[%s0 + $0x46c] sm:$0xff]
  %v172 = vld [vmem:[%s0 + $0x474] sm:$0xff]
  %v173 = vld [vmem:[%s0 + $0x47c] sm:$0xf]
  %v174 = vld [vmem:[%s0 + $0x480] sm:$0xff]
  %v175 = vld [vmem:[%s0 + $0x488] sm:$0xff]
  %v176 = vld [vmem:[%s0 + $0x490] sm:$0xff]
  %v177 = vld [vmem:[%s0 + $0x498] sm:$0xff]
  %v178 = vld [vmem:[%s0 + $0x4a0] sm:$0xf]
  %v179 = vld [vmem:[%s0 + $0x4a4] sm:$0xff]
  %v180 = vld [vmem:[%s0 + $0x4ac] sm:$0xff]
  %v181 = vld [vmem:[%s0 + $0x4b4] sm:$0xff]
  %v182 = vld [vmem:[%s0 + $0x4bc] sm:$0xff]
  %v183 = vld [vmem:[%s0 + $0x4c4] sm:$0xf]
  %v184 = vld [vmem:[%s0 + $0x4c8] sm:$0xff]
  %v185 = vld [vmem:[%s0 + $0x4d0] sm:$0xff]
  %v186 = vld [vmem:[%s0 + $0x4d8] sm:$0xff]
  %v187 = vld [vmem:[%s0 + $0x4e0] sm:$0xff]
  %v188 = vld [vmem:[%s0 + $0x4e8] sm:$0xf]
  %v189 = vld [vmem:[%s0 + $0x4ec] sm:$0xff]
  %v190 = vld [vmem:[%s0 + $0x4f4] sm:$0xff]
  %v191 = vld [vmem:[%s0 + $0x4fc] sm:$0xff]
  %v192 = vld [vmem:[%s0 + $0x504] sm:$0xff]
  %v193 = vld [vmem:[%s0 + $0x50c] sm:$0xf]
  %v194 = vld [vmem:[%s0 + $0x510] sm:$0xff]
  %v195 = vld [vmem:[%s0 + $0x518] sm:$0xff]
  %v196 = vld [vmem:[%s0 + $0x520] sm:$0xff]
  %v197 = vld [vmem:[%s0 + $0x528] sm:$0xff]
  %v198 = vld [vmem:[%s0 + $0x530] sm:$0xf]
  %v199 = vld [vmem:[%s0 + $0x534] sm:$0xff]
  %v200 = vld [vmem:[%s0 + $0x53c] sm:$0xff]
  %v201 = vld [vmem:[%s0 + $0x544] sm:$0xff]
  %v202 = vld [vmem:[%s0 + $0x54c] sm:$0xff]
  %v203 = vld [vmem:[%s0 + $0x554] sm:$0xf]
  %v204 = vld [vmem:[%s0 + $0x558] sm:$0xff]
  %v205 = vld [vmem:[%s0 + $0x560] sm:$0xff]
  %v206 = vld [vmem:[%s0 + $0x568] sm:$0xff]
  %v207 = vld [vmem:[%s0 + $0x570] sm:$0xff]
  %v208 = vld [vmem:[%s0 + $0x578] sm:$0xf]
  %v209 = vld [vmem:[%s0 + $0x57c] sm:$0xff]
  %v210 = vld [vmem:[%s0 + $0x584] sm:$0xff]
  %v211 = vld [vmem:[%s0 + $0x58c] sm:$0xff]
  %v212 = vld [vmem:[%s0 + $0x594] sm:$0xff]
  %v213 = vld [vmem:[%s0 + $0x59c] sm:$0xf]
  %v214 = vld [vmem:[%s0 + $0x5a0] sm:$0xff]
  %v215 = vld [vmem:[%s0 + $0x5a8] sm:$0xff]
  %v216 = vld [vmem:[%s0 + $0x5b0] sm:$0xff]
  %v217 = vld [vmem:[%s0 + $0x5b8] sm:$0xff]
  %v218 = vld [vmem:[%s0 + $0x5c0] sm:$0xf]
  %v219 = vld [vmem:[%s0 + $0x5c4] sm:$0xff]
  %v220 = vld [vmem:[%s0 + $0x5cc] sm:$0xff]
  %v221 = vld [vmem:[%s0 + $0x5d4] sm:$0xff]
  %v222 = vld [vmem:[%s0 + $0x5dc] sm:$0xff]
  %v223 = vld [vmem:[%s0 + $0x5e4] sm:$0xf]
  %v224 = vld [vmem:[%s0 + $0x5e8] sm:$0xff]
  %v225 = vld [vmem:[%s0 + $0x5f0] sm:$0xff]
  %v226 = vld [vmem:[%s0 + $0x5f8] sm:$0xff]
  %v227 = vld [vmem:[%s0 + $0x600] sm:$0xff]
  %v228 = vld [vmem:[%s0 + $0x608] sm:$0xf]
  %v229 = vld [vmem:[%s0 + $0x60c] sm:$0xff]
  %v230 = vld [vmem:[%s0 + $0x614] sm:$0xff]
  %v231 = vld [vmem:[%s0 + $0x61c] sm:$0xff]
  %v232 = vld [vmem:[%s0 + $0x624] sm:$0xff]
  %v233 = vld [vmem:[%s0 + $0x62c] sm:$0xf]
  %v234 = vld [vmem:[%s0 + $0x630] sm:$0xff]
  %v235 = vld [vmem:[%s0 + $0x638] sm:$0xff]
  %v236 = vld [vmem:[%s0 + $0x640] sm:$0xff]
  %v237 = vld [vmem:[%s0 + $0x648] sm:$0xff]
  %v238 = vld [vmem:[%s0 + $0x650] sm:$0xf]
  %v239 = vld [vmem:[%s0 + $0x654] sm:$0xff]
  %v240 = vld [vmem:[%s0 + $0x65c] sm:$0xff]
  %v241 = vld [vmem:[%s0 + $0x664] sm:$0xff]
  %v242 = vld [vmem:[%s0 + $0x66c] sm:$0xff]
  %v243 = vld [vmem:[%s0 + $0x674] sm:$0xf]
  %v244 = vld [vmem:[%s0 + $0x678] sm:$0xff]
  %v245 = vld [vmem:[%s0 + $0x680] sm:$0xff]
  %v246 = vld [vmem:[%s0 + $0x688] sm:$0xff]
  %v247 = vld [vmem:[%s0 + $0x690] sm:$0xff]
  %v248 = vld [vmem:[%s0 + $0x698] sm:$0xf]
  %v249 = vld [vmem:[%s0 + $0x69c] sm:$0xff]
  %v250 = vld [vmem:[%s0 + $0x6a4] sm:$0xff]
  %v251 = vld [vmem:[%s0 + $0x6ac] sm:$0xff]
  %v252 = vld [vmem:[%s0 + $0x6b4] sm:$0xff]
  %v253 = vld [vmem:[%s0 + $0x6bc] sm:$0xf]
  %v254 = vld [vmem:[%s0 + $0x6c0] sm:$0xff]
  %v255 = vld [vmem:[%s0 + $0x6c8] sm:$0xff]
  %v256 = vld [vmem:[%s0 + $0x6d0] sm:$0xff]
  %v257 = vld [vmem:[%s0 + $0x6d8] sm:$0xff]
  %v258 = vld [vmem:[%s0 + $0x6e0] sm:$0xf]
  %v259 = vld [vmem:[%s1] sm:$0xf]
  %v260 = vld [vmem:[%s1 + $0x4] sm:$0xf]
  %v261 = vld [vmem:[%s1 + $0x8] sm:$0xf]
  %v262 = vld [vmem:[%s1 + $0xc] sm:$0xf]
  %v263 = vld [vmem:[%s1 + $0x10] sm:$0xf]
  %v264 = vld [vmem:[%s1 + $0x14] sm:$0xf]
  %v265 = vld [vmem:[%s1 + $0x18] sm:$0xf]
  %v266 = vld [vmem:[%s1 + $0x1c] sm:$0xf]
  %v267 = vld [vmem:[%s1 + $0x20] sm:$0xf]
  %v268 = vld [vmem:[%s1 + $0x24] sm:$0xf]
  %v269 = vld [vmem:[%s1 + $0x28] sm:$0xf]
  %v270 = vld [vmem:[%s1 + $0x2c] sm:$0xf]
  %v271 = vld [vmem:[%s1 + $0x30] sm:$0xf]
  %v272 = vld [vmem:[%s1 + $0x34] sm:$0xf]
  %v273 = vld [vmem:[%s1 + $0x38] sm:$0xf]
  %v274 = vld [vmem:[%s1 + $0x3c] sm:$0xf]
  %v275 = vld [vmem:[%s1 + $0x40] sm:$0xf]
  %v276 = vld [vmem:[%s1 + $0x44] sm:$0xf]
  %v277 = vld [vmem:[%s1 + $0x48] sm:$0xf]
  %v278 = vld [vmem:[%s1 + $0x4c] sm:$0xf]
  %v279 = vld [vmem:[%s1 + $0x50] sm:$0xf]
  %v280 = vld [vmem:[%s1 + $0x54] sm:$0xf]
  %v281 = vld [vmem:[%s1 + $0x58] sm:$0xf]
  %v282 = vld [vmem:[%s1 + $0x5c] sm:$0xf]
  %v283 = vld [vmem:[%s1 + $0x60] sm:$0xf]
  %v284 = vld [vmem:[%s1 + $0x64] sm:$0xf]
  %v285 = vld [vmem:[%s1 + $0x68] sm:$0xf]
  %v286 = vld [vmem:[%s1 + $0x6c] sm:$0xf]
  %v287 = vld [vmem:[%s1 + $0x70] sm:$0xf]
  %v288 = vld [vmem:[%s1 + $0x74] sm:$0xf]
  %v289 = vld [vmem:[%s1 + $0x78] sm:$0xf]
  %v290 = vld [vmem:[%s1 + $0x7c] sm:$0xf]
  %v291 = vld [vmem:[%s1 + $0x80] sm:$0xf]
  %v292 = vld [vmem:[%s1 + $0x84] sm:$0xf]
  %v293 = vld [vmem:[%s1 + $0x88] sm:$0xf]
  %v294 = vld [vmem:[%s1 + $0x8c] sm:$0xf]
  %v295 = vld [vmem:[%s1 + $0x90] sm:$0xf]
  %v296 = vld [vmem:[%s1 + $0x94] sm:$0xf]
  %v297 = vld [vmem:[%s1 + $0x98] sm:$0xf]
  %v298 = vld [vmem:[%s1 + $0x9c] sm:$0xf]
  %v299 = vld [vmem:[%s1 + $0xa0] sm:$0xf]
  %v300 = vld [vmem:[%s1 + $0xa4] sm:$0xf]
  %v301 = vld [vmem:[%s1 + $0xa8] sm:$0xf]
  %v302 = vld [vmem:[%s1 + $0xac] sm:$0xf]
  %v303 = vld [vmem:[%s1 + $0xb0] sm:$0xf]
  %v304 = vld [vmem:[%s1 + $0xb4] sm:$0xf]
  %v305 = vld [vmem:[%s1 + $0xb8] sm:$0xf]
  %v306 = vld [vmem:[%s1 + $0xbc] sm:$0xf]
  %v307 = vld [vmem:[%s1 + $0xc0] sm:$0xf]
  %v308 = vld [vmem:[%s1 + $0xc4] sm:$0xf]
  %v309 = vld [vmem:[%s1 + $0xc8] sm:$0xf]
  %v310 = vld [vmem:[%s1 + $0xcc] sm:$0xf]
  %v311 = vld [vmem:[%s1 + $0xd0] sm:$0xf]
  %v312 = vld [vmem:[%s1 + $0xd4] sm:$0xf]
  %v313 = vld [vmem:[%s1 + $0xd8] sm:$0xf]
  %v314 = vld [vmem:[%s1 + $0xdc] sm:$0xf]
  %v315 = vld [vmem:[%s1 + $0xe0] sm:$0xf]
  %v316 = vld [vmem:[%s1 + $0xe4] sm:$0xf]
  %v317 = vld [vmem:[%s1 + $0xe8] sm:$0xf]
  %v318 = vld [vmem:[%s1 + $0xec] sm:$0xf]
  %v319 = vld [vmem:[%s1 + $0xf0] sm:$0xf]
  %v320 = vld [vmem:[%s1 + $0xf4] sm:$0xf]
  %v321 = vld [vmem:[%s1 + $0xf8] sm:$0xf]
  %v322 = vld [vmem:[%s1 + $0xfc] sm:$0xf]
  %v323 = vld [vmem:[%s1 + $0x100] sm:$0xf]
  %v324 = vld [vmem:[%s1 + $0x104] sm:$0xf]
  %v325 = vld [vmem:[%s1 + $0x108] sm:$0xf]
  %v326 = vld [vmem:[%s1 + $0x10c] sm:$0xf]
  %v327 = vld [vmem:[%s1 + $0x110] sm:$0xf]
  %v328 = vld [vmem:[%s1 + $0x114] sm:$0xf]
  %v329 = vld [vmem:[%s1 + $0x118] sm:$0xf]
  %v330 = vld [vmem:[%s1 + $0x11c] sm:$0xf]
  %v331 = vld [vmem:[%s1 + $0x120] sm:$0xf]
  %v332 = vld [vmem:[%s1 + $0x124] sm:$0xf]
  %v333 = vld [vmem:[%s1 + $0x128] sm:$0xf]
  %v334 = vld [vmem:[%s1 + $0x12c] sm:$0xf]
  %v335 = vld [vmem:[%s1 + $0x130] sm:$0xf]
  %v336 = vld [vmem:[%s1 + $0x134] sm:$0xf]
  %v337 = vld [vmem:[%s1 + $0x138] sm:$0xf]
  %v338 = vld [vmem:[%s1 + $0x13c] sm:$0xf]
  %v339 = vld [vmem:[%s1 + $0x140] sm:$0xf]
  %v340 = vld [vmem:[%s1 + $0x144] sm:$0xf]
  %v341 = vld [vmem:[%s1 + $0x148] sm:$0xf]
  %v342 = vld [vmem:[%s1 + $0x14c] sm:$0xf]
  %v343 = vld [vmem:[%s1 + $0x150] sm:$0xf]
  %v344 = vld [vmem:[%s1 + $0x154] sm:$0xf]
  %v345 = vld [vmem:[%s1 + $0x158] sm:$0xf]
  %v346 = vld [vmem:[%s1 + $0x15c] sm:$0xf]
  %v347 = vld [vmem:[%s1 + $0x160] sm:$0xf]
  %v348 = vld [vmem:[%s1 + $0x164] sm:$0xf]
  %v349 = vld [vmem:[%s1 + $0x168] sm:$0xf]
  %v350 = vld [vmem:[%s1 + $0x16c] sm:$0xf]
  %v351 = vld [vmem:[%s1 + $0x170] sm:$0xf]
  %v352 = vld [vmem:[%s1 + $0x174] sm:$0xf]
  %v353 = vld [vmem:[%s1 + $0x178] sm:$0xf]
  %v354 = vld [vmem:[%s1 + $0x17c] sm:$0xf]
  %v355 = vld [vmem:[%s1 + $0x180] sm:$0xf]
  %v356 = vld [vmem:[%s1 + $0x184] sm:$0xf]
  %v357 = vld [vmem:[%s1 + $0x188] sm:$0xf]
  %v358 = vld [vmem:[%s1 + $0x18c] sm:$0xf]
  %v359 = vld [vmem:[%s1 + $0x190] sm:$0xf]
  %v360 = vld [vmem:[%s1 + $0x194] sm:$0xf]
  %v361 = vld [vmem:[%s1 + $0x198] sm:$0xf]
  %v362 = vld [vmem:[%s1 + $0x19c] sm:$0xf]
  %v363 = vld [vmem:[%s1 + $0x1a0] sm:$0xf]
  %v364 = vld [vmem:[%s1 + $0x1a4] sm:$0xf]
  %v365 = vld [vmem:[%s1 + $0x1a8] sm:$0xf]
  %v366 = vld [vmem:[%s1 + $0x1ac] sm:$0xf]
  %v367 = vld [vmem:[%s1 + $0x1b0] sm:$0xf]
  %v368 = vld [vmem:[%s1 + $0x1b4] sm:$0xf]
  %v369 = vld [vmem:[%s1 + $0x1b8] sm:$0xf]
  %v370 = vld [vmem:[%s1 + $0x1bc] sm:$0xf]
  %v371 = vld [vmem:[%s1 + $0x1c0] sm:$0xf]
  %v372 = vld [vmem:[%s1 + $0x1c4] sm:$0xf]
  %v373 = vld [vmem:[%s1 + $0x1c8] sm:$0xf]
  %v374 = vld [vmem:[%s1 + $0x1cc] sm:$0xf]
  %v375 = vld [vmem:[%s1 + $0x1d0] sm:$0xf]
  %v376 = vld [vmem:[%s1 + $0x1d4] sm:$0xf]
  %v377 = vld [vmem:[%s1 + $0x1d8] sm:$0xf]
  %v378 = vld [vmem:[%s1 + $0x1dc] sm:$0xf]
  %v379 = vld [vmem:[%s1 + $0x1e0] sm:$0xf]
  %v380 = vld [vmem:[%s1 + $0x1e4] sm:$0xf]
  %v381 = vld [vmem:[%s1 + $0x1e8] sm:$0xf]
  %v382 = vld [vmem:[%s1 + $0x1ec] sm:$0xf]
  %v383 = vld [vmem:[%s1 + $0x1f0] sm:$0xf]
  %v384 = vld [vmem:[%s1 + $0x1f4] sm:$0xf]
  %v385 = vld [vmem:[%s1 + $0x1f8] sm:$0xf]
  %v386 = vld [vmem:[%s1 + $0x1fc] sm:$0xf]
  %v387 = vld [vmem:[%s1 + $0x200] sm:$0xf]
  %v388 = vld [vmem:[%s1 + $0x204] sm:$0xf]
  %v389 = vld [vmem:[%s1 + $0x208] sm:$0xf]
  %v390 = vld [vmem:[%s1 + $0x20c] sm:$0xf]
  %v391 = vld [vmem:[%s1 + $0x210] sm:$0xf]
  %v392 = vld [vmem:[%s1 + $0x214] sm:$0xf]
  %v393 = vld [vmem:[%s1 + $0x218] sm:$0xf]
  %v394 = vld [vmem:[%s1 + $0x21c] sm:$0xf]
  %v395 = vld [vmem:[%s1 + $0x220] sm:$0xf]
  %v396 = vld [vmem:[%s1 + $0x224] sm:$0xf]
  %v397 = vld [vmem:[%s1 + $0x228] sm:$0xf]
  %v398 = vld [vmem:[%s1 + $0x22c] sm:$0xf]
  %v399 = vld [vmem:[%s1 + $0x230] sm:$0xf]
  %v400 = vld [vmem:[%s1 + $0x234] sm:$0xf]
  %v401 = vld [vmem:[%s1 + $0x238] sm:$0xf]
  %v402 = vld [vmem:[%s1 + $0x23c] sm:$0xf]
  %v403 = vld [vmem:[%s2] sm:$0x1]
  %v405 = vperm.slane %v403, 0
  %v652 = vunpack.c.l.b16 %v14
  %v653 = vunpack.c.h.b16 %v14
  %v654 = vunpack.c.l.b16 %v15
  %v655 = vunpack.c.h.b16 %v15
  %v656 = vunpack.c.l.b16 %v16
  %v657 = vunpack.c.h.b16 %v16
  %v658 = vunpack.c.l.b16 %v17
  %v659 = vunpack.c.h.b16 %v17
  %v660 = vunpack.c.l.b16 %v18
  %v661 = vunpack.c.l.b16 %v19
  %v662 = vunpack.c.h.b16 %v19
  %v663 = vunpack.c.l.b16 %v20
  %v664 = vunpack.c.h.b16 %v20
  %v665 = vunpack.c.l.b16 %v21
  %v666 = vunpack.c.h.b16 %v21
  %v667 = vunpack.c.l.b16 %v22
  %v668 = vunpack.c.h.b16 %v22
  %v669 = vunpack.c.l.b16 %v23
  %v670 = vunpack.c.l.b16 %v24
  %v671 = vunpack.c.h.b16 %v24
  %v672 = vunpack.c.l.b16 %v25
  %v673 = vunpack.c.h.b16 %v25
  %v674 = vunpack.c.l.b16 %v26
  %v675 = vunpack.c.h.b16 %v26
  %v676 = vunpack.c.l.b16 %v27
  %v677 = vunpack.c.h.b16 %v27
  %v678 = vunpack.c.l.b16 %v28
  %v679 = vunpack.c.l.b16 %v29
  %v680 = vunpack.c.h.b16 %v29
  %v681 = vunpack.c.l.b16 %v30
  %v682 = vunpack.c.h.b16 %v30
  %v683 = vunpack.c.l.b16 %v31
  %v684 = vunpack.c.h.b16 %v31
  %v685 = vunpack.c.l.b16 %v32
  %v686 = vunpack.c.h.b16 %v32
  %v687 = vunpack.c.l.b16 %v33
  %v688 = vunpack.c.l.b16 %v34
  %v689 = vunpack.c.h.b16 %v34
  %v690 = vunpack.c.l.b16 %v35
  %v691 = vunpack.c.h.b16 %v35
  %v692 = vunpack.c.l.b16 %v36
  %v693 = vunpack.c.h.b16 %v36
  %v694 = vunpack.c.l.b16 %v37
  %v695 = vunpack.c.h.b16 %v37
  %v696 = vunpack.c.l.b16 %v38
  %v697 = vunpack.c.l.b16 %v39
  %v698 = vunpack.c.h.b16 %v39
  %v699 = vunpack.c.l.b16 %v40
  %v700 = vunpack.c.h.b16 %v40
  %v701 = vunpack.c.l.b16 %v41
  %v702 = vunpack.c.h.b16 %v41
  %v703 = vunpack.c.l.b16 %v42
  %v704 = vunpack.c.h.b16 %v42
  %v705 = vunpack.c.l.b16 %v43
  %v706 = vunpack.c.l.b16 %v44
  %v707 = vunpack.c.h.b16 %v44
  %v708 = vunpack.c.l.b16 %v45
  %v709 = vunpack.c.h.b16 %v45
  %v710 = vunpack.c.l.b16 %v46
  %v711 = vunpack.c.h.b16 %v46
  %v712 = vunpack.c.l.b16 %v47
  %v713 = vunpack.c.h.b16 %v47
  %v714 = vunpack.c.l.b16 %v48
  %v715 = vunpack.c.l.b16 %v49
  %v716 = vunpack.c.h.b16 %v49
  %v717 = vunpack.c.l.b16 %v50
  %v718 = vunpack.c.h.b16 %v50
  %v719 = vunpack.c.l.b16 %v51
  %v720 = vunpack.c.h.b16 %v51
  %v721 = vunpack.c.l.b16 %v52
  %v722 = vunpack.c.h.b16 %v52
  %v723 = vunpack.c.l.b16 %v53
  %v724 = vunpack.c.l.b16 %v54
  %v725 = vunpack.c.h.b16 %v54
  %v726 = vunpack.c.l.b16 %v55
  %v727 = vunpack.c.h.b16 %v55
  %v728 = vunpack.c.l.b16 %v56
  %v729 = vunpack.c.h.b16 %v56
  %v730 = vunpack.c.l.b16 %v57
  %v731 = vunpack.c.h.b16 %v57
  %v732 = vunpack.c.l.b16 %v58
  %v733 = vunpack.c.l.b16 %v59
  %v734 = vunpack.c.h.b16 %v59
  %v735 = vunpack.c.l.b16 %v60
  %v736 = vunpack.c.h.b16 %v60
  %v737 = vunpack.c.l.b16 %v61
  %v738 = vunpack.c.h.b16 %v61
  %v739 = vunpack.c.l.b16 %v62
  %v740 = vunpack.c.h.b16 %v62
  %v741 = vunpack.c.l.b16 %v63
  %v742 = vunpack.c.l.b16 %v64
  %v743 = vunpack.c.h.b16 %v64
  %v744 = vunpack.c.l.b16 %v65
  %v745 = vunpack.c.h.b16 %v65
  %v746 = vunpack.c.l.b16 %v66
  %v747 = vunpack.c.h.b16 %v66
  %v748 = vunpack.c.l.b16 %v67
  %v749 = vunpack.c.h.b16 %v67
  %v750 = vunpack.c.l.b16 %v68
  %v751 = vunpack.c.l.b16 %v69
  %v752 = vunpack.c.h.b16 %v69
  %v753 = vunpack.c.l.b16 %v70
  %v754 = vunpack.c.h.b16 %v70
  %v755 = vunpack.c.l.b16 %v71
  %v756 = vunpack.c.h.b16 %v71
  %v757 = vunpack.c.l.b16 %v72
  %v758 = vunpack.c.h.b16 %v72
  %v759 = vunpack.c.l.b16 %v73
  %v760 = vunpack.c.l.b16 %v74
  %v761 = vunpack.c.h.b16 %v74
  %v762 = vunpack.c.l.b16 %v75
  %v763 = vunpack.c.h.b16 %v75
  %v764 = vunpack.c.l.b16 %v76
  %v765 = vunpack.c.h.b16 %v76
  %v766 = vunpack.c.l.b16 %v77
  %v767 = vunpack.c.h.b16 %v77
  %v768 = vunpack.c.l.b16 %v78
  %v769 = vunpack.c.l.b16 %v79
  %v770 = vunpack.c.h.b16 %v79
  %v771 = vunpack.c.l.b16 %v80
  %v772 = vunpack.c.h.b16 %v80
  %v773 = vunpack.c.l.b16 %v81
  %v774 = vunpack.c.h.b16 %v81
  %v775 = vunpack.c.l.b16 %v82
  %v776 = vunpack.c.h.b16 %v82
  %v777 = vunpack.c.l.b16 %v83
  %v778 = vunpack.c.l.b16 %v84
  %v779 = vunpack.c.h.b16 %v84
  %v780 = vunpack.c.l.b16 %v85
  %v781 = vunpack.c.h.b16 %v85
  %v782 = vunpack.c.l.b16 %v86
  %v783 = vunpack.c.h.b16 %v86
  %v784 = vunpack.c.l.b16 %v87
  %v785 = vunpack.c.h.b16 %v87
  %v786 = vunpack.c.l.b16 %v88
  %v787 = vunpack.c.l.b16 %v89
  %v788 = vunpack.c.h.b16 %v89
  %v789 = vunpack.c.l.b16 %v90
  %v790 = vunpack.c.h.b16 %v90
  %v791 = vunpack.c.l.b16 %v91
  %v792 = vunpack.c.h.b16 %v91
  %v793 = vunpack.c.l.b16 %v92
  %v794 = vunpack.c.h.b16 %v92
  %v795 = vunpack.c.l.b16 %v93
  %v796 = vunpack.c.l.b16 %v94
  %v797 = vunpack.c.h.b16 %v94
  %v798 = vunpack.c.l.b16 %v95
  %v799 = vunpack.c.h.b16 %v95
  %v800 = vunpack.c.l.b16 %v96
  %v801 = vunpack.c.h.b16 %v96
  %v802 = vunpack.c.l.b16 %v97
  %v803 = vunpack.c.h.b16 %v97
  %v804 = vunpack.c.l.b16 %v98
  %v805 = vunpack.c.l.b16 %v99
  %v806 = vunpack.c.h.b16 %v99
  %v807 = vunpack.c.l.b16 %v100
  %v808 = vunpack.c.h.b16 %v100
  %v809 = vunpack.c.l.b16 %v101
  %v810 = vunpack.c.h.b16 %v101
  %v811 = vunpack.c.l.b16 %v102
  %v812 = vunpack.c.h.b16 %v102
  %v813 = vunpack.c.l.b16 %v103
  %v814 = vunpack.c.l.b16 %v104
  %v815 = vunpack.c.h.b16 %v104
  %v816 = vunpack.c.l.b16 %v105
  %v817 = vunpack.c.h.b16 %v105
  %v818 = vunpack.c.l.b16 %v106
  %v819 = vunpack.c.h.b16 %v106
  %v820 = vunpack.c.l.b16 %v107
  %v821 = vunpack.c.h.b16 %v107
  %v822 = vunpack.c.l.b16 %v108
  %v823 = vunpack.c.l.b16 %v109
  %v824 = vunpack.c.h.b16 %v109
  %v825 = vunpack.c.l.b16 %v110
  %v826 = vunpack.c.h.b16 %v110
  %v827 = vunpack.c.l.b16 %v111
  %v828 = vunpack.c.h.b16 %v111
  %v829 = vunpack.c.l.b16 %v112
  %v830 = vunpack.c.h.b16 %v112
  %v831 = vunpack.c.l.b16 %v113
  %v832 = vunpack.c.l.b16 %v114
  %v833 = vunpack.c.h.b16 %v114
  %v834 = vunpack.c.l.b16 %v115
  %v835 = vunpack.c.h.b16 %v115
  %v836 = vunpack.c.l.b16 %v116
  %v837 = vunpack.c.h.b16 %v116
  %v838 = vunpack.c.l.b16 %v117
  %v839 = vunpack.c.h.b16 %v117
  %v840 = vunpack.c.l.b16 %v118
  %v841 = vunpack.c.l.b16 %v119
  %v842 = vunpack.c.h.b16 %v119
  %v843 = vunpack.c.l.b16 %v120
  %v844 = vunpack.c.h.b16 %v120
  %v845 = vunpack.c.l.b16 %v121
  %v846 = vunpack.c.h.b16 %v121
  %v847 = vunpack.c.l.b16 %v122
  %v848 = vunpack.c.h.b16 %v122
  %v849 = vunpack.c.l.b16 %v123
  %v850 = vunpack.c.l.b16 %v124
  %v851 = vunpack.c.h.b16 %v124
  %v852 = vunpack.c.l.b16 %v125
  %v853 = vunpack.c.h.b16 %v125
  %v854 = vunpack.c.l.b16 %v126
  %v855 = vunpack.c.h.b16 %v126
  %v856 = vunpack.c.l.b16 %v127
  %v857 = vunpack.c.h.b16 %v127
  %v858 = vunpack.c.l.b16 %v128
  %v859 = vunpack.c.l.b16 %v129
  %v860 = vunpack.c.h.b16 %v129
  %v861 = vunpack.c.l.b16 %v130
  %v862 = vunpack.c.h.b16 %v130
  %v863 = vunpack.c.l.b16 %v131
  %v864 = vunpack.c.h.b16 %v131
  %v865 = vunpack.c.l.b16 %v132
  %v866 = vunpack.c.h.b16 %v132
  %v867 = vunpack.c.l.b16 %v133
  %v868 = vunpack.c.l.b16 %v134
  %v869 = vunpack.c.h.b16 %v134
  %v870 = vunpack.c.l.b16 %v135
  %v871 = vunpack.c.h.b16 %v135
  %v872 = vunpack.c.l.b16 %v136
  %v873 = vunpack.c.h.b16 %v136
  %v874 = vunpack.c.l.b16 %v137
  %v875 = vunpack.c.h.b16 %v137
  %v876 = vunpack.c.l.b16 %v138
  %v877 = vunpack.c.l.b16 %v139
  %v878 = vunpack.c.h.b16 %v139
  %v879 = vunpack.c.l.b16 %v140
  %v880 = vunpack.c.h.b16 %v140
  %v881 = vunpack.c.l.b16 %v141
  %v882 = vunpack.c.h.b16 %v141
  %v883 = vunpack.c.l.b16 %v142
  %v884 = vunpack.c.h.b16 %v142
  %v885 = vunpack.c.l.b16 %v143
  %v886 = vunpack.c.l.b16 %v144
  %v887 = vunpack.c.h.b16 %v144
  %v888 = vunpack.c.l.b16 %v145
  %v889 = vunpack.c.h.b16 %v145
  %v890 = vunpack.c.l.b16 %v146
  %v891 = vunpack.c.h.b16 %v146
  %v892 = vunpack.c.l.b16 %v147
  %v893 = vunpack.c.h.b16 %v147
  %v894 = vunpack.c.l.b16 %v148
  %v895 = vunpack.c.l.b16 %v149
  %v896 = vunpack.c.h.b16 %v149
  %v897 = vunpack.c.l.b16 %v150
  %v898 = vunpack.c.h.b16 %v150
  %v899 = vunpack.c.l.b16 %v151
  %v900 = vunpack.c.h.b16 %v151
  %v901 = vunpack.c.l.b16 %v152
  %v902 = vunpack.c.h.b16 %v152
  %v903 = vunpack.c.l.b16 %v153
  %v904 = vunpack.c.l.b16 %v154
  %v905 = vunpack.c.h.b16 %v154
  %v906 = vunpack.c.l.b16 %v155
  %v907 = vunpack.c.h.b16 %v155
  %v908 = vunpack.c.l.b16 %v156
  %v909 = vunpack.c.h.b16 %v156
  %v910 = vunpack.c.l.b16 %v157
  %v911 = vunpack.c.h.b16 %v157
  %v912 = vunpack.c.l.b16 %v158
  %v913 = vunpack.c.l.b16 %v159
  %v914 = vunpack.c.h.b16 %v159
  %v915 = vunpack.c.l.b16 %v160
  %v916 = vunpack.c.h.b16 %v160
  %v917 = vunpack.c.l.b16 %v161
  %v918 = vunpack.c.h.b16 %v161
  %v919 = vunpack.c.l.b16 %v162
  %v920 = vunpack.c.h.b16 %v162
  %v921 = vunpack.c.l.b16 %v163
  %v922 = vunpack.c.l.b16 %v164
  %v923 = vunpack.c.h.b16 %v164
  %v924 = vunpack.c.l.b16 %v165
  %v925 = vunpack.c.h.b16 %v165
  %v926 = vunpack.c.l.b16 %v166
  %v927 = vunpack.c.h.b16 %v166
  %v928 = vunpack.c.l.b16 %v167
  %v929 = vunpack.c.h.b16 %v167
  %v930 = vunpack.c.l.b16 %v168
  %v931 = vunpack.c.l.b16 %v169
  %v932 = vunpack.c.h.b16 %v169
  %v933 = vunpack.c.l.b16 %v170
  %v934 = vunpack.c.h.b16 %v170
  %v935 = vunpack.c.l.b16 %v171
  %v936 = vunpack.c.h.b16 %v171
  %v937 = vunpack.c.l.b16 %v172
  %v938 = vunpack.c.h.b16 %v172
  %v939 = vunpack.c.l.b16 %v173
  %v940 = vunpack.c.l.b16 %v174
  %v941 = vunpack.c.h.b16 %v174
  %v942 = vunpack.c.l.b16 %v175
  %v943 = vunpack.c.h.b16 %v175
  %v944 = vunpack.c.l.b16 %v176
  %v945 = vunpack.c.h.b16 %v176
  %v946 = vunpack.c.l.b16 %v177
  %v947 = vunpack.c.h.b16 %v177
  %v948 = vunpack.c.l.b16 %v178
  %v949 = vunpack.c.l.b16 %v179
  %v950 = vunpack.c.h.b16 %v179
  %v951 = vunpack.c.l.b16 %v180
  %v952 = vunpack.c.h.b16 %v180
  %v953 = vunpack.c.l.b16 %v181
  %v954 = vunpack.c.h.b16 %v181
  %v955 = vunpack.c.l.b16 %v182
  %v956 = vunpack.c.h.b16 %v182
  %v957 = vunpack.c.l.b16 %v183
  %v958 = vunpack.c.l.b16 %v184
  %v959 = vunpack.c.h.b16 %v184
  %v960 = vunpack.c.l.b16 %v185
  %v961 = vunpack.c.h.b16 %v185
  %v962 = vunpack.c.l.b16 %v186
  %v963 = vunpack.c.h.b16 %v186
  %v964 = vunpack.c.l.b16 %v187
  %v965 = vunpack.c.h.b16 %v187
  %v966 = vunpack.c.l.b16 %v188
  %v967 = vunpack.c.l.b16 %v189
  %v968 = vunpack.c.h.b16 %v189
  %v969 = vunpack.c.l.b16 %v190
  %v970 = vunpack.c.h.b16 %v190
  %v971 = vunpack.c.l.b16 %v191
  %v972 = vunpack.c.h.b16 %v191
  %v973 = vunpack.c.l.b16 %v192
  %v974 = vunpack.c.h.b16 %v192
  %v975 = vunpack.c.l.b16 %v193
  %v976 = vunpack.c.l.b16 %v194
  %v977 = vunpack.c.h.b16 %v194
  %v978 = vunpack.c.l.b16 %v195
  %v979 = vunpack.c.h.b16 %v195
  %v980 = vunpack.c.l.b16 %v196
  %v981 = vunpack.c.h.b16 %v196
  %v982 = vunpack.c.l.b16 %v197
  %v983 = vunpack.c.h.b16 %v197
  %v984 = vunpack.c.l.b16 %v198
  %v985 = vunpack.c.l.b16 %v199
  %v986 = vunpack.c.h.b16 %v199
  %v987 = vunpack.c.l.b16 %v200
  %v988 = vunpack.c.h.b16 %v200
  %v989 = vunpack.c.l.b16 %v201
  %v990 = vunpack.c.h.b16 %v201
  %v991 = vunpack.c.l.b16 %v202
  %v992 = vunpack.c.h.b16 %v202
  %v993 = vunpack.c.l.b16 %v203
  %v994 = vunpack.c.l.b16 %v204
  %v995 = vunpack.c.h.b16 %v204
  %v996 = vunpack.c.l.b16 %v205
  %v997 = vunpack.c.h.b16 %v205
  %v998 = vunpack.c.l.b16 %v206
  %v999 = vunpack.c.h.b16 %v206
  %v1000 = vunpack.c.l.b16 %v207
  %v1001 = vunpack.c.h.b16 %v207
  %v1002 = vunpack.c.l.b16 %v208
  %v1003 = vunpack.c.l.b16 %v209
  %v1004 = vunpack.c.h.b16 %v209
  %v1005 = vunpack.c.l.b16 %v210
  %v1006 = vunpack.c.h.b16 %v210
  %v1007 = vunpack.c.l.b16 %v211
  %v1008 = vunpack.c.h.b16 %v211
  %v1009 = vunpack.c.l.b16 %v212
  %v1010 = vunpack.c.h.b16 %v212
  %v1011 = vunpack.c.l.b16 %v213
  %v1012 = vunpack.c.l.b16 %v214
  %v1013 = vunpack.c.h.b16 %v214
  %v1014 = vunpack.c.l.b16 %v215
  %v1015 = vunpack.c.h.b16 %v215
  %v1016 = vunpack.c.l.b16 %v216
  %v1017 = vunpack.c.h.b16 %v216
  %v1018 = vunpack.c.l.b16 %v217
  %v1019 = vunpack.c.h.b16 %v217
  %v1020 = vunpack.c.l.b16 %v218
  %v1021 = vunpack.c.l.b16 %v219
  %v1022 = vunpack.c.h.b16 %v219
  %v1023 = vunpack.c.l.b16 %v220
  %v1024 = vunpack.c.h.b16 %v220
  %v1025 = vunpack.c.l.b16 %v221
  %v1026 = vunpack.c.h.b16 %v221
  %v1027 = vunpack.c.l.b16 %v222
  %v1028 = vunpack.c.h.b16 %v222
  %v1029 = vunpack.c.l.b16 %v223
  %v1030 = vunpack.c.l.b16 %v224
  %v1031 = vunpack.c.h.b16 %v224
  %v1032 = vunpack.c.l.b16 %v225
  %v1033 = vunpack.c.h.b16 %v225
  %v1034 = vunpack.c.l.b16 %v226
  %v1035 = vunpack.c.h.b16 %v226
  %v1036 = vunpack.c.l.b16 %v227
  %v1037 = vunpack.c.h.b16 %v227
  %v1038 = vunpack.c.l.b16 %v228
  %v1039 = vunpack.c.l.b16 %v229
  %v1040 = vunpack.c.h.b16 %v229
  %v1041 = vunpack.c.l.b16 %v230
  %v1042 = vunpack.c.h.b16 %v230
  %v1043 = vunpack.c.l.b16 %v231
  %v1044 = vunpack.c.h.b16 %v231
  %v1045 = vunpack.c.l.b16 %v232
  %v1046 = vunpack.c.h.b16 %v232
  %v1047 = vunpack.c.l.b16 %v233
  %v1048 = vunpack.c.l.b16 %v234
  %v1049 = vunpack.c.h.b16 %v234
  %v1050 = vunpack.c.l.b16 %v235
  %v1051 = vunpack.c.h.b16 %v235
  %v1052 = vunpack.c.l.b16 %v236
  %v1053 = vunpack.c.h.b16 %v236
  %v1054 = vunpack.c.l.b16 %v237
  %v1055 = vunpack.c.h.b16 %v237
  %v1056 = vunpack.c.l.b16 %v238
  %v1057 = vunpack.c.l.b16 %v239
  %v1058 = vunpack.c.h.b16 %v239
  %v1059 = vunpack.c.l.b16 %v240
  %v1060 = vunpack.c.h.b16 %v240
  %v1061 = vunpack.c.l.b16 %v241
  %v1062 = vunpack.c.h.b16 %v241
  %v1063 = vunpack.c.l.b16 %v242
  %v1064 = vunpack.c.h.b16 %v242
  %v1065 = vunpack.c.l.b16 %v243
  %v1066 = vunpack.c.l.b16 %v244
  %v1067 = vunpack.c.h.b16 %v244
  %v1068 = vunpack.c.l.b16 %v245
  %v1069 = vunpack.c.h.b16 %v245
  %v1070 = vunpack.c.l.b16 %v246
  %v1071 = vunpack.c.h.b16 %v246
  %v1072 = vunpack.c.l.b16 %v247
  %v1073 = vunpack.c.h.b16 %v247
  %v1074 = vunpack.c.l.b16 %v248
  %v1075 = vunpack.c.l.b16 %v249
  %v1076 = vunpack.c.h.b16 %v249
  %v1077 = vunpack.c.l.b16 %v250
  %v1078 = vunpack.c.h.b16 %v250
  %v1079 = vunpack.c.l.b16 %v251
  %v1080 = vunpack.c.h.b16 %v251
  %v1081 = vunpack.c.l.b16 %v252
  %v1082 = vunpack.c.h.b16 %v252
  %v1083 = vunpack.c.l.b16 %v253
  %v1084 = vunpack.c.l.b16 %v254
  %v1085 = vunpack.c.h.b16 %v254
  %v1086 = vunpack.c.l.b16 %v255
  %v1087 = vunpack.c.h.b16 %v255
  %v1088 = vunpack.c.l.b16 %v256
  %v1089 = vunpack.c.h.b16 %v256
  %v1090 = vunpack.c.l.b16 %v257
  %v1091 = vunpack.c.h.b16 %v257
  %v1092 = vunpack.c.l.b16 %v258
  %v1093 = vpack.c.b16 %v661, %v652
  %v1094 = vpack.c.b16 %v662, %v653
  %v1095 = vpack.c.b16 %v663, %v654
  %v1096 = vpack.c.b16 %v664, %v655
  %v1097 = vpack.c.b16 %v665, %v656
  %v1098 = vpack.c.b16 %v666, %v657
  %v1099 = vpack.c.b16 %v667, %v658
  %v1100 = vpack.c.b16 %v668, %v659
  %v1101 = vpack.c.b16 %v669, %v660
  %v1102 = vpack.c.b16 %v679, %v670
  %v1103 = vpack.c.b16 %v680, %v671
  %v1104 = vpack.c.b16 %v681, %v672
  %v1105 = vpack.c.b16 %v682, %v673
  %v1106 = vpack.c.b16 %v683, %v674
  %v1107 = vpack.c.b16 %v684, %v675
  %v1108 = vpack.c.b16 %v685, %v676
  %v1109 = vpack.c.b16 %v686, %v677
  %v1110 = vpack.c.b16 %v687, %v678
  %v1111 = vpack.c.b16 %v697, %v688
  %v1112 = vpack.c.b16 %v698, %v689
  %v1113 = vpack.c.b16 %v699, %v690
  %v1114 = vpack.c.b16 %v700, %v691
  %v1115 = vpack.c.b16 %v701, %v692
  %v1116 = vpack.c.b16 %v702, %v693
  %v1117 = vpack.c.b16 %v703, %v694
  %v1118 = vpack.c.b16 %v704, %v695
  %v1119 = vpack.c.b16 %v705, %v696
  %v1120 = vpack.c.b16 %v715, %v706
  %v1121 = vpack.c.b16 %v716, %v707
  %v1122 = vpack.c.b16 %v717, %v708
  %v1123 = vpack.c.b16 %v718, %v709
  %v1124 = vpack.c.b16 %v719, %v710
  %v1125 = vpack.c.b16 %v720, %v711
  %v1126 = vpack.c.b16 %v721, %v712
  %v1127 = vpack.c.b16 %v722, %v713
  %v1128 = vpack.c.b16 %v723, %v714
  %v1129 = vpack.c.b16 %v733, %v724
  %v1130 = vpack.c.b16 %v734, %v725
  %v1131 = vpack.c.b16 %v735, %v726
  %v1132 = vpack.c.b16 %v736, %v727
  %v1133 = vpack.c.b16 %v737, %v728
  %v1134 = vpack.c.b16 %v738, %v729
  %v1135 = vpack.c.b16 %v739, %v730
  %v1136 = vpack.c.b16 %v740, %v731
  %v1137 = vpack.c.b16 %v741, %v732
  %v1138 = vpack.c.b16 %v751, %v742
  %v1139 = vpack.c.b16 %v752, %v743
  %v1140 = vpack.c.b16 %v753, %v744
  %v1141 = vpack.c.b16 %v754, %v745
  %v1142 = vpack.c.b16 %v755, %v746
  %v1143 = vpack.c.b16 %v756, %v747
  %v1144 = vpack.c.b16 %v757, %v748
  %v1145 = vpack.c.b16 %v758, %v749
  %v1146 = vpack.c.b16 %v759, %v750
  %v1147 = vpack.c.b16 %v769, %v760
  %v1148 = vpack.c.b16 %v770, %v761
  %v1149 = vpack.c.b16 %v771, %v762
  %v1150 = vpack.c.b16 %v772, %v763
  %v1151 = vpack.c.b16 %v773, %v764
  %v1152 = vpack.c.b16 %v774, %v765
  %v1153 = vpack.c.b16 %v775, %v766
  %v1154 = vpack.c.b16 %v776, %v767
  %v1155 = vpack.c.b16 %v777, %v768
  %v1156 = vpack.c.b16 %v787, %v778
  %v1157 = vpack.c.b16 %v788, %v779
  %v1158 = vpack.c.b16 %v789, %v780
  %v1159 = vpack.c.b16 %v790, %v781
  %v1160 = vpack.c.b16 %v791, %v782
  %v1161 = vpack.c.b16 %v792, %v783
  %v1162 = vpack.c.b16 %v793, %v784
  %v1163 = vpack.c.b16 %v794, %v785
  %v1164 = vpack.c.b16 %v795, %v786
  %v1165 = vpack.c.b16 %v805, %v796
  %v1166 = vpack.c.b16 %v806, %v797
  %v1167 = vpack.c.b16 %v807, %v798
  %v1168 = vpack.c.b16 %v808, %v799
  %v1169 = vpack.c.b16 %v809, %v800
  %v1170 = vpack.c.b16 %v810, %v801
  %v1171 = vpack.c.b16 %v811, %v802
  %v1172 = vpack.c.b16 %v812, %v803
  %v1173 = vpack.c.b16 %v813, %v804
  %v1174 = vpack.c.b16 %v823, %v814
  %v1175 = vpack.c.b16 %v824, %v815
  %v1176 = vpack.c.b16 %v825, %v816
  %v1177 = vpack.c.b16 %v826, %v817
  %v1178 = vpack.c.b16 %v827, %v818
  %v1179 = vpack.c.b16 %v828, %v819
  %v1180 = vpack.c.b16 %v829, %v820
  %v1181 = vpack.c.b16 %v830, %v821
  %v1182 = vpack.c.b16 %v831, %v822
  %v1183 = vpack.c.b16 %v841, %v832
  %v1184 = vpack.c.b16 %v842, %v833
  %v1185 = vpack.c.b16 %v843, %v834
  %v1186 = vpack.c.b16 %v844, %v835
  %v1187 = vpack.c.b16 %v845, %v836
  %v1188 = vpack.c.b16 %v846, %v837
  %v1189 = vpack.c.b16 %v847, %v838
  %v1190 = vpack.c.b16 %v848, %v839
  %v1191 = vpack.c.b16 %v849, %v840
  %v1192 = vpack.c.b16 %v859, %v850
  %v1193 = vpack.c.b16 %v860, %v851
  %v1194 = vpack.c.b16 %v861, %v852
  %v1195 = vpack.c.b16 %v862, %v853
  %v1196 = vpack.c.b16 %v863, %v854
  %v1197 = vpack.c.b16 %v864, %v855
  %v1198 = vpack.c.b16 %v865, %v856
  %v1199 = vpack.c.b16 %v866, %v857
  %v1200 = vpack.c.b16 %v867, %v858
  %v1201 = vpack.c.b16 %v877, %v868
  %v1202 = vpack.c.b16 %v878, %v869
  %v1203 = vpack.c.b16 %v879, %v870
  %v1204 = vpack.c.b16 %v880, %v871
  %v1205 = vpack.c.b16 %v881, %v872
  %v1206 = vpack.c.b16 %v882, %v873
  %v1207 = vpack.c.b16 %v883, %v874
  %v1208 = vpack.c.b16 %v884, %v875
  %v1209 = vpack.c.b16 %v885, %v876
  %v1210 = vpack.c.b16 %v895, %v886
  %v1211 = vpack.c.b16 %v896, %v887
  %v1212 = vpack.c.b16 %v897, %v888
  %v1213 = vpack.c.b16 %v898, %v889
  %v1214 = vpack.c.b16 %v899, %v890
  %v1215 = vpack.c.b16 %v900, %v891
  %v1216 = vpack.c.b16 %v901, %v892
  %v1217 = vpack.c.b16 %v902, %v893
  %v1218 = vpack.c.b16 %v903, %v894
  %v1219 = vpack.c.b16 %v913, %v904
  %v1220 = vpack.c.b16 %v914, %v905
  %v1221 = vpack.c.b16 %v915, %v906
  %v1222 = vpack.c.b16 %v916, %v907
  %v1223 = vpack.c.b16 %v917, %v908
  %v1224 = vpack.c.b16 %v918, %v909
  %v1225 = vpack.c.b16 %v919, %v910
  %v1226 = vpack.c.b16 %v920, %v911
  %v1227 = vpack.c.b16 %v921, %v912
  %v1228 = vpack.c.b16 %v931, %v922
  %v1229 = vpack.c.b16 %v932, %v923
  %v1230 = vpack.c.b16 %v933, %v924
  %v1231 = vpack.c.b16 %v934, %v925
  %v1232 = vpack.c.b16 %v935, %v926
  %v1233 = vpack.c.b16 %v936, %v927
  %v1234 = vpack.c.b16 %v937, %v928
  %v1235 = vpack.c.b16 %v938, %v929
  %v1236 = vpack.c.b16 %v939, %v930
  %v1237 = vpack.c.b16 %v949, %v940
  %v1238 = vpack.c.b16 %v950, %v941
  %v1239 = vpack.c.b16 %v951, %v942
  %v1240 = vpack.c.b16 %v952, %v943
  %v1241 = vpack.c.b16 %v953, %v944
  %v1242 = vpack.c.b16 %v954, %v945
  %v1243 = vpack.c.b16 %v955, %v946
  %v1244 = vpack.c.b16 %v956, %v947
  %v1245 = vpack.c.b16 %v957, %v948
  %v1246 = vpack.c.b16 %v967, %v958
  %v1247 = vpack.c.b16 %v968, %v959
  %v1248 = vpack.c.b16 %v969, %v960
  %v1249 = vpack.c.b16 %v970, %v961
  %v1250 = vpack.c.b16 %v971, %v962
  %v1251 = vpack.c.b16 %v972, %v963
  %v1252 = vpack.c.b16 %v973, %v964
  %v1253 = vpack.c.b16 %v974, %v965
  %v1254 = vpack.c.b16 %v975, %v966
  %v1255 = vpack.c.b16 %v985, %v976
  %v1256 = vpack.c.b16 %v986, %v977
  %v1257 = vpack.c.b16 %v987, %v978
  %v1258 = vpack.c.b16 %v988, %v979
  %v1259 = vpack.c.b16 %v989, %v980
  %v1260 = vpack.c.b16 %v990, %v981
  %v1261 = vpack.c.b16 %v991, %v982
  %v1262 = vpack.c.b16 %v992, %v983
  %v1263 = vpack.c.b16 %v993, %v984
  %v1264 = vpack.c.b16 %v1003, %v994
  %v1265 = vpack.c.b16 %v1004, %v995
  %v1266 = vpack.c.b16 %v1005, %v996
  %v1267 = vpack.c.b16 %v1006, %v997
  %v1268 = vpack.c.b16 %v1007, %v998
  %v1269 = vpack.c.b16 %v1008, %v999
  %v1270 = vpack.c.b16 %v1009, %v1000
  %v1271 = vpack.c.b16 %v1010, %v1001
  %v1272 = vpack.c.b16 %v1011, %v1002
  %v1273 = vpack.c.b16 %v1021, %v1012
  %v1274 = vpack.c.b16 %v1022, %v1013
  %v1275 = vpack.c.b16 %v1023, %v1014
  %v1276 = vpack.c.b16 %v1024, %v1015
  %v1277 = vpack.c.b16 %v1025, %v1016
  %v1278 = vpack.c.b16 %v1026, %v1017
  %v1279 = vpack.c.b16 %v1027, %v1018
  %v1280 = vpack.c.b16 %v1028, %v1019
  %v1281 = vpack.c.b16 %v1029, %v1020
  %v1282 = vpack.c.b16 %v1039, %v1030
  %v1283 = vpack.c.b16 %v1040, %v1031
  %v1284 = vpack.c.b16 %v1041, %v1032
  %v1285 = vpack.c.b16 %v1042, %v1033
  %v1286 = vpack.c.b16 %v1043, %v1034
  %v1287 = vpack.c.b16 %v1044, %v1035
  %v1288 = vpack.c.b16 %v1045, %v1036
  %v1289 = vpack.c.b16 %v1046, %v1037
  %v1290 = vpack.c.b16 %v1047, %v1038
  %v1291 = vpack.c.b16 %v1057, %v1048
  %v1292 = vpack.c.b16 %v1058, %v1049
  %v1293 = vpack.c.b16 %v1059, %v1050
  %v1294 = vpack.c.b16 %v1060, %v1051
  %v1295 = vpack.c.b16 %v1061, %v1052
  %v1296 = vpack.c.b16 %v1062, %v1053
  %v1297 = vpack.c.b16 %v1063, %v1054
  %v1298 = vpack.c.b16 %v1064, %v1055
  %v1299 = vpack.c.b16 %v1065, %v1056
  %v1300 = vpack.c.b16 %v1075, %v1066
  %v1301 = vpack.c.b16 %v1076, %v1067
  %v1302 = vpack.c.b16 %v1077, %v1068
  %v1303 = vpack.c.b16 %v1078, %v1069
  %v1304 = vpack.c.b16 %v1079, %v1070
  %v1305 = vpack.c.b16 %v1080, %v1071
  %v1306 = vpack.c.b16 %v1081, %v1072
  %v1307 = vpack.c.b16 %v1082, %v1073
  %v1308 = vpack.c.b16 %v1083, %v1074
  %v1309 = vpack.c.b16 %v1084, %v1084
  %v1310 = vpack.c.b16 %v1085, %v1085
  %v1311 = vpack.c.b16 %v1086, %v1086
  %v1312 = vpack.c.b16 %v1087, %v1087
  %v1313 = vpack.c.b16 %v1088, %v1088
  %v1314 = vpack.c.b16 %v1089, %v1089
  %v1315 = vpack.c.b16 %v1090, %v1090
  %v1316 = vpack.c.b16 %v1091, %v1091
  %v1317 = vpack.c.b16 %v1092, %v1092
  %v1687 = vunpack.c.l.b16 %v259
  %v1688 = vunpack.c.l.b16 %v260
  %v1689 = vunpack.c.l.b16 %v261
  %v1690 = vunpack.c.l.b16 %v262
  %v1691 = vunpack.c.l.b16 %v263
  %v1692 = vunpack.c.l.b16 %v264
  %v1693 = vunpack.c.l.b16 %v265
  %v1694 = vunpack.c.l.b16 %v266
  %v1695 = vunpack.c.l.b16 %v267
  %v1696 = vunpack.c.l.b16 %v268
  %v1697 = vunpack.c.l.b16 %v269
  %v1698 = vunpack.c.l.b16 %v270
  %v1699 = vunpack.c.l.b16 %v271
  %v1700 = vunpack.c.l.b16 %v272
  %v1701 = vunpack.c.l.b16 %v273
  %v1702 = vunpack.c.l.b16 %v274
  %v1703 = vunpack.c.l.b16 %v275
  %v1704 = vunpack.c.l.b16 %v276
  %v1705 = vunpack.c.l.b16 %v277
  %v1706 = vunpack.c.l.b16 %v278
  %v1707 = vunpack.c.l.b16 %v279
  %v1708 = vunpack.c.l.b16 %v280
  %v1709 = vunpack.c.l.b16 %v281
  %v1710 = vunpack.c.l.b16 %v282
  %v1711 = vunpack.c.l.b16 %v283
  %v1712 = vunpack.c.l.b16 %v284
  %v1713 = vunpack.c.l.b16 %v285
  %v1714 = vunpack.c.l.b16 %v286
  %v1715 = vunpack.c.l.b16 %v287
  %v1716 = vunpack.c.l.b16 %v288
  %v1717 = vunpack.c.l.b16 %v289
  %v1718 = vunpack.c.l.b16 %v290
  %v1719 = vunpack.c.l.b16 %v291
  %v1720 = vunpack.c.l.b16 %v292
  %v1721 = vunpack.c.l.b16 %v293
  %v1722 = vunpack.c.l.b16 %v294
  %v1723 = vunpack.c.l.b16 %v295
  %v1724 = vunpack.c.l.b16 %v296
  %v1725 = vunpack.c.l.b16 %v297
  %v1726 = vunpack.c.l.b16 %v298
  %v1727 = vunpack.c.l.b16 %v299
  %v1728 = vunpack.c.l.b16 %v300
  %v1729 = vunpack.c.l.b16 %v301
  %v1730 = vunpack.c.l.b16 %v302
  %v1731 = vunpack.c.l.b16 %v303
  %v1732 = vunpack.c.l.b16 %v304
  %v1733 = vunpack.c.l.b16 %v305
  %v1734 = vunpack.c.l.b16 %v306
  %v1735 = vunpack.c.l.b16 %v307
  %v1736 = vunpack.c.l.b16 %v308
  %v1737 = vunpack.c.l.b16 %v309
  %v1738 = vunpack.c.l.b16 %v310
  %v1739 = vunpack.c.l.b16 %v311
  %v1740 = vunpack.c.l.b16 %v312
  %v1741 = vunpack.c.l.b16 %v313
  %v1742 = vunpack.c.l.b16 %v314
  %v1743 = vunpack.c.l.b16 %v315
  %v1744 = vunpack.c.l.b16 %v316
  %v1745 = vunpack.c.l.b16 %v317
  %v1746 = vunpack.c.l.b16 %v318
  %v1747 = vunpack.c.l.b16 %v319
  %v1748 = vunpack.c.l.b16 %v320
  %v1749 = vunpack.c.l.b16 %v321
  %v1750 = vunpack.c.l.b16 %v322
  %v1751 = vunpack.c.l.b16 %v323
  %v1752 = vunpack.c.l.b16 %v324
  %v1753 = vunpack.c.l.b16 %v325
  %v1754 = vunpack.c.l.b16 %v326
  %v1755 = vunpack.c.l.b16 %v327
  %v1756 = vunpack.c.l.b16 %v328
  %v1757 = vunpack.c.l.b16 %v329
  %v1758 = vunpack.c.l.b16 %v330
  %v1759 = vunpack.c.l.b16 %v331
  %v1760 = vunpack.c.l.b16 %v332
  %v1761 = vunpack.c.l.b16 %v333
  %v1762 = vunpack.c.l.b16 %v334
  %v1763 = vunpack.c.l.b16 %v335
  %v1764 = vunpack.c.l.b16 %v336
  %v1765 = vunpack.c.l.b16 %v337
  %v1766 = vunpack.c.l.b16 %v338
  %v1767 = vunpack.c.l.b16 %v339
  %v1768 = vunpack.c.l.b16 %v340
  %v1769 = vunpack.c.l.b16 %v341
  %v1770 = vunpack.c.l.b16 %v342
  %v1771 = vunpack.c.l.b16 %v343
  %v1772 = vunpack.c.l.b16 %v344
  %v1773 = vunpack.c.l.b16 %v345
  %v1774 = vunpack.c.l.b16 %v346
  %v1775 = vunpack.c.l.b16 %v347
  %v1776 = vunpack.c.l.b16 %v348
  %v1777 = vunpack.c.l.b16 %v349
  %v1778 = vunpack.c.l.b16 %v350
  %v1779 = vunpack.c.l.b16 %v351
  %v1780 = vunpack.c.l.b16 %v352
  %v1781 = vunpack.c.l.b16 %v353
  %v1782 = vunpack.c.l.b16 %v354
  %v1783 = vunpack.c.l.b16 %v355
  %v1784 = vunpack.c.l.b16 %v356
  %v1785 = vunpack.c.l.b16 %v357
  %v1786 = vunpack.c.l.b16 %v358
  %v1787 = vunpack.c.l.b16 %v359
  %v1788 = vunpack.c.l.b16 %v360
  %v1789 = vunpack.c.l.b16 %v361
  %v1790 = vunpack.c.l.b16 %v362
  %v1791 = vunpack.c.l.b16 %v363
  %v1792 = vunpack.c.l.b16 %v364
  %v1793 = vunpack.c.l.b16 %v365
  %v1794 = vunpack.c.l.b16 %v366
  %v1795 = vunpack.c.l.b16 %v367
  %v1796 = vunpack.c.l.b16 %v368
  %v1797 = vunpack.c.l.b16 %v369
  %v1798 = vunpack.c.l.b16 %v370
  %v1799 = vunpack.c.l.b16 %v371
  %v1800 = vunpack.c.l.b16 %v372
  %v1801 = vunpack.c.l.b16 %v373
  %v1802 = vunpack.c.l.b16 %v374
  %v1803 = vunpack.c.l.b16 %v375
  %v1804 = vunpack.c.l.b16 %v376
  %v1805 = vunpack.c.l.b16 %v377
  %v1806 = vunpack.c.l.b16 %v378
  %v1807 = vunpack.c.l.b16 %v379
  %v1808 = vunpack.c.l.b16 %v380
  %v1809 = vunpack.c.l.b16 %v381
  %v1810 = vunpack.c.l.b16 %v382
  %v1811 = vunpack.c.l.b16 %v383
  %v1812 = vunpack.c.l.b16 %v384
  %v1813 = vunpack.c.l.b16 %v385
  %v1814 = vunpack.c.l.b16 %v386
  %v1815 = vunpack.c.l.b16 %v387
  %v1816 = vunpack.c.l.b16 %v388
  %v1817 = vunpack.c.l.b16 %v389
  %v1818 = vunpack.c.l.b16 %v390
  %v1819 = vunpack.c.l.b16 %v391
  %v1820 = vunpack.c.l.b16 %v392
  %v1821 = vunpack.c.l.b16 %v393
  %v1822 = vunpack.c.l.b16 %v394
  %v1823 = vunpack.c.l.b16 %v395
  %v1824 = vunpack.c.l.b16 %v396
  %v1825 = vunpack.c.l.b16 %v397
  %v1826 = vunpack.c.l.b16 %v398
  %v1827 = vunpack.c.l.b16 %v399
  %v1828 = vunpack.c.l.b16 %v400
  %v1829 = vunpack.c.l.b16 %v401
  %v1830 = vunpack.c.l.b16 %v402
  %v1831 = vpack.c.b16 %v1688, %v1687
  %v1832 = vpack.c.b16 %v1690, %v1689
  %v1833 = vpack.c.b16 %v1692, %v1691
  %v1834 = vpack.c.b16 %v1694, %v1693
  %v1835 = vpack.c.b16 %v1696, %v1695
  %v1836 = vpack.c.b16 %v1698, %v1697
  %v1837 = vpack.c.b16 %v1700, %v1699
  %v1838 = vpack.c.b16 %v1702, %v1701
  %v1839 = vpack.c.b16 %v1704, %v1703
  %v1840 = vpack.c.b16 %v1706, %v1705
  %v1841 = vpack.c.b16 %v1708, %v1707
  %v1842 = vpack.c.b16 %v1710, %v1709
  %v1843 = vpack.c.b16 %v1712, %v1711
  %v1844 = vpack.c.b16 %v1714, %v1713
  %v1845 = vpack.c.b16 %v1716, %v1715
  %v1846 = vpack.c.b16 %v1718, %v1717
  %v1847 = vpack.c.b16 %v1720, %v1719
  %v1848 = vpack.c.b16 %v1722, %v1721
  %v1849 = vpack.c.b16 %v1724, %v1723
  %v1850 = vpack.c.b16 %v1726, %v1725
  %v1851 = vpack.c.b16 %v1728, %v1727
  %v1852 = vpack.c.b16 %v1730, %v1729
  %v1853 = vpack.c.b16 %v1732, %v1731
  %v1854 = vpack.c.b16 %v1734, %v1733
  %v1855 = vpack.c.b16 %v1736, %v1735
  %v1856 = vpack.c.b16 %v1738, %v1737
  %v1857 = vpack.c.b16 %v1740, %v1739
  %v1858 = vpack.c.b16 %v1742, %v1741
  %v1859 = vpack.c.b16 %v1744, %v1743
  %v1860 = vpack.c.b16 %v1746, %v1745
  %v1861 = vpack.c.b16 %v1748, %v1747
  %v1862 = vpack.c.b16 %v1750, %v1749
  %v1863 = vpack.c.b16 %v1752, %v1751
  %v1864 = vpack.c.b16 %v1754, %v1753
  %v1865 = vpack.c.b16 %v1756, %v1755
  %v1866 = vpack.c.b16 %v1758, %v1757
  %v1867 = vpack.c.b16 %v1760, %v1759
  %v1868 = vpack.c.b16 %v1762, %v1761
  %v1869 = vpack.c.b16 %v1764, %v1763
  %v1870 = vpack.c.b16 %v1766, %v1765
  %v1871 = vpack.c.b16 %v1768, %v1767
  %v1872 = vpack.c.b16 %v1770, %v1769
  %v1873 = vpack.c.b16 %v1772, %v1771
  %v1874 = vpack.c.b16 %v1774, %v1773
  %v1875 = vpack.c.b16 %v1776, %v1775
  %v1876 = vpack.c.b16 %v1778, %v1777
  %v1877 = vpack.c.b16 %v1780, %v1779
  %v1878 = vpack.c.b16 %v1782, %v1781
  %v1879 = vpack.c.b16 %v1784, %v1783
  %v1880 = vpack.c.b16 %v1786, %v1785
  %v1881 = vpack.c.b16 %v1788, %v1787
  %v1882 = vpack.c.b16 %v1790, %v1789
  %v1883 = vpack.c.b16 %v1792, %v1791
  %v1884 = vpack.c.b16 %v1794, %v1793
  %v1885 = vpack.c.b16 %v1796, %v1795
  %v1886 = vpack.c.b16 %v1798, %v1797
  %v1887 = vpack.c.b16 %v1800, %v1799
  %v1888 = vpack.c.b16 %v1802, %v1801
  %v1889 = vpack.c.b16 %v1804, %v1803
  %v1890 = vpack.c.b16 %v1806, %v1805
  %v1891 = vpack.c.b16 %v1808, %v1807
  %v1892 = vpack.c.b16 %v1810, %v1809
  %v1893 = vpack.c.b16 %v1812, %v1811
  %v1894 = vpack.c.b16 %v1814, %v1813
  %v1895 = vpack.c.b16 %v1816, %v1815
  %v1896 = vpack.c.b16 %v1818, %v1817
  %v1897 = vpack.c.b16 %v1820, %v1819
  %v1898 = vpack.c.b16 %v1822, %v1821
  %v1899 = vpack.c.b16 %v1824, %v1823
  %v1900 = vpack.c.b16 %v1826, %v1825
  %v1901 = vpack.c.b16 %v1828, %v1827
  %v1902 = vpack.c.b16 %v1830, %v1829
  %1975 = vmatpush.bf16.msra.mxu0 %v1838
  %1976 = vmatpush.bf16.msra.mxu0 %v1837
  %1977 = vmatpush.bf16.msra.mxu0 %v1836
  %1978 = vmatpush.bf16.msra.mxu0 %v1835
  %1979 = vmatpush.bf16.msra.mxu0 %v1834
  %1980 = vmatpush.bf16.msra.mxu0 %v1833
  %1981 = vmatpush.bf16.msra.mxu0 %v1832
  %1982 = vmatpush.bf16.msra.mxu0 %v1831
  %1983 = vmatmul.bf16.gmra.mxu0 %v1093
  %v1984 = vpop.f32.mrf.mxu0
  %v1985 = vadd.f32 %v405, %v1984
  %v1986 = vpop.f32.mrf.mxu0
  %v1987 = vadd.f32 %v405, %v1986
  %1988 = vmatmul.bf16.gmra.mxu0 %v1102
  %v1989 = vpop.f32.mrf.mxu0
  %v1990 = vadd.f32 %v405, %v1989
  %v1991 = vpop.f32.mrf.mxu0
  %v1992 = vadd.f32 %v405, %v1991
  %1993 = vmatmul.bf16.gmra.mxu0 %v1111
  %v1994 = vpop.f32.mrf.mxu0
  %v1995 = vadd.f32 %v405, %v1994
  %v1996 = vpop.f32.mrf.mxu0
  %v1997 = vadd.f32 %v405, %v1996
  %1998 = vmatmul.bf16.gmra.mxu0 %v1120
  %v1999 = vpop.f32.mrf.mxu0
  %v2000 = vadd.f32 %v405, %v1999
  %v2001 = vpop.f32.mrf.mxu0
  %v2002 = vadd.f32 %v405, %v2001
  %2003 = vmatmul.bf16.gmra.mxu0 %v1129
  %v2004 = vpop.f32.mrf.mxu0
  %v2005 = vadd.f32 %v405, %v2004
  %v2006 = vpop.f32.mrf.mxu0
  %v2007 = vadd.f32 %v405, %v2006
  %2008 = vmatmul.bf16.gmra.mxu0 %v1138
  %v2009 = vpop.f32.mrf.mxu0
  %v2010 = vadd.f32 %v405, %v2009
  %v2011 = vpop.f32.mrf.mxu0
  %v2012 = vadd.f32 %v405, %v2011
  %2013 = vmatmul.bf16.gmra.mxu0 %v1147
  %v2014 = vpop.f32.mrf.mxu0
  %v2015 = vadd.f32 %v405, %v2014
  %v2016 = vpop.f32.mrf.mxu0
  %v2017 = vadd.f32 %v405, %v2016
  %2018 = vmatmul.bf16.gmra.mxu0 %v1156
  %v2019 = vpop.f32.mrf.mxu0
  %v2020 = vadd.f32 %v405, %v2019
  %v2021 = vpop.f32.mrf.mxu0
  %v2022 = vadd.f32 %v405, %v2021
  %2023 = vmatmul.bf16.gmra.mxu0 %v1165
  %v2024 = vpop.f32.mrf.mxu0
  %v2025 = vadd.f32 %v405, %v2024
  %v2026 = vpop.f32.mrf.mxu0
  %v2027 = vadd.f32 %v405, %v2026
  %2028 = vmatmul.bf16.gmra.mxu0 %v1174
  %v2029 = vpop.f32.mrf.mxu0
  %v2030 = vadd.f32 %v405, %v2029
  %v2031 = vpop.f32.mrf.mxu0
  %v2032 = vadd.f32 %v405, %v2031
  %2033 = vmatmul.bf16.gmra.mxu0 %v1183
  %v2034 = vpop.f32.mrf.mxu0
  %v2035 = vadd.f32 %v405, %v2034
  %v2036 = vpop.f32.mrf.mxu0
  %v2037 = vadd.f32 %v405, %v2036
  %2038 = vmatmul.bf16.gmra.mxu0 %v1192
  %v2039 = vpop.f32.mrf.mxu0
  %v2040 = vadd.f32 %v405, %v2039
  %v2041 = vpop.f32.mrf.mxu0
  %v2042 = vadd.f32 %v405, %v2041
  %2043 = vmatmul.bf16.gmra.mxu0 %v1201
  %v2044 = vpop.f32.mrf.mxu0
  %v2045 = vadd.f32 %v405, %v2044
  %v2046 = vpop.f32.mrf.mxu0
  %v2047 = vadd.f32 %v405, %v2046
  %2048 = vmatmul.bf16.gmra.mxu0 %v1210
  %v2049 = vpop.f32.mrf.mxu0
  %v2050 = vadd.f32 %v405, %v2049
  %v2051 = vpop.f32.mrf.mxu0
  %v2052 = vadd.f32 %v405, %v2051
  %2053 = vmatmul.bf16.gmra.mxu0 %v1219
  %v2054 = vpop.f32.mrf.mxu0
  %v2055 = vadd.f32 %v405, %v2054
  %v2056 = vpop.f32.mrf.mxu0
  %v2057 = vadd.f32 %v405, %v2056
  %2058 = vmatmul.bf16.gmra.mxu0 %v1228
  %v2059 = vpop.f32.mrf.mxu0
  %v2060 = vadd.f32 %v405, %v2059
  %v2061 = vpop.f32.mrf.mxu0
  %v2062 = vadd.f32 %v405, %v2061
  %2063 = vmatmul.bf16.gmra.mxu0 %v1237
  %v2064 = vpop.f32.mrf.mxu0
  %v2065 = vadd.f32 %v405, %v2064
  %v2066 = vpop.f32.mrf.mxu0
  %v2067 = vadd.f32 %v405, %v2066
  %2068 = vmatmul.bf16.gmra.mxu0 %v1246
  %v2069 = vpop.f32.mrf.mxu0
  %v2070 = vadd.f32 %v405, %v2069
  %v2071 = vpop.f32.mrf.mxu0
  %v2072 = vadd.f32 %v405, %v2071
  %2073 = vmatmul.bf16.gmra.mxu0 %v1255
  %v2074 = vpop.f32.mrf.mxu0
  %v2075 = vadd.f32 %v405, %v2074
  %v2076 = vpop.f32.mrf.mxu0
  %v2077 = vadd.f32 %v405, %v2076
  %2078 = vmatmul.bf16.gmra.mxu0 %v1264
  %v2079 = vpop.f32.mrf.mxu0
  %v2080 = vadd.f32 %v405, %v2079
  %v2081 = vpop.f32.mrf.mxu0
  %v2082 = vadd.f32 %v405, %v2081
  %2083 = vmatmul.bf16.gmra.mxu0 %v1273
  %v2084 = vpop.f32.mrf.mxu0
  %v2085 = vadd.f32 %v405, %v2084
  %v2086 = vpop.f32.mrf.mxu0
  %v2087 = vadd.f32 %v405, %v2086
  %2088 = vmatmul.bf16.gmra.mxu0 %v1282
  %v2089 = vpop.f32.mrf.mxu0
  %v2090 = vadd.f32 %v405, %v2089
  %v2091 = vpop.f32.mrf.mxu0
  %v2092 = vadd.f32 %v405, %v2091
  %2093 = vmatmul.bf16.gmra.mxu0 %v1291
  %v2094 = vpop.f32.mrf.mxu0
  %v2095 = vadd.f32 %v405, %v2094
  %v2096 = vpop.f32.mrf.mxu0
  %v2097 = vadd.f32 %v405, %v2096
  %2098 = vmatmul.bf16.gmra.mxu0 %v1300
  %v2099 = vpop.f32.mrf.mxu0
  %v2100 = vadd.f32 %v405, %v2099
  %v2101 = vpop.f32.mrf.mxu0
  %v2102 = vadd.f32 %v405, %v2101
  %2103 = vmatmul.bf16.gmra.mxu0 %v1309
  %v2104 = vpop.f32.mrf.mxu0
  %v2105 = vadd.f32 %v405, %v2104
  %v2106 = vpop.f32.mrf.mxu0
  %2107 = vdwg.mxu0
  %2108 = vmatpush.bf16.msra.mxu0 %v1846
  %2109 = vmatpush.bf16.msra.mxu0 %v1845
  %2110 = vmatpush.bf16.msra.mxu0 %v1844
  %2111 = vmatpush.bf16.msra.mxu0 %v1843
  %2112 = vmatpush.bf16.msra.mxu0 %v1842
  %2113 = vmatpush.bf16.msra.mxu0 %v1841
  %2114 = vmatpush.bf16.msra.mxu0 %v1840
  %2115 = vmatpush.bf16.msra.mxu0 %v1839
  %2116 = vmatmul.bf16.gmra.mxu0 %v1094
  %v2117 = vpop.f32.mrf.mxu0
  %v2118 = vadd.f32 %v1985, %v2117
  %v2119 = vpop.f32.mrf.mxu0
  %v2120 = vadd.f32 %v1987, %v2119
  %2121 = vmatmul.bf16.gmra.mxu0 %v1103
  %v2122 = vpop.f32.mrf.mxu0
  %v2123 = vadd.f32 %v1990, %v2122
  %v2124 = vpop.f32.mrf.mxu0
  %v2125 = vadd.f32 %v1992, %v2124
  %2126 = vmatmul.bf16.gmra.mxu0 %v1112
  %v2127 = vpop.f32.mrf.mxu0
  %v2128 = vadd.f32 %v1995, %v2127
  %v2129 = vpop.f32.mrf.mxu0
  %v2130 = vadd.f32 %v1997, %v2129
  %2131 = vmatmul.bf16.gmra.mxu0 %v1121
  %v2132 = vpop.f32.mrf.mxu0
  %v2133 = vadd.f32 %v2000, %v2132
  %v2134 = vpop.f32.mrf.mxu0
  %v2135 = vadd.f32 %v2002, %v2134
  %2136 = vmatmul.bf16.gmra.mxu0 %v1130
  %v2137 = vpop.f32.mrf.mxu0
  %v2138 = vadd.f32 %v2005, %v2137
  %v2139 = vpop.f32.mrf.mxu0
  %v2140 = vadd.f32 %v2007, %v2139
  %2141 = vmatmul.bf16.gmra.mxu0 %v1139
  %v2142 = vpop.f32.mrf.mxu0
  %v2143 = vadd.f32 %v2010, %v2142
  %v2144 = vpop.f32.mrf.mxu0
  %v2145 = vadd.f32 %v2012, %v2144
  %2146 = vmatmul.bf16.gmra.mxu0 %v1148
  %v2147 = vpop.f32.mrf.mxu0
  %v2148 = vadd.f32 %v2015, %v2147
  %v2149 = vpop.f32.mrf.mxu0
  %v2150 = vadd.f32 %v2017, %v2149
  %2151 = vmatmul.bf16.gmra.mxu0 %v1157
  %v2152 = vpop.f32.mrf.mxu0
  %v2153 = vadd.f32 %v2020, %v2152
  %v2154 = vpop.f32.mrf.mxu0
  %v2155 = vadd.f32 %v2022, %v2154
  %2156 = vmatmul.bf16.gmra.mxu0 %v1166
  %v2157 = vpop.f32.mrf.mxu0
  %v2158 = vadd.f32 %v2025, %v2157
  %v2159 = vpop.f32.mrf.mxu0
  %v2160 = vadd.f32 %v2027, %v2159
  %2161 = vmatmul.bf16.gmra.mxu0 %v1175
  %v2162 = vpop.f32.mrf.mxu0
  %v2163 = vadd.f32 %v2030, %v2162
  %v2164 = vpop.f32.mrf.mxu0
  %v2165 = vadd.f32 %v2032, %v2164
  %2166 = vmatmul.bf16.gmra.mxu0 %v1184
  %v2167 = vpop.f32.mrf.mxu0
  %v2168 = vadd.f32 %v2035, %v2167
  %v2169 = vpop.f32.mrf.mxu0
  %v2170 = vadd.f32 %v2037, %v2169
  %2171 = vmatmul.bf16.gmra.mxu0 %v1193
  %v2172 = vpop.f32.mrf.mxu0
  %v2173 = vadd.f32 %v2040, %v2172
  %v2174 = vpop.f32.mrf.mxu0
  %v2175 = vadd.f32 %v2042, %v2174
  %2176 = vmatmul.bf16.gmra.mxu0 %v1202
  %v2177 = vpop.f32.mrf.mxu0
  %v2178 = vadd.f32 %v2045, %v2177
  %v2179 = vpop.f32.mrf.mxu0
  %v2180 = vadd.f32 %v2047, %v2179
  %2181 = vmatmul.bf16.gmra.mxu0 %v1211
  %v2182 = vpop.f32.mrf.mxu0
  %v2183 = vadd.f32 %v2050, %v2182
  %v2184 = vpop.f32.mrf.mxu0
  %v2185 = vadd.f32 %v2052, %v2184
  %2186 = vmatmul.bf16.gmra.mxu0 %v1220
  %v2187 = vpop.f32.mrf.mxu0
  %v2188 = vadd.f32 %v2055, %v2187
  %v2189 = vpop.f32.mrf.mxu0
  %v2190 = vadd.f32 %v2057, %v2189
  %2191 = vmatmul.bf16.gmra.mxu0 %v1229
  %v2192 = vpop.f32.mrf.mxu0
  %v2193 = vadd.f32 %v2060, %v2192
  %v2194 = vpop.f32.mrf.mxu0
  %v2195 = vadd.f32 %v2062, %v2194
  %2196 = vmatmul.bf16.gmra.mxu0 %v1238
  %v2197 = vpop.f32.mrf.mxu0
  %v2198 = vadd.f32 %v2065, %v2197
  %v2199 = vpop.f32.mrf.mxu0
  %v2200 = vadd.f32 %v2067, %v2199
  %2201 = vmatmul.bf16.gmra.mxu0 %v1247
  %v2202 = vpop.f32.mrf.mxu0
  %v2203 = vadd.f32 %v2070, %v2202
  %v2204 = vpop.f32.mrf.mxu0
  %v2205 = vadd.f32 %v2072, %v2204
  %2206 = vmatmul.bf16.gmra.mxu0 %v1256
  %v2207 = vpop.f32.mrf.mxu0
  %v2208 = vadd.f32 %v2075, %v2207
  %v2209 = vpop.f32.mrf.mxu0
  %v2210 = vadd.f32 %v2077, %v2209
  %2211 = vmatmul.bf16.gmra.mxu0 %v1265
  %v2212 = vpop.f32.mrf.mxu0
  %v2213 = vadd.f32 %v2080, %v2212
  %v2214 = vpop.f32.mrf.mxu0
  %v2215 = vadd.f32 %v2082, %v2214
  %2216 = vmatmul.bf16.gmra.mxu0 %v1274
  %v2217 = vpop.f32.mrf.mxu0
  %v2218 = vadd.f32 %v2085, %v2217
  %v2219 = vpop.f32.mrf.mxu0
  %v2220 = vadd.f32 %v2087, %v2219
  %2221 = vmatmul.bf16.gmra.mxu0 %v1283
  %v2222 = vpop.f32.mrf.mxu0
  %v2223 = vadd.f32 %v2090, %v2222
  %v2224 = vpop.f32.mrf.mxu0
  %v2225 = vadd.f32 %v2092, %v2224
  %2226 = vmatmul.bf16.gmra.mxu0 %v1292
  %v2227 = vpop.f32.mrf.mxu0
  %v2228 = vadd.f32 %v2095, %v2227
  %v2229 = vpop.f32.mrf.mxu0
  %v2230 = vadd.f32 %v2097, %v2229
  %2231 = vmatmul.bf16.gmra.mxu0 %v1301
  %v2232 = vpop.f32.mrf.mxu0
  %v2233 = vadd.f32 %v2100, %v2232
  %v2234 = vpop.f32.mrf.mxu0
  %v2235 = vadd.f32 %v2102, %v2234
  %2236 = vmatmul.bf16.gmra.mxu0 %v1310
  %v2237 = vpop.f32.mrf.mxu0
  %v2238 = vadd.f32 %v2105, %v2237
  %v2239 = vpop.f32.mrf.mxu0
  %2240 = vdwg.mxu0
  %2241 = vmatpush.bf16.msra.mxu0 %v1854
  %2242 = vmatpush.bf16.msra.mxu0 %v1853
  %2243 = vmatpush.bf16.msra.mxu0 %v1852
  %2244 = vmatpush.bf16.msra.mxu0 %v1851
  %2245 = vmatpush.bf16.msra.mxu0 %v1850
  %2246 = vmatpush.bf16.msra.mxu0 %v1849
  %2247 = vmatpush.bf16.msra.mxu0 %v1848
  %2248 = vmatpush.bf16.msra.mxu0 %v1847
  %2249 = vmatmul.bf16.gmra.mxu0 %v1095
  %v2250 = vpop.f32.mrf.mxu0
  %v2251 = vadd.f32 %v2118, %v2250
  %v2252 = vpop.f32.mrf.mxu0
  %v2253 = vadd.f32 %v2120, %v2252
  %2254 = vmatmul.bf16.gmra.mxu0 %v1104
  %v2255 = vpop.f32.mrf.mxu0
  %v2256 = vadd.f32 %v2123, %v2255
  %v2257 = vpop.f32.mrf.mxu0
  %v2258 = vadd.f32 %v2125, %v2257
  %2259 = vmatmul.bf16.gmra.mxu0 %v1113
  %v2260 = vpop.f32.mrf.mxu0
  %v2261 = vadd.f32 %v2128, %v2260
  %v2262 = vpop.f32.mrf.mxu0
  %v2263 = vadd.f32 %v2130, %v2262
  %2264 = vmatmul.bf16.gmra.mxu0 %v1122
  %v2265 = vpop.f32.mrf.mxu0
  %v2266 = vadd.f32 %v2133, %v2265
  %v2267 = vpop.f32.mrf.mxu0
  %v2268 = vadd.f32 %v2135, %v2267
  %2269 = vmatmul.bf16.gmra.mxu0 %v1131
  %v2270 = vpop.f32.mrf.mxu0
  %v2271 = vadd.f32 %v2138, %v2270
  %v2272 = vpop.f32.mrf.mxu0
  %v2273 = vadd.f32 %v2140, %v2272
  %2274 = vmatmul.bf16.gmra.mxu0 %v1140
  %v2275 = vpop.f32.mrf.mxu0
  %v2276 = vadd.f32 %v2143, %v2275
  %v2277 = vpop.f32.mrf.mxu0
  %v2278 = vadd.f32 %v2145, %v2277
  %2279 = vmatmul.bf16.gmra.mxu0 %v1149
  %v2280 = vpop.f32.mrf.mxu0
  %v2281 = vadd.f32 %v2148, %v2280
  %v2282 = vpop.f32.mrf.mxu0
  %v2283 = vadd.f32 %v2150, %v2282
  %2284 = vmatmul.bf16.gmra.mxu0 %v1158
  %v2285 = vpop.f32.mrf.mxu0
  %v2286 = vadd.f32 %v2153, %v2285
  %v2287 = vpop.f32.mrf.mxu0
  %v2288 = vadd.f32 %v2155, %v2287
  %2289 = vmatmul.bf16.gmra.mxu0 %v1167
  %v2290 = vpop.f32.mrf.mxu0
  %v2291 = vadd.f32 %v2158, %v2290
  %v2292 = vpop.f32.mrf.mxu0
  %v2293 = vadd.f32 %v2160, %v2292
  %2294 = vmatmul.bf16.gmra.mxu0 %v1176
  %v2295 = vpop.f32.mrf.mxu0
  %v2296 = vadd.f32 %v2163, %v2295
  %v2297 = vpop.f32.mrf.mxu0
  %v2298 = vadd.f32 %v2165, %v2297
  %2299 = vmatmul.bf16.gmra.mxu0 %v1185
  %v2300 = vpop.f32.mrf.mxu0
  %v2301 = vadd.f32 %v2168, %v2300
  %v2302 = vpop.f32.mrf.mxu0
  %v2303 = vadd.f32 %v2170, %v2302
  %2304 = vmatmul.bf16.gmra.mxu0 %v1194
  %v2305 = vpop.f32.mrf.mxu0
  %v2306 = vadd.f32 %v2173, %v2305
  %v2307 = vpop.f32.mrf.mxu0
  %v2308 = vadd.f32 %v2175, %v2307
  %2309 = vmatmul.bf16.gmra.mxu0 %v1203
  %v2310 = vpop.f32.mrf.mxu0
  %v2311 = vadd.f32 %v2178, %v2310
  %v2312 = vpop.f32.mrf.mxu0
  %v2313 = vadd.f32 %v2180, %v2312
  %2314 = vmatmul.bf16.gmra.mxu0 %v1212
  %v2315 = vpop.f32.mrf.mxu0
  %v2316 = vadd.f32 %v2183, %v2315
  %v2317 = vpop.f32.mrf.mxu0
  %v2318 = vadd.f32 %v2185, %v2317
  %2319 = vmatmul.bf16.gmra.mxu0 %v1221
  %v2320 = vpop.f32.mrf.mxu0
  %v2321 = vadd.f32 %v2188, %v2320
  %v2322 = vpop.f32.mrf.mxu0
  %v2323 = vadd.f32 %v2190, %v2322
  %2324 = vmatmul.bf16.gmra.mxu0 %v1230
  %v2325 = vpop.f32.mrf.mxu0
  %v2326 = vadd.f32 %v2193, %v2325
  %v2327 = vpop.f32.mrf.mxu0
  %v2328 = vadd.f32 %v2195, %v2327
  %2329 = vmatmul.bf16.gmra.mxu0 %v1239
  %v2330 = vpop.f32.mrf.mxu0
  %v2331 = vadd.f32 %v2198, %v2330
  %v2332 = vpop.f32.mrf.mxu0
  %v2333 = vadd.f32 %v2200, %v2332
  %2334 = vmatmul.bf16.gmra.mxu0 %v1248
  %v2335 = vpop.f32.mrf.mxu0
  %v2336 = vadd.f32 %v2203, %v2335
  %v2337 = vpop.f32.mrf.mxu0
  %v2338 = vadd.f32 %v2205, %v2337
  %2339 = vmatmul.bf16.gmra.mxu0 %v1257
  %v2340 = vpop.f32.mrf.mxu0
  %v2341 = vadd.f32 %v2208, %v2340
  %v2342 = vpop.f32.mrf.mxu0
  %v2343 = vadd.f32 %v2210, %v2342
  %2344 = vmatmul.bf16.gmra.mxu0 %v1266
  %v2345 = vpop.f32.mrf.mxu0
  %v2346 = vadd.f32 %v2213, %v2345
  %v2347 = vpop.f32.mrf.mxu0
  %v2348 = vadd.f32 %v2215, %v2347
  %2349 = vmatmul.bf16.gmra.mxu0 %v1275
  %v2350 = vpop.f32.mrf.mxu0
  %v2351 = vadd.f32 %v2218, %v2350
  %v2352 = vpop.f32.mrf.mxu0
  %v2353 = vadd.f32 %v2220, %v2352
  %2354 = vmatmul.bf16.gmra.mxu0 %v1284
  %v2355 = vpop.f32.mrf.mxu0
  %v2356 = vadd.f32 %v2223, %v2355
  %v2357 = vpop.f32.mrf.mxu0
  %v2358 = vadd.f32 %v2225, %v2357
  %2359 = vmatmul.bf16.gmra.mxu0 %v1293
  %v2360 = vpop.f32.mrf.mxu0
  %v2361 = vadd.f32 %v2228, %v2360
  %v2362 = vpop.f32.mrf.mxu0
  %v2363 = vadd.f32 %v2230, %v2362
  %2364 = vmatmul.bf16.gmra.mxu0 %v1302
  %v2365 = vpop.f32.mrf.mxu0
  %v2366 = vadd.f32 %v2233, %v2365
  %v2367 = vpop.f32.mrf.mxu0
  %v2368 = vadd.f32 %v2235, %v2367
  %2369 = vmatmul.bf16.gmra.mxu0 %v1311
  %v2370 = vpop.f32.mrf.mxu0
  %v2371 = vadd.f32 %v2238, %v2370
  %v2372 = vpop.f32.mrf.mxu0
  %2373 = vdwg.mxu0
  %2374 = vmatpush.bf16.msra.mxu0 %v1862
  %2375 = vmatpush.bf16.msra.mxu0 %v1861
  %2376 = vmatpush.bf16.msra.mxu0 %v1860
  %2377 = vmatpush.bf16.msra.mxu0 %v1859
  %2378 = vmatpush.bf16.msra.mxu0 %v1858
  %2379 = vmatpush.bf16.msra.mxu0 %v1857
  %2380 = vmatpush.bf16.msra.mxu0 %v1856
  %2381 = vmatpush.bf16.msra.mxu0 %v1855
  %2382 = vmatmul.bf16.gmra.mxu0 %v1096
  %v2383 = vpop.f32.mrf.mxu0
  %v2384 = vadd.f32 %v2251, %v2383
  %v2385 = vpop.f32.mrf.mxu0
  %v2386 = vadd.f32 %v2253, %v2385
  %2387 = vmatmul.bf16.gmra.mxu0 %v1105
  %v2388 = vpop.f32.mrf.mxu0
  %v2389 = vadd.f32 %v2256, %v2388
  %v2390 = vpop.f32.mrf.mxu0
  %v2391 = vadd.f32 %v2258, %v2390
  %2392 = vmatmul.bf16.gmra.mxu0 %v1114
  %v2393 = vpop.f32.mrf.mxu0
  %v2394 = vadd.f32 %v2261, %v2393
  %v2395 = vpop.f32.mrf.mxu0
  %v2396 = vadd.f32 %v2263, %v2395
  %2397 = vmatmul.bf16.gmra.mxu0 %v1123
  %v2398 = vpop.f32.mrf.mxu0
  %v2399 = vadd.f32 %v2266, %v2398
  %v2400 = vpop.f32.mrf.mxu0
  %v2401 = vadd.f32 %v2268, %v2400
  %2402 = vmatmul.bf16.gmra.mxu0 %v1132
  %v2403 = vpop.f32.mrf.mxu0
  %v2404 = vadd.f32 %v2271, %v2403
  %v2405 = vpop.f32.mrf.mxu0
  %v2406 = vadd.f32 %v2273, %v2405
  %2407 = vmatmul.bf16.gmra.mxu0 %v1141
  %v2408 = vpop.f32.mrf.mxu0
  %v2409 = vadd.f32 %v2276, %v2408
  %v2410 = vpop.f32.mrf.mxu0
  %v2411 = vadd.f32 %v2278, %v2410
  %2412 = vmatmul.bf16.gmra.mxu0 %v1150
  %v2413 = vpop.f32.mrf.mxu0
  %v2414 = vadd.f32 %v2281, %v2413
  %v2415 = vpop.f32.mrf.mxu0
  %v2416 = vadd.f32 %v2283, %v2415
  %2417 = vmatmul.bf16.gmra.mxu0 %v1159
  %v2418 = vpop.f32.mrf.mxu0
  %v2419 = vadd.f32 %v2286, %v2418
  %v2420 = vpop.f32.mrf.mxu0
  %v2421 = vadd.f32 %v2288, %v2420
  %2422 = vmatmul.bf16.gmra.mxu0 %v1168
  %v2423 = vpop.f32.mrf.mxu0
  %v2424 = vadd.f32 %v2291, %v2423
  %v2425 = vpop.f32.mrf.mxu0
  %v2426 = vadd.f32 %v2293, %v2425
  %2427 = vmatmul.bf16.gmra.mxu0 %v1177
  %v2428 = vpop.f32.mrf.mxu0
  %v2429 = vadd.f32 %v2296, %v2428
  %v2430 = vpop.f32.mrf.mxu0
  %v2431 = vadd.f32 %v2298, %v2430
  %2432 = vmatmul.bf16.gmra.mxu0 %v1186
  %v2433 = vpop.f32.mrf.mxu0
  %v2434 = vadd.f32 %v2301, %v2433
  %v2435 = vpop.f32.mrf.mxu0
  %v2436 = vadd.f32 %v2303, %v2435
  %2437 = vmatmul.bf16.gmra.mxu0 %v1195
  %v2438 = vpop.f32.mrf.mxu0
  %v2439 = vadd.f32 %v2306, %v2438
  %v2440 = vpop.f32.mrf.mxu0
  %v2441 = vadd.f32 %v2308, %v2440
  %2442 = vmatmul.bf16.gmra.mxu0 %v1204
  %v2443 = vpop.f32.mrf.mxu0
  %v2444 = vadd.f32 %v2311, %v2443
  %v2445 = vpop.f32.mrf.mxu0
  %v2446 = vadd.f32 %v2313, %v2445
  %2447 = vmatmul.bf16.gmra.mxu0 %v1213
  %v2448 = vpop.f32.mrf.mxu0
  %v2449 = vadd.f32 %v2316, %v2448
  %v2450 = vpop.f32.mrf.mxu0
  %v2451 = vadd.f32 %v2318, %v2450
  %2452 = vmatmul.bf16.gmra.mxu0 %v1222
  %v2453 = vpop.f32.mrf.mxu0
  %v2454 = vadd.f32 %v2321, %v2453
  %v2455 = vpop.f32.mrf.mxu0
  %v2456 = vadd.f32 %v2323, %v2455
  %2457 = vmatmul.bf16.gmra.mxu0 %v1231
  %v2458 = vpop.f32.mrf.mxu0
  %v2459 = vadd.f32 %v2326, %v2458
  %v2460 = vpop.f32.mrf.mxu0
  %v2461 = vadd.f32 %v2328, %v2460
  %2462 = vmatmul.bf16.gmra.mxu0 %v1240
  %v2463 = vpop.f32.mrf.mxu0
  %v2464 = vadd.f32 %v2331, %v2463
  %v2465 = vpop.f32.mrf.mxu0
  %v2466 = vadd.f32 %v2333, %v2465
  %2467 = vmatmul.bf16.gmra.mxu0 %v1249
  %v2468 = vpop.f32.mrf.mxu0
  %v2469 = vadd.f32 %v2336, %v2468
  %v2470 = vpop.f32.mrf.mxu0
  %v2471 = vadd.f32 %v2338, %v2470
  %2472 = vmatmul.bf16.gmra.mxu0 %v1258
  %v2473 = vpop.f32.mrf.mxu0
  %v2474 = vadd.f32 %v2341, %v2473
  %v2475 = vpop.f32.mrf.mxu0
  %v2476 = vadd.f32 %v2343, %v2475
  %2477 = vmatmul.bf16.gmra.mxu0 %v1267
  %v2478 = vpop.f32.mrf.mxu0
  %v2479 = vadd.f32 %v2346, %v2478
  %v2480 = vpop.f32.mrf.mxu0
  %v2481 = vadd.f32 %v2348, %v2480
  %2482 = vmatmul.bf16.gmra.mxu0 %v1276
  %v2483 = vpop.f32.mrf.mxu0
  %v2484 = vadd.f32 %v2351, %v2483
  %v2485 = vpop.f32.mrf.mxu0
  %v2486 = vadd.f32 %v2353, %v2485
  %2487 = vmatmul.bf16.gmra.mxu0 %v1285
  %v2488 = vpop.f32.mrf.mxu0
  %v2489 = vadd.f32 %v2356, %v2488
  %v2490 = vpop.f32.mrf.mxu0
  %v2491 = vadd.f32 %v2358, %v2490
  %2492 = vmatmul.bf16.gmra.mxu0 %v1294
  %v2493 = vpop.f32.mrf.mxu0
  %v2494 = vadd.f32 %v2361, %v2493
  %v2495 = vpop.f32.mrf.mxu0
  %v2496 = vadd.f32 %v2363, %v2495
  %2497 = vmatmul.bf16.gmra.mxu0 %v1303
  %v2498 = vpop.f32.mrf.mxu0
  %v2499 = vadd.f32 %v2366, %v2498
  %v2500 = vpop.f32.mrf.mxu0
  %v2501 = vadd.f32 %v2368, %v2500
  %2502 = vmatmul.bf16.gmra.mxu0 %v1312
  %v2503 = vpop.f32.mrf.mxu0
  %v2504 = vadd.f32 %v2371, %v2503
  %v2505 = vpop.f32.mrf.mxu0
  %2506 = vdwg.mxu0
  %2507 = vmatpush.bf16.msra.mxu0 %v1870
  %2508 = vmatpush.bf16.msra.mxu0 %v1869
  %2509 = vmatpush.bf16.msra.mxu0 %v1868
  %2510 = vmatpush.bf16.msra.mxu0 %v1867
  %2511 = vmatpush.bf16.msra.mxu0 %v1866
  %2512 = vmatpush.bf16.msra.mxu0 %v1865
  %2513 = vmatpush.bf16.msra.mxu0 %v1864
  %2514 = vmatpush.bf16.msra.mxu0 %v1863
  %2515 = vmatmul.bf16.gmra.mxu0 %v1097
  %v2516 = vpop.f32.mrf.mxu0
  %v2517 = vadd.f32 %v2384, %v2516
  %v2518 = vpop.f32.mrf.mxu0
  %v2519 = vadd.f32 %v2386, %v2518
  %2520 = vmatmul.bf16.gmra.mxu0 %v1106
  %v2521 = vpop.f32.mrf.mxu0
  %v2522 = vadd.f32 %v2389, %v2521
  %v2523 = vpop.f32.mrf.mxu0
  %v2524 = vadd.f32 %v2391, %v2523
  %2525 = vmatmul.bf16.gmra.mxu0 %v1115
  %v2526 = vpop.f32.mrf.mxu0
  %v2527 = vadd.f32 %v2394, %v2526
  %v2528 = vpop.f32.mrf.mxu0
  %v2529 = vadd.f32 %v2396, %v2528
  %2530 = vmatmul.bf16.gmra.mxu0 %v1124
  %v2531 = vpop.f32.mrf.mxu0
  %v2532 = vadd.f32 %v2399, %v2531
  %v2533 = vpop.f32.mrf.mxu0
  %v2534 = vadd.f32 %v2401, %v2533
  %2535 = vmatmul.bf16.gmra.mxu0 %v1133
  %v2536 = vpop.f32.mrf.mxu0
  %v2537 = vadd.f32 %v2404, %v2536
  %v2538 = vpop.f32.mrf.mxu0
  %v2539 = vadd.f32 %v2406, %v2538
  %2540 = vmatmul.bf16.gmra.mxu0 %v1142
  %v2541 = vpop.f32.mrf.mxu0
  %v2542 = vadd.f32 %v2409, %v2541
  %v2543 = vpop.f32.mrf.mxu0
  %v2544 = vadd.f32 %v2411, %v2543
  %2545 = vmatmul.bf16.gmra.mxu0 %v1151
  %v2546 = vpop.f32.mrf.mxu0
  %v2547 = vadd.f32 %v2414, %v2546
  %v2548 = vpop.f32.mrf.mxu0
  %v2549 = vadd.f32 %v2416, %v2548
  %2550 = vmatmul.bf16.gmra.mxu0 %v1160
  %v2551 = vpop.f32.mrf.mxu0
  %v2552 = vadd.f32 %v2419, %v2551
  %v2553 = vpop.f32.mrf.mxu0
  %v2554 = vadd.f32 %v2421, %v2553
  %2555 = vmatmul.bf16.gmra.mxu0 %v1169
  %v2556 = vpop.f32.mrf.mxu0
  %v2557 = vadd.f32 %v2424, %v2556
  %v2558 = vpop.f32.mrf.mxu0
  %v2559 = vadd.f32 %v2426, %v2558
  %2560 = vmatmul.bf16.gmra.mxu0 %v1178
  %v2561 = vpop.f32.mrf.mxu0
  %v2562 = vadd.f32 %v2429, %v2561
  %v2563 = vpop.f32.mrf.mxu0
  %v2564 = vadd.f32 %v2431, %v2563
  %2565 = vmatmul.bf16.gmra.mxu0 %v1187
  %v2566 = vpop.f32.mrf.mxu0
  %v2567 = vadd.f32 %v2434, %v2566
  %v2568 = vpop.f32.mrf.mxu0
  %v2569 = vadd.f32 %v2436, %v2568
  %2570 = vmatmul.bf16.gmra.mxu0 %v1196
  %v2571 = vpop.f32.mrf.mxu0
  %v2572 = vadd.f32 %v2439, %v2571
  %v2573 = vpop.f32.mrf.mxu0
  %v2574 = vadd.f32 %v2441, %v2573
  %2575 = vmatmul.bf16.gmra.mxu0 %v1205
  %v2576 = vpop.f32.mrf.mxu0
  %v2577 = vadd.f32 %v2444, %v2576
  %v2578 = vpop.f32.mrf.mxu0
  %v2579 = vadd.f32 %v2446, %v2578
  %2580 = vmatmul.bf16.gmra.mxu0 %v1214
  %v2581 = vpop.f32.mrf.mxu0
  %v2582 = vadd.f32 %v2449, %v2581
  %v2583 = vpop.f32.mrf.mxu0
  %v2584 = vadd.f32 %v2451, %v2583
  %2585 = vmatmul.bf16.gmra.mxu0 %v1223
  %v2586 = vpop.f32.mrf.mxu0
  %v2587 = vadd.f32 %v2454, %v2586
  %v2588 = vpop.f32.mrf.mxu0
  %v2589 = vadd.f32 %v2456, %v2588
  %2590 = vmatmul.bf16.gmra.mxu0 %v1232
  %v2591 = vpop.f32.mrf.mxu0
  %v2592 = vadd.f32 %v2459, %v2591
  %v2593 = vpop.f32.mrf.mxu0
  %v2594 = vadd.f32 %v2461, %v2593
  %2595 = vmatmul.bf16.gmra.mxu0 %v1241
  %v2596 = vpop.f32.mrf.mxu0
  %v2597 = vadd.f32 %v2464, %v2596
  %v2598 = vpop.f32.mrf.mxu0
  %v2599 = vadd.f32 %v2466, %v2598
  %2600 = vmatmul.bf16.gmra.mxu0 %v1250
  %v2601 = vpop.f32.mrf.mxu0
  %v2602 = vadd.f32 %v2469, %v2601
  %v2603 = vpop.f32.mrf.mxu0
  %v2604 = vadd.f32 %v2471, %v2603
  %2605 = vmatmul.bf16.gmra.mxu0 %v1259
  %v2606 = vpop.f32.mrf.mxu0
  %v2607 = vadd.f32 %v2474, %v2606
  %v2608 = vpop.f32.mrf.mxu0
  %v2609 = vadd.f32 %v2476, %v2608
  %2610 = vmatmul.bf16.gmra.mxu0 %v1268
  %v2611 = vpop.f32.mrf.mxu0
  %v2612 = vadd.f32 %v2479, %v2611
  %v2613 = vpop.f32.mrf.mxu0
  %v2614 = vadd.f32 %v2481, %v2613
  %2615 = vmatmul.bf16.gmra.mxu0 %v1277
  %v2616 = vpop.f32.mrf.mxu0
  %v2617 = vadd.f32 %v2484, %v2616
  %v2618 = vpop.f32.mrf.mxu0
  %v2619 = vadd.f32 %v2486, %v2618
  %2620 = vmatmul.bf16.gmra.mxu0 %v1286
  %v2621 = vpop.f32.mrf.mxu0
  %v2622 = vadd.f32 %v2489, %v2621
  %v2623 = vpop.f32.mrf.mxu0
  %v2624 = vadd.f32 %v2491, %v2623
  %2625 = vmatmul.bf16.gmra.mxu0 %v1295
  %v2626 = vpop.f32.mrf.mxu0
  %v2627 = vadd.f32 %v2494, %v2626
  %v2628 = vpop.f32.mrf.mxu0
  %v2629 = vadd.f32 %v2496, %v2628
  %2630 = vmatmul.bf16.gmra.mxu0 %v1304
  %v2631 = vpop.f32.mrf.mxu0
  %v2632 = vadd.f32 %v2499, %v2631
  %v2633 = vpop.f32.mrf.mxu0
  %v2634 = vadd.f32 %v2501, %v2633
  %2635 = vmatmul.bf16.gmra.mxu0 %v1313
  %v2636 = vpop.f32.mrf.mxu0
  %v2637 = vadd.f32 %v2504, %v2636
  %v2638 = vpop.f32.mrf.mxu0
  %2639 = vdwg.mxu0
  %2640 = vmatpush.bf16.msra.mxu0 %v1878
  %2641 = vmatpush.bf16.msra.mxu0 %v1877
  %2642 = vmatpush.bf16.msra.mxu0 %v1876
  %2643 = vmatpush.bf16.msra.mxu0 %v1875
  %2644 = vmatpush.bf16.msra.mxu0 %v1874
  %2645 = vmatpush.bf16.msra.mxu0 %v1873
  %2646 = vmatpush.bf16.msra.mxu0 %v1872
  %2647 = vmatpush.bf16.msra.mxu0 %v1871
  %2648 = vmatmul.bf16.gmra.mxu0 %v1098
  %v2649 = vpop.f32.mrf.mxu0
  %v2650 = vadd.f32 %v2517, %v2649
  %v2651 = vpop.f32.mrf.mxu0
  %v2652 = vadd.f32 %v2519, %v2651
  %2653 = vmatmul.bf16.gmra.mxu0 %v1107
  %v2654 = vpop.f32.mrf.mxu0
  %v2655 = vadd.f32 %v2522, %v2654
  %v2656 = vpop.f32.mrf.mxu0
  %v2657 = vadd.f32 %v2524, %v2656
  %2658 = vmatmul.bf16.gmra.mxu0 %v1116
  %v2659 = vpop.f32.mrf.mxu0
  %v2660 = vadd.f32 %v2527, %v2659
  %v2661 = vpop.f32.mrf.mxu0
  %v2662 = vadd.f32 %v2529, %v2661
  %2663 = vmatmul.bf16.gmra.mxu0 %v1125
  %v2664 = vpop.f32.mrf.mxu0
  %v2665 = vadd.f32 %v2532, %v2664
  %v2666 = vpop.f32.mrf.mxu0
  %v2667 = vadd.f32 %v2534, %v2666
  %2668 = vmatmul.bf16.gmra.mxu0 %v1134
  %v2669 = vpop.f32.mrf.mxu0
  %v2670 = vadd.f32 %v2537, %v2669
  %v2671 = vpop.f32.mrf.mxu0
  %v2672 = vadd.f32 %v2539, %v2671
  %2673 = vmatmul.bf16.gmra.mxu0 %v1143
  %v2674 = vpop.f32.mrf.mxu0
  %v2675 = vadd.f32 %v2542, %v2674
  %v2676 = vpop.f32.mrf.mxu0
  %v2677 = vadd.f32 %v2544, %v2676
  %2678 = vmatmul.bf16.gmra.mxu0 %v1152
  %v2679 = vpop.f32.mrf.mxu0
  %v2680 = vadd.f32 %v2547, %v2679
  %v2681 = vpop.f32.mrf.mxu0
  %v2682 = vadd.f32 %v2549, %v2681
  %2683 = vmatmul.bf16.gmra.mxu0 %v1161
  %v2684 = vpop.f32.mrf.mxu0
  %v2685 = vadd.f32 %v2552, %v2684
  %v2686 = vpop.f32.mrf.mxu0
  %v2687 = vadd.f32 %v2554, %v2686
  %2688 = vmatmul.bf16.gmra.mxu0 %v1170
  %v2689 = vpop.f32.mrf.mxu0
  %v2690 = vadd.f32 %v2557, %v2689
  %v2691 = vpop.f32.mrf.mxu0
  %v2692 = vadd.f32 %v2559, %v2691
  %2693 = vmatmul.bf16.gmra.mxu0 %v1179
  %v2694 = vpop.f32.mrf.mxu0
  %v2695 = vadd.f32 %v2562, %v2694
  %v2696 = vpop.f32.mrf.mxu0
  %v2697 = vadd.f32 %v2564, %v2696
  %2698 = vmatmul.bf16.gmra.mxu0 %v1188
  %v2699 = vpop.f32.mrf.mxu0
  %v2700 = vadd.f32 %v2567, %v2699
  %v2701 = vpop.f32.mrf.mxu0
  %v2702 = vadd.f32 %v2569, %v2701
  %2703 = vmatmul.bf16.gmra.mxu0 %v1197
  %v2704 = vpop.f32.mrf.mxu0
  %v2705 = vadd.f32 %v2572, %v2704
  %v2706 = vpop.f32.mrf.mxu0
  %v2707 = vadd.f32 %v2574, %v2706
  %2708 = vmatmul.bf16.gmra.mxu0 %v1206
  %v2709 = vpop.f32.mrf.mxu0
  %v2710 = vadd.f32 %v2577, %v2709
  %v2711 = vpop.f32.mrf.mxu0
  %v2712 = vadd.f32 %v2579, %v2711
  %2713 = vmatmul.bf16.gmra.mxu0 %v1215
  %v2714 = vpop.f32.mrf.mxu0
  %v2715 = vadd.f32 %v2582, %v2714
  %v2716 = vpop.f32.mrf.mxu0
  %v2717 = vadd.f32 %v2584, %v2716
  %2718 = vmatmul.bf16.gmra.mxu0 %v1224
  %v2719 = vpop.f32.mrf.mxu0
  %v2720 = vadd.f32 %v2587, %v2719
  %v2721 = vpop.f32.mrf.mxu0
  %v2722 = vadd.f32 %v2589, %v2721
  %2723 = vmatmul.bf16.gmra.mxu0 %v1233
  %v2724 = vpop.f32.mrf.mxu0
  %v2725 = vadd.f32 %v2592, %v2724
  %v2726 = vpop.f32.mrf.mxu0
  %v2727 = vadd.f32 %v2594, %v2726
  %2728 = vmatmul.bf16.gmra.mxu0 %v1242
  %v2729 = vpop.f32.mrf.mxu0
  %v2730 = vadd.f32 %v2597, %v2729
  %v2731 = vpop.f32.mrf.mxu0
  %v2732 = vadd.f32 %v2599, %v2731
  %2733 = vmatmul.bf16.gmra.mxu0 %v1251
  %v2734 = vpop.f32.mrf.mxu0
  %v2735 = vadd.f32 %v2602, %v2734
  %v2736 = vpop.f32.mrf.mxu0
  %v2737 = vadd.f32 %v2604, %v2736
  %2738 = vmatmul.bf16.gmra.mxu0 %v1260
  %v2739 = vpop.f32.mrf.mxu0
  %v2740 = vadd.f32 %v2607, %v2739
  %v2741 = vpop.f32.mrf.mxu0
  %v2742 = vadd.f32 %v2609, %v2741
  %2743 = vmatmul.bf16.gmra.mxu0 %v1269
  %v2744 = vpop.f32.mrf.mxu0
  %v2745 = vadd.f32 %v2612, %v2744
  %v2746 = vpop.f32.mrf.mxu0
  %v2747 = vadd.f32 %v2614, %v2746
  %2748 = vmatmul.bf16.gmra.mxu0 %v1278
  %v2749 = vpop.f32.mrf.mxu0
  %v2750 = vadd.f32 %v2617, %v2749
  %v2751 = vpop.f32.mrf.mxu0
  %v2752 = vadd.f32 %v2619, %v2751
  %2753 = vmatmul.bf16.gmra.mxu0 %v1287
  %v2754 = vpop.f32.mrf.mxu0
  %v2755 = vadd.f32 %v2622, %v2754
  %v2756 = vpop.f32.mrf.mxu0
  %v2757 = vadd.f32 %v2624, %v2756
  %2758 = vmatmul.bf16.gmra.mxu0 %v1296
  %v2759 = vpop.f32.mrf.mxu0
  %v2760 = vadd.f32 %v2627, %v2759
  %v2761 = vpop.f32.mrf.mxu0
  %v2762 = vadd.f32 %v2629, %v2761
  %2763 = vmatmul.bf16.gmra.mxu0 %v1305
  %v2764 = vpop.f32.mrf.mxu0
  %v2765 = vadd.f32 %v2632, %v2764
  %v2766 = vpop.f32.mrf.mxu0
  %v2767 = vadd.f32 %v2634, %v2766
  %2768 = vmatmul.bf16.gmra.mxu0 %v1314
  %v2769 = vpop.f32.mrf.mxu0
  %v2770 = vadd.f32 %v2637, %v2769
  %v2771 = vpop.f32.mrf.mxu0
  %2772 = vdwg.mxu0
  %2773 = vmatpush.bf16.msra.mxu0 %v1886
  %2774 = vmatpush.bf16.msra.mxu0 %v1885
  %2775 = vmatpush.bf16.msra.mxu0 %v1884
  %2776 = vmatpush.bf16.msra.mxu0 %v1883
  %2777 = vmatpush.bf16.msra.mxu0 %v1882
  %2778 = vmatpush.bf16.msra.mxu0 %v1881
  %2779 = vmatpush.bf16.msra.mxu0 %v1880
  %2780 = vmatpush.bf16.msra.mxu0 %v1879
  %2781 = vmatmul.bf16.gmra.mxu0 %v1099
  %v2782 = vpop.f32.mrf.mxu0
  %v2783 = vadd.f32 %v2650, %v2782
  %v2784 = vpop.f32.mrf.mxu0
  %v2785 = vadd.f32 %v2652, %v2784
  %2786 = vmatmul.bf16.gmra.mxu0 %v1108
  %v2787 = vpop.f32.mrf.mxu0
  %v2788 = vadd.f32 %v2655, %v2787
  %v2789 = vpop.f32.mrf.mxu0
  %v2790 = vadd.f32 %v2657, %v2789
  %2791 = vmatmul.bf16.gmra.mxu0 %v1117
  %v2792 = vpop.f32.mrf.mxu0
  %v2793 = vadd.f32 %v2660, %v2792
  %v2794 = vpop.f32.mrf.mxu0
  %v2795 = vadd.f32 %v2662, %v2794
  %2796 = vmatmul.bf16.gmra.mxu0 %v1126
  %v2797 = vpop.f32.mrf.mxu0
  %v2798 = vadd.f32 %v2665, %v2797
  %v2799 = vpop.f32.mrf.mxu0
  %v2800 = vadd.f32 %v2667, %v2799
  %2801 = vmatmul.bf16.gmra.mxu0 %v1135
  %v2802 = vpop.f32.mrf.mxu0
  %v2803 = vadd.f32 %v2670, %v2802
  %v2804 = vpop.f32.mrf.mxu0
  %v2805 = vadd.f32 %v2672, %v2804
  %2806 = vmatmul.bf16.gmra.mxu0 %v1144
  %v2807 = vpop.f32.mrf.mxu0
  %v2808 = vadd.f32 %v2675, %v2807
  %v2809 = vpop.f32.mrf.mxu0
  %v2810 = vadd.f32 %v2677, %v2809
  %2811 = vmatmul.bf16.gmra.mxu0 %v1153
  %v2812 = vpop.f32.mrf.mxu0
  %v2813 = vadd.f32 %v2680, %v2812
  %v2814 = vpop.f32.mrf.mxu0
  %v2815 = vadd.f32 %v2682, %v2814
  %2816 = vmatmul.bf16.gmra.mxu0 %v1162
  %v2817 = vpop.f32.mrf.mxu0
  %v2818 = vadd.f32 %v2685, %v2817
  %v2819 = vpop.f32.mrf.mxu0
  %v2820 = vadd.f32 %v2687, %v2819
  %2821 = vmatmul.bf16.gmra.mxu0 %v1171
  %v2822 = vpop.f32.mrf.mxu0
  %v2823 = vadd.f32 %v2690, %v2822
  %v2824 = vpop.f32.mrf.mxu0
  %v2825 = vadd.f32 %v2692, %v2824
  %2826 = vmatmul.bf16.gmra.mxu0 %v1180
  %v2827 = vpop.f32.mrf.mxu0
  %v2828 = vadd.f32 %v2695, %v2827
  %v2829 = vpop.f32.mrf.mxu0
  %v2830 = vadd.f32 %v2697, %v2829
  %2831 = vmatmul.bf16.gmra.mxu0 %v1189
  %v2832 = vpop.f32.mrf.mxu0
  %v2833 = vadd.f32 %v2700, %v2832
  %v2834 = vpop.f32.mrf.mxu0
  %v2835 = vadd.f32 %v2702, %v2834
  %2836 = vmatmul.bf16.gmra.mxu0 %v1198
  %v2837 = vpop.f32.mrf.mxu0
  %v2838 = vadd.f32 %v2705, %v2837
  %v2839 = vpop.f32.mrf.mxu0
  %v2840 = vadd.f32 %v2707, %v2839
  %2841 = vmatmul.bf16.gmra.mxu0 %v1207
  %v2842 = vpop.f32.mrf.mxu0
  %v2843 = vadd.f32 %v2710, %v2842
  %v2844 = vpop.f32.mrf.mxu0
  %v2845 = vadd.f32 %v2712, %v2844
  %2846 = vmatmul.bf16.gmra.mxu0 %v1216
  %v2847 = vpop.f32.mrf.mxu0
  %v2848 = vadd.f32 %v2715, %v2847
  %v2849 = vpop.f32.mrf.mxu0
  %v2850 = vadd.f32 %v2717, %v2849
  %2851 = vmatmul.bf16.gmra.mxu0 %v1225
  %v2852 = vpop.f32.mrf.mxu0
  %v2853 = vadd.f32 %v2720, %v2852
  %v2854 = vpop.f32.mrf.mxu0
  %v2855 = vadd.f32 %v2722, %v2854
  %2856 = vmatmul.bf16.gmra.mxu0 %v1234
  %v2857 = vpop.f32.mrf.mxu0
  %v2858 = vadd.f32 %v2725, %v2857
  %v2859 = vpop.f32.mrf.mxu0
  %v2860 = vadd.f32 %v2727, %v2859
  %2861 = vmatmul.bf16.gmra.mxu0 %v1243
  %v2862 = vpop.f32.mrf.mxu0
  %v2863 = vadd.f32 %v2730, %v2862
  %v2864 = vpop.f32.mrf.mxu0
  %v2865 = vadd.f32 %v2732, %v2864
  %2866 = vmatmul.bf16.gmra.mxu0 %v1252
  %v2867 = vpop.f32.mrf.mxu0
  %v2868 = vadd.f32 %v2735, %v2867
  %v2869 = vpop.f32.mrf.mxu0
  %v2870 = vadd.f32 %v2737, %v2869
  %2871 = vmatmul.bf16.gmra.mxu0 %v1261
  %v2872 = vpop.f32.mrf.mxu0
  %v2873 = vadd.f32 %v2740, %v2872
  %v2874 = vpop.f32.mrf.mxu0
  %v2875 = vadd.f32 %v2742, %v2874
  %2876 = vmatmul.bf16.gmra.mxu0 %v1270
  %v2877 = vpop.f32.mrf.mxu0
  %v2878 = vadd.f32 %v2745, %v2877
  %v2879 = vpop.f32.mrf.mxu0
  %v2880 = vadd.f32 %v2747, %v2879
  %2881 = vmatmul.bf16.gmra.mxu0 %v1279
  %v2882 = vpop.f32.mrf.mxu0
  %v2883 = vadd.f32 %v2750, %v2882
  %v2884 = vpop.f32.mrf.mxu0
  %v2885 = vadd.f32 %v2752, %v2884
  %2886 = vmatmul.bf16.gmra.mxu0 %v1288
  %v2887 = vpop.f32.mrf.mxu0
  %v2888 = vadd.f32 %v2755, %v2887
  %v2889 = vpop.f32.mrf.mxu0
  %v2890 = vadd.f32 %v2757, %v2889
  %2891 = vmatmul.bf16.gmra.mxu0 %v1297
  %v2892 = vpop.f32.mrf.mxu0
  %v2893 = vadd.f32 %v2760, %v2892
  %v2894 = vpop.f32.mrf.mxu0
  %v2895 = vadd.f32 %v2762, %v2894
  %2896 = vmatmul.bf16.gmra.mxu0 %v1306
  %v2897 = vpop.f32.mrf.mxu0
  %v2898 = vadd.f32 %v2765, %v2897
  %v2899 = vpop.f32.mrf.mxu0
  %v2900 = vadd.f32 %v2767, %v2899
  %2901 = vmatmul.bf16.gmra.mxu0 %v1315
  %v2902 = vpop.f32.mrf.mxu0
  %v2903 = vadd.f32 %v2770, %v2902
  %v2904 = vpop.f32.mrf.mxu0
  %2905 = vdwg.mxu0
  %2906 = vmatpush.bf16.msra.mxu0 %v1894
  %2907 = vmatpush.bf16.msra.mxu0 %v1893
  %2908 = vmatpush.bf16.msra.mxu0 %v1892
  %2909 = vmatpush.bf16.msra.mxu0 %v1891
  %2910 = vmatpush.bf16.msra.mxu0 %v1890
  %2911 = vmatpush.bf16.msra.mxu0 %v1889
  %2912 = vmatpush.bf16.msra.mxu0 %v1888
  %2913 = vmatpush.bf16.msra.mxu0 %v1887
  %2914 = vmatmul.bf16.gmra.mxu0 %v1100
  %v2915 = vpop.f32.mrf.mxu0
  %v2916 = vadd.f32 %v2783, %v2915
  %v2917 = vpop.f32.mrf.mxu0
  %v2918 = vadd.f32 %v2785, %v2917
  %2919 = vmatmul.bf16.gmra.mxu0 %v1109
  %v2920 = vpop.f32.mrf.mxu0
  %v2921 = vadd.f32 %v2788, %v2920
  %v2922 = vpop.f32.mrf.mxu0
  %v2923 = vadd.f32 %v2790, %v2922
  %2924 = vmatmul.bf16.gmra.mxu0 %v1118
  %v2925 = vpop.f32.mrf.mxu0
  %v2926 = vadd.f32 %v2793, %v2925
  %v2927 = vpop.f32.mrf.mxu0
  %v2928 = vadd.f32 %v2795, %v2927
  %2929 = vmatmul.bf16.gmra.mxu0 %v1127
  %v2930 = vpop.f32.mrf.mxu0
  %v2931 = vadd.f32 %v2798, %v2930
  %v2932 = vpop.f32.mrf.mxu0
  %v2933 = vadd.f32 %v2800, %v2932
  %2934 = vmatmul.bf16.gmra.mxu0 %v1136
  %v2935 = vpop.f32.mrf.mxu0
  %v2936 = vadd.f32 %v2803, %v2935
  %v2937 = vpop.f32.mrf.mxu0
  %v2938 = vadd.f32 %v2805, %v2937
  %2939 = vmatmul.bf16.gmra.mxu0 %v1145
  %v2940 = vpop.f32.mrf.mxu0
  %v2941 = vadd.f32 %v2808, %v2940
  %v2942 = vpop.f32.mrf.mxu0
  %v2943 = vadd.f32 %v2810, %v2942
  %2944 = vmatmul.bf16.gmra.mxu0 %v1154
  %v2945 = vpop.f32.mrf.mxu0
  %v2946 = vadd.f32 %v2813, %v2945
  %v2947 = vpop.f32.mrf.mxu0
  %v2948 = vadd.f32 %v2815, %v2947
  %2949 = vmatmul.bf16.gmra.mxu0 %v1163
  %v2950 = vpop.f32.mrf.mxu0
  %v2951 = vadd.f32 %v2818, %v2950
  %v2952 = vpop.f32.mrf.mxu0
  %v2953 = vadd.f32 %v2820, %v2952
  %2954 = vmatmul.bf16.gmra.mxu0 %v1172
  %v2955 = vpop.f32.mrf.mxu0
  %v2956 = vadd.f32 %v2823, %v2955
  %v2957 = vpop.f32.mrf.mxu0
  %v2958 = vadd.f32 %v2825, %v2957
  %2959 = vmatmul.bf16.gmra.mxu0 %v1181
  %v2960 = vpop.f32.mrf.mxu0
  %v2961 = vadd.f32 %v2828, %v2960
  %v2962 = vpop.f32.mrf.mxu0
  %v2963 = vadd.f32 %v2830, %v2962
  %2964 = vmatmul.bf16.gmra.mxu0 %v1190
  %v2965 = vpop.f32.mrf.mxu0
  %v2966 = vadd.f32 %v2833, %v2965
  %v2967 = vpop.f32.mrf.mxu0
  %v2968 = vadd.f32 %v2835, %v2967
  %2969 = vmatmul.bf16.gmra.mxu0 %v1199
  %v2970 = vpop.f32.mrf.mxu0
  %v2971 = vadd.f32 %v2838, %v2970
  %v2972 = vpop.f32.mrf.mxu0
  %v2973 = vadd.f32 %v2840, %v2972
  %2974 = vmatmul.bf16.gmra.mxu0 %v1208
  %v2975 = vpop.f32.mrf.mxu0
  %v2976 = vadd.f32 %v2843, %v2975
  %v2977 = vpop.f32.mrf.mxu0
  %v2978 = vadd.f32 %v2845, %v2977
  %2979 = vmatmul.bf16.gmra.mxu0 %v1217
  %v2980 = vpop.f32.mrf.mxu0
  %v2981 = vadd.f32 %v2848, %v2980
  %v2982 = vpop.f32.mrf.mxu0
  %v2983 = vadd.f32 %v2850, %v2982
  %2984 = vmatmul.bf16.gmra.mxu0 %v1226
  %v2985 = vpop.f32.mrf.mxu0
  %v2986 = vadd.f32 %v2853, %v2985
  %v2987 = vpop.f32.mrf.mxu0
  %v2988 = vadd.f32 %v2855, %v2987
  %2989 = vmatmul.bf16.gmra.mxu0 %v1235
  %v2990 = vpop.f32.mrf.mxu0
  %v2991 = vadd.f32 %v2858, %v2990
  %v2992 = vpop.f32.mrf.mxu0
  %v2993 = vadd.f32 %v2860, %v2992
  %2994 = vmatmul.bf16.gmra.mxu0 %v1244
  %v2995 = vpop.f32.mrf.mxu0
  %v2996 = vadd.f32 %v2863, %v2995
  %v2997 = vpop.f32.mrf.mxu0
  %v2998 = vadd.f32 %v2865, %v2997
  %2999 = vmatmul.bf16.gmra.mxu0 %v1253
  %v3000 = vpop.f32.mrf.mxu0
  %v3001 = vadd.f32 %v2868, %v3000
  %v3002 = vpop.f32.mrf.mxu0
  %v3003 = vadd.f32 %v2870, %v3002
  %3004 = vmatmul.bf16.gmra.mxu0 %v1262
  %v3005 = vpop.f32.mrf.mxu0
  %v3006 = vadd.f32 %v2873, %v3005
  %v3007 = vpop.f32.mrf.mxu0
  %v3008 = vadd.f32 %v2875, %v3007
  %3009 = vmatmul.bf16.gmra.mxu0 %v1271
  %v3010 = vpop.f32.mrf.mxu0
  %v3011 = vadd.f32 %v2878, %v3010
  %v3012 = vpop.f32.mrf.mxu0
  %v3013 = vadd.f32 %v2880, %v3012
  %3014 = vmatmul.bf16.gmra.mxu0 %v1280
  %v3015 = vpop.f32.mrf.mxu0
  %v3016 = vadd.f32 %v2883, %v3015
  %v3017 = vpop.f32.mrf.mxu0
  %v3018 = vadd.f32 %v2885, %v3017
  %3019 = vmatmul.bf16.gmra.mxu0 %v1289
  %v3020 = vpop.f32.mrf.mxu0
  %v3021 = vadd.f32 %v2888, %v3020
  %v3022 = vpop.f32.mrf.mxu0
  %v3023 = vadd.f32 %v2890, %v3022
  %3024 = vmatmul.bf16.gmra.mxu0 %v1298
  %v3025 = vpop.f32.mrf.mxu0
  %v3026 = vadd.f32 %v2893, %v3025
  %v3027 = vpop.f32.mrf.mxu0
  %v3028 = vadd.f32 %v2895, %v3027
  %3029 = vmatmul.bf16.gmra.mxu0 %v1307
  %v3030 = vpop.f32.mrf.mxu0
  %v3031 = vadd.f32 %v2898, %v3030
  %v3032 = vpop.f32.mrf.mxu0
  %v3033 = vadd.f32 %v2900, %v3032
  %3034 = vmatmul.bf16.gmra.mxu0 %v1316
  %v3035 = vpop.f32.mrf.mxu0
  %v3036 = vadd.f32 %v2903, %v3035
  %v3037 = vpop.f32.mrf.mxu0
  %3038 = vdwg.mxu0
  %3039 = vmatpush.bf16.msra.mxu0 %v1902
  %3040 = vmatpush.bf16.msra.mxu0 %v1901
  %3041 = vmatpush.bf16.msra.mxu0 %v1900
  %3042 = vmatpush.bf16.msra.mxu0 %v1899
  %3043 = vmatpush.bf16.msra.mxu0 %v1898
  %3044 = vmatpush.bf16.msra.mxu0 %v1897
  %3045 = vmatpush.bf16.msra.mxu0 %v1896
  %3046 = vmatpush.bf16.msra.mxu0 %v1895
  %3047 = vmatmul.bf16.gmra.mxu0 %v1101
  %v3048 = vpop.f32.mrf.mxu0
  %v3049 = vadd.f32 %v2916, %v3048
  %v3050 = vpop.f32.mrf.mxu0
  %v3051 = vadd.f32 %v2918, %v3050
  %3052 = vmatmul.bf16.gmra.mxu0 %v1110
  %v3053 = vpop.f32.mrf.mxu0
  %v3054 = vadd.f32 %v2921, %v3053
  %v3055 = vpop.f32.mrf.mxu0
  %v3056 = vadd.f32 %v2923, %v3055
  %3057 = vmatmul.bf16.gmra.mxu0 %v1119
  %v3058 = vpop.f32.mrf.mxu0
  %v3059 = vadd.f32 %v2926, %v3058
  %v3060 = vpop.f32.mrf.mxu0
  %v3061 = vadd.f32 %v2928, %v3060
  %3062 = vmatmul.bf16.gmra.mxu0 %v1128
  %v3063 = vpop.f32.mrf.mxu0
  %v3064 = vadd.f32 %v2931, %v3063
  %v3065 = vpop.f32.mrf.mxu0
  %v3066 = vadd.f32 %v2933, %v3065
  %3067 = vmatmul.bf16.gmra.mxu0 %v1137
  %v3068 = vpop.f32.mrf.mxu0
  %v3069 = vadd.f32 %v2936, %v3068
  %v3070 = vpop.f32.mrf.mxu0
  %v3071 = vadd.f32 %v2938, %v3070
  %3072 = vmatmul.bf16.gmra.mxu0 %v1146
  %v3073 = vpop.f32.mrf.mxu0
  %v3074 = vadd.f32 %v2941, %v3073
  %v3075 = vpop.f32.mrf.mxu0
  %v3076 = vadd.f32 %v2943, %v3075
  %3077 = vmatmul.bf16.gmra.mxu0 %v1155
  %v3078 = vpop.f32.mrf.mxu0
  %v3079 = vadd.f32 %v2946, %v3078
  %v3080 = vpop.f32.mrf.mxu0
  %v3081 = vadd.f32 %v2948, %v3080
  %3082 = vmatmul.bf16.gmra.mxu0 %v1164
  %v3083 = vpop.f32.mrf.mxu0
  %v3084 = vadd.f32 %v2951, %v3083
  %v3085 = vpop.f32.mrf.mxu0
  %v3086 = vadd.f32 %v2953, %v3085
  %3087 = vmatmul.bf16.gmra.mxu0 %v1173
  %v3088 = vpop.f32.mrf.mxu0
  %v3089 = vadd.f32 %v2956, %v3088
  %v3090 = vpop.f32.mrf.mxu0
  %v3091 = vadd.f32 %v2958, %v3090
  %3092 = vmatmul.bf16.gmra.mxu0 %v1182
  %v3093 = vpop.f32.mrf.mxu0
  %v3094 = vadd.f32 %v2961, %v3093
  %v3095 = vpop.f32.mrf.mxu0
  %v3096 = vadd.f32 %v2963, %v3095
  %3097 = vmatmul.bf16.gmra.mxu0 %v1191
  %v3098 = vpop.f32.mrf.mxu0
  %v3099 = vadd.f32 %v2966, %v3098
  %v3100 = vpop.f32.mrf.mxu0
  %v3101 = vadd.f32 %v2968, %v3100
  %3102 = vmatmul.bf16.gmra.mxu0 %v1200
  %v3103 = vpop.f32.mrf.mxu0
  %v3104 = vadd.f32 %v2971, %v3103
  %v3105 = vpop.f32.mrf.mxu0
  %v3106 = vadd.f32 %v2973, %v3105
  %3107 = vmatmul.bf16.gmra.mxu0 %v1209
  %v3108 = vpop.f32.mrf.mxu0
  %v3109 = vadd.f32 %v2976, %v3108
  %v3110 = vpop.f32.mrf.mxu0
  %v3111 = vadd.f32 %v2978, %v3110
  %3112 = vmatmul.bf16.gmra.mxu0 %v1218
  %v3113 = vpop.f32.mrf.mxu0
  %v3114 = vadd.f32 %v2981, %v3113
  %v3115 = vpop.f32.mrf.mxu0
  %v3116 = vadd.f32 %v2983, %v3115
  %3117 = vmatmul.bf16.gmra.mxu0 %v1227
  %v3118 = vpop.f32.mrf.mxu0
  %v3119 = vadd.f32 %v2986, %v3118
  %v3120 = vpop.f32.mrf.mxu0
  %v3121 = vadd.f32 %v2988, %v3120
  %3122 = vmatmul.bf16.gmra.mxu0 %v1236
  %v3123 = vpop.f32.mrf.mxu0
  %v3124 = vadd.f32 %v2991, %v3123
  %v3125 = vpop.f32.mrf.mxu0
  %v3126 = vadd.f32 %v2993, %v3125
  %3127 = vmatmul.bf16.gmra.mxu0 %v1245
  %v3128 = vpop.f32.mrf.mxu0
  %v3129 = vadd.f32 %v2996, %v3128
  %v3130 = vpop.f32.mrf.mxu0
  %v3131 = vadd.f32 %v2998, %v3130
  %3132 = vmatmul.bf16.gmra.mxu0 %v1254
  %v3133 = vpop.f32.mrf.mxu0
  %v3134 = vadd.f32 %v3001, %v3133
  %v3135 = vpop.f32.mrf.mxu0
  %v3136 = vadd.f32 %v3003, %v3135
  %3137 = vmatmul.bf16.gmra.mxu0 %v1263
  %v3138 = vpop.f32.mrf.mxu0
  %v3139 = vadd.f32 %v3006, %v3138
  %v3140 = vpop.f32.mrf.mxu0
  %v3141 = vadd.f32 %v3008, %v3140
  %3142 = vmatmul.bf16.gmra.mxu0 %v1272
  %v3143 = vpop.f32.mrf.mxu0
  %v3144 = vadd.f32 %v3011, %v3143
  %v3145 = vpop.f32.mrf.mxu0
  %v3146 = vadd.f32 %v3013, %v3145
  %3147 = vmatmul.bf16.gmra.mxu0 %v1281
  %v3148 = vpop.f32.mrf.mxu0
  %v3149 = vadd.f32 %v3016, %v3148
  %v3150 = vpop.f32.mrf.mxu0
  %v3151 = vadd.f32 %v3018, %v3150
  %3152 = vmatmul.bf16.gmra.mxu0 %v1290
  %v3153 = vpop.f32.mrf.mxu0
  %v3154 = vadd.f32 %v3021, %v3153
  %v3155 = vpop.f32.mrf.mxu0
  %v3156 = vadd.f32 %v3023, %v3155
  %3157 = vmatmul.bf16.gmra.mxu0 %v1299
  %v3158 = vpop.f32.mrf.mxu0
  %v3159 = vadd.f32 %v3026, %v3158
  %v3160 = vpop.f32.mrf.mxu0
  %v3161 = vadd.f32 %v3028, %v3160
  %3162 = vmatmul.bf16.gmra.mxu0 %v1308
  %v3163 = vpop.f32.mrf.mxu0
  %v3164 = vadd.f32 %v3031, %v3163
  %v3165 = vpop.f32.mrf.mxu0
  %v3166 = vadd.f32 %v3033, %v3165
  %3167 = vmatmul.bf16.gmra.mxu0 %v1317
  %v3168 = vpop.f32.mrf.mxu0
  %v3169 = vadd.f32 %v3036, %v3168
  %v3170 = vpop.f32.mrf.mxu0
  %3171 = vdwg.mxu0
  %v3172 = vmax.f32 %v3049, 0.0
  %v3173 = vmax.f32 %v3051, 0.0
  %v3174 = vmax.f32 %v3054, 0.0
  %v3175 = vmax.f32 %v3056, 0.0
  %v3176 = vmax.f32 %v3059, 0.0
  %v3177 = vmax.f32 %v3061, 0.0
  %v3178 = vmax.f32 %v3064, 0.0
  %v3179 = vmax.f32 %v3066, 0.0
  %v3180 = vmax.f32 %v3069, 0.0
  %v3181 = vmax.f32 %v3071, 0.0
  %v3182 = vmax.f32 %v3074, 0.0
  %v3183 = vmax.f32 %v3076, 0.0
  %v3184 = vmax.f32 %v3079, 0.0
  %v3185 = vmax.f32 %v3081, 0.0
  %v3186 = vmax.f32 %v3084, 0.0
  %v3187 = vmax.f32 %v3086, 0.0
  %v3188 = vmax.f32 %v3089, 0.0
  %v3189 = vmax.f32 %v3091, 0.0
  %v3190 = vmax.f32 %v3094, 0.0
  %v3191 = vmax.f32 %v3096, 0.0
  %v3192 = vmax.f32 %v3099, 0.0
  %v3193 = vmax.f32 %v3101, 0.0
  %v3194 = vmax.f32 %v3104, 0.0
  %v3195 = vmax.f32 %v3106, 0.0
  %v3196 = vmax.f32 %v3109, 0.0
  %v3197 = vmax.f32 %v3111, 0.0
  %v3198 = vmax.f32 %v3114, 0.0
  %v3199 = vmax.f32 %v3116, 0.0
  %v3200 = vmax.f32 %v3119, 0.0
  %v3201 = vmax.f32 %v3121, 0.0
  %v3202 = vmax.f32 %v3124, 0.0
  %v3203 = vmax.f32 %v3126, 0.0
  %v3204 = vmax.f32 %v3129, 0.0
  %v3205 = vmax.f32 %v3131, 0.0
  %v3206 = vmax.f32 %v3134, 0.0
  %v3207 = vmax.f32 %v3136, 0.0
  %v3208 = vmax.f32 %v3139, 0.0
  %v3209 = vmax.f32 %v3141, 0.0
  %v3210 = vmax.f32 %v3144, 0.0
  %v3211 = vmax.f32 %v3146, 0.0
  %v3212 = vmax.f32 %v3149, 0.0
  %v3213 = vmax.f32 %v3151, 0.0
  %v3214 = vmax.f32 %v3154, 0.0
  %v3215 = vmax.f32 %v3156, 0.0
  %v3216 = vmax.f32 %v3159, 0.0
  %v3217 = vmax.f32 %v3161, 0.0
  %v3218 = vmax.f32 %v3164, 0.0
  %v3219 = vmax.f32 %v3166, 0.0
  %v3220 = vmax.f32 %v3169, 0.0
  %v3221 = vpack.c.bf16 %v3172, %v3172
  %v3222 = vpack.c.bf16 %v3173, %v3173
  %v3223 = vpack.c.bf16 %v3174, %v3174
  %v3224 = vpack.c.bf16 %v3175, %v3175
  %v3225 = vpack.c.bf16 %v3176, %v3176
  %v3226 = vpack.c.bf16 %v3177, %v3177
  %v3227 = vpack.c.bf16 %v3178, %v3178
  %v3228 = vpack.c.bf16 %v3179, %v3179
  %v3229 = vpack.c.bf16 %v3180, %v3180
  %v3230 = vpack.c.bf16 %v3181, %v3181
  %v3231 = vpack.c.bf16 %v3182, %v3182
  %v3232 = vpack.c.bf16 %v3183, %v3183
  %v3233 = vpack.c.bf16 %v3184, %v3184
  %v3234 = vpack.c.bf16 %v3185, %v3185
  %v3235 = vpack.c.bf16 %v3186, %v3186
  %v3236 = vpack.c.bf16 %v3187, %v3187
  %v3237 = vpack.c.bf16 %v3188, %v3188
  %v3238 = vpack.c.bf16 %v3189, %v3189
  %v3239 = vpack.c.bf16 %v3190, %v3190
  %v3240 = vpack.c.bf16 %v3191, %v3191
  %v3241 = vpack.c.bf16 %v3192, %v3192
  %v3242 = vpack.c.bf16 %v3193, %v3193
  %v3243 = vpack.c.bf16 %v3194, %v3194
  %v3244 = vpack.c.bf16 %v3195, %v3195
  %v3245 = vpack.c.bf16 %v3196, %v3196
  %v3246 = vpack.c.bf16 %v3197, %v3197
  %v3247 = vpack.c.bf16 %v3198, %v3198
  %v3248 = vpack.c.bf16 %v3199, %v3199
  %v3249 = vpack.c.bf16 %v3200, %v3200
  %v3250 = vpack.c.bf16 %v3201, %v3201
  %v3251 = vpack.c.bf16 %v3202, %v3202
  %v3252 = vpack.c.bf16 %v3203, %v3203
  %v3253 = vpack.c.bf16 %v3204, %v3204
  %v3254 = vpack.c.bf16 %v3205, %v3205
  %v3255 = vpack.c.bf16 %v3206, %v3206
  %v3256 = vpack.c.bf16 %v3207, %v3207
  %v3257 = vpack.c.bf16 %v3208, %v3208
  %v3258 = vpack.c.bf16 %v3209, %v3209
  %v3259 = vpack.c.bf16 %v3210, %v3210
  %v3260 = vpack.c.bf16 %v3211, %v3211
  %v3261 = vpack.c.bf16 %v3212, %v3212
  %v3262 = vpack.c.bf16 %v3213, %v3213
  %v3263 = vpack.c.bf16 %v3214, %v3214
  %v3264 = vpack.c.bf16 %v3215, %v3215
  %v3265 = vpack.c.bf16 %v3216, %v3216
  %v3266 = vpack.c.bf16 %v3217, %v3217
  %v3267 = vpack.c.bf16 %v3218, %v3218
  %v3268 = vpack.c.bf16 %v3219, %v3219
  %v3269 = vpack.c.bf16 %v3220, %v3220
  %3270 = vst [vmem:[%s3] sm:$0xf] %v3221
  %3271 = vst [vmem:[%s3 + $0x4] sm:$0xf] %v3222
  %3272 = vst [vmem:[%s3 + $0x8] sm:$0xf] %v3223
  %3273 = vst [vmem:[%s3 + $0xc] sm:$0xf] %v3224
  %3274 = vst [vmem:[%s3 + $0x10] sm:$0xf] %v3225
  %3275 = vst [vmem:[%s3 + $0x14] sm:$0xf] %v3226
  %3276 = vst [vmem:[%s3 + $0x18] sm:$0xf] %v3227
  %3277 = vst [vmem:[%s3 + $0x1c] sm:$0xf] %v3228
  %3278 = vst [vmem:[%s3 + $0x20] sm:$0xf] %v3229
  %3279 = vst [vmem:[%s3 + $0x24] sm:$0xf] %v3230
  %3280 = vst [vmem:[%s3 + $0x28] sm:$0xf] %v3231
  %3281 = vst [vmem:[%s3 + $0x2c] sm:$0xf] %v3232
  %3282 = vst [vmem:[%s3 + $0x30] sm:$0xf] %v3233
  %3283 = vst [vmem:[%s3 + $0x34] sm:$0xf] %v3234
  %3284 = vst [vmem:[%s3 + $0x38] sm:$0xf] %v3235
  %3285 = vst [vmem:[%s3 + $0x3c] sm:$0xf] %v3236
  %3286 = vst [vmem:[%s3 + $0x40] sm:$0xf] %v3237
  %3287 = vst [vmem:[%s3 + $0x44] sm:$0xf] %v3238
  %3288 = vst [vmem:[%s3 + $0x48] sm:$0xf] %v3239
  %3289 = vst [vmem:[%s3 + $0x4c] sm:$0xf] %v3240
  %3290 = vst [vmem:[%s3 + $0x50] sm:$0xf] %v3241
  %3291 = vst [vmem:[%s3 + $0x54] sm:$0xf] %v3242
  %3292 = vst [vmem:[%s3 + $0x58] sm:$0xf] %v3243
  %3293 = vst [vmem:[%s3 + $0x5c] sm:$0xf] %v3244
  %3294 = vst [vmem:[%s3 + $0x60] sm:$0xf] %v3245
  %3295 = vst [vmem:[%s3 + $0x64] sm:$0xf] %v3246
  %3296 = vst [vmem:[%s3 + $0x68] sm:$0xf] %v3247
  %3297 = vst [vmem:[%s3 + $0x6c] sm:$0xf] %v3248
  %3298 = vst [vmem:[%s3 + $0x70] sm:$0xf] %v3249
  %3299 = vst [vmem:[%s3 + $0x74] sm:$0xf] %v3250
  %3300 = vst [vmem:[%s3 + $0x78] sm:$0xf] %v3251
  %3301 = vst [vmem:[%s3 + $0x7c] sm:$0xf] %v3252
  %3302 = vst [vmem:[%s3 + $0x80] sm:$0xf] %v3253
  %3303 = vst [vmem:[%s3 + $0x84] sm:$0xf] %v3254
  %3304 = vst [vmem:[%s3 + $0x88] sm:$0xf] %v3255
  %3305 = vst [vmem:[%s3 + $0x8c] sm:$0xf] %v3256
  %3306 = vst [vmem:[%s3 + $0x90] sm:$0xf] %v3257
  %3307 = vst [vmem:[%s3 + $0x94] sm:$0xf] %v3258
  %3308 = vst [vmem:[%s3 + $0x98] sm:$0xf] %v3259
  %3309 = vst [vmem:[%s3 + $0x9c] sm:$0xf] %v3260
  %3310 = vst [vmem:[%s3 + $0xa0] sm:$0xf] %v3261
  %3311 = vst [vmem:[%s3 + $0xa4] sm:$0xf] %v3262
  %3312 = vst [vmem:[%s3 + $0xa8] sm:$0xf] %v3263
  %3313 = vst [vmem:[%s3 + $0xac] sm:$0xf] %v3264
  %3314 = vst [vmem:[%s3 + $0xb0] sm:$0xf] %v3265
  %3315 = vst [vmem:[%s3 + $0xb4] sm:$0xf] %v3266
  %3316 = vst [vmem:[%s3 + $0xb8] sm:$0xf] %v3267
  %3317 = vst [vmem:[%s3 + $0xbc] sm:$0xf] %v3268
  %3318 = vst [vmem:[%s3 + $0xc0] sm:$0xf] %v3269
  // Predicated region
  $region14: #{cnn_net_forward.4} parent=0 // pred_check
    _
  $region15: #{cnn_net_forward.4} parent=0 // pred_check_branch
    %3320 = sbr.rel (0) target = $region17
  $region16: #{cnn_net_forward.4} parent=0 // pred_region
    _
  $region17: #{cnn_net_forward.4} parent=0 // pred_fallthru
    _
  // Predicated region
  $region18: #{cnn_net_forward.4} parent=0 // pred_check
    _
  $region19: #{cnn_net_forward.4} parent=0 // pred_check_branch
    %3322 = sbr.rel (0) target = $region21
  $region20: #{cnn_net_forward.4} parent=0 // pred_region
    _
  $region21: #{cnn_net_forward.4} parent=0 // pred_fallthru
    _

// kernel: cnn_net_forward.5
$region0: #{cnn_net_forward.5}
  #allocation0 [shape = 'u32[]', space=smem, size = 0x4, offset = 0x4, fixed_abs, tag = 'smem constant byte address 0x4 - core index']
  #allocation1 [shape = 'u32[72,128]{1,0:T(1,128)}', space=vmem, size = 0x9000, scoped, tag = 'internal scratch']
  %s0 = inlined_call_operand.vmem [shape: bf16[2,14,14,128], index: 0, kind: input, shape index: {}]
  %s1 = inlined_call_operand.vmem [shape: bf16[49,128,128], index: 1, kind: input, shape index: {}]
  %s2 = inlined_call_operand.vmem [shape: f32[1,128], index: 2, kind: input, shape index: {}]
  %s3 = inlined_call_operand.vmem [shape: bf16[128,128], index: 3, kind: input, shape index: {}]
  %s4 = inlined_call_operand.vmem [shape: f32[1,128], index: 4, kind: input, shape index: {}]
  %s5 = inlined_call_operand.hbm [shape: f32[2,128], index: 5, kind: output, shape index: {}]
  %s6 = sld [smem:[#allocation0]]
  $region30: #{cnn_net_forward.5} parent=0
    _
  %s8 = ssub.s32 1, %s6
  %s9 = scalar_select 0, %s8, %s6
  $region1: #{cnn_net_forward.5} parent=0
    #allocation2 [shape = 'u8[1024]{0}', space=vmem, size = 0x400, scoped, tag = 'output window, operand 0, single buffered']
    #allocation3 [shape = 's32[1]{0}', space=sflag, size = 0x4, scoped, tag = 'scoped memory for cnn_net_forward.5']
    %10 = vsyncpa [#allocation3], 0
    // Predicated region
    $region2: #{cnn_net_forward.5} parent=1 // pred_check
      _
    $region3: #{cnn_net_forward.5} parent=1 // pred_check_branch
      %12 = sbr.rel (0) target = $region5
    $region4: #{cnn_net_forward.5} parent=1 // pred_region
      _
    $region5: #{cnn_net_forward.5} parent=1 // pred_fallthru
      _
    // Predicated region
    $region6: #{cnn_net_forward.5} parent=1 // pred_check
      _
    $region7: #{cnn_net_forward.5} parent=1 // pred_check_branch
      %14 = sbr.rel (0) target = $region9
    $region8: #{cnn_net_forward.5} parent=1 // pred_region
      _
    $region9: #{cnn_net_forward.5} parent=1 // pred_fallthru
      _
    // Predicated region
    $region10: #{cnn_net_forward.5} parent=1 // pred_check
      _
    $region11: #{cnn_net_forward.5} parent=1 // pred_check_branch
      %16 = sbr.rel (0) target = $region13
    $region12: #{cnn_net_forward.5} parent=1 // pred_region
      _
    $region13: #{cnn_net_forward.5} parent=1 // pred_fallthru
      _
    // Predicated region
    $region14: #{cnn_net_forward.5} parent=1 // pred_check
      _
    $region15: #{cnn_net_forward.5} parent=1 // pred_check_branch
      %18 = sbr.rel (0) target = $region17
    $region16: #{cnn_net_forward.5} parent=1 // pred_region
      _
    $region17: #{cnn_net_forward.5} parent=1 // pred_fallthru
      _
    // Predicated region
    $region18: #{cnn_net_forward.5} parent=1 // pred_check
      _
    $region19: #{cnn_net_forward.5} parent=1 // pred_check_branch
      %20 = sbr.rel (0) target = $region21
    $region20: #{cnn_net_forward.5} parent=1 // pred_region
      _
    $region21: #{cnn_net_forward.5} parent=1 // pred_fallthru
      _
    %v21 = vld [vmem:[%s0] sm:$0x1]
    %v22 = vld [vmem:[%s0 + $0x70] sm:$0x1]
    %v23 = vunpack.c.l.bf16 %v21
    %v24 = vunpack.c.l.bf16 %v22
    %v27 = vrot.slane %v23, 1
    %v28 = vrot.slane %v24, 1
    %v31 = vmax.f32 %v23, %v27
    %v32 = vmax.f32 %v24, %v28
    %v33 = vpack.c.bf16 %v31, %v31
    %v34 = vpack.c.bf16 %v32, %v32
    %s35 = scalar_lea.vmem %s0, 8
    %v36 = vld [vmem:[%s35] sm:$0x1]
    %v37 = vld [vmem:[%s35 + $0x70] sm:$0x1]
    %v38 = vunpack.c.l.bf16 %v36
    %v39 = vunpack.c.l.bf16 %v37
    %v42 = vrot.slane %v38, 1
    %v43 = vrot.slane %v39, 1
    %v46 = vmax.f32 %v38, %v42
    %v47 = vmax.f32 %v39, %v43
    %v48 = vpack.c.bf16 %v46, %v46
    %v49 = vpack.c.bf16 %v47, %v47
    %v50 = vunpack.c.l.bf16 %v33
    %v51 = vunpack.c.l.bf16 %v34
    %v52 = vunpack.c.l.bf16 %v48
    %v53 = vunpack.c.l.bf16 %v49
    %v54 = vmax.f32 %v50, %v52
    %v55 = vmax.f32 %v51, %v53
    %v56 = vpack.c.bf16 %v54, %v54
    %v57 = vpack.c.bf16 %v55, %v55
    %v58 = vld [vmem:[%s1] sm:$0xf]
    %v59 = vld [vmem:[%s1 + $0x4] sm:$0xf]
    %v60 = vld [vmem:[%s1 + $0x8] sm:$0xf]
    %v61 = vld [vmem:[%s1 + $0xc] sm:$0xf]
    %v62 = vld [vmem:[%s1 + $0x10] sm:$0xf]
    %v63 = vld [vmem:[%s1 + $0x14] sm:$0xf]
    %v64 = vld [vmem:[%s1 + $0x18] sm:$0xf]
    %v65 = vld [vmem:[%s1 + $0x1c] sm:$0xf]
    %v66 = vld [vmem:[%s1 + $0x20] sm:$0xf]
    %v67 = vld [vmem:[%s1 + $0x24] sm:$0xf]
    %v68 = vld [vmem:[%s1 + $0x28] sm:$0xf]
    %v69 = vld [vmem:[%s1 + $0x2c] sm:$0xf]
    %v70 = vld [vmem:[%s1 + $0x30] sm:$0xf]
    %v71 = vld [vmem:[%s1 + $0x34] sm:$0xf]
    %v72 = vld [vmem:[%s1 + $0x38] sm:$0xf]
    %v73 = vld [vmem:[%s1 + $0x3c] sm:$0xf]
    %v74 = vld [vmem:[%s0] sm:$0x2]
    %v75 = vld [vmem:[%s0 + $0x70] sm:$0x2]
    %v76 = vunpack.c.l.bf16 %v74
    %v77 = vunpack.c.l.bf16 %v75
    %v80 = vrot.slane %v76, 1
    %v81 = vrot.slane %v77, 1
    %v84 = vmax.f32 %v76, %v80
    %v85 = vmax.f32 %v77, %v81
    %v86 = vpack.c.bf16 %v84, %v84
    %v87 = vpack.c.bf16 %v85, %v85
    %v88 = vld [vmem:[%s35] sm:$0x2]
    %v89 = vld [vmem:[%s35 + $0x70] sm:$0x2]
    %v90 = vunpack.c.l.bf16 %v88
    %v91 = vunpack.c.l.bf16 %v89
    %v94 = vrot.slane %v90, 1
    %v95 = vrot.slane %v91, 1
    %v98 = vmax.f32 %v90, %v94
    %v99 = vmax.f32 %v91, %v95
    %v100 = vpack.c.bf16 %v98, %v98
    %v101 = vpack.c.bf16 %v99, %v99
    %v102 = vunpack.c.l.bf16 %v86
    %v103 = vunpack.c.l.bf16 %v87
    %v104 = vunpack.c.l.bf16 %v100
    %v105 = vunpack.c.l.bf16 %v101
    %v106 = vmax.f32 %v102, %v104
    %v107 = vmax.f32 %v103, %v105
    %v108 = vpack.c.bf16 %v106, %v106
    %v109 = vpack.c.bf16 %v107, %v107
    %s110 = scalar_lea.vmem %s1, 64
    %v111 = vld [vmem:[%s110] sm:$0xf]
    %v112 = vld [vmem:[%s110 + $0x4] sm:$0xf]
    %v113 = vld [vmem:[%s110 + $0x8] sm:$0xf]
    %v114 = vld [vmem:[%s110 + $0xc] sm:$0xf]
    %v115 = vld [vmem:[%s110 + $0x10] sm:$0xf]
    %v116 = vld [vmem:[%s110 + $0x14] sm:$0xf]
    %v117 = vld [vmem:[%s110 + $0x18] sm:$0xf]
    %v118 = vld [vmem:[%s110 + $0x1c] sm:$0xf]
    %v119 = vld [vmem:[%s110 + $0x20] sm:$0xf]
    %v120 = vld [vmem:[%s110 + $0x24] sm:$0xf]
    %v121 = vld [vmem:[%s110 + $0x28] sm:$0xf]
    %v122 = vld [vmem:[%s110 + $0x2c] sm:$0xf]
    %v123 = vld [vmem:[%s110 + $0x30] sm:$0xf]
    %v124 = vld [vmem:[%s110 + $0x34] sm:$0xf]
    %v125 = vld [vmem:[%s110 + $0x38] sm:$0xf]
    %v126 = vld [vmem:[%s110 + $0x3c] sm:$0xf]
    %v129 = vunpack.c.l.b16 %v108
    %v130 = vunpack.c.l.b16 %v109
    %v131 = vrot.slane %v129, 2
    %v132 = vrot.slane %v130, 1
    %vm133 = vcmask 1041409
    %v134 = vsel %vm133, %v132, %v131
    %v135 = vpack.c.b16 %v134, %v134
    %v153 = vunpack.c.l.b16 %v111
    %v154 = vunpack.c.l.b16 %v112
    %v155 = vunpack.c.l.b16 %v113
    %v156 = vunpack.c.l.b16 %v114
    %v157 = vunpack.c.l.b16 %v115
    %v158 = vunpack.c.l.b16 %v116
    %v159 = vunpack.c.l.b16 %v117
    %v160 = vunpack.c.l.b16 %v118
    %v161 = vunpack.c.l.b16 %v119
    %v162 = vunpack.c.l.b16 %v120
    %v163 = vunpack.c.l.b16 %v121
    %v164 = vunpack.c.l.b16 %v122
    %v165 = vunpack.c.l.b16 %v123
    %v166 = vunpack.c.l.b16 %v124
    %v167 = vunpack.c.l.b16 %v125
    %v168 = vunpack.c.l.b16 %v126
    %v169 = vpack.c.b16 %v154, %v153
    %v170 = vpack.c.b16 %v156, %v155
    %v171 = vpack.c.b16 %v158, %v157
    %v172 = vpack.c.b16 %v160, %v159
    %v173 = vpack.c.b16 %v162, %v161
    %v174 = vpack.c.b16 %v164, %v163
    %v175 = vpack.c.b16 %v166, %v165
    %v176 = vpack.c.b16 %v168, %v167
    %185 = vmatpush.bf16.msra.mxu0 %v176
    %186 = vmatpush.bf16.msra.mxu0 %v175
    %187 = vmatpush.bf16.msra.mxu0 %v174
    %188 = vmatpush.bf16.msra.mxu0 %v173
    %189 = vmatpush.bf16.msra.mxu0 %v172
    %190 = vmatpush.bf16.msra.mxu0 %v171
    %191 = vmatpush.bf16.msra.mxu0 %v170
    %192 = vmatpush.bf16.msra.mxu0 %v169
    %193 = vmatmul.bf16.gmra.mxu0 %v135
    %v194 = vpop.f32.mrf.mxu0
    %v195 = vadd.f32 0.0, %v194
    %v196 = vpop.f32.mrf.mxu0
    %197 = vdwg.mxu0
    %v200 = vunpack.c.l.b16 %v56
    %v201 = vunpack.c.l.b16 %v57
    %v202 = vrot.slane %v201, 7
    %v203 = vsel %vm133, %v202, %v200
    %v204 = vpack.c.b16 %v203, %v203
    %v222 = vunpack.c.l.b16 %v58
    %v223 = vunpack.c.l.b16 %v59
    %v224 = vunpack.c.l.b16 %v60
    %v225 = vunpack.c.l.b16 %v61
    %v226 = vunpack.c.l.b16 %v62
    %v227 = vunpack.c.l.b16 %v63
    %v228 = vunpack.c.l.b16 %v64
    %v229 = vunpack.c.l.b16 %v65
    %v230 = vunpack.c.l.b16 %v66
    %v231 = vunpack.c.l.b16 %v67
    %v232 = vunpack.c.l.b16 %v68
    %v233 = vunpack.c.l.b16 %v69
    %v234 = vunpack.c.l.b16 %v70
    %v235 = vunpack.c.l.b16 %v71
    %v236 = vunpack.c.l.b16 %v72
    %v237 = vunpack.c.l.b16 %v73
    %v238 = vpack.c.b16 %v223, %v222
    %v239 = vpack.c.b16 %v225, %v224
    %v240 = vpack.c.b16 %v227, %v226
    %v241 = vpack.c.b16 %v229, %v228
    %v242 = vpack.c.b16 %v231, %v230
    %v243 = vpack.c.b16 %v233, %v232
    %v244 = vpack.c.b16 %v235, %v234
    %v245 = vpack.c.b16 %v237, %v236
    %254 = vmatpush.bf16.msra.mxu0 %v245
    %255 = vmatpush.bf16.msra.mxu0 %v244
    %256 = vmatpush.bf16.msra.mxu0 %v243
    %257 = vmatpush.bf16.msra.mxu0 %v242
    %258 = vmatpush.bf16.msra.mxu0 %v241
    %259 = vmatpush.bf16.msra.mxu0 %v240
    %260 = vmatpush.bf16.msra.mxu0 %v239
    %261 = vmatpush.bf16.msra.mxu0 %v238
    %262 = vmatmul.bf16.gmra.mxu0 %v204
    %v263 = vpop.f32.mrf.mxu0
    %v264 = vadd.f32 %v195, %v263
    %v265 = vpop.f32.mrf.mxu0
    %266 = vdwg.mxu0
    %v267 = vld [vmem:[%s0] sm:$0x4]
    %v268 = vld [vmem:[%s0 + $0x70] sm:$0x4]
    %v269 = vunpack.c.l.bf16 %v267
    %v270 = vunpack.c.l.bf16 %v268
    %v273 = vrot.slane %v269, 1
    %v274 = vrot.slane %v270, 1
    %v277 = vmax.f32 %v269, %v273
    %v278 = vmax.f32 %v270, %v274
    %v279 = vpack.c.bf16 %v277, %v277
    %v280 = vpack.c.bf16 %v278, %v278
    %v281 = vld [vmem:[%s35] sm:$0x4]
    %v282 = vld [vmem:[%s35 + $0x70] sm:$0x4]
    %v283 = vunpack.c.l.bf16 %v281
    %v284 = vunpack.c.l.bf16 %v282
    %v287 = vrot.slane %v283, 1
    %v288 = vrot.slane %v284, 1
    %v291 = vmax.f32 %v283, %v287
    %v292 = vmax.f32 %v284, %v288
    %v293 = vpack.c.bf16 %v291, %v291
    %v294 = vpack.c.bf16 %v292, %v292
    %v295 = vunpack.c.l.bf16 %v279
    %v296 = vunpack.c.l.bf16 %v280
    %v297 = vunpack.c.l.bf16 %v293
    %v298 = vunpack.c.l.bf16 %v294
    %v299 = vmax.f32 %v295, %v297
    %v300 = vmax.f32 %v296, %v298
    %v301 = vpack.c.bf16 %v299, %v299
    %v302 = vpack.c.bf16 %v300, %v300
    %s303 = scalar_lea.vmem %s1, 128
    %v304 = vld [vmem:[%s303] sm:$0xf]
    %v305 = vld [vmem:[%s303 + $0x4] sm:$0xf]
    %v306 = vld [vmem:[%s303 + $0x8] sm:$0xf]
    %v307 = vld [vmem:[%s303 + $0xc] sm:$0xf]
    %v308 = vld [vmem:[%s303 + $0x10] sm:$0xf]
    %v309 = vld [vmem:[%s303 + $0x14] sm:$0xf]
    %v310 = vld [vmem:[%s303 + $0x18] sm:$0xf]
    %v311 = vld [vmem:[%s303 + $0x1c] sm:$0xf]
    %v312 = vld [vmem:[%s303 + $0x20] sm:$0xf]
    %v313 = vld [vmem:[%s303 + $0x24] sm:$0xf]
    %v314 = vld [vmem:[%s303 + $0x28] sm:$0xf]
    %v315 = vld [vmem:[%s303 + $0x2c] sm:$0xf]
    %v316 = vld [vmem:[%s303 + $0x30] sm:$0xf]
    %v317 = vld [vmem:[%s303 + $0x34] sm:$0xf]
    %v318 = vld [vmem:[%s303 + $0x38] sm:$0xf]
    %v319 = vld [vmem:[%s303 + $0x3c] sm:$0xf]
    %v322 = vunpack.c.l.b16 %v301
    %v323 = vunpack.c.l.b16 %v302
    %v324 = vrot.slane %v322, 4
    %v325 = vrot.slane %v323, 3
    %v326 = vsel %vm133, %v325, %v324
    %v327 = vpack.c.b16 %v326, %v326
    %v345 = vunpack.c.l.b16 %v304
    %v346 = vunpack.c.l.b16 %v305
    %v347 = vunpack.c.l.b16 %v306
    %v348 = vunpack.c.l.b16 %v307
    %v349 = vunpack.c.l.b16 %v308
    %v350 = vunpack.c.l.b16 %v309
    %v351 = vunpack.c.l.b16 %v310
    %v352 = vunpack.c.l.b16 %v311
    %v353 = vunpack.c.l.b16 %v312
    %v354 = vunpack.c.l.b16 %v313
    %v355 = vunpack.c.l.b16 %v314
    %v356 = vunpack.c.l.b16 %v315
    %v357 = vunpack.c.l.b16 %v316
    %v358 = vunpack.c.l.b16 %v317
    %v359 = vunpack.c.l.b16 %v318
    %v360 = vunpack.c.l.b16 %v319
    %v361 = vpack.c.b16 %v346, %v345
    %v362 = vpack.c.b16 %v348, %v347
    %v363 = vpack.c.b16 %v350, %v349
    %v364 = vpack.c.b16 %v352, %v351
    %v365 = vpack.c.b16 %v354, %v353
    %v366 = vpack.c.b16 %v356, %v355
    %v367 = vpack.c.b16 %v358, %v357
    %v368 = vpack.c.b16 %v360, %v359
    %377 = vmatpush.bf16.msra.mxu0 %v368
    %378 = vmatpush.bf16.msra.mxu0 %v367
    %379 = vmatpush.bf16.msra.mxu0 %v366
    %380 = vmatpush.bf16.msra.mxu0 %v365
    %381 = vmatpush.bf16.msra.mxu0 %v364
    %382 = vmatpush.bf16.msra.mxu0 %v363
    %383 = vmatpush.bf16.msra.mxu0 %v362
    %384 = vmatpush.bf16.msra.mxu0 %v361
    %385 = vmatmul.bf16.gmra.mxu0 %v327
    %v386 = vpop.f32.mrf.mxu0
    %v387 = vadd.f32 0.0, %v386
    %v388 = vpop.f32.mrf.mxu0
    %389 = vdwg.mxu0
    %v390 = vadd.f32 %v264, %v387
    %v391 = vld [vmem:[%s0] sm:$0x8]
    %v392 = vld [vmem:[%s0 + $0x70] sm:$0x8]
    %v393 = vunpack.c.l.bf16 %v391
    %v394 = vunpack.c.l.bf16 %v392
    %v397 = vrot.slane %v393, 1
    %v398 = vrot.slane %v394, 1
    %v401 = vmax.f32 %v393, %v397
    %v402 = vmax.f32 %v394, %v398
    %v403 = vpack.c.bf16 %v401, %v401
    %v404 = vpack.c.bf16 %v402, %v402
    %v405 = vld [vmem:[%s35] sm:$0x8]
    %v406 = vld [vmem:[%s35 + $0x70] sm:$0x8]
    %v407 = vunpack.c.l.bf16 %v405
    %v408 = vunpack.c.l.bf16 %v406
    %v411 = vrot.slane %v407, 1
    %v412 = vrot.slane %v408, 1
    %v415 = vmax.f32 %v407, %v411
    %v416 = vmax.f32 %v408, %v412
    %v417 = vpack.c.bf16 %v415, %v415
    %v418 = vpack.c.bf16 %v416, %v416
    %v419 = vunpack.c.l.bf16 %v403
    %v420 = vunpack.c.l.bf16 %v404
    %v421 = vunpack.c.l.bf16 %v417
    %v422 = vunpack.c.l.bf16 %v418
    %v423 = vmax.f32 %v419, %v421
    %v424 = vmax.f32 %v420, %v422
    %v425 = vpack.c.bf16 %v423, %v423
    %v426 = vpack.c.bf16 %v424, %v424
    %s427 = scalar_lea.vmem %s1, 192
    %v428 = vld [vmem:[%s427] sm:$0xf]
    %v429 = vld [vmem:[%s427 + $0x4] sm:$0xf]
    %v430 = vld [vmem:[%s427 + $0x8] sm:$0xf]
    %v431 = vld [vmem:[%s427 + $0xc] sm:$0xf]
    %v432 = vld [vmem:[%s427 + $0x10] sm:$0xf]
    %v433 = vld [vmem:[%s427 + $0x14] sm:$0xf]
    %v434 = vld [vmem:[%s427 + $0x18] sm:$0xf]
    %v435 = vld [vmem:[%s427 + $0x1c] sm:$0xf]
    %v436 = vld [vmem:[%s427 + $0x20] sm:$0xf]
    %v437 = vld [vmem:[%s427 + $0x24] sm:$0xf]
    %v438 = vld [vmem:[%s427 + $0x28] sm:$0xf]
    %v439 = vld [vmem:[%s427 + $0x2c] sm:$0xf]
    %v440 = vld [vmem:[%s427 + $0x30] sm:$0xf]
    %v441 = vld [vmem:[%s427 + $0x34] sm:$0xf]
    %v442 = vld [vmem:[%s427 + $0x38] sm:$0xf]
    %v443 = vld [vmem:[%s427 + $0x3c] sm:$0xf]
    %v446 = vunpack.c.l.b16 %v425
    %v447 = vunpack.c.l.b16 %v426
    %v448 = vrot.slane %v446, 6
    %v449 = vrot.slane %v447, 5
    %v450 = vsel %vm133, %v449, %v448
    %v451 = vpack.c.b16 %v450, %v450
    %v469 = vunpack.c.l.b16 %v428
    %v470 = vunpack.c.l.b16 %v429
    %v471 = vunpack.c.l.b16 %v430
    %v472 = vunpack.c.l.b16 %v431
    %v473 = vunpack.c.l.b16 %v432
    %v474 = vunpack.c.l.b16 %v433
    %v475 = vunpack.c.l.b16 %v434
    %v476 = vunpack.c.l.b16 %v435
    %v477 = vunpack.c.l.b16 %v436
    %v478 = vunpack.c.l.b16 %v437
    %v479 = vunpack.c.l.b16 %v438
    %v480 = vunpack.c.l.b16 %v439
    %v481 = vunpack.c.l.b16 %v440
    %v482 = vunpack.c.l.b16 %v441
    %v483 = vunpack.c.l.b16 %v442
    %v484 = vunpack.c.l.b16 %v443
    %v485 = vpack.c.b16 %v470, %v469
    %v486 = vpack.c.b16 %v472, %v471
    %v487 = vpack.c.b16 %v474, %v473
    %v488 = vpack.c.b16 %v476, %v475
    %v489 = vpack.c.b16 %v478, %v477
    %v490 = vpack.c.b16 %v480, %v479
    %v491 = vpack.c.b16 %v482, %v481
    %v492 = vpack.c.b16 %v484, %v483
    %501 = vmatpush.bf16.msra.mxu0 %v492
    %502 = vmatpush.bf16.msra.mxu0 %v491
    %503 = vmatpush.bf16.msra.mxu0 %v490
    %504 = vmatpush.bf16.msra.mxu0 %v489
    %505 = vmatpush.bf16.msra.mxu0 %v488
    %506 = vmatpush.bf16.msra.mxu0 %v487
    %507 = vmatpush.bf16.msra.mxu0 %v486
    %508 = vmatpush.bf16.msra.mxu0 %v485
    %509 = vmatmul.bf16.gmra.mxu0 %v451
    %v510 = vpop.f32.mrf.mxu0
    %v511 = vadd.f32 0.0, %v510
    %v512 = vpop.f32.mrf.mxu0
    %513 = vdwg.mxu0
    %v514 = vadd.f32 %v390, %v511
    %v515 = vld [vmem:[%s0 + $0x4] sm:$0x1]
    %v516 = vld [vmem:[%s0 + $0x74] sm:$0x1]
    %v517 = vunpack.c.l.bf16 %v515
    %v518 = vunpack.c.l.bf16 %v516
    %v521 = vrot.slane %v517, 1
    %v522 = vrot.slane %v518, 1
    %v525 = vmax.f32 %v517, %v521
    %v526 = vmax.f32 %v518, %v522
    %v527 = vpack.c.bf16 %v525, %v525
    %v528 = vpack.c.bf16 %v526, %v526
    %v529 = vld [vmem:[%s35 + $0x4] sm:$0x1]
    %v530 = vld [vmem:[%s35 + $0x74] sm:$0x1]
    %v531 = vunpack.c.l.bf16 %v529
    %v532 = vunpack.c.l.bf16 %v530
    %v535 = vrot.slane %v531, 1
    %v536 = vrot.slane %v532, 1
    %v539 = vmax.f32 %v531, %v535
    %v540 = vmax.f32 %v532, %v536
    %v541 = vpack.c.bf16 %v539, %v539
    %v542 = vpack.c.bf16 %v540, %v540
    %v543 = vunpack.c.l.bf16 %v527
    %v544 = vunpack.c.l.bf16 %v528
    %v545 = vunpack.c.l.bf16 %v541
    %v546 = vunpack.c.l.bf16 %v542
    %v547 = vmax.f32 %v543, %v545
    %v548 = vmax.f32 %v544, %v546
    %v549 = vpack.c.bf16 %v547, %v547
    %v550 = vpack.c.bf16 %v548, %v548
    %s551 = scalar_lea.vmem %s1, 256
    %v552 = vld [vmem:[%s551] sm:$0xf]
    %v553 = vld [vmem:[%s551 + $0x4] sm:$0xf]
    %v554 = vld [vmem:[%s551 + $0x8] sm:$0xf]
    %v555 = vld [vmem:[%s551 + $0xc] sm:$0xf]
    %v556 = vld [vmem:[%s551 + $0x10] sm:$0xf]
    %v557 = vld [vmem:[%s551 + $0x14] sm:$0xf]
    %v558 = vld [vmem:[%s551 + $0x18] sm:$0xf]
    %v559 = vld [vmem:[%s551 + $0x1c] sm:$0xf]
    %v560 = vld [vmem:[%s551 + $0x20] sm:$0xf]
    %v561 = vld [vmem:[%s551 + $0x24] sm:$0xf]
    %v562 = vld [vmem:[%s551 + $0x28] sm:$0xf]
    %v563 = vld [vmem:[%s551 + $0x2c] sm:$0xf]
    %v564 = vld [vmem:[%s551 + $0x30] sm:$0xf]
    %v565 = vld [vmem:[%s551 + $0x34] sm:$0xf]
    %v566 = vld [vmem:[%s551 + $0x38] sm:$0xf]
    %v567 = vld [vmem:[%s551 + $0x3c] sm:$0xf]
    %v570 = vunpack.c.l.b16 %v549
    %v571 = vunpack.c.l.b16 %v550
    %v572 = vrot.slane %v571, 7
    %v573 = vsel %vm133, %v572, %v570
    %v574 = vpack.c.b16 %v573, %v573
    %v592 = vunpack.c.l.b16 %v552
    %v593 = vunpack.c.l.b16 %v553
    %v594 = vunpack.c.l.b16 %v554
    %v595 = vunpack.c.l.b16 %v555
    %v596 = vunpack.c.l.b16 %v556
    %v597 = vunpack.c.l.b16 %v557
    %v598 = vunpack.c.l.b16 %v558
    %v599 = vunpack.c.l.b16 %v559
    %v600 = vunpack.c.l.b16 %v560
    %v601 = vunpack.c.l.b16 %v561
    %v602 = vunpack.c.l.b16 %v562
    %v603 = vunpack.c.l.b16 %v563
    %v604 = vunpack.c.l.b16 %v564
    %v605 = vunpack.c.l.b16 %v565
    %v606 = vunpack.c.l.b16 %v566
    %v607 = vunpack.c.l.b16 %v567
    %v608 = vpack.c.b16 %v593, %v592
    %v609 = vpack.c.b16 %v595, %v594
    %v610 = vpack.c.b16 %v597, %v596
    %v611 = vpack.c.b16 %v599, %v598
    %v612 = vpack.c.b16 %v601, %v600
    %v613 = vpack.c.b16 %v603, %v602
    %v614 = vpack.c.b16 %v605, %v604
    %v615 = vpack.c.b16 %v607, %v606
    %624 = vmatpush.bf16.msra.mxu0 %v615
    %625 = vmatpush.bf16.msra.mxu0 %v614
    %626 = vmatpush.bf16.msra.mxu0 %v613
    %627 = vmatpush.bf16.msra.mxu0 %v612
    %628 = vmatpush.bf16.msra.mxu0 %v611
    %629 = vmatpush.bf16.msra.mxu0 %v610
    %630 = vmatpush.bf16.msra.mxu0 %v609
    %631 = vmatpush.bf16.msra.mxu0 %v608
    %632 = vmatmul.bf16.gmra.mxu0 %v574
    %v633 = vpop.f32.mrf.mxu0
    %v634 = vadd.f32 0.0, %v633
    %v635 = vpop.f32.mrf.mxu0
    %636 = vdwg.mxu0
    %v637 = vadd.f32 %v514, %v634
    %v638 = vld [vmem:[%s0 + $0x4] sm:$0x2]
    %v639 = vld [vmem:[%s0 + $0x74] sm:$0x2]
    %v640 = vunpack.c.l.bf16 %v638
    %v641 = vunpack.c.l.bf16 %v639
    %v644 = vrot.slane %v640, 1
    %v645 = vrot.slane %v641, 1
    %v648 = vmax.f32 %v640, %v644
    %v649 = vmax.f32 %v641, %v645
    %v650 = vpack.c.bf16 %v648, %v648
    %v651 = vpack.c.bf16 %v649, %v649
    %v652 = vld [vmem:[%s35 + $0x4] sm:$0x2]
    %v653 = vld [vmem:[%s35 + $0x74] sm:$0x2]
    %v654 = vunpack.c.l.bf16 %v652
    %v655 = vunpack.c.l.bf16 %v653
    %v658 = vrot.slane %v654, 1
    %v659 = vrot.slane %v655, 1
    %v662 = vmax.f32 %v654, %v658
    %v663 = vmax.f32 %v655, %v659
    %v664 = vpack.c.bf16 %v662, %v662
    %v665 = vpack.c.bf16 %v663, %v663
    %v666 = vunpack.c.l.bf16 %v650
    %v667 = vunpack.c.l.bf16 %v651
    %v668 = vunpack.c.l.bf16 %v664
    %v669 = vunpack.c.l.bf16 %v665
    %v670 = vmax.f32 %v666, %v668
    %v671 = vmax.f32 %v667, %v669
    %v672 = vpack.c.bf16 %v670, %v670
    %v673 = vpack.c.bf16 %v671, %v671
    %s674 = scalar_lea.vmem %s1, 320
    %v675 = vld [vmem:[%s674] sm:$0xf]
    %v676 = vld [vmem:[%s674 + $0x4] sm:$0xf]
    %v677 = vld [vmem:[%s674 + $0x8] sm:$0xf]
    %v678 = vld [vmem:[%s674 + $0xc] sm:$0xf]
    %v679 = vld [vmem:[%s674 + $0x10] sm:$0xf]
    %v680 = vld [vmem:[%s674 + $0x14] sm:$0xf]
    %v681 = vld [vmem:[%s674 + $0x18] sm:$0xf]
    %v682 = vld [vmem:[%s674 + $0x1c] sm:$0xf]
    %v683 = vld [vmem:[%s674 + $0x20] sm:$0xf]
    %v684 = vld [vmem:[%s674 + $0x24] sm:$0xf]
    %v685 = vld [vmem:[%s674 + $0x28] sm:$0xf]
    %v686 = vld [vmem:[%s674 + $0x2c] sm:$0xf]
    %v687 = vld [vmem:[%s674 + $0x30] sm:$0xf]
    %v688 = vld [vmem:[%s674 + $0x34] sm:$0xf]
    %v689 = vld [vmem:[%s674 + $0x38] sm:$0xf]
    %v690 = vld [vmem:[%s674 + $0x3c] sm:$0xf]
    %v693 = vunpack.c.l.b16 %v672
    %v694 = vunpack.c.l.b16 %v673
    %v695 = vrot.slane %v693, 2
    %v696 = vrot.slane %v694, 1
    %v697 = vsel %vm133, %v696, %v695
    %v698 = vpack.c.b16 %v697, %v697
    %v716 = vunpack.c.l.b16 %v675
    %v717 = vunpack.c.l.b16 %v676
    %v718 = vunpack.c.l.b16 %v677
    %v719 = vunpack.c.l.b16 %v678
    %v720 = vunpack.c.l.b16 %v679
    %v721 = vunpack.c.l.b16 %v680
    %v722 = vunpack.c.l.b16 %v681
    %v723 = vunpack.c.l.b16 %v682
    %v724 = vunpack.c.l.b16 %v683
    %v725 = vunpack.c.l.b16 %v684
    %v726 = vunpack.c.l.b16 %v685
    %v727 = vunpack.c.l.b16 %v686
    %v728 = vunpack.c.l.b16 %v687
    %v729 = vunpack.c.l.b16 %v688
    %v730 = vunpack.c.l.b16 %v689
    %v731 = vunpack.c.l.b16 %v690
    %v732 = vpack.c.b16 %v717, %v716
    %v733 = vpack.c.b16 %v719, %v718
    %v734 = vpack.c.b16 %v721, %v720
    %v735 = vpack.c.b16 %v723, %v722
    %v736 = vpack.c.b16 %v725, %v724
    %v737 = vpack.c.b16 %v727, %v726
    %v738 = vpack.c.b16 %v729, %v728
    %v739 = vpack.c.b16 %v731, %v730
    %748 = vmatpush.bf16.msra.mxu0 %v739
    %749 = vmatpush.bf16.msra.mxu0 %v738
    %750 = vmatpush.bf16.msra.mxu0 %v737
    %751 = vmatpush.bf16.msra.mxu0 %v736
    %752 = vmatpush.bf16.msra.mxu0 %v735
    %753 = vmatpush.bf16.msra.mxu0 %v734
    %754 = vmatpush.bf16.msra.mxu0 %v733
    %755 = vmatpush.bf16.msra.mxu0 %v732
    %756 = vmatmul.bf16.gmra.mxu0 %v698
    %v757 = vpop.f32.mrf.mxu0
    %v758 = vadd.f32 0.0, %v757
    %v759 = vpop.f32.mrf.mxu0
    %760 = vdwg.mxu0
    %v761 = vadd.f32 %v637, %v758
    %v762 = vld [vmem:[%s0 + $0x4] sm:$0x4]
    %v763 = vld [vmem:[%s0 + $0x74] sm:$0x4]
    %v764 = vunpack.c.l.bf16 %v762
    %v765 = vunpack.c.l.bf16 %v763
    %v768 = vrot.slane %v764, 1
    %v769 = vrot.slane %v765, 1
    %v772 = vmax.f32 %v764, %v768
    %v773 = vmax.f32 %v765, %v769
    %v774 = vpack.c.bf16 %v772, %v772
    %v775 = vpack.c.bf16 %v773, %v773
    %v776 = vld [vmem:[%s35 + $0x4] sm:$0x4]
    %v777 = vld [vmem:[%s35 + $0x74] sm:$0x4]
    %v778 = vunpack.c.l.bf16 %v776
    %v779 = vunpack.c.l.bf16 %v777
    %v782 = vrot.slane %v778, 1
    %v783 = vrot.slane %v779, 1
    %v786 = vmax.f32 %v778, %v782
    %v787 = vmax.f32 %v779, %v783
    %v788 = vpack.c.bf16 %v786, %v786
    %v789 = vpack.c.bf16 %v787, %v787
    %v790 = vunpack.c.l.bf16 %v774
    %v791 = vunpack.c.l.bf16 %v775
    %v792 = vunpack.c.l.bf16 %v788
    %v793 = vunpack.c.l.bf16 %v789
    %v794 = vmax.f32 %v790, %v792
    %v795 = vmax.f32 %v791, %v793
    %v796 = vpack.c.bf16 %v794, %v794
    %v797 = vpack.c.bf16 %v795, %v795
    %s798 = scalar_lea.vmem %s1, 384
    %v799 = vld [vmem:[%s798] sm:$0xf]
    %v800 = vld [vmem:[%s798 + $0x4] sm:$0xf]
    %v801 = vld [vmem:[%s798 + $0x8] sm:$0xf]
    %v802 = vld [vmem:[%s798 + $0xc] sm:$0xf]
    %v803 = vld [vmem:[%s798 + $0x10] sm:$0xf]
    %v804 = vld [vmem:[%s798 + $0x14] sm:$0xf]
    %v805 = vld [vmem:[%s798 + $0x18] sm:$0xf]
    %v806 = vld [vmem:[%s798 + $0x1c] sm:$0xf]
    %v807 = vld [vmem:[%s798 + $0x20] sm:$0xf]
    %v808 = vld [vmem:[%s798 + $0x24] sm:$0xf]
    %v809 = vld [vmem:[%s798 + $0x28] sm:$0xf]
    %v810 = vld [vmem:[%s798 + $0x2c] sm:$0xf]
    %v811 = vld [vmem:[%s798 + $0x30] sm:$0xf]
    %v812 = vld [vmem:[%s798 + $0x34] sm:$0xf]
    %v813 = vld [vmem:[%s798 + $0x38] sm:$0xf]
    %v814 = vld [vmem:[%s798 + $0x3c] sm:$0xf]
    %v817 = vunpack.c.l.b16 %v796
    %v818 = vunpack.c.l.b16 %v797
    %v819 = vrot.slane %v817, 4
    %v820 = vrot.slane %v818, 3
    %v821 = vsel %vm133, %v820, %v819
    %v822 = vpack.c.b16 %v821, %v821
    %v840 = vunpack.c.l.b16 %v799
    %v841 = vunpack.c.l.b16 %v800
    %v842 = vunpack.c.l.b16 %v801
    %v843 = vunpack.c.l.b16 %v802
    %v844 = vunpack.c.l.b16 %v803
    %v845 = vunpack.c.l.b16 %v804
    %v846 = vunpack.c.l.b16 %v805
    %v847 = vunpack.c.l.b16 %v806
    %v848 = vunpack.c.l.b16 %v807
    %v849 = vunpack.c.l.b16 %v808
    %v850 = vunpack.c.l.b16 %v809
    %v851 = vunpack.c.l.b16 %v810
    %v852 = vunpack.c.l.b16 %v811
    %v853 = vunpack.c.l.b16 %v812
    %v854 = vunpack.c.l.b16 %v813
    %v855 = vunpack.c.l.b16 %v814
    %v856 = vpack.c.b16 %v841, %v840
    %v857 = vpack.c.b16 %v843, %v842
    %v858 = vpack.c.b16 %v845, %v844
    %v859 = vpack.c.b16 %v847, %v846
    %v860 = vpack.c.b16 %v849, %v848
    %v861 = vpack.c.b16 %v851, %v850
    %v862 = vpack.c.b16 %v853, %v852
    %v863 = vpack.c.b16 %v855, %v854
    %872 = vmatpush.bf16.msra.mxu0 %v863
    %873 = vmatpush.bf16.msra.mxu0 %v862
    %874 = vmatpush.bf16.msra.mxu0 %v861
    %875 = vmatpush.bf16.msra.mxu0 %v860
    %876 = vmatpush.bf16.msra.mxu0 %v859
    %877 = vmatpush.bf16.msra.mxu0 %v858
    %878 = vmatpush.bf16.msra.mxu0 %v857
    %879 = vmatpush.bf16.msra.mxu0 %v856
    %880 = vmatmul.bf16.gmra.mxu0 %v822
    %v881 = vpop.f32.mrf.mxu0
    %v882 = vadd.f32 0.0, %v881
    %v883 = vpop.f32.mrf.mxu0
    %884 = vdwg.mxu0
    %v885 = vadd.f32 %v761, %v882
    %s886 = scalar_lea.vmem %s0, 16
    %v887 = vld [vmem:[%s886] sm:$0x1]
    %v888 = vld [vmem:[%s886 + $0x70] sm:$0x1]
    %v889 = vunpack.c.l.bf16 %v887
    %v890 = vunpack.c.l.bf16 %v888
    %v893 = vrot.slane %v889, 1
    %v894 = vrot.slane %v890, 1
    %v897 = vmax.f32 %v889, %v893
    %v898 = vmax.f32 %v890, %v894
    %v899 = vpack.c.bf16 %v897, %v897
    %v900 = vpack.c.bf16 %v898, %v898
    %s901 = scalar_lea.vmem %s0, 24
    %v902 = vld [vmem:[%s901] sm:$0x1]
    %v903 = vld [vmem:[%s901 + $0x70] sm:$0x1]
    %v904 = vunpack.c.l.bf16 %v902
    %v905 = vunpack.c.l.bf16 %v903
    %v908 = vrot.slane %v904, 1
    %v909 = vrot.slane %v905, 1
    %v912 = vmax.f32 %v904, %v908
    %v913 = vmax.f32 %v905, %v909
    %v914 = vpack.c.bf16 %v912, %v912
    %v915 = vpack.c.bf16 %v913, %v913
    %v916 = vunpack.c.l.bf16 %v899
    %v917 = vunpack.c.l.bf16 %v900
    %v918 = vunpack.c.l.bf16 %v914
    %v919 = vunpack.c.l.bf16 %v915
    %v920 = vmax.f32 %v916, %v918
    %v921 = vmax.f32 %v917, %v919
    %v922 = vpack.c.bf16 %v920, %v920
    %v923 = vpack.c.bf16 %v921, %v921
    %s924 = scalar_lea.vmem %s1, 448
    %v925 = vld [vmem:[%s924] sm:$0xf]
    %v926 = vld [vmem:[%s924 + $0x4] sm:$0xf]
    %v927 = vld [vmem:[%s924 + $0x8] sm:$0xf]
    %v928 = vld [vmem:[%s924 + $0xc] sm:$0xf]
    %v929 = vld [vmem:[%s924 + $0x10] sm:$0xf]
    %v930 = vld [vmem:[%s924 + $0x14] sm:$0xf]
    %v931 = vld [vmem:[%s924 + $0x18] sm:$0xf]
    %v932 = vld [vmem:[%s924 + $0x1c] sm:$0xf]
    %v933 = vld [vmem:[%s924 + $0x20] sm:$0xf]
    %v934 = vld [vmem:[%s924 + $0x24] sm:$0xf]
    %v935 = vld [vmem:[%s924 + $0x28] sm:$0xf]
    %v936 = vld [vmem:[%s924 + $0x2c] sm:$0xf]
    %v937 = vld [vmem:[%s924 + $0x30] sm:$0xf]
    %v938 = vld [vmem:[%s924 + $0x34] sm:$0xf]
    %v939 = vld [vmem:[%s924 + $0x38] sm:$0xf]
    %v940 = vld [vmem:[%s924 + $0x3c] sm:$0xf]
    %v943 = vunpack.c.l.b16 %v922
    %v944 = vunpack.c.l.b16 %v923
    %v945 = vrot.slane %v944, 7
    %v946 = vsel %vm133, %v945, %v943
    %v947 = vpack.c.b16 %v946, %v946
    %v965 = vunpack.c.l.b16 %v925
    %v966 = vunpack.c.l.b16 %v926
    %v967 = vunpack.c.l.b16 %v927
    %v968 = vunpack.c.l.b16 %v928
    %v969 = vunpack.c.l.b16 %v929
    %v970 = vunpack.c.l.b16 %v930
    %v971 = vunpack.c.l.b16 %v931
    %v972 = vunpack.c.l.b16 %v932
    %v973 = vunpack.c.l.b16 %v933
    %v974 = vunpack.c.l.b16 %v934
    %v975 = vunpack.c.l.b16 %v935
    %v976 = vunpack.c.l.b16 %v936
    %v977 = vunpack.c.l.b16 %v937
    %v978 = vunpack.c.l.b16 %v938
    %v979 = vunpack.c.l.b16 %v939
    %v980 = vunpack.c.l.b16 %v940
    %v981 = vpack.c.b16 %v966, %v965
    %v982 = vpack.c.b16 %v968, %v967
    %v983 = vpack.c.b16 %v970, %v969
    %v984 = vpack.c.b16 %v972, %v971
    %v985 = vpack.c.b16 %v974, %v973
    %v986 = vpack.c.b16 %v976, %v975
    %v987 = vpack.c.b16 %v978, %v977
    %v988 = vpack.c.b16 %v980, %v979
    %997 = vmatpush.bf16.msra.mxu0 %v988
    %998 = vmatpush.bf16.msra.mxu0 %v987
    %999 = vmatpush.bf16.msra.mxu0 %v986
    %1000 = vmatpush.bf16.msra.mxu0 %v985
    %1001 = vmatpush.bf16.msra.mxu0 %v984
    %1002 = vmatpush.bf16.msra.mxu0 %v983
    %1003 = vmatpush.bf16.msra.mxu0 %v982
    %1004 = vmatpush.bf16.msra.mxu0 %v981
    %1005 = vmatmul.bf16.gmra.mxu0 %v947
    %v1006 = vpop.f32.mrf.mxu0
    %v1007 = vadd.f32 0.0, %v1006
    %v1008 = vpop.f32.mrf.mxu0
    %1009 = vdwg.mxu0
    %v1010 = vadd.f32 %v885, %v1007
    %v1011 = vld [vmem:[%s886] sm:$0x2]
    %v1012 = vld [vmem:[%s886 + $0x70] sm:$0x2]
    %v1013 = vunpack.c.l.bf16 %v1011
    %v1014 = vunpack.c.l.bf16 %v1012
    %v1017 = vrot.slane %v1013, 1
    %v1018 = vrot.slane %v1014, 1
    %v1021 = vmax.f32 %v1013, %v1017
    %v1022 = vmax.f32 %v1014, %v1018
    %v1023 = vpack.c.bf16 %v1021, %v1021
    %v1024 = vpack.c.bf16 %v1022, %v1022
    %v1025 = vld [vmem:[%s901] sm:$0x2]
    %v1026 = vld [vmem:[%s901 + $0x70] sm:$0x2]
    %v1027 = vunpack.c.l.bf16 %v1025
    %v1028 = vunpack.c.l.bf16 %v1026
    %v1031 = vrot.slane %v1027, 1
    %v1032 = vrot.slane %v1028, 1
    %v1035 = vmax.f32 %v1027, %v1031
    %v1036 = vmax.f32 %v1028, %v1032
    %v1037 = vpack.c.bf16 %v1035, %v1035
    %v1038 = vpack.c.bf16 %v1036, %v1036
    %v1039 = vunpack.c.l.bf16 %v1023
    %v1040 = vunpack.c.l.bf16 %v1024
    %v1041 = vunpack.c.l.bf16 %v1037
    %v1042 = vunpack.c.l.bf16 %v1038
    %v1043 = vmax.f32 %v1039, %v1041
    %v1044 = vmax.f32 %v1040, %v1042
    %v1045 = vpack.c.bf16 %v1043, %v1043
    %v1046 = vpack.c.bf16 %v1044, %v1044
    %s1047 = scalar_lea.vmem %s1, 512
    %v1048 = vld [vmem:[%s1047] sm:$0xf]
    %v1049 = vld [vmem:[%s1047 + $0x4] sm:$0xf]
    %v1050 = vld [vmem:[%s1047 + $0x8] sm:$0xf]
    %v1051 = vld [vmem:[%s1047 + $0xc] sm:$0xf]
    %v1052 = vld [vmem:[%s1047 + $0x10] sm:$0xf]
    %v1053 = vld [vmem:[%s1047 + $0x14] sm:$0xf]
    %v1054 = vld [vmem:[%s1047 + $0x18] sm:$0xf]
    %v1055 = vld [vmem:[%s1047 + $0x1c] sm:$0xf]
    %v1056 = vld [vmem:[%s1047 + $0x20] sm:$0xf]
    %v1057 = vld [vmem:[%s1047 + $0x24] sm:$0xf]
    %v1058 = vld [vmem:[%s1047 + $0x28] sm:$0xf]
    %v1059 = vld [vmem:[%s1047 + $0x2c] sm:$0xf]
    %v1060 = vld [vmem:[%s1047 + $0x30] sm:$0xf]
    %v1061 = vld [vmem:[%s1047 + $0x34] sm:$0xf]
    %v1062 = vld [vmem:[%s1047 + $0x38] sm:$0xf]
    %v1063 = vld [vmem:[%s1047 + $0x3c] sm:$0xf]
    %v1066 = vunpack.c.l.b16 %v1045
    %v1067 = vunpack.c.l.b16 %v1046
    %v1068 = vrot.slane %v1066, 2
    %v1069 = vrot.slane %v1067, 1
    %v1070 = vsel %vm133, %v1069, %v1068
    %v1071 = vpack.c.b16 %v1070, %v1070
    %v1089 = vunpack.c.l.b16 %v1048
    %v1090 = vunpack.c.l.b16 %v1049
    %v1091 = vunpack.c.l.b16 %v1050
    %v1092 = vunpack.c.l.b16 %v1051
    %v1093 = vunpack.c.l.b16 %v1052
    %v1094 = vunpack.c.l.b16 %v1053
    %v1095 = vunpack.c.l.b16 %v1054
    %v1096 = vunpack.c.l.b16 %v1055
    %v1097 = vunpack.c.l.b16 %v1056
    %v1098 = vunpack.c.l.b16 %v1057
    %v1099 = vunpack.c.l.b16 %v1058
    %v1100 = vunpack.c.l.b16 %v1059
    %v1101 = vunpack.c.l.b16 %v1060
    %v1102 = vunpack.c.l.b16 %v1061
    %v1103 = vunpack.c.l.b16 %v1062
    %v1104 = vunpack.c.l.b16 %v1063
    %v1105 = vpack.c.b16 %v1090, %v1089
    %v1106 = vpack.c.b16 %v1092, %v1091
    %v1107 = vpack.c.b16 %v1094, %v1093
    %v1108 = vpack.c.b16 %v1096, %v1095
    %v1109 = vpack.c.b16 %v1098, %v1097
    %v1110 = vpack.c.b16 %v1100, %v1099
    %v1111 = vpack.c.b16 %v1102, %v1101
    %v1112 = vpack.c.b16 %v1104, %v1103
    %1121 = vmatpush.bf16.msra.mxu0 %v1112
    %1122 = vmatpush.bf16.msra.mxu0 %v1111
    %1123 = vmatpush.bf16.msra.mxu0 %v1110
    %1124 = vmatpush.bf16.msra.mxu0 %v1109
    %1125 = vmatpush.bf16.msra.mxu0 %v1108
    %1126 = vmatpush.bf16.msra.mxu0 %v1107
    %1127 = vmatpush.bf16.msra.mxu0 %v1106
    %1128 = vmatpush.bf16.msra.mxu0 %v1105
    %1129 = vmatmul.bf16.gmra.mxu0 %v1071
    %v1130 = vpop.f32.mrf.mxu0
    %v1131 = vadd.f32 0.0, %v1130
    %v1132 = vpop.f32.mrf.mxu0
    %1133 = vdwg.mxu0
    %v1134 = vadd.f32 %v1010, %v1131
    %v1135 = vld [vmem:[%s886] sm:$0x4]
    %v1136 = vld [vmem:[%s886 + $0x70] sm:$0x4]
    %v1137 = vunpack.c.l.bf16 %v1135
    %v1138 = vunpack.c.l.bf16 %v1136
    %v1141 = vrot.slane %v1137, 1
    %v1142 = vrot.slane %v1138, 1
    %v1145 = vmax.f32 %v1137, %v1141
    %v1146 = vmax.f32 %v1138, %v1142
    %v1147 = vpack.c.bf16 %v1145, %v1145
    %v1148 = vpack.c.bf16 %v1146, %v1146
    %v1149 = vld [vmem:[%s901] sm:$0x4]
    %v1150 = vld [vmem:[%s901 + $0x70] sm:$0x4]
    %v1151 = vunpack.c.l.bf16 %v1149
    %v1152 = vunpack.c.l.bf16 %v1150
    %v1155 = vrot.slane %v1151, 1
    %v1156 = vrot.slane %v1152, 1
    %v1159 = vmax.f32 %v1151, %v1155
    %v1160 = vmax.f32 %v1152, %v1156
    %v1161 = vpack.c.bf16 %v1159, %v1159
    %v1162 = vpack.c.bf16 %v1160, %v1160
    %v1163 = vunpack.c.l.bf16 %v1147
    %v1164 = vunpack.c.l.bf16 %v1148
    %v1165 = vunpack.c.l.bf16 %v1161
    %v1166 = vunpack.c.l.bf16 %v1162
    %v1167 = vmax.f32 %v1163, %v1165
    %v1168 = vmax.f32 %v1164, %v1166
    %v1169 = vpack.c.bf16 %v1167, %v1167
    %v1170 = vpack.c.bf16 %v1168, %v1168
    %s1171 = scalar_lea.vmem %s1, 576
    %v1172 = vld [vmem:[%s1171] sm:$0xf]
    %v1173 = vld [vmem:[%s1171 + $0x4] sm:$0xf]
    %v1174 = vld [vmem:[%s1171 + $0x8] sm:$0xf]
    %v1175 = vld [vmem:[%s1171 + $0xc] sm:$0xf]
    %v1176 = vld [vmem:[%s1171 + $0x10] sm:$0xf]
    %v1177 = vld [vmem:[%s1171 + $0x14] sm:$0xf]
    %v1178 = vld [vmem:[%s1171 + $0x18] sm:$0xf]
    %v1179 = vld [vmem:[%s1171 + $0x1c] sm:$0xf]
    %v1180 = vld [vmem:[%s1171 + $0x20] sm:$0xf]
    %v1181 = vld [vmem:[%s1171 + $0x24] sm:$0xf]
    %v1182 = vld [vmem:[%s1171 + $0x28] sm:$0xf]
    %v1183 = vld [vmem:[%s1171 + $0x2c] sm:$0xf]
    %v1184 = vld [vmem:[%s1171 + $0x30] sm:$0xf]
    %v1185 = vld [vmem:[%s1171 + $0x34] sm:$0xf]
    %v1186 = vld [vmem:[%s1171 + $0x38] sm:$0xf]
    %v1187 = vld [vmem:[%s1171 + $0x3c] sm:$0xf]
    %v1190 = vunpack.c.l.b16 %v1169
    %v1191 = vunpack.c.l.b16 %v1170
    %v1192 = vrot.slane %v1190, 4
    %v1193 = vrot.slane %v1191, 3
    %v1194 = vsel %vm133, %v1193, %v1192
    %v1195 = vpack.c.b16 %v1194, %v1194
    %v1213 = vunpack.c.l.b16 %v1172
    %v1214 = vunpack.c.l.b16 %v1173
    %v1215 = vunpack.c.l.b16 %v1174
    %v1216 = vunpack.c.l.b16 %v1175
    %v1217 = vunpack.c.l.b16 %v1176
    %v1218 = vunpack.c.l.b16 %v1177
    %v1219 = vunpack.c.l.b16 %v1178
    %v1220 = vunpack.c.l.b16 %v1179
    %v1221 = vunpack.c.l.b16 %v1180
    %v1222 = vunpack.c.l.b16 %v1181
    %v1223 = vunpack.c.l.b16 %v1182
    %v1224 = vunpack.c.l.b16 %v1183
    %v1225 = vunpack.c.l.b16 %v1184
    %v1226 = vunpack.c.l.b16 %v1185
    %v1227 = vunpack.c.l.b16 %v1186
    %v1228 = vunpack.c.l.b16 %v1187
    %v1229 = vpack.c.b16 %v1214, %v1213
    %v1230 = vpack.c.b16 %v1216, %v1215
    %v1231 = vpack.c.b16 %v1218, %v1217
    %v1232 = vpack.c.b16 %v1220, %v1219
    %v1233 = vpack.c.b16 %v1222, %v1221
    %v1234 = vpack.c.b16 %v1224, %v1223
    %v1235 = vpack.c.b16 %v1226, %v1225
    %v1236 = vpack.c.b16 %v1228, %v1227
    %1245 = vmatpush.bf16.msra.mxu0 %v1236
    %1246 = vmatpush.bf16.msra.mxu0 %v1235
    %1247 = vmatpush.bf16.msra.mxu0 %v1234
    %1248 = vmatpush.bf16.msra.mxu0 %v1233
    %1249 = vmatpush.bf16.msra.mxu0 %v1232
    %1250 = vmatpush.bf16.msra.mxu0 %v1231
    %1251 = vmatpush.bf16.msra.mxu0 %v1230
    %1252 = vmatpush.bf16.msra.mxu0 %v1229
    %1253 = vmatmul.bf16.gmra.mxu0 %v1195
    %v1254 = vpop.f32.mrf.mxu0
    %v1255 = vadd.f32 0.0, %v1254
    %v1256 = vpop.f32.mrf.mxu0
    %1257 = vdwg.mxu0
    %v1258 = vadd.f32 %v1134, %v1255
    %v1259 = vld [vmem:[%s886] sm:$0x8]
    %v1260 = vld [vmem:[%s886 + $0x70] sm:$0x8]
    %v1261 = vunpack.c.l.bf16 %v1259
    %v1262 = vunpack.c.l.bf16 %v1260
    %v1265 = vrot.slane %v1261, 1
    %v1266 = vrot.slane %v1262, 1
    %v1269 = vmax.f32 %v1261, %v1265
    %v1270 = vmax.f32 %v1262, %v1266
    %v1271 = vpack.c.bf16 %v1269, %v1269
    %v1272 = vpack.c.bf16 %v1270, %v1270
    %v1273 = vld [vmem:[%s901] sm:$0x8]
    %v1274 = vld [vmem:[%s901 + $0x70] sm:$0x8]
    %v1275 = vunpack.c.l.bf16 %v1273
    %v1276 = vunpack.c.l.bf16 %v1274
    %v1279 = vrot.slane %v1275, 1
    %v1280 = vrot.slane %v1276, 1
    %v1283 = vmax.f32 %v1275, %v1279
    %v1284 = vmax.f32 %v1276, %v1280
    %v1285 = vpack.c.bf16 %v1283, %v1283
    %v1286 = vpack.c.bf16 %v1284, %v1284
    %v1287 = vunpack.c.l.bf16 %v1271
    %v1288 = vunpack.c.l.bf16 %v1272
    %v1289 = vunpack.c.l.bf16 %v1285
    %v1290 = vunpack.c.l.bf16 %v1286
    %v1291 = vmax.f32 %v1287, %v1289
    %v1292 = vmax.f32 %v1288, %v1290
    %v1293 = vpack.c.bf16 %v1291, %v1291
    %v1294 = vpack.c.bf16 %v1292, %v1292
    %s1295 = scalar_lea.vmem %s1, 640
    %v1296 = vld [vmem:[%s1295] sm:$0xf]
    %v1297 = vld [vmem:[%s1295 + $0x4] sm:$0xf]
    %v1298 = vld [vmem:[%s1295 + $0x8] sm:$0xf]
    %v1299 = vld [vmem:[%s1295 + $0xc] sm:$0xf]
    %v1300 = vld [vmem:[%s1295 + $0x10] sm:$0xf]
    %v1301 = vld [vmem:[%s1295 + $0x14] sm:$0xf]
    %v1302 = vld [vmem:[%s1295 + $0x18] sm:$0xf]
    %v1303 = vld [vmem:[%s1295 + $0x1c] sm:$0xf]
    %v1304 = vld [vmem:[%s1295 + $0x20] sm:$0xf]
    %v1305 = vld [vmem:[%s1295 + $0x24] sm:$0xf]
    %v1306 = vld [vmem:[%s1295 + $0x28] sm:$0xf]
    %v1307 = vld [vmem:[%s1295 + $0x2c] sm:$0xf]
    %v1308 = vld [vmem:[%s1295 + $0x30] sm:$0xf]
    %v1309 = vld [vmem:[%s1295 + $0x34] sm:$0xf]
    %v1310 = vld [vmem:[%s1295 + $0x38] sm:$0xf]
    %v1311 = vld [vmem:[%s1295 + $0x3c] sm:$0xf]
    %v1314 = vunpack.c.l.b16 %v1293
    %v1315 = vunpack.c.l.b16 %v1294
    %v1316 = vrot.slane %v1314, 6
    %v1317 = vrot.slane %v1315, 5
    %v1318 = vsel %vm133, %v1317, %v1316
    %v1319 = vpack.c.b16 %v1318, %v1318
    %v1337 = vunpack.c.l.b16 %v1296
    %v1338 = vunpack.c.l.b16 %v1297
    %v1339 = vunpack.c.l.b16 %v1298
    %v1340 = vunpack.c.l.b16 %v1299
    %v1341 = vunpack.c.l.b16 %v1300
    %v1342 = vunpack.c.l.b16 %v1301
    %v1343 = vunpack.c.l.b16 %v1302
    %v1344 = vunpack.c.l.b16 %v1303
    %v1345 = vunpack.c.l.b16 %v1304
    %v1346 = vunpack.c.l.b16 %v1305
    %v1347 = vunpack.c.l.b16 %v1306
    %v1348 = vunpack.c.l.b16 %v1307
    %v1349 = vunpack.c.l.b16 %v1308
    %v1350 = vunpack.c.l.b16 %v1309
    %v1351 = vunpack.c.l.b16 %v1310
    %v1352 = vunpack.c.l.b16 %v1311
    %v1353 = vpack.c.b16 %v1338, %v1337
    %v1354 = vpack.c.b16 %v1340, %v1339
    %v1355 = vpack.c.b16 %v1342, %v1341
    %v1356 = vpack.c.b16 %v1344, %v1343
    %v1357 = vpack.c.b16 %v1346, %v1345
    %v1358 = vpack.c.b16 %v1348, %v1347
    %v1359 = vpack.c.b16 %v1350, %v1349
    %v1360 = vpack.c.b16 %v1352, %v1351
    %1369 = vmatpush.bf16.msra.mxu0 %v1360
    %1370 = vmatpush.bf16.msra.mxu0 %v1359
    %1371 = vmatpush.bf16.msra.mxu0 %v1358
    %1372 = vmatpush.bf16.msra.mxu0 %v1357
    %1373 = vmatpush.bf16.msra.mxu0 %v1356
    %1374 = vmatpush.bf16.msra.mxu0 %v1355
    %1375 = vmatpush.bf16.msra.mxu0 %v1354
    %1376 = vmatpush.bf16.msra.mxu0 %v1353
    %1377 = vmatmul.bf16.gmra.mxu0 %v1319
    %v1378 = vpop.f32.mrf.mxu0
    %v1379 = vadd.f32 0.0, %v1378
    %v1380 = vpop.f32.mrf.mxu0
    %1381 = vdwg.mxu0
    %v1382 = vadd.f32 %v1258, %v1379
    %v1383 = vld [vmem:[%s886 + $0x4] sm:$0x1]
    %v1384 = vld [vmem:[%s886 + $0x74] sm:$0x1]
    %v1385 = vunpack.c.l.bf16 %v1383
    %v1386 = vunpack.c.l.bf16 %v1384
    %v1389 = vrot.slane %v1385, 1
    %v1390 = vrot.slane %v1386, 1
    %v1393 = vmax.f32 %v1385, %v1389
    %v1394 = vmax.f32 %v1386, %v1390
    %v1395 = vpack.c.bf16 %v1393, %v1393
    %v1396 = vpack.c.bf16 %v1394, %v1394
    %v1397 = vld [vmem:[%s901 + $0x4] sm:$0x1]
    %v1398 = vld [vmem:[%s901 + $0x74] sm:$0x1]
    %v1399 = vunpack.c.l.bf16 %v1397
    %v1400 = vunpack.c.l.bf16 %v1398
    %v1403 = vrot.slane %v1399, 1
    %v1404 = vrot.slane %v1400, 1
    %v1407 = vmax.f32 %v1399, %v1403
    %v1408 = vmax.f32 %v1400, %v1404
    %v1409 = vpack.c.bf16 %v1407, %v1407
    %v1410 = vpack.c.bf16 %v1408, %v1408
    %v1411 = vunpack.c.l.bf16 %v1395
    %v1412 = vunpack.c.l.bf16 %v1396
    %v1413 = vunpack.c.l.bf16 %v1409
    %v1414 = vunpack.c.l.bf16 %v1410
    %v1415 = vmax.f32 %v1411, %v1413
    %v1416 = vmax.f32 %v1412, %v1414
    %v1417 = vpack.c.bf16 %v1415, %v1415
    %v1418 = vpack.c.bf16 %v1416, %v1416
    %s1419 = scalar_lea.vmem %s1, 704
    %v1420 = vld [vmem:[%s1419] sm:$0xf]
    %v1421 = vld [vmem:[%s1419 + $0x4] sm:$0xf]
    %v1422 = vld [vmem:[%s1419 + $0x8] sm:$0xf]
    %v1423 = vld [vmem:[%s1419 + $0xc] sm:$0xf]
    %v1424 = vld [vmem:[%s1419 + $0x10] sm:$0xf]
    %v1425 = vld [vmem:[%s1419 + $0x14] sm:$0xf]
    %v1426 = vld [vmem:[%s1419 + $0x18] sm:$0xf]
    %v1427 = vld [vmem:[%s1419 + $0x1c] sm:$0xf]
    %v1428 = vld [vmem:[%s1419 + $0x20] sm:$0xf]
    %v1429 = vld [vmem:[%s1419 + $0x24] sm:$0xf]
    %v1430 = vld [vmem:[%s1419 + $0x28] sm:$0xf]
    %v1431 = vld [vmem:[%s1419 + $0x2c] sm:$0xf]
    %v1432 = vld [vmem:[%s1419 + $0x30] sm:$0xf]
    %v1433 = vld [vmem:[%s1419 + $0x34] sm:$0xf]
    %v1434 = vld [vmem:[%s1419 + $0x38] sm:$0xf]
    %v1435 = vld [vmem:[%s1419 + $0x3c] sm:$0xf]
    %v1438 = vunpack.c.l.b16 %v1417
    %v1439 = vunpack.c.l.b16 %v1418
    %v1440 = vrot.slane %v1439, 7
    %v1441 = vsel %vm133, %v1440, %v1438
    %v1442 = vpack.c.b16 %v1441, %v1441
    %v1460 = vunpack.c.l.b16 %v1420
    %v1461 = vunpack.c.l.b16 %v1421
    %v1462 = vunpack.c.l.b16 %v1422
    %v1463 = vunpack.c.l.b16 %v1423
    %v1464 = vunpack.c.l.b16 %v1424
    %v1465 = vunpack.c.l.b16 %v1425
    %v1466 = vunpack.c.l.b16 %v1426
    %v1467 = vunpack.c.l.b16 %v1427
    %v1468 = vunpack.c.l.b16 %v1428
    %v1469 = vunpack.c.l.b16 %v1429
    %v1470 = vunpack.c.l.b16 %v1430
    %v1471 = vunpack.c.l.b16 %v1431
    %v1472 = vunpack.c.l.b16 %v1432
    %v1473 = vunpack.c.l.b16 %v1433
    %v1474 = vunpack.c.l.b16 %v1434
    %v1475 = vunpack.c.l.b16 %v1435
    %v1476 = vpack.c.b16 %v1461, %v1460
    %v1477 = vpack.c.b16 %v1463, %v1462
    %v1478 = vpack.c.b16 %v1465, %v1464
    %v1479 = vpack.c.b16 %v1467, %v1466
    %v1480 = vpack.c.b16 %v1469, %v1468
    %v1481 = vpack.c.b16 %v1471, %v1470
    %v1482 = vpack.c.b16 %v1473, %v1472
    %v1483 = vpack.c.b16 %v1475, %v1474
    %1492 = vmatpush.bf16.msra.mxu0 %v1483
    %1493 = vmatpush.bf16.msra.mxu0 %v1482
    %1494 = vmatpush.bf16.msra.mxu0 %v1481
    %1495 = vmatpush.bf16.msra.mxu0 %v1480
    %1496 = vmatpush.bf16.msra.mxu0 %v1479
    %1497 = vmatpush.bf16.msra.mxu0 %v1478
    %1498 = vmatpush.bf16.msra.mxu0 %v1477
    %1499 = vmatpush.bf16.msra.mxu0 %v1476
    %1500 = vmatmul.bf16.gmra.mxu0 %v1442
    %v1501 = vpop.f32.mrf.mxu0
    %v1502 = vadd.f32 0.0, %v1501
    %v1503 = vpop.f32.mrf.mxu0
    %1504 = vdwg.mxu0
    %v1505 = vadd.f32 %v1382, %v1502
    %v1506 = vld [vmem:[%s886 + $0x4] sm:$0x2]
    %v1507 = vld [vmem:[%s886 + $0x74] sm:$0x2]
    %v1508 = vunpack.c.l.bf16 %v1506
    %v1509 = vunpack.c.l.bf16 %v1507
    %v1512 = vrot.slane %v1508, 1
    %v1513 = vrot.slane %v1509, 1
    %v1516 = vmax.f32 %v1508, %v1512
    %v1517 = vmax.f32 %v1509, %v1513
    %v1518 = vpack.c.bf16 %v1516, %v1516
    %v1519 = vpack.c.bf16 %v1517, %v1517
    %v1520 = vld [vmem:[%s901 + $0x4] sm:$0x2]
    %v1521 = vld [vmem:[%s901 + $0x74] sm:$0x2]
    %v1522 = vunpack.c.l.bf16 %v1520
    %v1523 = vunpack.c.l.bf16 %v1521
    %v1526 = vrot.slane %v1522, 1
    %v1527 = vrot.slane %v1523, 1
    %v1530 = vmax.f32 %v1522, %v1526
    %v1531 = vmax.f32 %v1523, %v1527
    %v1532 = vpack.c.bf16 %v1530, %v1530
    %v1533 = vpack.c.bf16 %v1531, %v1531
    %v1534 = vunpack.c.l.bf16 %v1518
    %v1535 = vunpack.c.l.bf16 %v1519
    %v1536 = vunpack.c.l.bf16 %v1532
    %v1537 = vunpack.c.l.bf16 %v1533
    %v1538 = vmax.f32 %v1534, %v1536
    %v1539 = vmax.f32 %v1535, %v1537
    %v1540 = vpack.c.bf16 %v1538, %v1538
    %v1541 = vpack.c.bf16 %v1539, %v1539
    %s1542 = scalar_lea.vmem %s1, 768
    %v1543 = vld [vmem:[%s1542] sm:$0xf]
    %v1544 = vld [vmem:[%s1542 + $0x4] sm:$0xf]
    %v1545 = vld [vmem:[%s1542 + $0x8] sm:$0xf]
    %v1546 = vld [vmem:[%s1542 + $0xc] sm:$0xf]
    %v1547 = vld [vmem:[%s1542 + $0x10] sm:$0xf]
    %v1548 = vld [vmem:[%s1542 + $0x14] sm:$0xf]
    %v1549 = vld [vmem:[%s1542 + $0x18] sm:$0xf]
    %v1550 = vld [vmem:[%s1542 + $0x1c] sm:$0xf]
    %v1551 = vld [vmem:[%s1542 + $0x20] sm:$0xf]
    %v1552 = vld [vmem:[%s1542 + $0x24] sm:$0xf]
    %v1553 = vld [vmem:[%s1542 + $0x28] sm:$0xf]
    %v1554 = vld [vmem:[%s1542 + $0x2c] sm:$0xf]
    %v1555 = vld [vmem:[%s1542 + $0x30] sm:$0xf]
    %v1556 = vld [vmem:[%s1542 + $0x34] sm:$0xf]
    %v1557 = vld [vmem:[%s1542 + $0x38] sm:$0xf]
    %v1558 = vld [vmem:[%s1542 + $0x3c] sm:$0xf]
    %v1561 = vunpack.c.l.b16 %v1540
    %v1562 = vunpack.c.l.b16 %v1541
    %v1563 = vrot.slane %v1561, 2
    %v1564 = vrot.slane %v1562, 1
    %v1565 = vsel %vm133, %v1564, %v1563
    %v1566 = vpack.c.b16 %v1565, %v1565
    %v1584 = vunpack.c.l.b16 %v1543
    %v1585 = vunpack.c.l.b16 %v1544
    %v1586 = vunpack.c.l.b16 %v1545
    %v1587 = vunpack.c.l.b16 %v1546
    %v1588 = vunpack.c.l.b16 %v1547
    %v1589 = vunpack.c.l.b16 %v1548
    %v1590 = vunpack.c.l.b16 %v1549
    %v1591 = vunpack.c.l.b16 %v1550
    %v1592 = vunpack.c.l.b16 %v1551
    %v1593 = vunpack.c.l.b16 %v1552
    %v1594 = vunpack.c.l.b16 %v1553
    %v1595 = vunpack.c.l.b16 %v1554
    %v1596 = vunpack.c.l.b16 %v1555
    %v1597 = vunpack.c.l.b16 %v1556
    %v1598 = vunpack.c.l.b16 %v1557
    %v1599 = vunpack.c.l.b16 %v1558
    %v1600 = vpack.c.b16 %v1585, %v1584
    %v1601 = vpack.c.b16 %v1587, %v1586
    %v1602 = vpack.c.b16 %v1589, %v1588
    %v1603 = vpack.c.b16 %v1591, %v1590
    %v1604 = vpack.c.b16 %v1593, %v1592
    %v1605 = vpack.c.b16 %v1595, %v1594
    %v1606 = vpack.c.b16 %v1597, %v1596
    %v1607 = vpack.c.b16 %v1599, %v1598
    %1616 = vmatpush.bf16.msra.mxu0 %v1607
    %1617 = vmatpush.bf16.msra.mxu0 %v1606
    %1618 = vmatpush.bf16.msra.mxu0 %v1605
    %1619 = vmatpush.bf16.msra.mxu0 %v1604
    %1620 = vmatpush.bf16.msra.mxu0 %v1603
    %1621 = vmatpush.bf16.msra.mxu0 %v1602
    %1622 = vmatpush.bf16.msra.mxu0 %v1601
    %1623 = vmatpush.bf16.msra.mxu0 %v1600
    %1624 = vmatmul.bf16.gmra.mxu0 %v1566
    %v1625 = vpop.f32.mrf.mxu0
    %v1626 = vadd.f32 0.0, %v1625
    %v1627 = vpop.f32.mrf.mxu0
    %1628 = vdwg.mxu0
    %v1629 = vadd.f32 %v1505, %v1626
    %v1630 = vld [vmem:[%s886 + $0x4] sm:$0x4]
    %v1631 = vld [vmem:[%s886 + $0x74] sm:$0x4]
    %v1632 = vunpack.c.l.bf16 %v1630
    %v1633 = vunpack.c.l.bf16 %v1631
    %v1636 = vrot.slane %v1632, 1
    %v1637 = vrot.slane %v1633, 1
    %v1640 = vmax.f32 %v1632, %v1636
    %v1641 = vmax.f32 %v1633, %v1637
    %v1642 = vpack.c.bf16 %v1640, %v1640
    %v1643 = vpack.c.bf16 %v1641, %v1641
    %v1644 = vld [vmem:[%s901 + $0x4] sm:$0x4]
    %v1645 = vld [vmem:[%s901 + $0x74] sm:$0x4]
    %v1646 = vunpack.c.l.bf16 %v1644
    %v1647 = vunpack.c.l.bf16 %v1645
    %v1650 = vrot.slane %v1646, 1
    %v1651 = vrot.slane %v1647, 1
    %v1654 = vmax.f32 %v1646, %v1650
    %v1655 = vmax.f32 %v1647, %v1651
    %v1656 = vpack.c.bf16 %v1654, %v1654
    %v1657 = vpack.c.bf16 %v1655, %v1655
    %v1658 = vunpack.c.l.bf16 %v1642
    %v1659 = vunpack.c.l.bf16 %v1643
    %v1660 = vunpack.c.l.bf16 %v1656
    %v1661 = vunpack.c.l.bf16 %v1657
    %v1662 = vmax.f32 %v1658, %v1660
    %v1663 = vmax.f32 %v1659, %v1661
    %v1664 = vpack.c.bf16 %v1662, %v1662
    %v1665 = vpack.c.bf16 %v1663, %v1663
    %s1666 = scalar_lea.vmem %s1, 832
    %v1667 = vld [vmem:[%s1666] sm:$0xf]
    %v1668 = vld [vmem:[%s1666 + $0x4] sm:$0xf]
    %v1669 = vld [vmem:[%s1666 + $0x8] sm:$0xf]
    %v1670 = vld [vmem:[%s1666 + $0xc] sm:$0xf]
    %v1671 = vld [vmem:[%s1666 + $0x10] sm:$0xf]
    %v1672 = vld [vmem:[%s1666 + $0x14] sm:$0xf]
    %v1673 = vld [vmem:[%s1666 + $0x18] sm:$0xf]
    %v1674 = vld [vmem:[%s1666 + $0x1c] sm:$0xf]
    %v1675 = vld [vmem:[%s1666 + $0x20] sm:$0xf]
    %v1676 = vld [vmem:[%s1666 + $0x24] sm:$0xf]
    %v1677 = vld [vmem:[%s1666 + $0x28] sm:$0xf]
    %v1678 = vld [vmem:[%s1666 + $0x2c] sm:$0xf]
    %v1679 = vld [vmem:[%s1666 + $0x30] sm:$0xf]
    %v1680 = vld [vmem:[%s1666 + $0x34] sm:$0xf]
    %v1681 = vld [vmem:[%s1666 + $0x38] sm:$0xf]
    %v1682 = vld [vmem:[%s1666 + $0x3c] sm:$0xf]
    %v1685 = vunpack.c.l.b16 %v1664
    %v1686 = vunpack.c.l.b16 %v1665
    %v1687 = vrot.slane %v1685, 4
    %v1688 = vrot.slane %v1686, 3
    %v1689 = vsel %vm133, %v1688, %v1687
    %v1690 = vpack.c.b16 %v1689, %v1689
    %v1708 = vunpack.c.l.b16 %v1667
    %v1709 = vunpack.c.l.b16 %v1668
    %v1710 = vunpack.c.l.b16 %v1669
    %v1711 = vunpack.c.l.b16 %v1670
    %v1712 = vunpack.c.l.b16 %v1671
    %v1713 = vunpack.c.l.b16 %v1672
    %v1714 = vunpack.c.l.b16 %v1673
    %v1715 = vunpack.c.l.b16 %v1674
    %v1716 = vunpack.c.l.b16 %v1675
    %v1717 = vunpack.c.l.b16 %v1676
    %v1718 = vunpack.c.l.b16 %v1677
    %v1719 = vunpack.c.l.b16 %v1678
    %v1720 = vunpack.c.l.b16 %v1679
    %v1721 = vunpack.c.l.b16 %v1680
    %v1722 = vunpack.c.l.b16 %v1681
    %v1723 = vunpack.c.l.b16 %v1682
    %v1724 = vpack.c.b16 %v1709, %v1708
    %v1725 = vpack.c.b16 %v1711, %v1710
    %v1726 = vpack.c.b16 %v1713, %v1712
    %v1727 = vpack.c.b16 %v1715, %v1714
    %v1728 = vpack.c.b16 %v1717, %v1716
    %v1729 = vpack.c.b16 %v1719, %v1718
    %v1730 = vpack.c.b16 %v1721, %v1720
    %v1731 = vpack.c.b16 %v1723, %v1722
    %1740 = vmatpush.bf16.msra.mxu0 %v1731
    %1741 = vmatpush.bf16.msra.mxu0 %v1730
    %1742 = vmatpush.bf16.msra.mxu0 %v1729
    %1743 = vmatpush.bf16.msra.mxu0 %v1728
    %1744 = vmatpush.bf16.msra.mxu0 %v1727
    %1745 = vmatpush.bf16.msra.mxu0 %v1726
    %1746 = vmatpush.bf16.msra.mxu0 %v1725
    %1747 = vmatpush.bf16.msra.mxu0 %v1724
    %1748 = vmatmul.bf16.gmra.mxu0 %v1690
    %v1749 = vpop.f32.mrf.mxu0
    %v1750 = vadd.f32 0.0, %v1749
    %v1751 = vpop.f32.mrf.mxu0
    %1752 = vdwg.mxu0
    %v1753 = vadd.f32 %v1629, %v1750
    %s1754 = scalar_lea.vmem %s0, 32
    %v1755 = vld [vmem:[%s1754] sm:$0x1]
    %v1756 = vld [vmem:[%s1754 + $0x70] sm:$0x1]
    %v1757 = vunpack.c.l.bf16 %v1755
    %v1758 = vunpack.c.l.bf16 %v1756
    %v1761 = vrot.slane %v1757, 1
    %v1762 = vrot.slane %v1758, 1
    %v1765 = vmax.f32 %v1757, %v1761
    %v1766 = vmax.f32 %v1758, %v1762
    %v1767 = vpack.c.bf16 %v1765, %v1765
    %v1768 = vpack.c.bf16 %v1766, %v1766
    %s1769 = scalar_lea.vmem %s0, 40
    %v1770 = vld [vmem:[%s1769] sm:$0x1]
    %v1771 = vld [vmem:[%s1769 + $0x70] sm:$0x1]
    %v1772 = vunpack.c.l.bf16 %v1770
    %v1773 = vunpack.c.l.bf16 %v1771
    %v1776 = vrot.slane %v1772, 1
    %v1777 = vrot.slane %v1773, 1
    %v1780 = vmax.f32 %v1772, %v1776
    %v1781 = vmax.f32 %v1773, %v1777
    %v1782 = vpack.c.bf16 %v1780, %v1780
    %v1783 = vpack.c.bf16 %v1781, %v1781
    %v1784 = vunpack.c.l.bf16 %v1767
    %v1785 = vunpack.c.l.bf16 %v1768
    %v1786 = vunpack.c.l.bf16 %v1782
    %v1787 = vunpack.c.l.bf16 %v1783
    %v1788 = vmax.f32 %v1784, %v1786
    %v1789 = vmax.f32 %v1785, %v1787
    %v1790 = vpack.c.bf16 %v1788, %v1788
    %v1791 = vpack.c.bf16 %v1789, %v1789
    %s1792 = scalar_lea.vmem %s1, 896
    %v1793 = vld [vmem:[%s1792] sm:$0xf]
    %v1794 = vld [vmem:[%s1792 + $0x4] sm:$0xf]
    %v1795 = vld [vmem:[%s1792 + $0x8] sm:$0xf]
    %v1796 = vld [vmem:[%s1792 + $0xc] sm:$0xf]
    %v1797 = vld [vmem:[%s1792 + $0x10] sm:$0xf]
    %v1798 = vld [vmem:[%s1792 + $0x14] sm:$0xf]
    %v1799 = vld [vmem:[%s1792 + $0x18] sm:$0xf]
    %v1800 = vld [vmem:[%s1792 + $0x1c] sm:$0xf]
    %v1801 = vld [vmem:[%s1792 + $0x20] sm:$0xf]
    %v1802 = vld [vmem:[%s1792 + $0x24] sm:$0xf]
    %v1803 = vld [vmem:[%s1792 + $0x28] sm:$0xf]
    %v1804 = vld [vmem:[%s1792 + $0x2c] sm:$0xf]
    %v1805 = vld [vmem:[%s1792 + $0x30] sm:$0xf]
    %v1806 = vld [vmem:[%s1792 + $0x34] sm:$0xf]
    %v1807 = vld [vmem:[%s1792 + $0x38] sm:$0xf]
    %v1808 = vld [vmem:[%s1792 + $0x3c] sm:$0xf]
    %v1811 = vunpack.c.l.b16 %v1790
    %v1812 = vunpack.c.l.b16 %v1791
    %v1813 = vrot.slane %v1812, 7
    %v1814 = vsel %vm133, %v1813, %v1811
    %v1815 = vpack.c.b16 %v1814, %v1814
    %v1833 = vunpack.c.l.b16 %v1793
    %v1834 = vunpack.c.l.b16 %v1794
    %v1835 = vunpack.c.l.b16 %v1795
    %v1836 = vunpack.c.l.b16 %v1796
    %v1837 = vunpack.c.l.b16 %v1797
    %v1838 = vunpack.c.l.b16 %v1798
    %v1839 = vunpack.c.l.b16 %v1799
    %v1840 = vunpack.c.l.b16 %v1800
    %v1841 = vunpack.c.l.b16 %v1801
    %v1842 = vunpack.c.l.b16 %v1802
    %v1843 = vunpack.c.l.b16 %v1803
    %v1844 = vunpack.c.l.b16 %v1804
    %v1845 = vunpack.c.l.b16 %v1805
    %v1846 = vunpack.c.l.b16 %v1806
    %v1847 = vunpack.c.l.b16 %v1807
    %v1848 = vunpack.c.l.b16 %v1808
    %v1849 = vpack.c.b16 %v1834, %v1833
    %v1850 = vpack.c.b16 %v1836, %v1835
    %v1851 = vpack.c.b16 %v1838, %v1837
    %v1852 = vpack.c.b16 %v1840, %v1839
    %v1853 = vpack.c.b16 %v1842, %v1841
    %v1854 = vpack.c.b16 %v1844, %v1843
    %v1855 = vpack.c.b16 %v1846, %v1845
    %v1856 = vpack.c.b16 %v1848, %v1847
    %1865 = vmatpush.bf16.msra.mxu0 %v1856
    %1866 = vmatpush.bf16.msra.mxu0 %v1855
    %1867 = vmatpush.bf16.msra.mxu0 %v1854
    %1868 = vmatpush.bf16.msra.mxu0 %v1853
    %1869 = vmatpush.bf16.msra.mxu0 %v1852
    %1870 = vmatpush.bf16.msra.mxu0 %v1851
    %1871 = vmatpush.bf16.msra.mxu0 %v1850
    %1872 = vmatpush.bf16.msra.mxu0 %v1849
    %1873 = vmatmul.bf16.gmra.mxu0 %v1815
    %v1874 = vpop.f32.mrf.mxu0
    %v1875 = vadd.f32 0.0, %v1874
    %v1876 = vpop.f32.mrf.mxu0
    %1877 = vdwg.mxu0
    %v1878 = vadd.f32 %v1753, %v1875
    %v1879 = vld [vmem:[%s1754] sm:$0x2]
    %v1880 = vld [vmem:[%s1754 + $0x70] sm:$0x2]
    %v1881 = vunpack.c.l.bf16 %v1879
    %v1882 = vunpack.c.l.bf16 %v1880
    %v1885 = vrot.slane %v1881, 1
    %v1886 = vrot.slane %v1882, 1
    %v1889 = vmax.f32 %v1881, %v1885
    %v1890 = vmax.f32 %v1882, %v1886
    %v1891 = vpack.c.bf16 %v1889, %v1889
    %v1892 = vpack.c.bf16 %v1890, %v1890
    %v1893 = vld [vmem:[%s1769] sm:$0x2]
    %v1894 = vld [vmem:[%s1769 + $0x70] sm:$0x2]
    %v1895 = vunpack.c.l.bf16 %v1893
    %v1896 = vunpack.c.l.bf16 %v1894
    %v1899 = vrot.slane %v1895, 1
    %v1900 = vrot.slane %v1896, 1
    %v1903 = vmax.f32 %v1895, %v1899
    %v1904 = vmax.f32 %v1896, %v1900
    %v1905 = vpack.c.bf16 %v1903, %v1903
    %v1906 = vpack.c.bf16 %v1904, %v1904
    %v1907 = vunpack.c.l.bf16 %v1891
    %v1908 = vunpack.c.l.bf16 %v1892
    %v1909 = vunpack.c.l.bf16 %v1905
    %v1910 = vunpack.c.l.bf16 %v1906
    %v1911 = vmax.f32 %v1907, %v1909
    %v1912 = vmax.f32 %v1908, %v1910
    %v1913 = vpack.c.bf16 %v1911, %v1911
    %v1914 = vpack.c.bf16 %v1912, %v1912
    %s1915 = scalar_lea.vmem %s1, 960
    %v1916 = vld [vmem:[%s1915] sm:$0xf]
    %v1917 = vld [vmem:[%s1915 + $0x4] sm:$0xf]
    %v1918 = vld [vmem:[%s1915 + $0x8] sm:$0xf]
    %v1919 = vld [vmem:[%s1915 + $0xc] sm:$0xf]
    %v1920 = vld [vmem:[%s1915 + $0x10] sm:$0xf]
    %v1921 = vld [vmem:[%s1915 + $0x14] sm:$0xf]
    %v1922 = vld [vmem:[%s1915 + $0x18] sm:$0xf]
    %v1923 = vld [vmem:[%s1915 + $0x1c] sm:$0xf]
    %v1924 = vld [vmem:[%s1915 + $0x20] sm:$0xf]
    %v1925 = vld [vmem:[%s1915 + $0x24] sm:$0xf]
    %v1926 = vld [vmem:[%s1915 + $0x28] sm:$0xf]
    %v1927 = vld [vmem:[%s1915 + $0x2c] sm:$0xf]
    %v1928 = vld [vmem:[%s1915 + $0x30] sm:$0xf]
    %v1929 = vld [vmem:[%s1915 + $0x34] sm:$0xf]
    %v1930 = vld [vmem:[%s1915 + $0x38] sm:$0xf]
    %v1931 = vld [vmem:[%s1915 + $0x3c] sm:$0xf]
    %v1934 = vunpack.c.l.b16 %v1913
    %v1935 = vunpack.c.l.b16 %v1914
    %v1936 = vrot.slane %v1934, 2
    %v1937 = vrot.slane %v1935, 1
    %v1938 = vsel %vm133, %v1937, %v1936
    %v1939 = vpack.c.b16 %v1938, %v1938
    %v1957 = vunpack.c.l.b16 %v1916
    %v1958 = vunpack.c.l.b16 %v1917
    %v1959 = vunpack.c.l.b16 %v1918
    %v1960 = vunpack.c.l.b16 %v1919
    %v1961 = vunpack.c.l.b16 %v1920
    %v1962 = vunpack.c.l.b16 %v1921
    %v1963 = vunpack.c.l.b16 %v1922
    %v1964 = vunpack.c.l.b16 %v1923
    %v1965 = vunpack.c.l.b16 %v1924
    %v1966 = vunpack.c.l.b16 %v1925
    %v1967 = vunpack.c.l.b16 %v1926
    %v1968 = vunpack.c.l.b16 %v1927
    %v1969 = vunpack.c.l.b16 %v1928
    %v1970 = vunpack.c.l.b16 %v1929
    %v1971 = vunpack.c.l.b16 %v1930
    %v1972 = vunpack.c.l.b16 %v1931
    %v1973 = vpack.c.b16 %v1958, %v1957
    %v1974 = vpack.c.b16 %v1960, %v1959
    %v1975 = vpack.c.b16 %v1962, %v1961
    %v1976 = vpack.c.b16 %v1964, %v1963
    %v1977 = vpack.c.b16 %v1966, %v1965
    %v1978 = vpack.c.b16 %v1968, %v1967
    %v1979 = vpack.c.b16 %v1970, %v1969
    %v1980 = vpack.c.b16 %v1972, %v1971
    %1989 = vmatpush.bf16.msra.mxu0 %v1980
    %1990 = vmatpush.bf16.msra.mxu0 %v1979
    %1991 = vmatpush.bf16.msra.mxu0 %v1978
    %1992 = vmatpush.bf16.msra.mxu0 %v1977
    %1993 = vmatpush.bf16.msra.mxu0 %v1976
    %1994 = vmatpush.bf16.msra.mxu0 %v1975
    %1995 = vmatpush.bf16.msra.mxu0 %v1974
    %1996 = vmatpush.bf16.msra.mxu0 %v1973
    %1997 = vmatmul.bf16.gmra.mxu0 %v1939
    %v1998 = vpop.f32.mrf.mxu0
    %v1999 = vadd.f32 0.0, %v1998
    %v2000 = vpop.f32.mrf.mxu0
    %2001 = vdwg.mxu0
    %v2002 = vadd.f32 %v1878, %v1999
    %v2003 = vld [vmem:[%s1754] sm:$0x4]
    %v2004 = vld [vmem:[%s1754 + $0x70] sm:$0x4]
    %v2005 = vunpack.c.l.bf16 %v2003
    %v2006 = vunpack.c.l.bf16 %v2004
    %v2009 = vrot.slane %v2005, 1
    %v2010 = vrot.slane %v2006, 1
    %v2013 = vmax.f32 %v2005, %v2009
    %v2014 = vmax.f32 %v2006, %v2010
    %v2015 = vpack.c.bf16 %v2013, %v2013
    %v2016 = vpack.c.bf16 %v2014, %v2014
    %v2017 = vld [vmem:[%s1769] sm:$0x4]
    %v2018 = vld [vmem:[%s1769 + $0x70] sm:$0x4]
    %v2019 = vunpack.c.l.bf16 %v2017
    %v2020 = vunpack.c.l.bf16 %v2018
    %v2023 = vrot.slane %v2019, 1
    %v2024 = vrot.slane %v2020, 1
    %v2027 = vmax.f32 %v2019, %v2023
    %v2028 = vmax.f32 %v2020, %v2024
    %v2029 = vpack.c.bf16 %v2027, %v2027
    %v2030 = vpack.c.bf16 %v2028, %v2028
    %v2031 = vunpack.c.l.bf16 %v2015
    %v2032 = vunpack.c.l.bf16 %v2016
    %v2033 = vunpack.c.l.bf16 %v2029
    %v2034 = vunpack.c.l.bf16 %v2030
    %v2035 = vmax.f32 %v2031, %v2033
    %v2036 = vmax.f32 %v2032, %v2034
    %v2037 = vpack.c.bf16 %v2035, %v2035
    %v2038 = vpack.c.bf16 %v2036, %v2036
    %s2039 = scalar_lea.vmem %s1, 1024
    %v2040 = vld [vmem:[%s2039] sm:$0xf]
    %v2041 = vld [vmem:[%s2039 + $0x4] sm:$0xf]
    %v2042 = vld [vmem:[%s2039 + $0x8] sm:$0xf]
    %v2043 = vld [vmem:[%s2039 + $0xc] sm:$0xf]
    %v2044 = vld [vmem:[%s2039 + $0x10] sm:$0xf]
    %v2045 = vld [vmem:[%s2039 + $0x14] sm:$0xf]
    %v2046 = vld [vmem:[%s2039 + $0x18] sm:$0xf]
    %v2047 = vld [vmem:[%s2039 + $0x1c] sm:$0xf]
    %v2048 = vld [vmem:[%s2039 + $0x20] sm:$0xf]
    %v2049 = vld [vmem:[%s2039 + $0x24] sm:$0xf]
    %v2050 = vld [vmem:[%s2039 + $0x28] sm:$0xf]
    %v2051 = vld [vmem:[%s2039 + $0x2c] sm:$0xf]
    %v2052 = vld [vmem:[%s2039 + $0x30] sm:$0xf]
    %v2053 = vld [vmem:[%s2039 + $0x34] sm:$0xf]
    %v2054 = vld [vmem:[%s2039 + $0x38] sm:$0xf]
    %v2055 = vld [vmem:[%s2039 + $0x3c] sm:$0xf]
    %v2058 = vunpack.c.l.b16 %v2037
    %v2059 = vunpack.c.l.b16 %v2038
    %v2060 = vrot.slane %v2058, 4
    %v2061 = vrot.slane %v2059, 3
    %v2062 = vsel %vm133, %v2061, %v2060
    %v2063 = vpack.c.b16 %v2062, %v2062
    %v2081 = vunpack.c.l.b16 %v2040
    %v2082 = vunpack.c.l.b16 %v2041
    %v2083 = vunpack.c.l.b16 %v2042
    %v2084 = vunpack.c.l.b16 %v2043
    %v2085 = vunpack.c.l.b16 %v2044
    %v2086 = vunpack.c.l.b16 %v2045
    %v2087 = vunpack.c.l.b16 %v2046
    %v2088 = vunpack.c.l.b16 %v2047
    %v2089 = vunpack.c.l.b16 %v2048
    %v2090 = vunpack.c.l.b16 %v2049
    %v2091 = vunpack.c.l.b16 %v2050
    %v2092 = vunpack.c.l.b16 %v2051
    %v2093 = vunpack.c.l.b16 %v2052
    %v2094 = vunpack.c.l.b16 %v2053
    %v2095 = vunpack.c.l.b16 %v2054
    %v2096 = vunpack.c.l.b16 %v2055
    %v2097 = vpack.c.b16 %v2082, %v2081
    %v2098 = vpack.c.b16 %v2084, %v2083
    %v2099 = vpack.c.b16 %v2086, %v2085
    %v2100 = vpack.c.b16 %v2088, %v2087
    %v2101 = vpack.c.b16 %v2090, %v2089
    %v2102 = vpack.c.b16 %v2092, %v2091
    %v2103 = vpack.c.b16 %v2094, %v2093
    %v2104 = vpack.c.b16 %v2096, %v2095
    %2113 = vmatpush.bf16.msra.mxu0 %v2104
    %2114 = vmatpush.bf16.msra.mxu0 %v2103
    %2115 = vmatpush.bf16.msra.mxu0 %v2102
    %2116 = vmatpush.bf16.msra.mxu0 %v2101
    %2117 = vmatpush.bf16.msra.mxu0 %v2100
    %2118 = vmatpush.bf16.msra.mxu0 %v2099
    %2119 = vmatpush.bf16.msra.mxu0 %v2098
    %2120 = vmatpush.bf16.msra.mxu0 %v2097
    %2121 = vmatmul.bf16.gmra.mxu0 %v2063
    %v2122 = vpop.f32.mrf.mxu0
    %v2123 = vadd.f32 0.0, %v2122
    %v2124 = vpop.f32.mrf.mxu0
    %2125 = vdwg.mxu0
    %v2126 = vadd.f32 %v2002, %v2123
    %v2127 = vld [vmem:[%s1754] sm:$0x8]
    %v2128 = vld [vmem:[%s1754 + $0x70] sm:$0x8]
    %v2129 = vunpack.c.l.bf16 %v2127
    %v2130 = vunpack.c.l.bf16 %v2128
    %v2133 = vrot.slane %v2129, 1
    %v2134 = vrot.slane %v2130, 1
    %v2137 = vmax.f32 %v2129, %v2133
    %v2138 = vmax.f32 %v2130, %v2134
    %v2139 = vpack.c.bf16 %v2137, %v2137
    %v2140 = vpack.c.bf16 %v2138, %v2138
    %v2141 = vld [vmem:[%s1769] sm:$0x8]
    %v2142 = vld [vmem:[%s1769 + $0x70] sm:$0x8]
    %v2143 = vunpack.c.l.bf16 %v2141
    %v2144 = vunpack.c.l.bf16 %v2142
    %v2147 = vrot.slane %v2143, 1
    %v2148 = vrot.slane %v2144, 1
    %v2151 = vmax.f32 %v2143, %v2147
    %v2152 = vmax.f32 %v2144, %v2148
    %v2153 = vpack.c.bf16 %v2151, %v2151
    %v2154 = vpack.c.bf16 %v2152, %v2152
    %v2155 = vunpack.c.l.bf16 %v2139
    %v2156 = vunpack.c.l.bf16 %v2140
    %v2157 = vunpack.c.l.bf16 %v2153
    %v2158 = vunpack.c.l.bf16 %v2154
    %v2159 = vmax.f32 %v2155, %v2157
    %v2160 = vmax.f32 %v2156, %v2158
    %v2161 = vpack.c.bf16 %v2159, %v2159
    %v2162 = vpack.c.bf16 %v2160, %v2160
    %s2163 = scalar_lea.vmem %s1, 1088
    %v2164 = vld [vmem:[%s2163] sm:$0xf]
    %v2165 = vld [vmem:[%s2163 + $0x4] sm:$0xf]
    %v2166 = vld [vmem:[%s2163 + $0x8] sm:$0xf]
    %v2167 = vld [vmem:[%s2163 + $0xc] sm:$0xf]
    %v2168 = vld [vmem:[%s2163 + $0x10] sm:$0xf]
    %v2169 = vld [vmem:[%s2163 + $0x14] sm:$0xf]
    %v2170 = vld [vmem:[%s2163 + $0x18] sm:$0xf]
    %v2171 = vld [vmem:[%s2163 + $0x1c] sm:$0xf]
    %v2172 = vld [vmem:[%s2163 + $0x20] sm:$0xf]
    %v2173 = vld [vmem:[%s2163 + $0x24] sm:$0xf]
    %v2174 = vld [vmem:[%s2163 + $0x28] sm:$0xf]
    %v2175 = vld [vmem:[%s2163 + $0x2c] sm:$0xf]
    %v2176 = vld [vmem:[%s2163 + $0x30] sm:$0xf]
    %v2177 = vld [vmem:[%s2163 + $0x34] sm:$0xf]
    %v2178 = vld [vmem:[%s2163 + $0x38] sm:$0xf]
    %v2179 = vld [vmem:[%s2163 + $0x3c] sm:$0xf]
    %v2182 = vunpack.c.l.b16 %v2161
    %v2183 = vunpack.c.l.b16 %v2162
    %v2184 = vrot.slane %v2182, 6
    %v2185 = vrot.slane %v2183, 5
    %v2186 = vsel %vm133, %v2185, %v2184
    %v2187 = vpack.c.b16 %v2186, %v2186
    %v2205 = vunpack.c.l.b16 %v2164
    %v2206 = vunpack.c.l.b16 %v2165
    %v2207 = vunpack.c.l.b16 %v2166
    %v2208 = vunpack.c.l.b16 %v2167
    %v2209 = vunpack.c.l.b16 %v2168
    %v2210 = vunpack.c.l.b16 %v2169
    %v2211 = vunpack.c.l.b16 %v2170
    %v2212 = vunpack.c.l.b16 %v2171
    %v2213 = vunpack.c.l.b16 %v2172
    %v2214 = vunpack.c.l.b16 %v2173
    %v2215 = vunpack.c.l.b16 %v2174
    %v2216 = vunpack.c.l.b16 %v2175
    %v2217 = vunpack.c.l.b16 %v2176
    %v2218 = vunpack.c.l.b16 %v2177
    %v2219 = vunpack.c.l.b16 %v2178
    %v2220 = vunpack.c.l.b16 %v2179
    %v2221 = vpack.c.b16 %v2206, %v2205
    %v2222 = vpack.c.b16 %v2208, %v2207
    %v2223 = vpack.c.b16 %v2210, %v2209
    %v2224 = vpack.c.b16 %v2212, %v2211
    %v2225 = vpack.c.b16 %v2214, %v2213
    %v2226 = vpack.c.b16 %v2216, %v2215
    %v2227 = vpack.c.b16 %v2218, %v2217
    %v2228 = vpack.c.b16 %v2220, %v2219
    %2237 = vmatpush.bf16.msra.mxu0 %v2228
    %2238 = vmatpush.bf16.msra.mxu0 %v2227
    %2239 = vmatpush.bf16.msra.mxu0 %v2226
    %2240 = vmatpush.bf16.msra.mxu0 %v2225
    %2241 = vmatpush.bf16.msra.mxu0 %v2224
    %2242 = vmatpush.bf16.msra.mxu0 %v2223
    %2243 = vmatpush.bf16.msra.mxu0 %v2222
    %2244 = vmatpush.bf16.msra.mxu0 %v2221
    %2245 = vmatmul.bf16.gmra.mxu0 %v2187
    %v2246 = vpop.f32.mrf.mxu0
    %v2247 = vadd.f32 0.0, %v2246
    %v2248 = vpop.f32.mrf.mxu0
    %2249 = vdwg.mxu0
    %v2250 = vadd.f32 %v2126, %v2247
    %v2251 = vld [vmem:[%s1754 + $0x4] sm:$0x1]
    %v2252 = vld [vmem:[%s1754 + $0x74] sm:$0x1]
    %v2253 = vunpack.c.l.bf16 %v2251
    %v2254 = vunpack.c.l.bf16 %v2252
    %v2257 = vrot.slane %v2253, 1
    %v2258 = vrot.slane %v2254, 1
    %v2261 = vmax.f32 %v2253, %v2257
    %v2262 = vmax.f32 %v2254, %v2258
    %v2263 = vpack.c.bf16 %v2261, %v2261
    %v2264 = vpack.c.bf16 %v2262, %v2262
    %v2265 = vld [vmem:[%s1769 + $0x4] sm:$0x1]
    %v2266 = vld [vmem:[%s1769 + $0x74] sm:$0x1]
    %v2267 = vunpack.c.l.bf16 %v2265
    %v2268 = vunpack.c.l.bf16 %v2266
    %v2271 = vrot.slane %v2267, 1
    %v2272 = vrot.slane %v2268, 1
    %v2275 = vmax.f32 %v2267, %v2271
    %v2276 = vmax.f32 %v2268, %v2272
    %v2277 = vpack.c.bf16 %v2275, %v2275
    %v2278 = vpack.c.bf16 %v2276, %v2276
    %v2279 = vunpack.c.l.bf16 %v2263
    %v2280 = vunpack.c.l.bf16 %v2264
    %v2281 = vunpack.c.l.bf16 %v2277
    %v2282 = vunpack.c.l.bf16 %v2278
    %v2283 = vmax.f32 %v2279, %v2281
    %v2284 = vmax.f32 %v2280, %v2282
    %v2285 = vpack.c.bf16 %v2283, %v2283
    %v2286 = vpack.c.bf16 %v2284, %v2284
    %s2287 = scalar_lea.vmem %s1, 1152
    %v2288 = vld [vmem:[%s2287] sm:$0xf]
    %v2289 = vld [vmem:[%s2287 + $0x4] sm:$0xf]
    %v2290 = vld [vmem:[%s2287 + $0x8] sm:$0xf]
    %v2291 = vld [vmem:[%s2287 + $0xc] sm:$0xf]
    %v2292 = vld [vmem:[%s2287 + $0x10] sm:$0xf]
    %v2293 = vld [vmem:[%s2287 + $0x14] sm:$0xf]
    %v2294 = vld [vmem:[%s2287 + $0x18] sm:$0xf]
    %v2295 = vld [vmem:[%s2287 + $0x1c] sm:$0xf]
    %v2296 = vld [vmem:[%s2287 + $0x20] sm:$0xf]
    %v2297 = vld [vmem:[%s2287 + $0x24] sm:$0xf]
    %v2298 = vld [vmem:[%s2287 + $0x28] sm:$0xf]
    %v2299 = vld [vmem:[%s2287 + $0x2c] sm:$0xf]
    %v2300 = vld [vmem:[%s2287 + $0x30] sm:$0xf]
    %v2301 = vld [vmem:[%s2287 + $0x34] sm:$0xf]
    %v2302 = vld [vmem:[%s2287 + $0x38] sm:$0xf]
    %v2303 = vld [vmem:[%s2287 + $0x3c] sm:$0xf]
    %v2306 = vunpack.c.l.b16 %v2285
    %v2307 = vunpack.c.l.b16 %v2286
    %v2308 = vrot.slane %v2307, 7
    %v2309 = vsel %vm133, %v2308, %v2306
    %v2310 = vpack.c.b16 %v2309, %v2309
    %v2328 = vunpack.c.l.b16 %v2288
    %v2329 = vunpack.c.l.b16 %v2289
    %v2330 = vunpack.c.l.b16 %v2290
    %v2331 = vunpack.c.l.b16 %v2291
    %v2332 = vunpack.c.l.b16 %v2292
    %v2333 = vunpack.c.l.b16 %v2293
    %v2334 = vunpack.c.l.b16 %v2294
    %v2335 = vunpack.c.l.b16 %v2295
    %v2336 = vunpack.c.l.b16 %v2296
    %v2337 = vunpack.c.l.b16 %v2297
    %v2338 = vunpack.c.l.b16 %v2298
    %v2339 = vunpack.c.l.b16 %v2299
    %v2340 = vunpack.c.l.b16 %v2300
    %v2341 = vunpack.c.l.b16 %v2301
    %v2342 = vunpack.c.l.b16 %v2302
    %v2343 = vunpack.c.l.b16 %v2303
    %v2344 = vpack.c.b16 %v2329, %v2328
    %v2345 = vpack.c.b16 %v2331, %v2330
    %v2346 = vpack.c.b16 %v2333, %v2332
    %v2347 = vpack.c.b16 %v2335, %v2334
    %v2348 = vpack.c.b16 %v2337, %v2336
    %v2349 = vpack.c.b16 %v2339, %v2338
    %v2350 = vpack.c.b16 %v2341, %v2340
    %v2351 = vpack.c.b16 %v2343, %v2342
    %2360 = vmatpush.bf16.msra.mxu0 %v2351
    %2361 = vmatpush.bf16.msra.mxu0 %v2350
    %2362 = vmatpush.bf16.msra.mxu0 %v2349
    %2363 = vmatpush.bf16.msra.mxu0 %v2348
    %2364 = vmatpush.bf16.msra.mxu0 %v2347
    %2365 = vmatpush.bf16.msra.mxu0 %v2346
    %2366 = vmatpush.bf16.msra.mxu0 %v2345
    %2367 = vmatpush.bf16.msra.mxu0 %v2344
    %2368 = vmatmul.bf16.gmra.mxu0 %v2310
    %v2369 = vpop.f32.mrf.mxu0
    %v2370 = vadd.f32 0.0, %v2369
    %v2371 = vpop.f32.mrf.mxu0
    %2372 = vdwg.mxu0
    %v2373 = vadd.f32 %v2250, %v2370
    %v2374 = vld [vmem:[%s1754 + $0x4] sm:$0x2]
    %v2375 = vld [vmem:[%s1754 + $0x74] sm:$0x2]
    %v2376 = vunpack.c.l.bf16 %v2374
    %v2377 = vunpack.c.l.bf16 %v2375
    %v2380 = vrot.slane %v2376, 1
    %v2381 = vrot.slane %v2377, 1
    %v2384 = vmax.f32 %v2376, %v2380
    %v2385 = vmax.f32 %v2377, %v2381
    %v2386 = vpack.c.bf16 %v2384, %v2384
    %v2387 = vpack.c.bf16 %v2385, %v2385
    %v2388 = vld [vmem:[%s1769 + $0x4] sm:$0x2]
    %v2389 = vld [vmem:[%s1769 + $0x74] sm:$0x2]
    %v2390 = vunpack.c.l.bf16 %v2388
    %v2391 = vunpack.c.l.bf16 %v2389
    %v2394 = vrot.slane %v2390, 1
    %v2395 = vrot.slane %v2391, 1
    %v2398 = vmax.f32 %v2390, %v2394
    %v2399 = vmax.f32 %v2391, %v2395
    %v2400 = vpack.c.bf16 %v2398, %v2398
    %v2401 = vpack.c.bf16 %v2399, %v2399
    %v2402 = vunpack.c.l.bf16 %v2386
    %v2403 = vunpack.c.l.bf16 %v2387
    %v2404 = vunpack.c.l.bf16 %v2400
    %v2405 = vunpack.c.l.bf16 %v2401
    %v2406 = vmax.f32 %v2402, %v2404
    %v2407 = vmax.f32 %v2403, %v2405
    %v2408 = vpack.c.bf16 %v2406, %v2406
    %v2409 = vpack.c.bf16 %v2407, %v2407
    %s2410 = scalar_lea.vmem %s1, 1216
    %v2411 = vld [vmem:[%s2410] sm:$0xf]
    %v2412 = vld [vmem:[%s2410 + $0x4] sm:$0xf]
    %v2413 = vld [vmem:[%s2410 + $0x8] sm:$0xf]
    %v2414 = vld [vmem:[%s2410 + $0xc] sm:$0xf]
    %v2415 = vld [vmem:[%s2410 + $0x10] sm:$0xf]
    %v2416 = vld [vmem:[%s2410 + $0x14] sm:$0xf]
    %v2417 = vld [vmem:[%s2410 + $0x18] sm:$0xf]
    %v2418 = vld [vmem:[%s2410 + $0x1c] sm:$0xf]
    %v2419 = vld [vmem:[%s2410 + $0x20] sm:$0xf]
    %v2420 = vld [vmem:[%s2410 + $0x24] sm:$0xf]
    %v2421 = vld [vmem:[%s2410 + $0x28] sm:$0xf]
    %v2422 = vld [vmem:[%s2410 + $0x2c] sm:$0xf]
    %v2423 = vld [vmem:[%s2410 + $0x30] sm:$0xf]
    %v2424 = vld [vmem:[%s2410 + $0x34] sm:$0xf]
    %v2425 = vld [vmem:[%s2410 + $0x38] sm:$0xf]
    %v2426 = vld [vmem:[%s2410 + $0x3c] sm:$0xf]
    %v2429 = vunpack.c.l.b16 %v2408
    %v2430 = vunpack.c.l.b16 %v2409
    %v2431 = vrot.slane %v2429, 2
    %v2432 = vrot.slane %v2430, 1
    %v2433 = vsel %vm133, %v2432, %v2431
    %v2434 = vpack.c.b16 %v2433, %v2433
    %v2452 = vunpack.c.l.b16 %v2411
    %v2453 = vunpack.c.l.b16 %v2412
    %v2454 = vunpack.c.l.b16 %v2413
    %v2455 = vunpack.c.l.b16 %v2414
    %v2456 = vunpack.c.l.b16 %v2415
    %v2457 = vunpack.c.l.b16 %v2416
    %v2458 = vunpack.c.l.b16 %v2417
    %v2459 = vunpack.c.l.b16 %v2418
    %v2460 = vunpack.c.l.b16 %v2419
    %v2461 = vunpack.c.l.b16 %v2420
    %v2462 = vunpack.c.l.b16 %v2421
    %v2463 = vunpack.c.l.b16 %v2422
    %v2464 = vunpack.c.l.b16 %v2423
    %v2465 = vunpack.c.l.b16 %v2424
    %v2466 = vunpack.c.l.b16 %v2425
    %v2467 = vunpack.c.l.b16 %v2426
    %v2468 = vpack.c.b16 %v2453, %v2452
    %v2469 = vpack.c.b16 %v2455, %v2454
    %v2470 = vpack.c.b16 %v2457, %v2456
    %v2471 = vpack.c.b16 %v2459, %v2458
    %v2472 = vpack.c.b16 %v2461, %v2460
    %v2473 = vpack.c.b16 %v2463, %v2462
    %v2474 = vpack.c.b16 %v2465, %v2464
    %v2475 = vpack.c.b16 %v2467, %v2466
    %2484 = vmatpush.bf16.msra.mxu0 %v2475
    %2485 = vmatpush.bf16.msra.mxu0 %v2474
    %2486 = vmatpush.bf16.msra.mxu0 %v2473
    %2487 = vmatpush.bf16.msra.mxu0 %v2472
    %2488 = vmatpush.bf16.msra.mxu0 %v2471
    %2489 = vmatpush.bf16.msra.mxu0 %v2470
    %2490 = vmatpush.bf16.msra.mxu0 %v2469
    %2491 = vmatpush.bf16.msra.mxu0 %v2468
    %2492 = vmatmul.bf16.gmra.mxu0 %v2434
    %v2493 = vpop.f32.mrf.mxu0
    %v2494 = vadd.f32 0.0, %v2493
    %v2495 = vpop.f32.mrf.mxu0
    %2496 = vdwg.mxu0
    %v2497 = vadd.f32 %v2373, %v2494
    %v2498 = vld [vmem:[%s1754 + $0x4] sm:$0x4]
    %v2499 = vld [vmem:[%s1754 + $0x74] sm:$0x4]
    %v2500 = vunpack.c.l.bf16 %v2498
    %v2501 = vunpack.c.l.bf16 %v2499
    %v2504 = vrot.slane %v2500, 1
    %v2505 = vrot.slane %v2501, 1
    %v2508 = vmax.f32 %v2500, %v2504
    %v2509 = vmax.f32 %v2501, %v2505
    %v2510 = vpack.c.bf16 %v2508, %v2508
    %v2511 = vpack.c.bf16 %v2509, %v2509
    %v2512 = vld [vmem:[%s1769 + $0x4] sm:$0x4]
    %v2513 = vld [vmem:[%s1769 + $0x74] sm:$0x4]
    %v2514 = vunpack.c.l.bf16 %v2512
    %v2515 = vunpack.c.l.bf16 %v2513
    %v2518 = vrot.slane %v2514, 1
    %v2519 = vrot.slane %v2515, 1
    %v2522 = vmax.f32 %v2514, %v2518
    %v2523 = vmax.f32 %v2515, %v2519
    %v2524 = vpack.c.bf16 %v2522, %v2522
    %v2525 = vpack.c.bf16 %v2523, %v2523
    %v2526 = vunpack.c.l.bf16 %v2510
    %v2527 = vunpack.c.l.bf16 %v2511
    %v2528 = vunpack.c.l.bf16 %v2524
    %v2529 = vunpack.c.l.bf16 %v2525
    %v2530 = vmax.f32 %v2526, %v2528
    %v2531 = vmax.f32 %v2527, %v2529
    %v2532 = vpack.c.bf16 %v2530, %v2530
    %v2533 = vpack.c.bf16 %v2531, %v2531
    %s2534 = scalar_lea.vmem %s1, 1280
    %v2535 = vld [vmem:[%s2534] sm:$0xf]
    %v2536 = vld [vmem:[%s2534 + $0x4] sm:$0xf]
    %v2537 = vld [vmem:[%s2534 + $0x8] sm:$0xf]
    %v2538 = vld [vmem:[%s2534 + $0xc] sm:$0xf]
    %v2539 = vld [vmem:[%s2534 + $0x10] sm:$0xf]
    %v2540 = vld [vmem:[%s2534 + $0x14] sm:$0xf]
    %v2541 = vld [vmem:[%s2534 + $0x18] sm:$0xf]
    %v2542 = vld [vmem:[%s2534 + $0x1c] sm:$0xf]
    %v2543 = vld [vmem:[%s2534 + $0x20] sm:$0xf]
    %v2544 = vld [vmem:[%s2534 + $0x24] sm:$0xf]
    %v2545 = vld [vmem:[%s2534 + $0x28] sm:$0xf]
    %v2546 = vld [vmem:[%s2534 + $0x2c] sm:$0xf]
    %v2547 = vld [vmem:[%s2534 + $0x30] sm:$0xf]
    %v2548 = vld [vmem:[%s2534 + $0x34] sm:$0xf]
    %v2549 = vld [vmem:[%s2534 + $0x38] sm:$0xf]
    %v2550 = vld [vmem:[%s2534 + $0x3c] sm:$0xf]
    %v2553 = vunpack.c.l.b16 %v2532
    %v2554 = vunpack.c.l.b16 %v2533
    %v2555 = vrot.slane %v2553, 4
    %v2556 = vrot.slane %v2554, 3
    %v2557 = vsel %vm133, %v2556, %v2555
    %v2558 = vpack.c.b16 %v2557, %v2557
    %v2576 = vunpack.c.l.b16 %v2535
    %v2577 = vunpack.c.l.b16 %v2536
    %v2578 = vunpack.c.l.b16 %v2537
    %v2579 = vunpack.c.l.b16 %v2538
    %v2580 = vunpack.c.l.b16 %v2539
    %v2581 = vunpack.c.l.b16 %v2540
    %v2582 = vunpack.c.l.b16 %v2541
    %v2583 = vunpack.c.l.b16 %v2542
    %v2584 = vunpack.c.l.b16 %v2543
    %v2585 = vunpack.c.l.b16 %v2544
    %v2586 = vunpack.c.l.b16 %v2545
    %v2587 = vunpack.c.l.b16 %v2546
    %v2588 = vunpack.c.l.b16 %v2547
    %v2589 = vunpack.c.l.b16 %v2548
    %v2590 = vunpack.c.l.b16 %v2549
    %v2591 = vunpack.c.l.b16 %v2550
    %v2592 = vpack.c.b16 %v2577, %v2576
    %v2593 = vpack.c.b16 %v2579, %v2578
    %v2594 = vpack.c.b16 %v2581, %v2580
    %v2595 = vpack.c.b16 %v2583, %v2582
    %v2596 = vpack.c.b16 %v2585, %v2584
    %v2597 = vpack.c.b16 %v2587, %v2586
    %v2598 = vpack.c.b16 %v2589, %v2588
    %v2599 = vpack.c.b16 %v2591, %v2590
    %2608 = vmatpush.bf16.msra.mxu0 %v2599
    %2609 = vmatpush.bf16.msra.mxu0 %v2598
    %2610 = vmatpush.bf16.msra.mxu0 %v2597
    %2611 = vmatpush.bf16.msra.mxu0 %v2596
    %2612 = vmatpush.bf16.msra.mxu0 %v2595
    %2613 = vmatpush.bf16.msra.mxu0 %v2594
    %2614 = vmatpush.bf16.msra.mxu0 %v2593
    %2615 = vmatpush.bf16.msra.mxu0 %v2592
    %2616 = vmatmul.bf16.gmra.mxu0 %v2558
    %v2617 = vpop.f32.mrf.mxu0
    %v2618 = vadd.f32 0.0, %v2617
    %v2619 = vpop.f32.mrf.mxu0
    %2620 = vdwg.mxu0
    %v2621 = vadd.f32 %v2497, %v2618
    %s2622 = scalar_lea.vmem %s0, 48
    %v2623 = vld [vmem:[%s2622] sm:$0x1]
    %v2624 = vld [vmem:[%s2622 + $0x70] sm:$0x1]
    %v2625 = vunpack.c.l.bf16 %v2623
    %v2626 = vunpack.c.l.bf16 %v2624
    %v2629 = vrot.slane %v2625, 1
    %v2630 = vrot.slane %v2626, 1
    %v2633 = vmax.f32 %v2625, %v2629
    %v2634 = vmax.f32 %v2626, %v2630
    %v2635 = vpack.c.bf16 %v2633, %v2633
    %v2636 = vpack.c.bf16 %v2634, %v2634
    %s2637 = scalar_lea.vmem %s0, 56
    %v2638 = vld [vmem:[%s2637] sm:$0x1]
    %v2639 = vld [vmem:[%s2637 + $0x70] sm:$0x1]
    %v2640 = vunpack.c.l.bf16 %v2638
    %v2641 = vunpack.c.l.bf16 %v2639
    %v2644 = vrot.slane %v2640, 1
    %v2645 = vrot.slane %v2641, 1
    %v2648 = vmax.f32 %v2640, %v2644
    %v2649 = vmax.f32 %v2641, %v2645
    %v2650 = vpack.c.bf16 %v2648, %v2648
    %v2651 = vpack.c.bf16 %v2649, %v2649
    %v2652 = vunpack.c.l.bf16 %v2635
    %v2653 = vunpack.c.l.bf16 %v2636
    %v2654 = vunpack.c.l.bf16 %v2650
    %v2655 = vunpack.c.l.bf16 %v2651
    %v2656 = vmax.f32 %v2652, %v2654
    %v2657 = vmax.f32 %v2653, %v2655
    %v2658 = vpack.c.bf16 %v2656, %v2656
    %v2659 = vpack.c.bf16 %v2657, %v2657
    %s2660 = scalar_lea.vmem %s1, 1344
    %v2661 = vld [vmem:[%s2660] sm:$0xf]
    %v2662 = vld [vmem:[%s2660 + $0x4] sm:$0xf]
    %v2663 = vld [vmem:[%s2660 + $0x8] sm:$0xf]
    %v2664 = vld [vmem:[%s2660 + $0xc] sm:$0xf]
    %v2665 = vld [vmem:[%s2660 + $0x10] sm:$0xf]
    %v2666 = vld [vmem:[%s2660 + $0x14] sm:$0xf]
    %v2667 = vld [vmem:[%s2660 + $0x18] sm:$0xf]
    %v2668 = vld [vmem:[%s2660 + $0x1c] sm:$0xf]
    %v2669 = vld [vmem:[%s2660 + $0x20] sm:$0xf]
    %v2670 = vld [vmem:[%s2660 + $0x24] sm:$0xf]
    %v2671 = vld [vmem:[%s2660 + $0x28] sm:$0xf]
    %v2672 = vld [vmem:[%s2660 + $0x2c] sm:$0xf]
    %v2673 = vld [vmem:[%s2660 + $0x30] sm:$0xf]
    %v2674 = vld [vmem:[%s2660 + $0x34] sm:$0xf]
    %v2675 = vld [vmem:[%s2660 + $0x38] sm:$0xf]
    %v2676 = vld [vmem:[%s2660 + $0x3c] sm:$0xf]
    %v2679 = vunpack.c.l.b16 %v2658
    %v2680 = vunpack.c.l.b16 %v2659
    %v2681 = vrot.slane %v2680, 7
    %v2682 = vsel %vm133, %v2681, %v2679
    %v2683 = vpack.c.b16 %v2682, %v2682
    %v2701 = vunpack.c.l.b16 %v2661
    %v2702 = vunpack.c.l.b16 %v2662
    %v2703 = vunpack.c.l.b16 %v2663
    %v2704 = vunpack.c.l.b16 %v2664
    %v2705 = vunpack.c.l.b16 %v2665
    %v2706 = vunpack.c.l.b16 %v2666
    %v2707 = vunpack.c.l.b16 %v2667
    %v2708 = vunpack.c.l.b16 %v2668
    %v2709 = vunpack.c.l.b16 %v2669
    %v2710 = vunpack.c.l.b16 %v2670
    %v2711 = vunpack.c.l.b16 %v2671
    %v2712 = vunpack.c.l.b16 %v2672
    %v2713 = vunpack.c.l.b16 %v2673
    %v2714 = vunpack.c.l.b16 %v2674
    %v2715 = vunpack.c.l.b16 %v2675
    %v2716 = vunpack.c.l.b16 %v2676
    %v2717 = vpack.c.b16 %v2702, %v2701
    %v2718 = vpack.c.b16 %v2704, %v2703
    %v2719 = vpack.c.b16 %v2706, %v2705
    %v2720 = vpack.c.b16 %v2708, %v2707
    %v2721 = vpack.c.b16 %v2710, %v2709
    %v2722 = vpack.c.b16 %v2712, %v2711
    %v2723 = vpack.c.b16 %v2714, %v2713
    %v2724 = vpack.c.b16 %v2716, %v2715
    %2733 = vmatpush.bf16.msra.mxu0 %v2724
    %2734 = vmatpush.bf16.msra.mxu0 %v2723
    %2735 = vmatpush.bf16.msra.mxu0 %v2722
    %2736 = vmatpush.bf16.msra.mxu0 %v2721
    %2737 = vmatpush.bf16.msra.mxu0 %v2720
    %2738 = vmatpush.bf16.msra.mxu0 %v2719
    %2739 = vmatpush.bf16.msra.mxu0 %v2718
    %2740 = vmatpush.bf16.msra.mxu0 %v2717
    %2741 = vmatmul.bf16.gmra.mxu0 %v2683
    %v2742 = vpop.f32.mrf.mxu0
    %v2743 = vadd.f32 0.0, %v2742
    %v2744 = vpop.f32.mrf.mxu0
    %2745 = vdwg.mxu0
    %v2746 = vadd.f32 %v2621, %v2743
    %v2747 = vld [vmem:[%s2622] sm:$0x2]
    %v2748 = vld [vmem:[%s2622 + $0x70] sm:$0x2]
    %v2749 = vunpack.c.l.bf16 %v2747
    %v2750 = vunpack.c.l.bf16 %v2748
    %v2753 = vrot.slane %v2749, 1
    %v2754 = vrot.slane %v2750, 1
    %v2757 = vmax.f32 %v2749, %v2753
    %v2758 = vmax.f32 %v2750, %v2754
    %v2759 = vpack.c.bf16 %v2757, %v2757
    %v2760 = vpack.c.bf16 %v2758, %v2758
    %v2761 = vld [vmem:[%s2637] sm:$0x2]
    %v2762 = vld [vmem:[%s2637 + $0x70] sm:$0x2]
    %v2763 = vunpack.c.l.bf16 %v2761
    %v2764 = vunpack.c.l.bf16 %v2762
    %v2767 = vrot.slane %v2763, 1
    %v2768 = vrot.slane %v2764, 1
    %v2771 = vmax.f32 %v2763, %v2767
    %v2772 = vmax.f32 %v2764, %v2768
    %v2773 = vpack.c.bf16 %v2771, %v2771
    %v2774 = vpack.c.bf16 %v2772, %v2772
    %v2775 = vunpack.c.l.bf16 %v2759
    %v2776 = vunpack.c.l.bf16 %v2760
    %v2777 = vunpack.c.l.bf16 %v2773
    %v2778 = vunpack.c.l.bf16 %v2774
    %v2779 = vmax.f32 %v2775, %v2777
    %v2780 = vmax.f32 %v2776, %v2778
    %v2781 = vpack.c.bf16 %v2779, %v2779
    %v2782 = vpack.c.bf16 %v2780, %v2780
    %s2783 = scalar_lea.vmem %s1, 1408
    %v2784 = vld [vmem:[%s2783] sm:$0xf]
    %v2785 = vld [vmem:[%s2783 + $0x4] sm:$0xf]
    %v2786 = vld [vmem:[%s2783 + $0x8] sm:$0xf]
    %v2787 = vld [vmem:[%s2783 + $0xc] sm:$0xf]
    %v2788 = vld [vmem:[%s2783 + $0x10] sm:$0xf]
    %v2789 = vld [vmem:[%s2783 + $0x14] sm:$0xf]
    %v2790 = vld [vmem:[%s2783 + $0x18] sm:$0xf]
    %v2791 = vld [vmem:[%s2783 + $0x1c] sm:$0xf]
    %v2792 = vld [vmem:[%s2783 + $0x20] sm:$0xf]
    %v2793 = vld [vmem:[%s2783 + $0x24] sm:$0xf]
    %v2794 = vld [vmem:[%s2783 + $0x28] sm:$0xf]
    %v2795 = vld [vmem:[%s2783 + $0x2c] sm:$0xf]
    %v2796 = vld [vmem:[%s2783 + $0x30] sm:$0xf]
    %v2797 = vld [vmem:[%s2783 + $0x34] sm:$0xf]
    %v2798 = vld [vmem:[%s2783 + $0x38] sm:$0xf]
    %v2799 = vld [vmem:[%s2783 + $0x3c] sm:$0xf]
    %v2802 = vunpack.c.l.b16 %v2781
    %v2803 = vunpack.c.l.b16 %v2782
    %v2804 = vrot.slane %v2802, 2
    %v2805 = vrot.slane %v2803, 1
    %v2806 = vsel %vm133, %v2805, %v2804
    %v2807 = vpack.c.b16 %v2806, %v2806
    %v2825 = vunpack.c.l.b16 %v2784
    %v2826 = vunpack.c.l.b16 %v2785
    %v2827 = vunpack.c.l.b16 %v2786
    %v2828 = vunpack.c.l.b16 %v2787
    %v2829 = vunpack.c.l.b16 %v2788
    %v2830 = vunpack.c.l.b16 %v2789
    %v2831 = vunpack.c.l.b16 %v2790
    %v2832 = vunpack.c.l.b16 %v2791
    %v2833 = vunpack.c.l.b16 %v2792
    %v2834 = vunpack.c.l.b16 %v2793
    %v2835 = vunpack.c.l.b16 %v2794
    %v2836 = vunpack.c.l.b16 %v2795
    %v2837 = vunpack.c.l.b16 %v2796
    %v2838 = vunpack.c.l.b16 %v2797
    %v2839 = vunpack.c.l.b16 %v2798
    %v2840 = vunpack.c.l.b16 %v2799
    %v2841 = vpack.c.b16 %v2826, %v2825
    %v2842 = vpack.c.b16 %v2828, %v2827
    %v2843 = vpack.c.b16 %v2830, %v2829
    %v2844 = vpack.c.b16 %v2832, %v2831
    %v2845 = vpack.c.b16 %v2834, %v2833
    %v2846 = vpack.c.b16 %v2836, %v2835
    %v2847 = vpack.c.b16 %v2838, %v2837
    %v2848 = vpack.c.b16 %v2840, %v2839
    %2857 = vmatpush.bf16.msra.mxu0 %v2848
    %2858 = vmatpush.bf16.msra.mxu0 %v2847
    %2859 = vmatpush.bf16.msra.mxu0 %v2846
    %2860 = vmatpush.bf16.msra.mxu0 %v2845
    %2861 = vmatpush.bf16.msra.mxu0 %v2844
    %2862 = vmatpush.bf16.msra.mxu0 %v2843
    %2863 = vmatpush.bf16.msra.mxu0 %v2842
    %2864 = vmatpush.bf16.msra.mxu0 %v2841
    %2865 = vmatmul.bf16.gmra.mxu0 %v2807
    %v2866 = vpop.f32.mrf.mxu0
    %v2867 = vadd.f32 0.0, %v2866
    %v2868 = vpop.f32.mrf.mxu0
    %2869 = vdwg.mxu0
    %v2870 = vadd.f32 %v2746, %v2867
    %v2871 = vld [vmem:[%s2622] sm:$0x4]
    %v2872 = vld [vmem:[%s2622 + $0x70] sm:$0x4]
    %v2873 = vunpack.c.l.bf16 %v2871
    %v2874 = vunpack.c.l.bf16 %v2872
    %v2877 = vrot.slane %v2873, 1
    %v2878 = vrot.slane %v2874, 1
    %v2881 = vmax.f32 %v2873, %v2877
    %v2882 = vmax.f32 %v2874, %v2878
    %v2883 = vpack.c.bf16 %v2881, %v2881
    %v2884 = vpack.c.bf16 %v2882, %v2882
    %v2885 = vld [vmem:[%s2637] sm:$0x4]
    %v2886 = vld [vmem:[%s2637 + $0x70] sm:$0x4]
    %v2887 = vunpack.c.l.bf16 %v2885
    %v2888 = vunpack.c.l.bf16 %v2886
    %v2891 = vrot.slane %v2887, 1
    %v2892 = vrot.slane %v2888, 1
    %v2895 = vmax.f32 %v2887, %v2891
    %v2896 = vmax.f32 %v2888, %v2892
    %v2897 = vpack.c.bf16 %v2895, %v2895
    %v2898 = vpack.c.bf16 %v2896, %v2896
    %v2899 = vunpack.c.l.bf16 %v2883
    %v2900 = vunpack.c.l.bf16 %v2884
    %v2901 = vunpack.c.l.bf16 %v2897
    %v2902 = vunpack.c.l.bf16 %v2898
    %v2903 = vmax.f32 %v2899, %v2901
    %v2904 = vmax.f32 %v2900, %v2902
    %v2905 = vpack.c.bf16 %v2903, %v2903
    %v2906 = vpack.c.bf16 %v2904, %v2904
    %s2907 = scalar_lea.vmem %s1, 1472
    %v2908 = vld [vmem:[%s2907] sm:$0xf]
    %v2909 = vld [vmem:[%s2907 + $0x4] sm:$0xf]
    %v2910 = vld [vmem:[%s2907 + $0x8] sm:$0xf]
    %v2911 = vld [vmem:[%s2907 + $0xc] sm:$0xf]
    %v2912 = vld [vmem:[%s2907 + $0x10] sm:$0xf]
    %v2913 = vld [vmem:[%s2907 + $0x14] sm:$0xf]
    %v2914 = vld [vmem:[%s2907 + $0x18] sm:$0xf]
    %v2915 = vld [vmem:[%s2907 + $0x1c] sm:$0xf]
    %v2916 = vld [vmem:[%s2907 + $0x20] sm:$0xf]
    %v2917 = vld [vmem:[%s2907 + $0x24] sm:$0xf]
    %v2918 = vld [vmem:[%s2907 + $0x28] sm:$0xf]
    %v2919 = vld [vmem:[%s2907 + $0x2c] sm:$0xf]
    %v2920 = vld [vmem:[%s2907 + $0x30] sm:$0xf]
    %v2921 = vld [vmem:[%s2907 + $0x34] sm:$0xf]
    %v2922 = vld [vmem:[%s2907 + $0x38] sm:$0xf]
    %v2923 = vld [vmem:[%s2907 + $0x3c] sm:$0xf]
    %v2926 = vunpack.c.l.b16 %v2905
    %v2927 = vunpack.c.l.b16 %v2906
    %v2928 = vrot.slane %v2926, 4
    %v2929 = vrot.slane %v2927, 3
    %v2930 = vsel %vm133, %v2929, %v2928
    %v2931 = vpack.c.b16 %v2930, %v2930
    %v2949 = vunpack.c.l.b16 %v2908
    %v2950 = vunpack.c.l.b16 %v2909
    %v2951 = vunpack.c.l.b16 %v2910
    %v2952 = vunpack.c.l.b16 %v2911
    %v2953 = vunpack.c.l.b16 %v2912
    %v2954 = vunpack.c.l.b16 %v2913
    %v2955 = vunpack.c.l.b16 %v2914
    %v2956 = vunpack.c.l.b16 %v2915
    %v2957 = vunpack.c.l.b16 %v2916
    %v2958 = vunpack.c.l.b16 %v2917
    %v2959 = vunpack.c.l.b16 %v2918
    %v2960 = vunpack.c.l.b16 %v2919
    %v2961 = vunpack.c.l.b16 %v2920
    %v2962 = vunpack.c.l.b16 %v2921
    %v2963 = vunpack.c.l.b16 %v2922
    %v2964 = vunpack.c.l.b16 %v2923
    %v2965 = vpack.c.b16 %v2950, %v2949
    %v2966 = vpack.c.b16 %v2952, %v2951
    %v2967 = vpack.c.b16 %v2954, %v2953
    %v2968 = vpack.c.b16 %v2956, %v2955
    %v2969 = vpack.c.b16 %v2958, %v2957
    %v2970 = vpack.c.b16 %v2960, %v2959
    %v2971 = vpack.c.b16 %v2962, %v2961
    %v2972 = vpack.c.b16 %v2964, %v2963
    %2981 = vmatpush.bf16.msra.mxu0 %v2972
    %2982 = vmatpush.bf16.msra.mxu0 %v2971
    %2983 = vmatpush.bf16.msra.mxu0 %v2970
    %2984 = vmatpush.bf16.msra.mxu0 %v2969
    %2985 = vmatpush.bf16.msra.mxu0 %v2968
    %2986 = vmatpush.bf16.msra.mxu0 %v2967
    %2987 = vmatpush.bf16.msra.mxu0 %v2966
    %2988 = vmatpush.bf16.msra.mxu0 %v2965
    %2989 = vmatmul.bf16.gmra.mxu0 %v2931
    %v2990 = vpop.f32.mrf.mxu0
    %v2991 = vadd.f32 0.0, %v2990
    %v2992 = vpop.f32.mrf.mxu0
    %2993 = vdwg.mxu0
    %v2994 = vadd.f32 %v2870, %v2991
    %v2995 = vld [vmem:[%s2622] sm:$0x8]
    %v2996 = vld [vmem:[%s2622 + $0x70] sm:$0x8]
    %v2997 = vunpack.c.l.bf16 %v2995
    %v2998 = vunpack.c.l.bf16 %v2996
    %v3001 = vrot.slane %v2997, 1
    %v3002 = vrot.slane %v2998, 1
    %v3005 = vmax.f32 %v2997, %v3001
    %v3006 = vmax.f32 %v2998, %v3002
    %v3007 = vpack.c.bf16 %v3005, %v3005
    %v3008 = vpack.c.bf16 %v3006, %v3006
    %v3009 = vld [vmem:[%s2637] sm:$0x8]
    %v3010 = vld [vmem:[%s2637 + $0x70] sm:$0x8]
    %v3011 = vunpack.c.l.bf16 %v3009
    %v3012 = vunpack.c.l.bf16 %v3010
    %v3015 = vrot.slane %v3011, 1
    %v3016 = vrot.slane %v3012, 1
    %v3019 = vmax.f32 %v3011, %v3015
    %v3020 = vmax.f32 %v3012, %v3016
    %v3021 = vpack.c.bf16 %v3019, %v3019
    %v3022 = vpack.c.bf16 %v3020, %v3020
    %v3023 = vunpack.c.l.bf16 %v3007
    %v3024 = vunpack.c.l.bf16 %v3008
    %v3025 = vunpack.c.l.bf16 %v3021
    %v3026 = vunpack.c.l.bf16 %v3022
    %v3027 = vmax.f32 %v3023, %v3025
    %v3028 = vmax.f32 %v3024, %v3026
    %v3029 = vpack.c.bf16 %v3027, %v3027
    %v3030 = vpack.c.bf16 %v3028, %v3028
    %s3031 = scalar_lea.vmem %s1, 1536
    %v3032 = vld [vmem:[%s3031] sm:$0xf]
    %v3033 = vld [vmem:[%s3031 + $0x4] sm:$0xf]
    %v3034 = vld [vmem:[%s3031 + $0x8] sm:$0xf]
    %v3035 = vld [vmem:[%s3031 + $0xc] sm:$0xf]
    %v3036 = vld [vmem:[%s3031 + $0x10] sm:$0xf]
    %v3037 = vld [vmem:[%s3031 + $0x14] sm:$0xf]
    %v3038 = vld [vmem:[%s3031 + $0x18] sm:$0xf]
    %v3039 = vld [vmem:[%s3031 + $0x1c] sm:$0xf]
    %v3040 = vld [vmem:[%s3031 + $0x20] sm:$0xf]
    %v3041 = vld [vmem:[%s3031 + $0x24] sm:$0xf]
    %v3042 = vld [vmem:[%s3031 + $0x28] sm:$0xf]
    %v3043 = vld [vmem:[%s3031 + $0x2c] sm:$0xf]
    %v3044 = vld [vmem:[%s3031 + $0x30] sm:$0xf]
    %v3045 = vld [vmem:[%s3031 + $0x34] sm:$0xf]
    %v3046 = vld [vmem:[%s3031 + $0x38] sm:$0xf]
    %v3047 = vld [vmem:[%s3031 + $0x3c] sm:$0xf]
    %v3050 = vunpack.c.l.b16 %v3029
    %v3051 = vunpack.c.l.b16 %v3030
    %v3052 = vrot.slane %v3050, 6
    %v3053 = vrot.slane %v3051, 5
    %v3054 = vsel %vm133, %v3053, %v3052
    %v3055 = vpack.c.b16 %v3054, %v3054
    %v3073 = vunpack.c.l.b16 %v3032
    %v3074 = vunpack.c.l.b16 %v3033
    %v3075 = vunpack.c.l.b16 %v3034
    %v3076 = vunpack.c.l.b16 %v3035
    %v3077 = vunpack.c.l.b16 %v3036
    %v3078 = vunpack.c.l.b16 %v3037
    %v3079 = vunpack.c.l.b16 %v3038
    %v3080 = vunpack.c.l.b16 %v3039
    %v3081 = vunpack.c.l.b16 %v3040
    %v3082 = vunpack.c.l.b16 %v3041
    %v3083 = vunpack.c.l.b16 %v3042
    %v3084 = vunpack.c.l.b16 %v3043
    %v3085 = vunpack.c.l.b16 %v3044
    %v3086 = vunpack.c.l.b16 %v3045
    %v3087 = vunpack.c.l.b16 %v3046
    %v3088 = vunpack.c.l.b16 %v3047
    %v3089 = vpack.c.b16 %v3074, %v3073
    %v3090 = vpack.c.b16 %v3076, %v3075
    %v3091 = vpack.c.b16 %v3078, %v3077
    %v3092 = vpack.c.b16 %v3080, %v3079
    %v3093 = vpack.c.b16 %v3082, %v3081
    %v3094 = vpack.c.b16 %v3084, %v3083
    %v3095 = vpack.c.b16 %v3086, %v3085
    %v3096 = vpack.c.b16 %v3088, %v3087
    %3105 = vmatpush.bf16.msra.mxu0 %v3096
    %3106 = vmatpush.bf16.msra.mxu0 %v3095
    %3107 = vmatpush.bf16.msra.mxu0 %v3094
    %3108 = vmatpush.bf16.msra.mxu0 %v3093
    %3109 = vmatpush.bf16.msra.mxu0 %v3092
    %3110 = vmatpush.bf16.msra.mxu0 %v3091
    %3111 = vmatpush.bf16.msra.mxu0 %v3090
    %3112 = vmatpush.bf16.msra.mxu0 %v3089
    %3113 = vmatmul.bf16.gmra.mxu0 %v3055
    %v3114 = vpop.f32.mrf.mxu0
    %v3115 = vadd.f32 0.0, %v3114
    %v3116 = vpop.f32.mrf.mxu0
    %3117 = vdwg.mxu0
    %v3118 = vadd.f32 %v2994, %v3115
    %v3119 = vld [vmem:[%s2622 + $0x4] sm:$0x1]
    %v3120 = vld [vmem:[%s2622 + $0x74] sm:$0x1]
    %v3121 = vunpack.c.l.bf16 %v3119
    %v3122 = vunpack.c.l.bf16 %v3120
    %v3125 = vrot.slane %v3121, 1
    %v3126 = vrot.slane %v3122, 1
    %v3129 = vmax.f32 %v3121, %v3125
    %v3130 = vmax.f32 %v3122, %v3126
    %v3131 = vpack.c.bf16 %v3129, %v3129
    %v3132 = vpack.c.bf16 %v3130, %v3130
    %v3133 = vld [vmem:[%s2637 + $0x4] sm:$0x1]
    %v3134 = vld [vmem:[%s2637 + $0x74] sm:$0x1]
    %v3135 = vunpack.c.l.bf16 %v3133
    %v3136 = vunpack.c.l.bf16 %v3134
    %v3139 = vrot.slane %v3135, 1
    %v3140 = vrot.slane %v3136, 1
    %v3143 = vmax.f32 %v3135, %v3139
    %v3144 = vmax.f32 %v3136, %v3140
    %v3145 = vpack.c.bf16 %v3143, %v3143
    %v3146 = vpack.c.bf16 %v3144, %v3144
    %v3147 = vunpack.c.l.bf16 %v3131
    %v3148 = vunpack.c.l.bf16 %v3132
    %v3149 = vunpack.c.l.bf16 %v3145
    %v3150 = vunpack.c.l.bf16 %v3146
    %v3151 = vmax.f32 %v3147, %v3149
    %v3152 = vmax.f32 %v3148, %v3150
    %v3153 = vpack.c.bf16 %v3151, %v3151
    %v3154 = vpack.c.bf16 %v3152, %v3152
    %s3155 = scalar_lea.vmem %s1, 1600
    %v3156 = vld [vmem:[%s3155] sm:$0xf]
    %v3157 = vld [vmem:[%s3155 + $0x4] sm:$0xf]
    %v3158 = vld [vmem:[%s3155 + $0x8] sm:$0xf]
    %v3159 = vld [vmem:[%s3155 + $0xc] sm:$0xf]
    %v3160 = vld [vmem:[%s3155 + $0x10] sm:$0xf]
    %v3161 = vld [vmem:[%s3155 + $0x14] sm:$0xf]
    %v3162 = vld [vmem:[%s3155 + $0x18] sm:$0xf]
    %v3163 = vld [vmem:[%s3155 + $0x1c] sm:$0xf]
    %v3164 = vld [vmem:[%s3155 + $0x20] sm:$0xf]
    %v3165 = vld [vmem:[%s3155 + $0x24] sm:$0xf]
    %v3166 = vld [vmem:[%s3155 + $0x28] sm:$0xf]
    %v3167 = vld [vmem:[%s3155 + $0x2c] sm:$0xf]
    %v3168 = vld [vmem:[%s3155 + $0x30] sm:$0xf]
    %v3169 = vld [vmem:[%s3155 + $0x34] sm:$0xf]
    %v3170 = vld [vmem:[%s3155 + $0x38] sm:$0xf]
    %v3171 = vld [vmem:[%s3155 + $0x3c] sm:$0xf]
    %v3174 = vunpack.c.l.b16 %v3153
    %v3175 = vunpack.c.l.b16 %v3154
    %v3176 = vrot.slane %v3175, 7
    %v3177 = vsel %vm133, %v3176, %v3174
    %v3178 = vpack.c.b16 %v3177, %v3177
    %v3196 = vunpack.c.l.b16 %v3156
    %v3197 = vunpack.c.l.b16 %v3157
    %v3198 = vunpack.c.l.b16 %v3158
    %v3199 = vunpack.c.l.b16 %v3159
    %v3200 = vunpack.c.l.b16 %v3160
    %v3201 = vunpack.c.l.b16 %v3161
    %v3202 = vunpack.c.l.b16 %v3162
    %v3203 = vunpack.c.l.b16 %v3163
    %v3204 = vunpack.c.l.b16 %v3164
    %v3205 = vunpack.c.l.b16 %v3165
    %v3206 = vunpack.c.l.b16 %v3166
    %v3207 = vunpack.c.l.b16 %v3167
    %v3208 = vunpack.c.l.b16 %v3168
    %v3209 = vunpack.c.l.b16 %v3169
    %v3210 = vunpack.c.l.b16 %v3170
    %v3211 = vunpack.c.l.b16 %v3171
    %v3212 = vpack.c.b16 %v3197, %v3196
    %v3213 = vpack.c.b16 %v3199, %v3198
    %v3214 = vpack.c.b16 %v3201, %v3200
    %v3215 = vpack.c.b16 %v3203, %v3202
    %v3216 = vpack.c.b16 %v3205, %v3204
    %v3217 = vpack.c.b16 %v3207, %v3206
    %v3218 = vpack.c.b16 %v3209, %v3208
    %v3219 = vpack.c.b16 %v3211, %v3210
    %3228 = vmatpush.bf16.msra.mxu0 %v3219
    %3229 = vmatpush.bf16.msra.mxu0 %v3218
    %3230 = vmatpush.bf16.msra.mxu0 %v3217
    %3231 = vmatpush.bf16.msra.mxu0 %v3216
    %3232 = vmatpush.bf16.msra.mxu0 %v3215
    %3233 = vmatpush.bf16.msra.mxu0 %v3214
    %3234 = vmatpush.bf16.msra.mxu0 %v3213
    %3235 = vmatpush.bf16.msra.mxu0 %v3212
    %3236 = vmatmul.bf16.gmra.mxu0 %v3178
    %v3237 = vpop.f32.mrf.mxu0
    %v3238 = vadd.f32 0.0, %v3237
    %v3239 = vpop.f32.mrf.mxu0
    %3240 = vdwg.mxu0
    %v3241 = vadd.f32 %v3118, %v3238
    %v3242 = vld [vmem:[%s2622 + $0x4] sm:$0x2]
    %v3243 = vld [vmem:[%s2622 + $0x74] sm:$0x2]
    %v3244 = vunpack.c.l.bf16 %v3242
    %v3245 = vunpack.c.l.bf16 %v3243
    %v3248 = vrot.slane %v3244, 1
    %v3249 = vrot.slane %v3245, 1
    %v3252 = vmax.f32 %v3244, %v3248
    %v3253 = vmax.f32 %v3245, %v3249
    %v3254 = vpack.c.bf16 %v3252, %v3252
    %v3255 = vpack.c.bf16 %v3253, %v3253
    %v3256 = vld [vmem:[%s2637 + $0x4] sm:$0x2]
    %v3257 = vld [vmem:[%s2637 + $0x74] sm:$0x2]
    %v3258 = vunpack.c.l.bf16 %v3256
    %v3259 = vunpack.c.l.bf16 %v3257
    %v3262 = vrot.slane %v3258, 1
    %v3263 = vrot.slane %v3259, 1
    %v3266 = vmax.f32 %v3258, %v3262
    %v3267 = vmax.f32 %v3259, %v3263
    %v3268 = vpack.c.bf16 %v3266, %v3266
    %v3269 = vpack.c.bf16 %v3267, %v3267
    %v3270 = vunpack.c.l.bf16 %v3254
    %v3271 = vunpack.c.l.bf16 %v3255
    %v3272 = vunpack.c.l.bf16 %v3268
    %v3273 = vunpack.c.l.bf16 %v3269
    %v3274 = vmax.f32 %v3270, %v3272
    %v3275 = vmax.f32 %v3271, %v3273
    %v3276 = vpack.c.bf16 %v3274, %v3274
    %v3277 = vpack.c.bf16 %v3275, %v3275
    %s3278 = scalar_lea.vmem %s1, 1664
    %v3279 = vld [vmem:[%s3278] sm:$0xf]
    %v3280 = vld [vmem:[%s3278 + $0x4] sm:$0xf]
    %v3281 = vld [vmem:[%s3278 + $0x8] sm:$0xf]
    %v3282 = vld [vmem:[%s3278 + $0xc] sm:$0xf]
    %v3283 = vld [vmem:[%s3278 + $0x10] sm:$0xf]
    %v3284 = vld [vmem:[%s3278 + $0x14] sm:$0xf]
    %v3285 = vld [vmem:[%s3278 + $0x18] sm:$0xf]
    %v3286 = vld [vmem:[%s3278 + $0x1c] sm:$0xf]
    %v3287 = vld [vmem:[%s3278 + $0x20] sm:$0xf]
    %v3288 = vld [vmem:[%s3278 + $0x24] sm:$0xf]
    %v3289 = vld [vmem:[%s3278 + $0x28] sm:$0xf]
    %v3290 = vld [vmem:[%s3278 + $0x2c] sm:$0xf]
    %v3291 = vld [vmem:[%s3278 + $0x30] sm:$0xf]
    %v3292 = vld [vmem:[%s3278 + $0x34] sm:$0xf]
    %v3293 = vld [vmem:[%s3278 + $0x38] sm:$0xf]
    %v3294 = vld [vmem:[%s3278 + $0x3c] sm:$0xf]
    %v3297 = vunpack.c.l.b16 %v3276
    %v3298 = vunpack.c.l.b16 %v3277
    %v3299 = vrot.slane %v3297, 2
    %v3300 = vrot.slane %v3298, 1
    %v3301 = vsel %vm133, %v3300, %v3299
    %v3302 = vpack.c.b16 %v3301, %v3301
    %v3320 = vunpack.c.l.b16 %v3279
    %v3321 = vunpack.c.l.b16 %v3280
    %v3322 = vunpack.c.l.b16 %v3281
    %v3323 = vunpack.c.l.b16 %v3282
    %v3324 = vunpack.c.l.b16 %v3283
    %v3325 = vunpack.c.l.b16 %v3284
    %v3326 = vunpack.c.l.b16 %v3285
    %v3327 = vunpack.c.l.b16 %v3286
    %v3328 = vunpack.c.l.b16 %v3287
    %v3329 = vunpack.c.l.b16 %v3288
    %v3330 = vunpack.c.l.b16 %v3289
    %v3331 = vunpack.c.l.b16 %v3290
    %v3332 = vunpack.c.l.b16 %v3291
    %v3333 = vunpack.c.l.b16 %v3292
    %v3334 = vunpack.c.l.b16 %v3293
    %v3335 = vunpack.c.l.b16 %v3294
    %v3336 = vpack.c.b16 %v3321, %v3320
    %v3337 = vpack.c.b16 %v3323, %v3322
    %v3338 = vpack.c.b16 %v3325, %v3324
    %v3339 = vpack.c.b16 %v3327, %v3326
    %v3340 = vpack.c.b16 %v3329, %v3328
    %v3341 = vpack.c.b16 %v3331, %v3330
    %v3342 = vpack.c.b16 %v3333, %v3332
    %v3343 = vpack.c.b16 %v3335, %v3334
    %3352 = vmatpush.bf16.msra.mxu0 %v3343
    %3353 = vmatpush.bf16.msra.mxu0 %v3342
    %3354 = vmatpush.bf16.msra.mxu0 %v3341
    %3355 = vmatpush.bf16.msra.mxu0 %v3340
    %3356 = vmatpush.bf16.msra.mxu0 %v3339
    %3357 = vmatpush.bf16.msra.mxu0 %v3338
    %3358 = vmatpush.bf16.msra.mxu0 %v3337
    %3359 = vmatpush.bf16.msra.mxu0 %v3336
    %3360 = vmatmul.bf16.gmra.mxu0 %v3302
    %v3361 = vpop.f32.mrf.mxu0
    %v3362 = vadd.f32 0.0, %v3361
    %v3363 = vpop.f32.mrf.mxu0
    %3364 = vdwg.mxu0
    %v3365 = vadd.f32 %v3241, %v3362
    %v3366 = vld [vmem:[%s2622 + $0x4] sm:$0x4]
    %v3367 = vld [vmem:[%s2622 + $0x74] sm:$0x4]
    %v3368 = vunpack.c.l.bf16 %v3366
    %v3369 = vunpack.c.l.bf16 %v3367
    %v3372 = vrot.slane %v3368, 1
    %v3373 = vrot.slane %v3369, 1
    %v3376 = vmax.f32 %v3368, %v3372
    %v3377 = vmax.f32 %v3369, %v3373
    %v3378 = vpack.c.bf16 %v3376, %v3376
    %v3379 = vpack.c.bf16 %v3377, %v3377
    %v3380 = vld [vmem:[%s2637 + $0x4] sm:$0x4]
    %v3381 = vld [vmem:[%s2637 + $0x74] sm:$0x4]
    %v3382 = vunpack.c.l.bf16 %v3380
    %v3383 = vunpack.c.l.bf16 %v3381
    %v3386 = vrot.slane %v3382, 1
    %v3387 = vrot.slane %v3383, 1
    %v3390 = vmax.f32 %v3382, %v3386
    %v3391 = vmax.f32 %v3383, %v3387
    %v3392 = vpack.c.bf16 %v3390, %v3390
    %v3393 = vpack.c.bf16 %v3391, %v3391
    %v3394 = vunpack.c.l.bf16 %v3378
    %v3395 = vunpack.c.l.bf16 %v3379
    %v3396 = vunpack.c.l.bf16 %v3392
    %v3397 = vunpack.c.l.bf16 %v3393
    %v3398 = vmax.f32 %v3394, %v3396
    %v3399 = vmax.f32 %v3395, %v3397
    %v3400 = vpack.c.bf16 %v3398, %v3398
    %v3401 = vpack.c.bf16 %v3399, %v3399
    %s3402 = scalar_lea.vmem %s1, 1728
    %v3403 = vld [vmem:[%s3402] sm:$0xf]
    %v3404 = vld [vmem:[%s3402 + $0x4] sm:$0xf]
    %v3405 = vld [vmem:[%s3402 + $0x8] sm:$0xf]
    %v3406 = vld [vmem:[%s3402 + $0xc] sm:$0xf]
    %v3407 = vld [vmem:[%s3402 + $0x10] sm:$0xf]
    %v3408 = vld [vmem:[%s3402 + $0x14] sm:$0xf]
    %v3409 = vld [vmem:[%s3402 + $0x18] sm:$0xf]
    %v3410 = vld [vmem:[%s3402 + $0x1c] sm:$0xf]
    %v3411 = vld [vmem:[%s3402 + $0x20] sm:$0xf]
    %v3412 = vld [vmem:[%s3402 + $0x24] sm:$0xf]
    %v3413 = vld [vmem:[%s3402 + $0x28] sm:$0xf]
    %v3414 = vld [vmem:[%s3402 + $0x2c] sm:$0xf]
    %v3415 = vld [vmem:[%s3402 + $0x30] sm:$0xf]
    %v3416 = vld [vmem:[%s3402 + $0x34] sm:$0xf]
    %v3417 = vld [vmem:[%s3402 + $0x38] sm:$0xf]
    %v3418 = vld [vmem:[%s3402 + $0x3c] sm:$0xf]
    %v3421 = vunpack.c.l.b16 %v3400
    %v3422 = vunpack.c.l.b16 %v3401
    %v3423 = vrot.slane %v3421, 4
    %v3424 = vrot.slane %v3422, 3
    %v3425 = vsel %vm133, %v3424, %v3423
    %v3426 = vpack.c.b16 %v3425, %v3425
    %v3444 = vunpack.c.l.b16 %v3403
    %v3445 = vunpack.c.l.b16 %v3404
    %v3446 = vunpack.c.l.b16 %v3405
    %v3447 = vunpack.c.l.b16 %v3406
    %v3448 = vunpack.c.l.b16 %v3407
    %v3449 = vunpack.c.l.b16 %v3408
    %v3450 = vunpack.c.l.b16 %v3409
    %v3451 = vunpack.c.l.b16 %v3410
    %v3452 = vunpack.c.l.b16 %v3411
    %v3453 = vunpack.c.l.b16 %v3412
    %v3454 = vunpack.c.l.b16 %v3413
    %v3455 = vunpack.c.l.b16 %v3414
    %v3456 = vunpack.c.l.b16 %v3415
    %v3457 = vunpack.c.l.b16 %v3416
    %v3458 = vunpack.c.l.b16 %v3417
    %v3459 = vunpack.c.l.b16 %v3418
    %v3460 = vpack.c.b16 %v3445, %v3444
    %v3461 = vpack.c.b16 %v3447, %v3446
    %v3462 = vpack.c.b16 %v3449, %v3448
    %v3463 = vpack.c.b16 %v3451, %v3450
    %v3464 = vpack.c.b16 %v3453, %v3452
    %v3465 = vpack.c.b16 %v3455, %v3454
    %v3466 = vpack.c.b16 %v3457, %v3456
    %v3467 = vpack.c.b16 %v3459, %v3458
    %3476 = vmatpush.bf16.msra.mxu0 %v3467
    %3477 = vmatpush.bf16.msra.mxu0 %v3466
    %3478 = vmatpush.bf16.msra.mxu0 %v3465
    %3479 = vmatpush.bf16.msra.mxu0 %v3464
    %3480 = vmatpush.bf16.msra.mxu0 %v3463
    %3481 = vmatpush.bf16.msra.mxu0 %v3462
    %3482 = vmatpush.bf16.msra.mxu0 %v3461
    %3483 = vmatpush.bf16.msra.mxu0 %v3460
    %3484 = vmatmul.bf16.gmra.mxu0 %v3426
    %v3485 = vpop.f32.mrf.mxu0
    %v3486 = vadd.f32 0.0, %v3485
    %v3487 = vpop.f32.mrf.mxu0
    %3488 = vdwg.mxu0
    %v3489 = vadd.f32 %v3365, %v3486
    %s3490 = scalar_lea.vmem %s0, 64
    %v3491 = vld [vmem:[%s3490] sm:$0x1]
    %v3492 = vld [vmem:[%s3490 + $0x70] sm:$0x1]
    %v3493 = vunpack.c.l.bf16 %v3491
    %v3494 = vunpack.c.l.bf16 %v3492
    %v3497 = vrot.slane %v3493, 1
    %v3498 = vrot.slane %v3494, 1
    %v3501 = vmax.f32 %v3493, %v3497
    %v3502 = vmax.f32 %v3494, %v3498
    %v3503 = vpack.c.bf16 %v3501, %v3501
    %v3504 = vpack.c.bf16 %v3502, %v3502
    %s3505 = scalar_lea.vmem %s0, 72
    %v3506 = vld [vmem:[%s3505] sm:$0x1]
    %v3507 = vld [vmem:[%s3505 + $0x70] sm:$0x1]
    %v3508 = vunpack.c.l.bf16 %v3506
    %v3509 = vunpack.c.l.bf16 %v3507
    %v3512 = vrot.slane %v3508, 1
    %v3513 = vrot.slane %v3509, 1
    %v3516 = vmax.f32 %v3508, %v3512
    %v3517 = vmax.f32 %v3509, %v3513
    %v3518 = vpack.c.bf16 %v3516, %v3516
    %v3519 = vpack.c.bf16 %v3517, %v3517
    %v3520 = vunpack.c.l.bf16 %v3503
    %v3521 = vunpack.c.l.bf16 %v3504
    %v3522 = vunpack.c.l.bf16 %v3518
    %v3523 = vunpack.c.l.bf16 %v3519
    %v3524 = vmax.f32 %v3520, %v3522
    %v3525 = vmax.f32 %v3521, %v3523
    %v3526 = vpack.c.bf16 %v3524, %v3524
    %v3527 = vpack.c.bf16 %v3525, %v3525
    %s3528 = scalar_lea.vmem %s1, 1792
    %v3529 = vld [vmem:[%s3528] sm:$0xf]
    %v3530 = vld [vmem:[%s3528 + $0x4] sm:$0xf]
    %v3531 = vld [vmem:[%s3528 + $0x8] sm:$0xf]
    %v3532 = vld [vmem:[%s3528 + $0xc] sm:$0xf]
    %v3533 = vld [vmem:[%s3528 + $0x10] sm:$0xf]
    %v3534 = vld [vmem:[%s3528 + $0x14] sm:$0xf]
    %v3535 = vld [vmem:[%s3528 + $0x18] sm:$0xf]
    %v3536 = vld [vmem:[%s3528 + $0x1c] sm:$0xf]
    %v3537 = vld [vmem:[%s3528 + $0x20] sm:$0xf]
    %v3538 = vld [vmem:[%s3528 + $0x24] sm:$0xf]
    %v3539 = vld [vmem:[%s3528 + $0x28] sm:$0xf]
    %v3540 = vld [vmem:[%s3528 + $0x2c] sm:$0xf]
    %v3541 = vld [vmem:[%s3528 + $0x30] sm:$0xf]
    %v3542 = vld [vmem:[%s3528 + $0x34] sm:$0xf]
    %v3543 = vld [vmem:[%s3528 + $0x38] sm:$0xf]
    %v3544 = vld [vmem:[%s3528 + $0x3c] sm:$0xf]
    %v3547 = vunpack.c.l.b16 %v3526
    %v3548 = vunpack.c.l.b16 %v3527
    %v3549 = vrot.slane %v3548, 7
    %v3550 = vsel %vm133, %v3549, %v3547
    %v3551 = vpack.c.b16 %v3550, %v3550
    %v3569 = vunpack.c.l.b16 %v3529
    %v3570 = vunpack.c.l.b16 %v3530
    %v3571 = vunpack.c.l.b16 %v3531
    %v3572 = vunpack.c.l.b16 %v3532
    %v3573 = vunpack.c.l.b16 %v3533
    %v3574 = vunpack.c.l.b16 %v3534
    %v3575 = vunpack.c.l.b16 %v3535
    %v3576 = vunpack.c.l.b16 %v3536
    %v3577 = vunpack.c.l.b16 %v3537
    %v3578 = vunpack.c.l.b16 %v3538
    %v3579 = vunpack.c.l.b16 %v3539
    %v3580 = vunpack.c.l.b16 %v3540
    %v3581 = vunpack.c.l.b16 %v3541
    %v3582 = vunpack.c.l.b16 %v3542
    %v3583 = vunpack.c.l.b16 %v3543
    %v3584 = vunpack.c.l.b16 %v3544
    %v3585 = vpack.c.b16 %v3570, %v3569
    %v3586 = vpack.c.b16 %v3572, %v3571
    %v3587 = vpack.c.b16 %v3574, %v3573
    %v3588 = vpack.c.b16 %v3576, %v3575
    %v3589 = vpack.c.b16 %v3578, %v3577
    %v3590 = vpack.c.b16 %v3580, %v3579
    %v3591 = vpack.c.b16 %v3582, %v3581
    %v3592 = vpack.c.b16 %v3584, %v3583
    %3601 = vmatpush.bf16.msra.mxu0 %v3592
    %3602 = vmatpush.bf16.msra.mxu0 %v3591
    %3603 = vmatpush.bf16.msra.mxu0 %v3590
    %3604 = vmatpush.bf16.msra.mxu0 %v3589
    %3605 = vmatpush.bf16.msra.mxu0 %v3588
    %3606 = vmatpush.bf16.msra.mxu0 %v3587
    %3607 = vmatpush.bf16.msra.mxu0 %v3586
    %3608 = vmatpush.bf16.msra.mxu0 %v3585
    %3609 = vmatmul.bf16.gmra.mxu0 %v3551
    %v3610 = vpop.f32.mrf.mxu0
    %v3611 = vadd.f32 0.0, %v3610
    %v3612 = vpop.f32.mrf.mxu0
    %3613 = vdwg.mxu0
    %v3614 = vadd.f32 %v3489, %v3611
    %v3615 = vld [vmem:[%s3490] sm:$0x2]
    %v3616 = vld [vmem:[%s3490 + $0x70] sm:$0x2]
    %v3617 = vunpack.c.l.bf16 %v3615
    %v3618 = vunpack.c.l.bf16 %v3616
    %v3621 = vrot.slane %v3617, 1
    %v3622 = vrot.slane %v3618, 1
    %v3625 = vmax.f32 %v3617, %v3621
    %v3626 = vmax.f32 %v3618, %v3622
    %v3627 = vpack.c.bf16 %v3625, %v3625
    %v3628 = vpack.c.bf16 %v3626, %v3626
    %v3629 = vld [vmem:[%s3505] sm:$0x2]
    %v3630 = vld [vmem:[%s3505 + $0x70] sm:$0x2]
    %v3631 = vunpack.c.l.bf16 %v3629
    %v3632 = vunpack.c.l.bf16 %v3630
    %v3635 = vrot.slane %v3631, 1
    %v3636 = vrot.slane %v3632, 1
    %v3639 = vmax.f32 %v3631, %v3635
    %v3640 = vmax.f32 %v3632, %v3636
    %v3641 = vpack.c.bf16 %v3639, %v3639
    %v3642 = vpack.c.bf16 %v3640, %v3640
    %v3643 = vunpack.c.l.bf16 %v3627
    %v3644 = vunpack.c.l.bf16 %v3628
    %v3645 = vunpack.c.l.bf16 %v3641
    %v3646 = vunpack.c.l.bf16 %v3642
    %v3647 = vmax.f32 %v3643, %v3645
    %v3648 = vmax.f32 %v3644, %v3646
    %v3649 = vpack.c.bf16 %v3647, %v3647
    %v3650 = vpack.c.bf16 %v3648, %v3648
    %s3651 = scalar_lea.vmem %s1, 1856
    %v3652 = vld [vmem:[%s3651] sm:$0xf]
    %v3653 = vld [vmem:[%s3651 + $0x4] sm:$0xf]
    %v3654 = vld [vmem:[%s3651 + $0x8] sm:$0xf]
    %v3655 = vld [vmem:[%s3651 + $0xc] sm:$0xf]
    %v3656 = vld [vmem:[%s3651 + $0x10] sm:$0xf]
    %v3657 = vld [vmem:[%s3651 + $0x14] sm:$0xf]
    %v3658 = vld [vmem:[%s3651 + $0x18] sm:$0xf]
    %v3659 = vld [vmem:[%s3651 + $0x1c] sm:$0xf]
    %v3660 = vld [vmem:[%s3651 + $0x20] sm:$0xf]
    %v3661 = vld [vmem:[%s3651 + $0x24] sm:$0xf]
    %v3662 = vld [vmem:[%s3651 + $0x28] sm:$0xf]
    %v3663 = vld [vmem:[%s3651 + $0x2c] sm:$0xf]
    %v3664 = vld [vmem:[%s3651 + $0x30] sm:$0xf]
    %v3665 = vld [vmem:[%s3651 + $0x34] sm:$0xf]
    %v3666 = vld [vmem:[%s3651 + $0x38] sm:$0xf]
    %v3667 = vld [vmem:[%s3651 + $0x3c] sm:$0xf]
    %v3670 = vunpack.c.l.b16 %v3649
    %v3671 = vunpack.c.l.b16 %v3650
    %v3672 = vrot.slane %v3670, 2
    %v3673 = vrot.slane %v3671, 1
    %v3674 = vsel %vm133, %v3673, %v3672
    %v3675 = vpack.c.b16 %v3674, %v3674
    %v3693 = vunpack.c.l.b16 %v3652
    %v3694 = vunpack.c.l.b16 %v3653
    %v3695 = vunpack.c.l.b16 %v3654
    %v3696 = vunpack.c.l.b16 %v3655
    %v3697 = vunpack.c.l.b16 %v3656
    %v3698 = vunpack.c.l.b16 %v3657
    %v3699 = vunpack.c.l.b16 %v3658
    %v3700 = vunpack.c.l.b16 %v3659
    %v3701 = vunpack.c.l.b16 %v3660
    %v3702 = vunpack.c.l.b16 %v3661
    %v3703 = vunpack.c.l.b16 %v3662
    %v3704 = vunpack.c.l.b16 %v3663
    %v3705 = vunpack.c.l.b16 %v3664
    %v3706 = vunpack.c.l.b16 %v3665
    %v3707 = vunpack.c.l.b16 %v3666
    %v3708 = vunpack.c.l.b16 %v3667
    %v3709 = vpack.c.b16 %v3694, %v3693
    %v3710 = vpack.c.b16 %v3696, %v3695
    %v3711 = vpack.c.b16 %v3698, %v3697
    %v3712 = vpack.c.b16 %v3700, %v3699
    %v3713 = vpack.c.b16 %v3702, %v3701
    %v3714 = vpack.c.b16 %v3704, %v3703
    %v3715 = vpack.c.b16 %v3706, %v3705
    %v3716 = vpack.c.b16 %v3708, %v3707
    %3725 = vmatpush.bf16.msra.mxu0 %v3716
    %3726 = vmatpush.bf16.msra.mxu0 %v3715
    %3727 = vmatpush.bf16.msra.mxu0 %v3714
    %3728 = vmatpush.bf16.msra.mxu0 %v3713
    %3729 = vmatpush.bf16.msra.mxu0 %v3712
    %3730 = vmatpush.bf16.msra.mxu0 %v3711
    %3731 = vmatpush.bf16.msra.mxu0 %v3710
    %3732 = vmatpush.bf16.msra.mxu0 %v3709
    %3733 = vmatmul.bf16.gmra.mxu0 %v3675
    %v3734 = vpop.f32.mrf.mxu0
    %v3735 = vadd.f32 0.0, %v3734
    %v3736 = vpop.f32.mrf.mxu0
    %3737 = vdwg.mxu0
    %v3738 = vadd.f32 %v3614, %v3735
    %v3739 = vld [vmem:[%s3490] sm:$0x4]
    %v3740 = vld [vmem:[%s3490 + $0x70] sm:$0x4]
    %v3741 = vunpack.c.l.bf16 %v3739
    %v3742 = vunpack.c.l.bf16 %v3740
    %v3745 = vrot.slane %v3741, 1
    %v3746 = vrot.slane %v3742, 1
    %v3749 = vmax.f32 %v3741, %v3745
    %v3750 = vmax.f32 %v3742, %v3746
    %v3751 = vpack.c.bf16 %v3749, %v3749
    %v3752 = vpack.c.bf16 %v3750, %v3750
    %v3753 = vld [vmem:[%s3505] sm:$0x4]
    %v3754 = vld [vmem:[%s3505 + $0x70] sm:$0x4]
    %v3755 = vunpack.c.l.bf16 %v3753
    %v3756 = vunpack.c.l.bf16 %v3754
    %v3759 = vrot.slane %v3755, 1
    %v3760 = vrot.slane %v3756, 1
    %v3763 = vmax.f32 %v3755, %v3759
    %v3764 = vmax.f32 %v3756, %v3760
    %v3765 = vpack.c.bf16 %v3763, %v3763
    %v3766 = vpack.c.bf16 %v3764, %v3764
    %v3767 = vunpack.c.l.bf16 %v3751
    %v3768 = vunpack.c.l.bf16 %v3752
    %v3769 = vunpack.c.l.bf16 %v3765
    %v3770 = vunpack.c.l.bf16 %v3766
    %v3771 = vmax.f32 %v3767, %v3769
    %v3772 = vmax.f32 %v3768, %v3770
    %v3773 = vpack.c.bf16 %v3771, %v3771
    %v3774 = vpack.c.bf16 %v3772, %v3772
    %s3775 = scalar_lea.vmem %s1, 1920
    %v3776 = vld [vmem:[%s3775] sm:$0xf]
    %v3777 = vld [vmem:[%s3775 + $0x4] sm:$0xf]
    %v3778 = vld [vmem:[%s3775 + $0x8] sm:$0xf]
    %v3779 = vld [vmem:[%s3775 + $0xc] sm:$0xf]
    %v3780 = vld [vmem:[%s3775 + $0x10] sm:$0xf]
    %v3781 = vld [vmem:[%s3775 + $0x14] sm:$0xf]
    %v3782 = vld [vmem:[%s3775 + $0x18] sm:$0xf]
    %v3783 = vld [vmem:[%s3775 + $0x1c] sm:$0xf]
    %v3784 = vld [vmem:[%s3775 + $0x20] sm:$0xf]
    %v3785 = vld [vmem:[%s3775 + $0x24] sm:$0xf]
    %v3786 = vld [vmem:[%s3775 + $0x28] sm:$0xf]
    %v3787 = vld [vmem:[%s3775 + $0x2c] sm:$0xf]
    %v3788 = vld [vmem:[%s3775 + $0x30] sm:$0xf]
    %v3789 = vld [vmem:[%s3775 + $0x34] sm:$0xf]
    %v3790 = vld [vmem:[%s3775 + $0x38] sm:$0xf]
    %v3791 = vld [vmem:[%s3775 + $0x3c] sm:$0xf]
    %v3794 = vunpack.c.l.b16 %v3773
    %v3795 = vunpack.c.l.b16 %v3774
    %v3796 = vrot.slane %v3794, 4
    %v3797 = vrot.slane %v3795, 3
    %v3798 = vsel %vm133, %v3797, %v3796
    %v3799 = vpack.c.b16 %v3798, %v3798
    %v3817 = vunpack.c.l.b16 %v3776
    %v3818 = vunpack.c.l.b16 %v3777
    %v3819 = vunpack.c.l.b16 %v3778
    %v3820 = vunpack.c.l.b16 %v3779
    %v3821 = vunpack.c.l.b16 %v3780
    %v3822 = vunpack.c.l.b16 %v3781
    %v3823 = vunpack.c.l.b16 %v3782
    %v3824 = vunpack.c.l.b16 %v3783
    %v3825 = vunpack.c.l.b16 %v3784
    %v3826 = vunpack.c.l.b16 %v3785
    %v3827 = vunpack.c.l.b16 %v3786
    %v3828 = vunpack.c.l.b16 %v3787
    %v3829 = vunpack.c.l.b16 %v3788
    %v3830 = vunpack.c.l.b16 %v3789
    %v3831 = vunpack.c.l.b16 %v3790
    %v3832 = vunpack.c.l.b16 %v3791
    %v3833 = vpack.c.b16 %v3818, %v3817
    %v3834 = vpack.c.b16 %v3820, %v3819
    %v3835 = vpack.c.b16 %v3822, %v3821
    %v3836 = vpack.c.b16 %v3824, %v3823
    %v3837 = vpack.c.b16 %v3826, %v3825
    %v3838 = vpack.c.b16 %v3828, %v3827
    %v3839 = vpack.c.b16 %v3830, %v3829
    %v3840 = vpack.c.b16 %v3832, %v3831
    %3849 = vmatpush.bf16.msra.mxu0 %v3840
    %3850 = vmatpush.bf16.msra.mxu0 %v3839
    %3851 = vmatpush.bf16.msra.mxu0 %v3838
    %3852 = vmatpush.bf16.msra.mxu0 %v3837
    %3853 = vmatpush.bf16.msra.mxu0 %v3836
    %3854 = vmatpush.bf16.msra.mxu0 %v3835
    %3855 = vmatpush.bf16.msra.mxu0 %v3834
    %3856 = vmatpush.bf16.msra.mxu0 %v3833
    %3857 = vmatmul.bf16.gmra.mxu0 %v3799
    %v3858 = vpop.f32.mrf.mxu0
    %v3859 = vadd.f32 0.0, %v3858
    %v3860 = vpop.f32.mrf.mxu0
    %3861 = vdwg.mxu0
    %v3862 = vadd.f32 %v3738, %v3859
    %v3863 = vld [vmem:[%s3490] sm:$0x8]
    %v3864 = vld [vmem:[%s3490 + $0x70] sm:$0x8]
    %v3865 = vunpack.c.l.bf16 %v3863
    %v3866 = vunpack.c.l.bf16 %v3864
    %v3869 = vrot.slane %v3865, 1
    %v3870 = vrot.slane %v3866, 1
    %v3873 = vmax.f32 %v3865, %v3869
    %v3874 = vmax.f32 %v3866, %v3870
    %v3875 = vpack.c.bf16 %v3873, %v3873
    %v3876 = vpack.c.bf16 %v3874, %v3874
    %v3877 = vld [vmem:[%s3505] sm:$0x8]
    %v3878 = vld [vmem:[%s3505 + $0x70] sm:$0x8]
    %v3879 = vunpack.c.l.bf16 %v3877
    %v3880 = vunpack.c.l.bf16 %v3878
    %v3883 = vrot.slane %v3879, 1
    %v3884 = vrot.slane %v3880, 1
    %v3887 = vmax.f32 %v3879, %v3883
    %v3888 = vmax.f32 %v3880, %v3884
    %v3889 = vpack.c.bf16 %v3887, %v3887
    %v3890 = vpack.c.bf16 %v3888, %v3888
    %v3891 = vunpack.c.l.bf16 %v3875
    %v3892 = vunpack.c.l.bf16 %v3876
    %v3893 = vunpack.c.l.bf16 %v3889
    %v3894 = vunpack.c.l.bf16 %v3890
    %v3895 = vmax.f32 %v3891, %v3893
    %v3896 = vmax.f32 %v3892, %v3894
    %v3897 = vpack.c.bf16 %v3895, %v3895
    %v3898 = vpack.c.bf16 %v3896, %v3896
    %s3899 = scalar_lea.vmem %s1, 1984
    %v3900 = vld [vmem:[%s3899] sm:$0xf]
    %v3901 = vld [vmem:[%s3899 + $0x4] sm:$0xf]
    %v3902 = vld [vmem:[%s3899 + $0x8] sm:$0xf]
    %v3903 = vld [vmem:[%s3899 + $0xc] sm:$0xf]
    %v3904 = vld [vmem:[%s3899 + $0x10] sm:$0xf]
    %v3905 = vld [vmem:[%s3899 + $0x14] sm:$0xf]
    %v3906 = vld [vmem:[%s3899 + $0x18] sm:$0xf]
    %v3907 = vld [vmem:[%s3899 + $0x1c] sm:$0xf]
    %v3908 = vld [vmem:[%s3899 + $0x20] sm:$0xf]
    %v3909 = vld [vmem:[%s3899 + $0x24] sm:$0xf]
    %v3910 = vld [vmem:[%s3899 + $0x28] sm:$0xf]
    %v3911 = vld [vmem:[%s3899 + $0x2c] sm:$0xf]
    %v3912 = vld [vmem:[%s3899 + $0x30] sm:$0xf]
    %v3913 = vld [vmem:[%s3899 + $0x34] sm:$0xf]
    %v3914 = vld [vmem:[%s3899 + $0x38] sm:$0xf]
    %v3915 = vld [vmem:[%s3899 + $0x3c] sm:$0xf]
    %v3918 = vunpack.c.l.b16 %v3897
    %v3919 = vunpack.c.l.b16 %v3898
    %v3920 = vrot.slane %v3918, 6
    %v3921 = vrot.slane %v3919, 5
    %v3922 = vsel %vm133, %v3921, %v3920
    %v3923 = vpack.c.b16 %v3922, %v3922
    %v3941 = vunpack.c.l.b16 %v3900
    %v3942 = vunpack.c.l.b16 %v3901
    %v3943 = vunpack.c.l.b16 %v3902
    %v3944 = vunpack.c.l.b16 %v3903
    %v3945 = vunpack.c.l.b16 %v3904
    %v3946 = vunpack.c.l.b16 %v3905
    %v3947 = vunpack.c.l.b16 %v3906
    %v3948 = vunpack.c.l.b16 %v3907
    %v3949 = vunpack.c.l.b16 %v3908
    %v3950 = vunpack.c.l.b16 %v3909
    %v3951 = vunpack.c.l.b16 %v3910
    %v3952 = vunpack.c.l.b16 %v3911
    %v3953 = vunpack.c.l.b16 %v3912
    %v3954 = vunpack.c.l.b16 %v3913
    %v3955 = vunpack.c.l.b16 %v3914
    %v3956 = vunpack.c.l.b16 %v3915
    %v3957 = vpack.c.b16 %v3942, %v3941
    %v3958 = vpack.c.b16 %v3944, %v3943
    %v3959 = vpack.c.b16 %v3946, %v3945
    %v3960 = vpack.c.b16 %v3948, %v3947
    %v3961 = vpack.c.b16 %v3950, %v3949
    %v3962 = vpack.c.b16 %v3952, %v3951
    %v3963 = vpack.c.b16 %v3954, %v3953
    %v3964 = vpack.c.b16 %v3956, %v3955
    %3973 = vmatpush.bf16.msra.mxu0 %v3964
    %3974 = vmatpush.bf16.msra.mxu0 %v3963
    %3975 = vmatpush.bf16.msra.mxu0 %v3962
    %3976 = vmatpush.bf16.msra.mxu0 %v3961
    %3977 = vmatpush.bf16.msra.mxu0 %v3960
    %3978 = vmatpush.bf16.msra.mxu0 %v3959
    %3979 = vmatpush.bf16.msra.mxu0 %v3958
    %3980 = vmatpush.bf16.msra.mxu0 %v3957
    %3981 = vmatmul.bf16.gmra.mxu0 %v3923
    %v3982 = vpop.f32.mrf.mxu0
    %v3983 = vadd.f32 0.0, %v3982
    %v3984 = vpop.f32.mrf.mxu0
    %3985 = vdwg.mxu0
    %v3986 = vadd.f32 %v3862, %v3983
    %v3987 = vld [vmem:[%s3490 + $0x4] sm:$0x1]
    %v3988 = vld [vmem:[%s3490 + $0x74] sm:$0x1]
    %v3989 = vunpack.c.l.bf16 %v3987
    %v3990 = vunpack.c.l.bf16 %v3988
    %v3993 = vrot.slane %v3989, 1
    %v3994 = vrot.slane %v3990, 1
    %v3997 = vmax.f32 %v3989, %v3993
    %v3998 = vmax.f32 %v3990, %v3994
    %v3999 = vpack.c.bf16 %v3997, %v3997
    %v4000 = vpack.c.bf16 %v3998, %v3998
    %v4001 = vld [vmem:[%s3505 + $0x4] sm:$0x1]
    %v4002 = vld [vmem:[%s3505 + $0x74] sm:$0x1]
    %v4003 = vunpack.c.l.bf16 %v4001
    %v4004 = vunpack.c.l.bf16 %v4002
    %v4007 = vrot.slane %v4003, 1
    %v4008 = vrot.slane %v4004, 1
    %v4011 = vmax.f32 %v4003, %v4007
    %v4012 = vmax.f32 %v4004, %v4008
    %v4013 = vpack.c.bf16 %v4011, %v4011
    %v4014 = vpack.c.bf16 %v4012, %v4012
    %v4015 = vunpack.c.l.bf16 %v3999
    %v4016 = vunpack.c.l.bf16 %v4000
    %v4017 = vunpack.c.l.bf16 %v4013
    %v4018 = vunpack.c.l.bf16 %v4014
    %v4019 = vmax.f32 %v4015, %v4017
    %v4020 = vmax.f32 %v4016, %v4018
    %v4021 = vpack.c.bf16 %v4019, %v4019
    %v4022 = vpack.c.bf16 %v4020, %v4020
    %s4023 = scalar_lea.vmem %s1, 2048
    %v4024 = vld [vmem:[%s4023] sm:$0xf]
    %v4025 = vld [vmem:[%s4023 + $0x4] sm:$0xf]
    %v4026 = vld [vmem:[%s4023 + $0x8] sm:$0xf]
    %v4027 = vld [vmem:[%s4023 + $0xc] sm:$0xf]
    %v4028 = vld [vmem:[%s4023 + $0x10] sm:$0xf]
    %v4029 = vld [vmem:[%s4023 + $0x14] sm:$0xf]
    %v4030 = vld [vmem:[%s4023 + $0x18] sm:$0xf]
    %v4031 = vld [vmem:[%s4023 + $0x1c] sm:$0xf]
    %v4032 = vld [vmem:[%s4023 + $0x20] sm:$0xf]
    %v4033 = vld [vmem:[%s4023 + $0x24] sm:$0xf]
    %v4034 = vld [vmem:[%s4023 + $0x28] sm:$0xf]
    %v4035 = vld [vmem:[%s4023 + $0x2c] sm:$0xf]
    %v4036 = vld [vmem:[%s4023 + $0x30] sm:$0xf]
    %v4037 = vld [vmem:[%s4023 + $0x34] sm:$0xf]
    %v4038 = vld [vmem:[%s4023 + $0x38] sm:$0xf]
    %v4039 = vld [vmem:[%s4023 + $0x3c] sm:$0xf]
    %v4042 = vunpack.c.l.b16 %v4021
    %v4043 = vunpack.c.l.b16 %v4022
    %v4044 = vrot.slane %v4043, 7
    %v4045 = vsel %vm133, %v4044, %v4042
    %v4046 = vpack.c.b16 %v4045, %v4045
    %v4064 = vunpack.c.l.b16 %v4024
    %v4065 = vunpack.c.l.b16 %v4025
    %v4066 = vunpack.c.l.b16 %v4026
    %v4067 = vunpack.c.l.b16 %v4027
    %v4068 = vunpack.c.l.b16 %v4028
    %v4069 = vunpack.c.l.b16 %v4029
    %v4070 = vunpack.c.l.b16 %v4030
    %v4071 = vunpack.c.l.b16 %v4031
    %v4072 = vunpack.c.l.b16 %v4032
    %v4073 = vunpack.c.l.b16 %v4033
    %v4074 = vunpack.c.l.b16 %v4034
    %v4075 = vunpack.c.l.b16 %v4035
    %v4076 = vunpack.c.l.b16 %v4036
    %v4077 = vunpack.c.l.b16 %v4037
    %v4078 = vunpack.c.l.b16 %v4038
    %v4079 = vunpack.c.l.b16 %v4039
    %v4080 = vpack.c.b16 %v4065, %v4064
    %v4081 = vpack.c.b16 %v4067, %v4066
    %v4082 = vpack.c.b16 %v4069, %v4068
    %v4083 = vpack.c.b16 %v4071, %v4070
    %v4084 = vpack.c.b16 %v4073, %v4072
    %v4085 = vpack.c.b16 %v4075, %v4074
    %v4086 = vpack.c.b16 %v4077, %v4076
    %v4087 = vpack.c.b16 %v4079, %v4078
    %4096 = vmatpush.bf16.msra.mxu0 %v4087
    %4097 = vmatpush.bf16.msra.mxu0 %v4086
    %4098 = vmatpush.bf16.msra.mxu0 %v4085
    %4099 = vmatpush.bf16.msra.mxu0 %v4084
    %4100 = vmatpush.bf16.msra.mxu0 %v4083
    %4101 = vmatpush.bf16.msra.mxu0 %v4082
    %4102 = vmatpush.bf16.msra.mxu0 %v4081
    %4103 = vmatpush.bf16.msra.mxu0 %v4080
    %4104 = vmatmul.bf16.gmra.mxu0 %v4046
    %v4105 = vpop.f32.mrf.mxu0
    %v4106 = vadd.f32 0.0, %v4105
    %v4107 = vpop.f32.mrf.mxu0
    %4108 = vdwg.mxu0
    %v4109 = vadd.f32 %v3986, %v4106
    %v4110 = vld [vmem:[%s3490 + $0x4] sm:$0x2]
    %v4111 = vld [vmem:[%s3490 + $0x74] sm:$0x2]
    %v4112 = vunpack.c.l.bf16 %v4110
    %v4113 = vunpack.c.l.bf16 %v4111
    %v4116 = vrot.slane %v4112, 1
    %v4117 = vrot.slane %v4113, 1
    %v4120 = vmax.f32 %v4112, %v4116
    %v4121 = vmax.f32 %v4113, %v4117
    %v4122 = vpack.c.bf16 %v4120, %v4120
    %v4123 = vpack.c.bf16 %v4121, %v4121
    %v4124 = vld [vmem:[%s3505 + $0x4] sm:$0x2]
    %v4125 = vld [vmem:[%s3505 + $0x74] sm:$0x2]
    %v4126 = vunpack.c.l.bf16 %v4124
    %v4127 = vunpack.c.l.bf16 %v4125
    %v4130 = vrot.slane %v4126, 1
    %v4131 = vrot.slane %v4127, 1
    %v4134 = vmax.f32 %v4126, %v4130
    %v4135 = vmax.f32 %v4127, %v4131
    %v4136 = vpack.c.bf16 %v4134, %v4134
    %v4137 = vpack.c.bf16 %v4135, %v4135
    %v4138 = vunpack.c.l.bf16 %v4122
    %v4139 = vunpack.c.l.bf16 %v4123
    %v4140 = vunpack.c.l.bf16 %v4136
    %v4141 = vunpack.c.l.bf16 %v4137
    %v4142 = vmax.f32 %v4138, %v4140
    %v4143 = vmax.f32 %v4139, %v4141
    %v4144 = vpack.c.bf16 %v4142, %v4142
    %v4145 = vpack.c.bf16 %v4143, %v4143
    %s4146 = scalar_lea.vmem %s1, 2112
    %v4147 = vld [vmem:[%s4146] sm:$0xf]
    %v4148 = vld [vmem:[%s4146 + $0x4] sm:$0xf]
    %v4149 = vld [vmem:[%s4146 + $0x8] sm:$0xf]
    %v4150 = vld [vmem:[%s4146 + $0xc] sm:$0xf]
    %v4151 = vld [vmem:[%s4146 + $0x10] sm:$0xf]
    %v4152 = vld [vmem:[%s4146 + $0x14] sm:$0xf]
    %v4153 = vld [vmem:[%s4146 + $0x18] sm:$0xf]
    %v4154 = vld [vmem:[%s4146 + $0x1c] sm:$0xf]
    %v4155 = vld [vmem:[%s4146 + $0x20] sm:$0xf]
    %v4156 = vld [vmem:[%s4146 + $0x24] sm:$0xf]
    %v4157 = vld [vmem:[%s4146 + $0x28] sm:$0xf]
    %v4158 = vld [vmem:[%s4146 + $0x2c] sm:$0xf]
    %v4159 = vld [vmem:[%s4146 + $0x30] sm:$0xf]
    %v4160 = vld [vmem:[%s4146 + $0x34] sm:$0xf]
    %v4161 = vld [vmem:[%s4146 + $0x38] sm:$0xf]
    %v4162 = vld [vmem:[%s4146 + $0x3c] sm:$0xf]
    %v4165 = vunpack.c.l.b16 %v4144
    %v4166 = vunpack.c.l.b16 %v4145
    %v4167 = vrot.slane %v4165, 2
    %v4168 = vrot.slane %v4166, 1
    %v4169 = vsel %vm133, %v4168, %v4167
    %v4170 = vpack.c.b16 %v4169, %v4169
    %v4188 = vunpack.c.l.b16 %v4147
    %v4189 = vunpack.c.l.b16 %v4148
    %v4190 = vunpack.c.l.b16 %v4149
    %v4191 = vunpack.c.l.b16 %v4150
    %v4192 = vunpack.c.l.b16 %v4151
    %v4193 = vunpack.c.l.b16 %v4152
    %v4194 = vunpack.c.l.b16 %v4153
    %v4195 = vunpack.c.l.b16 %v4154
    %v4196 = vunpack.c.l.b16 %v4155
    %v4197 = vunpack.c.l.b16 %v4156
    %v4198 = vunpack.c.l.b16 %v4157
    %v4199 = vunpack.c.l.b16 %v4158
    %v4200 = vunpack.c.l.b16 %v4159
    %v4201 = vunpack.c.l.b16 %v4160
    %v4202 = vunpack.c.l.b16 %v4161
    %v4203 = vunpack.c.l.b16 %v4162
    %v4204 = vpack.c.b16 %v4189, %v4188
    %v4205 = vpack.c.b16 %v4191, %v4190
    %v4206 = vpack.c.b16 %v4193, %v4192
    %v4207 = vpack.c.b16 %v4195, %v4194
    %v4208 = vpack.c.b16 %v4197, %v4196
    %v4209 = vpack.c.b16 %v4199, %v4198
    %v4210 = vpack.c.b16 %v4201, %v4200
    %v4211 = vpack.c.b16 %v4203, %v4202
    %4220 = vmatpush.bf16.msra.mxu0 %v4211
    %4221 = vmatpush.bf16.msra.mxu0 %v4210
    %4222 = vmatpush.bf16.msra.mxu0 %v4209
    %4223 = vmatpush.bf16.msra.mxu0 %v4208
    %4224 = vmatpush.bf16.msra.mxu0 %v4207
    %4225 = vmatpush.bf16.msra.mxu0 %v4206
    %4226 = vmatpush.bf16.msra.mxu0 %v4205
    %4227 = vmatpush.bf16.msra.mxu0 %v4204
    %4228 = vmatmul.bf16.gmra.mxu0 %v4170
    %v4229 = vpop.f32.mrf.mxu0
    %v4230 = vadd.f32 0.0, %v4229
    %v4231 = vpop.f32.mrf.mxu0
    %4232 = vdwg.mxu0
    %v4233 = vadd.f32 %v4109, %v4230
    %v4234 = vld [vmem:[%s3490 + $0x4] sm:$0x4]
    %v4235 = vld [vmem:[%s3490 + $0x74] sm:$0x4]
    %v4236 = vunpack.c.l.bf16 %v4234
    %v4237 = vunpack.c.l.bf16 %v4235
    %v4240 = vrot.slane %v4236, 1
    %v4241 = vrot.slane %v4237, 1
    %v4244 = vmax.f32 %v4236, %v4240
    %v4245 = vmax.f32 %v4237, %v4241
    %v4246 = vpack.c.bf16 %v4244, %v4244
    %v4247 = vpack.c.bf16 %v4245, %v4245
    %v4248 = vld [vmem:[%s3505 + $0x4] sm:$0x4]
    %v4249 = vld [vmem:[%s3505 + $0x74] sm:$0x4]
    %v4250 = vunpack.c.l.bf16 %v4248
    %v4251 = vunpack.c.l.bf16 %v4249
    %v4254 = vrot.slane %v4250, 1
    %v4255 = vrot.slane %v4251, 1
    %v4258 = vmax.f32 %v4250, %v4254
    %v4259 = vmax.f32 %v4251, %v4255
    %v4260 = vpack.c.bf16 %v4258, %v4258
    %v4261 = vpack.c.bf16 %v4259, %v4259
    %v4262 = vunpack.c.l.bf16 %v4246
    %v4263 = vunpack.c.l.bf16 %v4247
    %v4264 = vunpack.c.l.bf16 %v4260
    %v4265 = vunpack.c.l.bf16 %v4261
    %v4266 = vmax.f32 %v4262, %v4264
    %v4267 = vmax.f32 %v4263, %v4265
    %v4268 = vpack.c.bf16 %v4266, %v4266
    %v4269 = vpack.c.bf16 %v4267, %v4267
    %s4270 = scalar_lea.vmem %s1, 2176
    %v4271 = vld [vmem:[%s4270] sm:$0xf]
    %v4272 = vld [vmem:[%s4270 + $0x4] sm:$0xf]
    %v4273 = vld [vmem:[%s4270 + $0x8] sm:$0xf]
    %v4274 = vld [vmem:[%s4270 + $0xc] sm:$0xf]
    %v4275 = vld [vmem:[%s4270 + $0x10] sm:$0xf]
    %v4276 = vld [vmem:[%s4270 + $0x14] sm:$0xf]
    %v4277 = vld [vmem:[%s4270 + $0x18] sm:$0xf]
    %v4278 = vld [vmem:[%s4270 + $0x1c] sm:$0xf]
    %v4279 = vld [vmem:[%s4270 + $0x20] sm:$0xf]
    %v4280 = vld [vmem:[%s4270 + $0x24] sm:$0xf]
    %v4281 = vld [vmem:[%s4270 + $0x28] sm:$0xf]
    %v4282 = vld [vmem:[%s4270 + $0x2c] sm:$0xf]
    %v4283 = vld [vmem:[%s4270 + $0x30] sm:$0xf]
    %v4284 = vld [vmem:[%s4270 + $0x34] sm:$0xf]
    %v4285 = vld [vmem:[%s4270 + $0x38] sm:$0xf]
    %v4286 = vld [vmem:[%s4270 + $0x3c] sm:$0xf]
    %v4289 = vunpack.c.l.b16 %v4268
    %v4290 = vunpack.c.l.b16 %v4269
    %v4291 = vrot.slane %v4289, 4
    %v4292 = vrot.slane %v4290, 3
    %v4293 = vsel %vm133, %v4292, %v4291
    %v4294 = vpack.c.b16 %v4293, %v4293
    %v4312 = vunpack.c.l.b16 %v4271
    %v4313 = vunpack.c.l.b16 %v4272
    %v4314 = vunpack.c.l.b16 %v4273
    %v4315 = vunpack.c.l.b16 %v4274
    %v4316 = vunpack.c.l.b16 %v4275
    %v4317 = vunpack.c.l.b16 %v4276
    %v4318 = vunpack.c.l.b16 %v4277
    %v4319 = vunpack.c.l.b16 %v4278
    %v4320 = vunpack.c.l.b16 %v4279
    %v4321 = vunpack.c.l.b16 %v4280
    %v4322 = vunpack.c.l.b16 %v4281
    %v4323 = vunpack.c.l.b16 %v4282
    %v4324 = vunpack.c.l.b16 %v4283
    %v4325 = vunpack.c.l.b16 %v4284
    %v4326 = vunpack.c.l.b16 %v4285
    %v4327 = vunpack.c.l.b16 %v4286
    %v4328 = vpack.c.b16 %v4313, %v4312
    %v4329 = vpack.c.b16 %v4315, %v4314
    %v4330 = vpack.c.b16 %v4317, %v4316
    %v4331 = vpack.c.b16 %v4319, %v4318
    %v4332 = vpack.c.b16 %v4321, %v4320
    %v4333 = vpack.c.b16 %v4323, %v4322
    %v4334 = vpack.c.b16 %v4325, %v4324
    %v4335 = vpack.c.b16 %v4327, %v4326
    %4344 = vmatpush.bf16.msra.mxu0 %v4335
    %4345 = vmatpush.bf16.msra.mxu0 %v4334
    %4346 = vmatpush.bf16.msra.mxu0 %v4333
    %4347 = vmatpush.bf16.msra.mxu0 %v4332
    %4348 = vmatpush.bf16.msra.mxu0 %v4331
    %4349 = vmatpush.bf16.msra.mxu0 %v4330
    %4350 = vmatpush.bf16.msra.mxu0 %v4329
    %4351 = vmatpush.bf16.msra.mxu0 %v4328
    %4352 = vmatmul.bf16.gmra.mxu0 %v4294
    %v4353 = vpop.f32.mrf.mxu0
    %v4354 = vadd.f32 0.0, %v4353
    %v4355 = vpop.f32.mrf.mxu0
    %4356 = vdwg.mxu0
    %v4357 = vadd.f32 %v4233, %v4354
    %s4358 = scalar_lea.vmem %s0, 80
    %v4359 = vld [vmem:[%s4358] sm:$0x1]
    %v4360 = vld [vmem:[%s4358 + $0x70] sm:$0x1]
    %v4361 = vunpack.c.l.bf16 %v4359
    %v4362 = vunpack.c.l.bf16 %v4360
    %v4365 = vrot.slane %v4361, 1
    %v4366 = vrot.slane %v4362, 1
    %v4369 = vmax.f32 %v4361, %v4365
    %v4370 = vmax.f32 %v4362, %v4366
    %v4371 = vpack.c.bf16 %v4369, %v4369
    %v4372 = vpack.c.bf16 %v4370, %v4370
    %s4373 = scalar_lea.vmem %s0, 88
    %v4374 = vld [vmem:[%s4373] sm:$0x1]
    %v4375 = vld [vmem:[%s4373 + $0x70] sm:$0x1]
    %v4376 = vunpack.c.l.bf16 %v4374
    %v4377 = vunpack.c.l.bf16 %v4375
    %v4380 = vrot.slane %v4376, 1
    %v4381 = vrot.slane %v4377, 1
    %v4384 = vmax.f32 %v4376, %v4380
    %v4385 = vmax.f32 %v4377, %v4381
    %v4386 = vpack.c.bf16 %v4384, %v4384
    %v4387 = vpack.c.bf16 %v4385, %v4385
    %v4388 = vunpack.c.l.bf16 %v4371
    %v4389 = vunpack.c.l.bf16 %v4372
    %v4390 = vunpack.c.l.bf16 %v4386
    %v4391 = vunpack.c.l.bf16 %v4387
    %v4392 = vmax.f32 %v4388, %v4390
    %v4393 = vmax.f32 %v4389, %v4391
    %v4394 = vpack.c.bf16 %v4392, %v4392
    %v4395 = vpack.c.bf16 %v4393, %v4393
    %s4396 = scalar_lea.vmem %s1, 2240
    %v4397 = vld [vmem:[%s4396] sm:$0xf]
    %v4398 = vld [vmem:[%s4396 + $0x4] sm:$0xf]
    %v4399 = vld [vmem:[%s4396 + $0x8] sm:$0xf]
    %v4400 = vld [vmem:[%s4396 + $0xc] sm:$0xf]
    %v4401 = vld [vmem:[%s4396 + $0x10] sm:$0xf]
    %v4402 = vld [vmem:[%s4396 + $0x14] sm:$0xf]
    %v4403 = vld [vmem:[%s4396 + $0x18] sm:$0xf]
    %v4404 = vld [vmem:[%s4396 + $0x1c] sm:$0xf]
    %v4405 = vld [vmem:[%s4396 + $0x20] sm:$0xf]
    %v4406 = vld [vmem:[%s4396 + $0x24] sm:$0xf]
    %v4407 = vld [vmem:[%s4396 + $0x28] sm:$0xf]
    %v4408 = vld [vmem:[%s4396 + $0x2c] sm:$0xf]
    %v4409 = vld [vmem:[%s4396 + $0x30] sm:$0xf]
    %v4410 = vld [vmem:[%s4396 + $0x34] sm:$0xf]
    %v4411 = vld [vmem:[%s4396 + $0x38] sm:$0xf]
    %v4412 = vld [vmem:[%s4396 + $0x3c] sm:$0xf]
    %v4415 = vunpack.c.l.b16 %v4394
    %v4416 = vunpack.c.l.b16 %v4395
    %v4417 = vrot.slane %v4416, 7
    %v4418 = vsel %vm133, %v4417, %v4415
    %v4419 = vpack.c.b16 %v4418, %v4418
    %v4437 = vunpack.c.l.b16 %v4397
    %v4438 = vunpack.c.l.b16 %v4398
    %v4439 = vunpack.c.l.b16 %v4399
    %v4440 = vunpack.c.l.b16 %v4400
    %v4441 = vunpack.c.l.b16 %v4401
    %v4442 = vunpack.c.l.b16 %v4402
    %v4443 = vunpack.c.l.b16 %v4403
    %v4444 = vunpack.c.l.b16 %v4404
    %v4445 = vunpack.c.l.b16 %v4405
    %v4446 = vunpack.c.l.b16 %v4406
    %v4447 = vunpack.c.l.b16 %v4407
    %v4448 = vunpack.c.l.b16 %v4408
    %v4449 = vunpack.c.l.b16 %v4409
    %v4450 = vunpack.c.l.b16 %v4410
    %v4451 = vunpack.c.l.b16 %v4411
    %v4452 = vunpack.c.l.b16 %v4412
    %v4453 = vpack.c.b16 %v4438, %v4437
    %v4454 = vpack.c.b16 %v4440, %v4439
    %v4455 = vpack.c.b16 %v4442, %v4441
    %v4456 = vpack.c.b16 %v4444, %v4443
    %v4457 = vpack.c.b16 %v4446, %v4445
    %v4458 = vpack.c.b16 %v4448, %v4447
    %v4459 = vpack.c.b16 %v4450, %v4449
    %v4460 = vpack.c.b16 %v4452, %v4451
    %4469 = vmatpush.bf16.msra.mxu0 %v4460
    %4470 = vmatpush.bf16.msra.mxu0 %v4459
    %4471 = vmatpush.bf16.msra.mxu0 %v4458
    %4472 = vmatpush.bf16.msra.mxu0 %v4457
    %4473 = vmatpush.bf16.msra.mxu0 %v4456
    %4474 = vmatpush.bf16.msra.mxu0 %v4455
    %4475 = vmatpush.bf16.msra.mxu0 %v4454
    %4476 = vmatpush.bf16.msra.mxu0 %v4453
    %4477 = vmatmul.bf16.gmra.mxu0 %v4419
    %v4478 = vpop.f32.mrf.mxu0
    %v4479 = vadd.f32 0.0, %v4478
    %v4480 = vpop.f32.mrf.mxu0
    %4481 = vdwg.mxu0
    %v4482 = vadd.f32 %v4357, %v4479
    %v4483 = vld [vmem:[%s4358] sm:$0x2]
    %v4484 = vld [vmem:[%s4358 + $0x70] sm:$0x2]
    %v4485 = vunpack.c.l.bf16 %v4483
    %v4486 = vunpack.c.l.bf16 %v4484
    %v4489 = vrot.slane %v4485, 1
    %v4490 = vrot.slane %v4486, 1
    %v4493 = vmax.f32 %v4485, %v4489
    %v4494 = vmax.f32 %v4486, %v4490
    %v4495 = vpack.c.bf16 %v4493, %v4493
    %v4496 = vpack.c.bf16 %v4494, %v4494
    %v4497 = vld [vmem:[%s4373] sm:$0x2]
    %v4498 = vld [vmem:[%s4373 + $0x70] sm:$0x2]
    %v4499 = vunpack.c.l.bf16 %v4497
    %v4500 = vunpack.c.l.bf16 %v4498
    %v4503 = vrot.slane %v4499, 1
    %v4504 = vrot.slane %v4500, 1
    %v4507 = vmax.f32 %v4499, %v4503
    %v4508 = vmax.f32 %v4500, %v4504
    %v4509 = vpack.c.bf16 %v4507, %v4507
    %v4510 = vpack.c.bf16 %v4508, %v4508
    %v4511 = vunpack.c.l.bf16 %v4495
    %v4512 = vunpack.c.l.bf16 %v4496
    %v4513 = vunpack.c.l.bf16 %v4509
    %v4514 = vunpack.c.l.bf16 %v4510
    %v4515 = vmax.f32 %v4511, %v4513
    %v4516 = vmax.f32 %v4512, %v4514
    %v4517 = vpack.c.bf16 %v4515, %v4515
    %v4518 = vpack.c.bf16 %v4516, %v4516
    %s4519 = scalar_lea.vmem %s1, 2304
    %v4520 = vld [vmem:[%s4519] sm:$0xf]
    %v4521 = vld [vmem:[%s4519 + $0x4] sm:$0xf]
    %v4522 = vld [vmem:[%s4519 + $0x8] sm:$0xf]
    %v4523 = vld [vmem:[%s4519 + $0xc] sm:$0xf]
    %v4524 = vld [vmem:[%s4519 + $0x10] sm:$0xf]
    %v4525 = vld [vmem:[%s4519 + $0x14] sm:$0xf]
    %v4526 = vld [vmem:[%s4519 + $0x18] sm:$0xf]
    %v4527 = vld [vmem:[%s4519 + $0x1c] sm:$0xf]
    %v4528 = vld [vmem:[%s4519 + $0x20] sm:$0xf]
    %v4529 = vld [vmem:[%s4519 + $0x24] sm:$0xf]
    %v4530 = vld [vmem:[%s4519 + $0x28] sm:$0xf]
    %v4531 = vld [vmem:[%s4519 + $0x2c] sm:$0xf]
    %v4532 = vld [vmem:[%s4519 + $0x30] sm:$0xf]
    %v4533 = vld [vmem:[%s4519 + $0x34] sm:$0xf]
    %v4534 = vld [vmem:[%s4519 + $0x38] sm:$0xf]
    %v4535 = vld [vmem:[%s4519 + $0x3c] sm:$0xf]
    %v4538 = vunpack.c.l.b16 %v4517
    %v4539 = vunpack.c.l.b16 %v4518
    %v4540 = vrot.slane %v4538, 2
    %v4541 = vrot.slane %v4539, 1
    %v4542 = vsel %vm133, %v4541, %v4540
    %v4543 = vpack.c.b16 %v4542, %v4542
    %v4561 = vunpack.c.l.b16 %v4520
    %v4562 = vunpack.c.l.b16 %v4521
    %v4563 = vunpack.c.l.b16 %v4522
    %v4564 = vunpack.c.l.b16 %v4523
    %v4565 = vunpack.c.l.b16 %v4524
    %v4566 = vunpack.c.l.b16 %v4525
    %v4567 = vunpack.c.l.b16 %v4526
    %v4568 = vunpack.c.l.b16 %v4527
    %v4569 = vunpack.c.l.b16 %v4528
    %v4570 = vunpack.c.l.b16 %v4529
    %v4571 = vunpack.c.l.b16 %v4530
    %v4572 = vunpack.c.l.b16 %v4531
    %v4573 = vunpack.c.l.b16 %v4532
    %v4574 = vunpack.c.l.b16 %v4533
    %v4575 = vunpack.c.l.b16 %v4534
    %v4576 = vunpack.c.l.b16 %v4535
    %v4577 = vpack.c.b16 %v4562, %v4561
    %v4578 = vpack.c.b16 %v4564, %v4563
    %v4579 = vpack.c.b16 %v4566, %v4565
    %v4580 = vpack.c.b16 %v4568, %v4567
    %v4581 = vpack.c.b16 %v4570, %v4569
    %v4582 = vpack.c.b16 %v4572, %v4571
    %v4583 = vpack.c.b16 %v4574, %v4573
    %v4584 = vpack.c.b16 %v4576, %v4575
    %4593 = vmatpush.bf16.msra.mxu0 %v4584
    %4594 = vmatpush.bf16.msra.mxu0 %v4583
    %4595 = vmatpush.bf16.msra.mxu0 %v4582
    %4596 = vmatpush.bf16.msra.mxu0 %v4581
    %4597 = vmatpush.bf16.msra.mxu0 %v4580
    %4598 = vmatpush.bf16.msra.mxu0 %v4579
    %4599 = vmatpush.bf16.msra.mxu0 %v4578
    %4600 = vmatpush.bf16.msra.mxu0 %v4577
    %4601 = vmatmul.bf16.gmra.mxu0 %v4543
    %v4602 = vpop.f32.mrf.mxu0
    %v4603 = vadd.f32 0.0, %v4602
    %v4604 = vpop.f32.mrf.mxu0
    %4605 = vdwg.mxu0
    %v4606 = vadd.f32 %v4482, %v4603
    %v4607 = vld [vmem:[%s4358] sm:$0x4]
    %v4608 = vld [vmem:[%s4358 + $0x70] sm:$0x4]
    %v4609 = vunpack.c.l.bf16 %v4607
    %v4610 = vunpack.c.l.bf16 %v4608
    %v4613 = vrot.slane %v4609, 1
    %v4614 = vrot.slane %v4610, 1
    %v4617 = vmax.f32 %v4609, %v4613
    %v4618 = vmax.f32 %v4610, %v4614
    %v4619 = vpack.c.bf16 %v4617, %v4617
    %v4620 = vpack.c.bf16 %v4618, %v4618
    %v4621 = vld [vmem:[%s4373] sm:$0x4]
    %v4622 = vld [vmem:[%s4373 + $0x70] sm:$0x4]
    %v4623 = vunpack.c.l.bf16 %v4621
    %v4624 = vunpack.c.l.bf16 %v4622
    %v4627 = vrot.slane %v4623, 1
    %v4628 = vrot.slane %v4624, 1
    %v4631 = vmax.f32 %v4623, %v4627
    %v4632 = vmax.f32 %v4624, %v4628
    %v4633 = vpack.c.bf16 %v4631, %v4631
    %v4634 = vpack.c.bf16 %v4632, %v4632
    %v4635 = vunpack.c.l.bf16 %v4619
    %v4636 = vunpack.c.l.bf16 %v4620
    %v4637 = vunpack.c.l.bf16 %v4633
    %v4638 = vunpack.c.l.bf16 %v4634
    %v4639 = vmax.f32 %v4635, %v4637
    %v4640 = vmax.f32 %v4636, %v4638
    %v4641 = vpack.c.bf16 %v4639, %v4639
    %v4642 = vpack.c.bf16 %v4640, %v4640
    %s4643 = scalar_lea.vmem %s1, 2368
    %v4644 = vld [vmem:[%s4643] sm:$0xf]
    %v4645 = vld [vmem:[%s4643 + $0x4] sm:$0xf]
    %v4646 = vld [vmem:[%s4643 + $0x8] sm:$0xf]
    %v4647 = vld [vmem:[%s4643 + $0xc] sm:$0xf]
    %v4648 = vld [vmem:[%s4643 + $0x10] sm:$0xf]
    %v4649 = vld [vmem:[%s4643 + $0x14] sm:$0xf]
    %v4650 = vld [vmem:[%s4643 + $0x18] sm:$0xf]
    %v4651 = vld [vmem:[%s4643 + $0x1c] sm:$0xf]
    %v4652 = vld [vmem:[%s4643 + $0x20] sm:$0xf]
    %v4653 = vld [vmem:[%s4643 + $0x24] sm:$0xf]
    %v4654 = vld [vmem:[%s4643 + $0x28] sm:$0xf]
    %v4655 = vld [vmem:[%s4643 + $0x2c] sm:$0xf]
    %v4656 = vld [vmem:[%s4643 + $0x30] sm:$0xf]
    %v4657 = vld [vmem:[%s4643 + $0x34] sm:$0xf]
    %v4658 = vld [vmem:[%s4643 + $0x38] sm:$0xf]
    %v4659 = vld [vmem:[%s4643 + $0x3c] sm:$0xf]
    %v4662 = vunpack.c.l.b16 %v4641
    %v4663 = vunpack.c.l.b16 %v4642
    %v4664 = vrot.slane %v4662, 4
    %v4665 = vrot.slane %v4663, 3
    %v4666 = vsel %vm133, %v4665, %v4664
    %v4667 = vpack.c.b16 %v4666, %v4666
    %v4685 = vunpack.c.l.b16 %v4644
    %v4686 = vunpack.c.l.b16 %v4645
    %v4687 = vunpack.c.l.b16 %v4646
    %v4688 = vunpack.c.l.b16 %v4647
    %v4689 = vunpack.c.l.b16 %v4648
    %v4690 = vunpack.c.l.b16 %v4649
    %v4691 = vunpack.c.l.b16 %v4650
    %v4692 = vunpack.c.l.b16 %v4651
    %v4693 = vunpack.c.l.b16 %v4652
    %v4694 = vunpack.c.l.b16 %v4653
    %v4695 = vunpack.c.l.b16 %v4654
    %v4696 = vunpack.c.l.b16 %v4655
    %v4697 = vunpack.c.l.b16 %v4656
    %v4698 = vunpack.c.l.b16 %v4657
    %v4699 = vunpack.c.l.b16 %v4658
    %v4700 = vunpack.c.l.b16 %v4659
    %v4701 = vpack.c.b16 %v4686, %v4685
    %v4702 = vpack.c.b16 %v4688, %v4687
    %v4703 = vpack.c.b16 %v4690, %v4689
    %v4704 = vpack.c.b16 %v4692, %v4691
    %v4705 = vpack.c.b16 %v4694, %v4693
    %v4706 = vpack.c.b16 %v4696, %v4695
    %v4707 = vpack.c.b16 %v4698, %v4697
    %v4708 = vpack.c.b16 %v4700, %v4699
    %4717 = vmatpush.bf16.msra.mxu0 %v4708
    %4718 = vmatpush.bf16.msra.mxu0 %v4707
    %4719 = vmatpush.bf16.msra.mxu0 %v4706
    %4720 = vmatpush.bf16.msra.mxu0 %v4705
    %4721 = vmatpush.bf16.msra.mxu0 %v4704
    %4722 = vmatpush.bf16.msra.mxu0 %v4703
    %4723 = vmatpush.bf16.msra.mxu0 %v4702
    %4724 = vmatpush.bf16.msra.mxu0 %v4701
    %4725 = vmatmul.bf16.gmra.mxu0 %v4667
    %v4726 = vpop.f32.mrf.mxu0
    %v4727 = vadd.f32 0.0, %v4726
    %v4728 = vpop.f32.mrf.mxu0
    %4729 = vdwg.mxu0
    %v4730 = vadd.f32 %v4606, %v4727
    %v4731 = vld [vmem:[%s4358] sm:$0x8]
    %v4732 = vld [vmem:[%s4358 + $0x70] sm:$0x8]
    %v4733 = vunpack.c.l.bf16 %v4731
    %v4734 = vunpack.c.l.bf16 %v4732
    %v4737 = vrot.slane %v4733, 1
    %v4738 = vrot.slane %v4734, 1
    %v4741 = vmax.f32 %v4733, %v4737
    %v4742 = vmax.f32 %v4734, %v4738
    %v4743 = vpack.c.bf16 %v4741, %v4741
    %v4744 = vpack.c.bf16 %v4742, %v4742
    %v4745 = vld [vmem:[%s4373] sm:$0x8]
    %v4746 = vld [vmem:[%s4373 + $0x70] sm:$0x8]
    %v4747 = vunpack.c.l.bf16 %v4745
    %v4748 = vunpack.c.l.bf16 %v4746
    %v4751 = vrot.slane %v4747, 1
    %v4752 = vrot.slane %v4748, 1
    %v4755 = vmax.f32 %v4747, %v4751
    %v4756 = vmax.f32 %v4748, %v4752
    %v4757 = vpack.c.bf16 %v4755, %v4755
    %v4758 = vpack.c.bf16 %v4756, %v4756
    %v4759 = vunpack.c.l.bf16 %v4743
    %v4760 = vunpack.c.l.bf16 %v4744
    %v4761 = vunpack.c.l.bf16 %v4757
    %v4762 = vunpack.c.l.bf16 %v4758
    %v4763 = vmax.f32 %v4759, %v4761
    %v4764 = vmax.f32 %v4760, %v4762
    %v4765 = vpack.c.bf16 %v4763, %v4763
    %v4766 = vpack.c.bf16 %v4764, %v4764
    %s4767 = scalar_lea.vmem %s1, 2432
    %v4768 = vld [vmem:[%s4767] sm:$0xf]
    %v4769 = vld [vmem:[%s4767 + $0x4] sm:$0xf]
    %v4770 = vld [vmem:[%s4767 + $0x8] sm:$0xf]
    %v4771 = vld [vmem:[%s4767 + $0xc] sm:$0xf]
    %v4772 = vld [vmem:[%s4767 + $0x10] sm:$0xf]
    %v4773 = vld [vmem:[%s4767 + $0x14] sm:$0xf]
    %v4774 = vld [vmem:[%s4767 + $0x18] sm:$0xf]
    %v4775 = vld [vmem:[%s4767 + $0x1c] sm:$0xf]
    %v4776 = vld [vmem:[%s4767 + $0x20] sm:$0xf]
    %v4777 = vld [vmem:[%s4767 + $0x24] sm:$0xf]
    %v4778 = vld [vmem:[%s4767 + $0x28] sm:$0xf]
    %v4779 = vld [vmem:[%s4767 + $0x2c] sm:$0xf]
    %v4780 = vld [vmem:[%s4767 + $0x30] sm:$0xf]
    %v4781 = vld [vmem:[%s4767 + $0x34] sm:$0xf]
    %v4782 = vld [vmem:[%s4767 + $0x38] sm:$0xf]
    %v4783 = vld [vmem:[%s4767 + $0x3c] sm:$0xf]
    %v4786 = vunpack.c.l.b16 %v4765
    %v4787 = vunpack.c.l.b16 %v4766
    %v4788 = vrot.slane %v4786, 6
    %v4789 = vrot.slane %v4787, 5
    %v4790 = vsel %vm133, %v4789, %v4788
    %v4791 = vpack.c.b16 %v4790, %v4790
    %v4809 = vunpack.c.l.b16 %v4768
    %v4810 = vunpack.c.l.b16 %v4769
    %v4811 = vunpack.c.l.b16 %v4770
    %v4812 = vunpack.c.l.b16 %v4771
    %v4813 = vunpack.c.l.b16 %v4772
    %v4814 = vunpack.c.l.b16 %v4773
    %v4815 = vunpack.c.l.b16 %v4774
    %v4816 = vunpack.c.l.b16 %v4775
    %v4817 = vunpack.c.l.b16 %v4776
    %v4818 = vunpack.c.l.b16 %v4777
    %v4819 = vunpack.c.l.b16 %v4778
    %v4820 = vunpack.c.l.b16 %v4779
    %v4821 = vunpack.c.l.b16 %v4780
    %v4822 = vunpack.c.l.b16 %v4781
    %v4823 = vunpack.c.l.b16 %v4782
    %v4824 = vunpack.c.l.b16 %v4783
    %v4825 = vpack.c.b16 %v4810, %v4809
    %v4826 = vpack.c.b16 %v4812, %v4811
    %v4827 = vpack.c.b16 %v4814, %v4813
    %v4828 = vpack.c.b16 %v4816, %v4815
    %v4829 = vpack.c.b16 %v4818, %v4817
    %v4830 = vpack.c.b16 %v4820, %v4819
    %v4831 = vpack.c.b16 %v4822, %v4821
    %v4832 = vpack.c.b16 %v4824, %v4823
    %4841 = vmatpush.bf16.msra.mxu0 %v4832
    %4842 = vmatpush.bf16.msra.mxu0 %v4831
    %4843 = vmatpush.bf16.msra.mxu0 %v4830
    %4844 = vmatpush.bf16.msra.mxu0 %v4829
    %4845 = vmatpush.bf16.msra.mxu0 %v4828
    %4846 = vmatpush.bf16.msra.mxu0 %v4827
    %4847 = vmatpush.bf16.msra.mxu0 %v4826
    %4848 = vmatpush.bf16.msra.mxu0 %v4825
    %4849 = vmatmul.bf16.gmra.mxu0 %v4791
    %v4850 = vpop.f32.mrf.mxu0
    %v4851 = vadd.f32 0.0, %v4850
    %v4852 = vpop.f32.mrf.mxu0
    %4853 = vdwg.mxu0
    %v4854 = vadd.f32 %v4730, %v4851
    %v4855 = vld [vmem:[%s4358 + $0x4] sm:$0x1]
    %v4856 = vld [vmem:[%s4358 + $0x74] sm:$0x1]
    %v4857 = vunpack.c.l.bf16 %v4855
    %v4858 = vunpack.c.l.bf16 %v4856
    %v4861 = vrot.slane %v4857, 1
    %v4862 = vrot.slane %v4858, 1
    %v4865 = vmax.f32 %v4857, %v4861
    %v4866 = vmax.f32 %v4858, %v4862
    %v4867 = vpack.c.bf16 %v4865, %v4865
    %v4868 = vpack.c.bf16 %v4866, %v4866
    %v4869 = vld [vmem:[%s4373 + $0x4] sm:$0x1]
    %v4870 = vld [vmem:[%s4373 + $0x74] sm:$0x1]
    %v4871 = vunpack.c.l.bf16 %v4869
    %v4872 = vunpack.c.l.bf16 %v4870
    %v4875 = vrot.slane %v4871, 1
    %v4876 = vrot.slane %v4872, 1
    %v4879 = vmax.f32 %v4871, %v4875
    %v4880 = vmax.f32 %v4872, %v4876
    %v4881 = vpack.c.bf16 %v4879, %v4879
    %v4882 = vpack.c.bf16 %v4880, %v4880
    %v4883 = vunpack.c.l.bf16 %v4867
    %v4884 = vunpack.c.l.bf16 %v4868
    %v4885 = vunpack.c.l.bf16 %v4881
    %v4886 = vunpack.c.l.bf16 %v4882
    %v4887 = vmax.f32 %v4883, %v4885
    %v4888 = vmax.f32 %v4884, %v4886
    %v4889 = vpack.c.bf16 %v4887, %v4887
    %v4890 = vpack.c.bf16 %v4888, %v4888
    %s4891 = scalar_lea.vmem %s1, 2496
    %v4892 = vld [vmem:[%s4891] sm:$0xf]
    %v4893 = vld [vmem:[%s4891 + $0x4] sm:$0xf]
    %v4894 = vld [vmem:[%s4891 + $0x8] sm:$0xf]
    %v4895 = vld [vmem:[%s4891 + $0xc] sm:$0xf]
    %v4896 = vld [vmem:[%s4891 + $0x10] sm:$0xf]
    %v4897 = vld [vmem:[%s4891 + $0x14] sm:$0xf]
    %v4898 = vld [vmem:[%s4891 + $0x18] sm:$0xf]
    %v4899 = vld [vmem:[%s4891 + $0x1c] sm:$0xf]
    %v4900 = vld [vmem:[%s4891 + $0x20] sm:$0xf]
    %v4901 = vld [vmem:[%s4891 + $0x24] sm:$0xf]
    %v4902 = vld [vmem:[%s4891 + $0x28] sm:$0xf]
    %v4903 = vld [vmem:[%s4891 + $0x2c] sm:$0xf]
    %v4904 = vld [vmem:[%s4891 + $0x30] sm:$0xf]
    %v4905 = vld [vmem:[%s4891 + $0x34] sm:$0xf]
    %v4906 = vld [vmem:[%s4891 + $0x38] sm:$0xf]
    %v4907 = vld [vmem:[%s4891 + $0x3c] sm:$0xf]
    %v4910 = vunpack.c.l.b16 %v4889
    %v4911 = vunpack.c.l.b16 %v4890
    %v4912 = vrot.slane %v4911, 7
    %v4913 = vsel %vm133, %v4912, %v4910
    %v4914 = vpack.c.b16 %v4913, %v4913
    %v4932 = vunpack.c.l.b16 %v4892
    %v4933 = vunpack.c.l.b16 %v4893
    %v4934 = vunpack.c.l.b16 %v4894
    %v4935 = vunpack.c.l.b16 %v4895
    %v4936 = vunpack.c.l.b16 %v4896
    %v4937 = vunpack.c.l.b16 %v4897
    %v4938 = vunpack.c.l.b16 %v4898
    %v4939 = vunpack.c.l.b16 %v4899
    %v4940 = vunpack.c.l.b16 %v4900
    %v4941 = vunpack.c.l.b16 %v4901
    %v4942 = vunpack.c.l.b16 %v4902
    %v4943 = vunpack.c.l.b16 %v4903
    %v4944 = vunpack.c.l.b16 %v4904
    %v4945 = vunpack.c.l.b16 %v4905
    %v4946 = vunpack.c.l.b16 %v4906
    %v4947 = vunpack.c.l.b16 %v4907
    %v4948 = vpack.c.b16 %v4933, %v4932
    %v4949 = vpack.c.b16 %v4935, %v4934
    %v4950 = vpack.c.b16 %v4937, %v4936
    %v4951 = vpack.c.b16 %v4939, %v4938
    %v4952 = vpack.c.b16 %v4941, %v4940
    %v4953 = vpack.c.b16 %v4943, %v4942
    %v4954 = vpack.c.b16 %v4945, %v4944
    %v4955 = vpack.c.b16 %v4947, %v4946
    %4964 = vmatpush.bf16.msra.mxu0 %v4955
    %4965 = vmatpush.bf16.msra.mxu0 %v4954
    %4966 = vmatpush.bf16.msra.mxu0 %v4953
    %4967 = vmatpush.bf16.msra.mxu0 %v4952
    %4968 = vmatpush.bf16.msra.mxu0 %v4951
    %4969 = vmatpush.bf16.msra.mxu0 %v4950
    %4970 = vmatpush.bf16.msra.mxu0 %v4949
    %4971 = vmatpush.bf16.msra.mxu0 %v4948
    %4972 = vmatmul.bf16.gmra.mxu0 %v4914
    %v4973 = vpop.f32.mrf.mxu0
    %v4974 = vadd.f32 0.0, %v4973
    %v4975 = vpop.f32.mrf.mxu0
    %4976 = vdwg.mxu0
    %v4977 = vadd.f32 %v4854, %v4974
    %v4978 = vld [vmem:[%s4358 + $0x4] sm:$0x2]
    %v4979 = vld [vmem:[%s4358 + $0x74] sm:$0x2]
    %v4980 = vunpack.c.l.bf16 %v4978
    %v4981 = vunpack.c.l.bf16 %v4979
    %v4984 = vrot.slane %v4980, 1
    %v4985 = vrot.slane %v4981, 1
    %v4988 = vmax.f32 %v4980, %v4984
    %v4989 = vmax.f32 %v4981, %v4985
    %v4990 = vpack.c.bf16 %v4988, %v4988
    %v4991 = vpack.c.bf16 %v4989, %v4989
    %v4992 = vld [vmem:[%s4373 + $0x4] sm:$0x2]
    %v4993 = vld [vmem:[%s4373 + $0x74] sm:$0x2]
    %v4994 = vunpack.c.l.bf16 %v4992
    %v4995 = vunpack.c.l.bf16 %v4993
    %v4998 = vrot.slane %v4994, 1
    %v4999 = vrot.slane %v4995, 1
    %v5002 = vmax.f32 %v4994, %v4998
    %v5003 = vmax.f32 %v4995, %v4999
    %v5004 = vpack.c.bf16 %v5002, %v5002
    %v5005 = vpack.c.bf16 %v5003, %v5003
    %v5006 = vunpack.c.l.bf16 %v4990
    %v5007 = vunpack.c.l.bf16 %v4991
    %v5008 = vunpack.c.l.bf16 %v5004
    %v5009 = vunpack.c.l.bf16 %v5005
    %v5010 = vmax.f32 %v5006, %v5008
    %v5011 = vmax.f32 %v5007, %v5009
    %v5012 = vpack.c.bf16 %v5010, %v5010
    %v5013 = vpack.c.bf16 %v5011, %v5011
    %s5014 = scalar_lea.vmem %s1, 2560
    %v5015 = vld [vmem:[%s5014] sm:$0xf]
    %v5016 = vld [vmem:[%s5014 + $0x4] sm:$0xf]
    %v5017 = vld [vmem:[%s5014 + $0x8] sm:$0xf]
    %v5018 = vld [vmem:[%s5014 + $0xc] sm:$0xf]
    %v5019 = vld [vmem:[%s5014 + $0x10] sm:$0xf]
    %v5020 = vld [vmem:[%s5014 + $0x14] sm:$0xf]
    %v5021 = vld [vmem:[%s5014 + $0x18] sm:$0xf]
    %v5022 = vld [vmem:[%s5014 + $0x1c] sm:$0xf]
    %v5023 = vld [vmem:[%s5014 + $0x20] sm:$0xf]
    %v5024 = vld [vmem:[%s5014 + $0x24] sm:$0xf]
    %v5025 = vld [vmem:[%s5014 + $0x28] sm:$0xf]
    %v5026 = vld [vmem:[%s5014 + $0x2c] sm:$0xf]
    %v5027 = vld [vmem:[%s5014 + $0x30] sm:$0xf]
    %v5028 = vld [vmem:[%s5014 + $0x34] sm:$0xf]
    %v5029 = vld [vmem:[%s5014 + $0x38] sm:$0xf]
    %v5030 = vld [vmem:[%s5014 + $0x3c] sm:$0xf]
    %v5033 = vunpack.c.l.b16 %v5012
    %v5034 = vunpack.c.l.b16 %v5013
    %v5035 = vrot.slane %v5033, 2
    %v5036 = vrot.slane %v5034, 1
    %v5037 = vsel %vm133, %v5036, %v5035
    %v5038 = vpack.c.b16 %v5037, %v5037
    %v5056 = vunpack.c.l.b16 %v5015
    %v5057 = vunpack.c.l.b16 %v5016
    %v5058 = vunpack.c.l.b16 %v5017
    %v5059 = vunpack.c.l.b16 %v5018
    %v5060 = vunpack.c.l.b16 %v5019
    %v5061 = vunpack.c.l.b16 %v5020
    %v5062 = vunpack.c.l.b16 %v5021
    %v5063 = vunpack.c.l.b16 %v5022
    %v5064 = vunpack.c.l.b16 %v5023
    %v5065 = vunpack.c.l.b16 %v5024
    %v5066 = vunpack.c.l.b16 %v5025
    %v5067 = vunpack.c.l.b16 %v5026
    %v5068 = vunpack.c.l.b16 %v5027
    %v5069 = vunpack.c.l.b16 %v5028
    %v5070 = vunpack.c.l.b16 %v5029
    %v5071 = vunpack.c.l.b16 %v5030
    %v5072 = vpack.c.b16 %v5057, %v5056
    %v5073 = vpack.c.b16 %v5059, %v5058
    %v5074 = vpack.c.b16 %v5061, %v5060
    %v5075 = vpack.c.b16 %v5063, %v5062
    %v5076 = vpack.c.b16 %v5065, %v5064
    %v5077 = vpack.c.b16 %v5067, %v5066
    %v5078 = vpack.c.b16 %v5069, %v5068
    %v5079 = vpack.c.b16 %v5071, %v5070
    %5088 = vmatpush.bf16.msra.mxu0 %v5079
    %5089 = vmatpush.bf16.msra.mxu0 %v5078
    %5090 = vmatpush.bf16.msra.mxu0 %v5077
    %5091 = vmatpush.bf16.msra.mxu0 %v5076
    %5092 = vmatpush.bf16.msra.mxu0 %v5075
    %5093 = vmatpush.bf16.msra.mxu0 %v5074
    %5094 = vmatpush.bf16.msra.mxu0 %v5073
    %5095 = vmatpush.bf16.msra.mxu0 %v5072
    %5096 = vmatmul.bf16.gmra.mxu0 %v5038
    %v5097 = vpop.f32.mrf.mxu0
    %v5098 = vadd.f32 0.0, %v5097
    %v5099 = vpop.f32.mrf.mxu0
    %5100 = vdwg.mxu0
    %v5101 = vadd.f32 %v4977, %v5098
    %v5102 = vld [vmem:[%s4358 + $0x4] sm:$0x4]
    %v5103 = vld [vmem:[%s4358 + $0x74] sm:$0x4]
    %v5104 = vunpack.c.l.bf16 %v5102
    %v5105 = vunpack.c.l.bf16 %v5103
    %v5108 = vrot.slane %v5104, 1
    %v5109 = vrot.slane %v5105, 1
    %v5112 = vmax.f32 %v5104, %v5108
    %v5113 = vmax.f32 %v5105, %v5109
    %v5114 = vpack.c.bf16 %v5112, %v5112
    %v5115 = vpack.c.bf16 %v5113, %v5113
    %v5116 = vld [vmem:[%s4373 + $0x4] sm:$0x4]
    %v5117 = vld [vmem:[%s4373 + $0x74] sm:$0x4]
    %v5118 = vunpack.c.l.bf16 %v5116
    %v5119 = vunpack.c.l.bf16 %v5117
    %v5122 = vrot.slane %v5118, 1
    %v5123 = vrot.slane %v5119, 1
    %v5126 = vmax.f32 %v5118, %v5122
    %v5127 = vmax.f32 %v5119, %v5123
    %v5128 = vpack.c.bf16 %v5126, %v5126
    %v5129 = vpack.c.bf16 %v5127, %v5127
    %v5130 = vunpack.c.l.bf16 %v5114
    %v5131 = vunpack.c.l.bf16 %v5115
    %v5132 = vunpack.c.l.bf16 %v5128
    %v5133 = vunpack.c.l.bf16 %v5129
    %v5134 = vmax.f32 %v5130, %v5132
    %v5135 = vmax.f32 %v5131, %v5133
    %v5136 = vpack.c.bf16 %v5134, %v5134
    %v5137 = vpack.c.bf16 %v5135, %v5135
    %s5138 = scalar_lea.vmem %s1, 2624
    %v5139 = vld [vmem:[%s5138] sm:$0xf]
    %v5140 = vld [vmem:[%s5138 + $0x4] sm:$0xf]
    %v5141 = vld [vmem:[%s5138 + $0x8] sm:$0xf]
    %v5142 = vld [vmem:[%s5138 + $0xc] sm:$0xf]
    %v5143 = vld [vmem:[%s5138 + $0x10] sm:$0xf]
    %v5144 = vld [vmem:[%s5138 + $0x14] sm:$0xf]
    %v5145 = vld [vmem:[%s5138 + $0x18] sm:$0xf]
    %v5146 = vld [vmem:[%s5138 + $0x1c] sm:$0xf]
    %v5147 = vld [vmem:[%s5138 + $0x20] sm:$0xf]
    %v5148 = vld [vmem:[%s5138 + $0x24] sm:$0xf]
    %v5149 = vld [vmem:[%s5138 + $0x28] sm:$0xf]
    %v5150 = vld [vmem:[%s5138 + $0x2c] sm:$0xf]
    %v5151 = vld [vmem:[%s5138 + $0x30] sm:$0xf]
    %v5152 = vld [vmem:[%s5138 + $0x34] sm:$0xf]
    %v5153 = vld [vmem:[%s5138 + $0x38] sm:$0xf]
    %v5154 = vld [vmem:[%s5138 + $0x3c] sm:$0xf]
    %v5157 = vunpack.c.l.b16 %v5136
    %v5158 = vunpack.c.l.b16 %v5137
    %v5159 = vrot.slane %v5157, 4
    %v5160 = vrot.slane %v5158, 3
    %v5161 = vsel %vm133, %v5160, %v5159
    %v5162 = vpack.c.b16 %v5161, %v5161
    %v5180 = vunpack.c.l.b16 %v5139
    %v5181 = vunpack.c.l.b16 %v5140
    %v5182 = vunpack.c.l.b16 %v5141
    %v5183 = vunpack.c.l.b16 %v5142
    %v5184 = vunpack.c.l.b16 %v5143
    %v5185 = vunpack.c.l.b16 %v5144
    %v5186 = vunpack.c.l.b16 %v5145
    %v5187 = vunpack.c.l.b16 %v5146
    %v5188 = vunpack.c.l.b16 %v5147
    %v5189 = vunpack.c.l.b16 %v5148
    %v5190 = vunpack.c.l.b16 %v5149
    %v5191 = vunpack.c.l.b16 %v5150
    %v5192 = vunpack.c.l.b16 %v5151
    %v5193 = vunpack.c.l.b16 %v5152
    %v5194 = vunpack.c.l.b16 %v5153
    %v5195 = vunpack.c.l.b16 %v5154
    %v5196 = vpack.c.b16 %v5181, %v5180
    %v5197 = vpack.c.b16 %v5183, %v5182
    %v5198 = vpack.c.b16 %v5185, %v5184
    %v5199 = vpack.c.b16 %v5187, %v5186
    %v5200 = vpack.c.b16 %v5189, %v5188
    %v5201 = vpack.c.b16 %v5191, %v5190
    %v5202 = vpack.c.b16 %v5193, %v5192
    %v5203 = vpack.c.b16 %v5195, %v5194
    %5212 = vmatpush.bf16.msra.mxu0 %v5203
    %5213 = vmatpush.bf16.msra.mxu0 %v5202
    %5214 = vmatpush.bf16.msra.mxu0 %v5201
    %5215 = vmatpush.bf16.msra.mxu0 %v5200
    %5216 = vmatpush.bf16.msra.mxu0 %v5199
    %5217 = vmatpush.bf16.msra.mxu0 %v5198
    %5218 = vmatpush.bf16.msra.mxu0 %v5197
    %5219 = vmatpush.bf16.msra.mxu0 %v5196
    %5220 = vmatmul.bf16.gmra.mxu0 %v5162
    %v5221 = vpop.f32.mrf.mxu0
    %v5222 = vadd.f32 0.0, %v5221
    %v5223 = vpop.f32.mrf.mxu0
    %5224 = vdwg.mxu0
    %v5225 = vadd.f32 %v5101, %v5222
    %s5226 = scalar_lea.vmem %s0, 96
    %v5227 = vld [vmem:[%s5226] sm:$0x1]
    %v5228 = vld [vmem:[%s5226 + $0x70] sm:$0x1]
    %v5229 = vunpack.c.l.bf16 %v5227
    %v5230 = vunpack.c.l.bf16 %v5228
    %v5233 = vrot.slane %v5229, 1
    %v5234 = vrot.slane %v5230, 1
    %v5237 = vmax.f32 %v5229, %v5233
    %v5238 = vmax.f32 %v5230, %v5234
    %v5239 = vpack.c.bf16 %v5237, %v5237
    %v5240 = vpack.c.bf16 %v5238, %v5238
    %s5241 = scalar_lea.vmem %s0, 104
    %v5242 = vld [vmem:[%s5241] sm:$0x1]
    %v5243 = vld [vmem:[%s5241 + $0x70] sm:$0x1]
    %v5244 = vunpack.c.l.bf16 %v5242
    %v5245 = vunpack.c.l.bf16 %v5243
    %v5248 = vrot.slane %v5244, 1
    %v5249 = vrot.slane %v5245, 1
    %v5252 = vmax.f32 %v5244, %v5248
    %v5253 = vmax.f32 %v5245, %v5249
    %v5254 = vpack.c.bf16 %v5252, %v5252
    %v5255 = vpack.c.bf16 %v5253, %v5253
    %v5256 = vunpack.c.l.bf16 %v5239
    %v5257 = vunpack.c.l.bf16 %v5240
    %v5258 = vunpack.c.l.bf16 %v5254
    %v5259 = vunpack.c.l.bf16 %v5255
    %v5260 = vmax.f32 %v5256, %v5258
    %v5261 = vmax.f32 %v5257, %v5259
    %v5262 = vpack.c.bf16 %v5260, %v5260
    %v5263 = vpack.c.bf16 %v5261, %v5261
    %s5264 = scalar_lea.vmem %s1, 2688
    %v5265 = vld [vmem:[%s5264] sm:$0xf]
    %v5266 = vld [vmem:[%s5264 + $0x4] sm:$0xf]
    %v5267 = vld [vmem:[%s5264 + $0x8] sm:$0xf]
    %v5268 = vld [vmem:[%s5264 + $0xc] sm:$0xf]
    %v5269 = vld [vmem:[%s5264 + $0x10] sm:$0xf]
    %v5270 = vld [vmem:[%s5264 + $0x14] sm:$0xf]
    %v5271 = vld [vmem:[%s5264 + $0x18] sm:$0xf]
    %v5272 = vld [vmem:[%s5264 + $0x1c] sm:$0xf]
    %v5273 = vld [vmem:[%s5264 + $0x20] sm:$0xf]
    %v5274 = vld [vmem:[%s5264 + $0x24] sm:$0xf]
    %v5275 = vld [vmem:[%s5264 + $0x28] sm:$0xf]
    %v5276 = vld [vmem:[%s5264 + $0x2c] sm:$0xf]
    %v5277 = vld [vmem:[%s5264 + $0x30] sm:$0xf]
    %v5278 = vld [vmem:[%s5264 + $0x34] sm:$0xf]
    %v5279 = vld [vmem:[%s5264 + $0x38] sm:$0xf]
    %v5280 = vld [vmem:[%s5264 + $0x3c] sm:$0xf]
    %v5283 = vunpack.c.l.b16 %v5262
    %v5284 = vunpack.c.l.b16 %v5263
    %v5285 = vrot.slane %v5284, 7
    %v5286 = vsel %vm133, %v5285, %v5283
    %v5287 = vpack.c.b16 %v5286, %v5286
    %v5305 = vunpack.c.l.b16 %v5265
    %v5306 = vunpack.c.l.b16 %v5266
    %v5307 = vunpack.c.l.b16 %v5267
    %v5308 = vunpack.c.l.b16 %v5268
    %v5309 = vunpack.c.l.b16 %v5269
    %v5310 = vunpack.c.l.b16 %v5270
    %v5311 = vunpack.c.l.b16 %v5271
    %v5312 = vunpack.c.l.b16 %v5272
    %v5313 = vunpack.c.l.b16 %v5273
    %v5314 = vunpack.c.l.b16 %v5274
    %v5315 = vunpack.c.l.b16 %v5275
    %v5316 = vunpack.c.l.b16 %v5276
    %v5317 = vunpack.c.l.b16 %v5277
    %v5318 = vunpack.c.l.b16 %v5278
    %v5319 = vunpack.c.l.b16 %v5279
    %v5320 = vunpack.c.l.b16 %v5280
    %v5321 = vpack.c.b16 %v5306, %v5305
    %v5322 = vpack.c.b16 %v5308, %v5307
    %v5323 = vpack.c.b16 %v5310, %v5309
    %v5324 = vpack.c.b16 %v5312, %v5311
    %v5325 = vpack.c.b16 %v5314, %v5313
    %v5326 = vpack.c.b16 %v5316, %v5315
    %v5327 = vpack.c.b16 %v5318, %v5317
    %v5328 = vpack.c.b16 %v5320, %v5319
    %5337 = vmatpush.bf16.msra.mxu0 %v5328
    %5338 = vmatpush.bf16.msra.mxu0 %v5327
    %5339 = vmatpush.bf16.msra.mxu0 %v5326
    %5340 = vmatpush.bf16.msra.mxu0 %v5325
    %5341 = vmatpush.bf16.msra.mxu0 %v5324
    %5342 = vmatpush.bf16.msra.mxu0 %v5323
    %5343 = vmatpush.bf16.msra.mxu0 %v5322
    %5344 = vmatpush.bf16.msra.mxu0 %v5321
    %5345 = vmatmul.bf16.gmra.mxu0 %v5287
    %v5346 = vpop.f32.mrf.mxu0
    %v5347 = vadd.f32 0.0, %v5346
    %v5348 = vpop.f32.mrf.mxu0
    %5349 = vdwg.mxu0
    %v5350 = vadd.f32 %v5225, %v5347
    %v5351 = vld [vmem:[%s5226] sm:$0x2]
    %v5352 = vld [vmem:[%s5226 + $0x70] sm:$0x2]
    %v5353 = vunpack.c.l.bf16 %v5351
    %v5354 = vunpack.c.l.bf16 %v5352
    %v5357 = vrot.slane %v5353, 1
    %v5358 = vrot.slane %v5354, 1
    %v5361 = vmax.f32 %v5353, %v5357
    %v5362 = vmax.f32 %v5354, %v5358
    %v5363 = vpack.c.bf16 %v5361, %v5361
    %v5364 = vpack.c.bf16 %v5362, %v5362
    %v5365 = vld [vmem:[%s5241] sm:$0x2]
    %v5366 = vld [vmem:[%s5241 + $0x70] sm:$0x2]
    %v5367 = vunpack.c.l.bf16 %v5365
    %v5368 = vunpack.c.l.bf16 %v5366
    %v5371 = vrot.slane %v5367, 1
    %v5372 = vrot.slane %v5368, 1
    %v5375 = vmax.f32 %v5367, %v5371
    %v5376 = vmax.f32 %v5368, %v5372
    %v5377 = vpack.c.bf16 %v5375, %v5375
    %v5378 = vpack.c.bf16 %v5376, %v5376
    %v5379 = vunpack.c.l.bf16 %v5363
    %v5380 = vunpack.c.l.bf16 %v5364
    %v5381 = vunpack.c.l.bf16 %v5377
    %v5382 = vunpack.c.l.bf16 %v5378
    %v5383 = vmax.f32 %v5379, %v5381
    %v5384 = vmax.f32 %v5380, %v5382
    %v5385 = vpack.c.bf16 %v5383, %v5383
    %v5386 = vpack.c.bf16 %v5384, %v5384
    %s5387 = scalar_lea.vmem %s1, 2752
    %v5388 = vld [vmem:[%s5387] sm:$0xf]
    %v5389 = vld [vmem:[%s5387 + $0x4] sm:$0xf]
    %v5390 = vld [vmem:[%s5387 + $0x8] sm:$0xf]
    %v5391 = vld [vmem:[%s5387 + $0xc] sm:$0xf]
    %v5392 = vld [vmem:[%s5387 + $0x10] sm:$0xf]
    %v5393 = vld [vmem:[%s5387 + $0x14] sm:$0xf]
    %v5394 = vld [vmem:[%s5387 + $0x18] sm:$0xf]
    %v5395 = vld [vmem:[%s5387 + $0x1c] sm:$0xf]
    %v5396 = vld [vmem:[%s5387 + $0x20] sm:$0xf]
    %v5397 = vld [vmem:[%s5387 + $0x24] sm:$0xf]
    %v5398 = vld [vmem:[%s5387 + $0x28] sm:$0xf]
    %v5399 = vld [vmem:[%s5387 + $0x2c] sm:$0xf]
    %v5400 = vld [vmem:[%s5387 + $0x30] sm:$0xf]
    %v5401 = vld [vmem:[%s5387 + $0x34] sm:$0xf]
    %v5402 = vld [vmem:[%s5387 + $0x38] sm:$0xf]
    %v5403 = vld [vmem:[%s5387 + $0x3c] sm:$0xf]
    %v5406 = vunpack.c.l.b16 %v5385
    %v5407 = vunpack.c.l.b16 %v5386
    %v5408 = vrot.slane %v5406, 2
    %v5409 = vrot.slane %v5407, 1
    %v5410 = vsel %vm133, %v5409, %v5408
    %v5411 = vpack.c.b16 %v5410, %v5410
    %v5429 = vunpack.c.l.b16 %v5388
    %v5430 = vunpack.c.l.b16 %v5389
    %v5431 = vunpack.c.l.b16 %v5390
    %v5432 = vunpack.c.l.b16 %v5391
    %v5433 = vunpack.c.l.b16 %v5392
    %v5434 = vunpack.c.l.b16 %v5393
    %v5435 = vunpack.c.l.b16 %v5394
    %v5436 = vunpack.c.l.b16 %v5395
    %v5437 = vunpack.c.l.b16 %v5396
    %v5438 = vunpack.c.l.b16 %v5397
    %v5439 = vunpack.c.l.b16 %v5398
    %v5440 = vunpack.c.l.b16 %v5399
    %v5441 = vunpack.c.l.b16 %v5400
    %v5442 = vunpack.c.l.b16 %v5401
    %v5443 = vunpack.c.l.b16 %v5402
    %v5444 = vunpack.c.l.b16 %v5403
    %v5445 = vpack.c.b16 %v5430, %v5429
    %v5446 = vpack.c.b16 %v5432, %v5431
    %v5447 = vpack.c.b16 %v5434, %v5433
    %v5448 = vpack.c.b16 %v5436, %v5435
    %v5449 = vpack.c.b16 %v5438, %v5437
    %v5450 = vpack.c.b16 %v5440, %v5439
    %v5451 = vpack.c.b16 %v5442, %v5441
    %v5452 = vpack.c.b16 %v5444, %v5443
    %5461 = vmatpush.bf16.msra.mxu0 %v5452
    %5462 = vmatpush.bf16.msra.mxu0 %v5451
    %5463 = vmatpush.bf16.msra.mxu0 %v5450
    %5464 = vmatpush.bf16.msra.mxu0 %v5449
    %5465 = vmatpush.bf16.msra.mxu0 %v5448
    %5466 = vmatpush.bf16.msra.mxu0 %v5447
    %5467 = vmatpush.bf16.msra.mxu0 %v5446
    %5468 = vmatpush.bf16.msra.mxu0 %v5445
    %5469 = vmatmul.bf16.gmra.mxu0 %v5411
    %v5470 = vpop.f32.mrf.mxu0
    %v5471 = vadd.f32 0.0, %v5470
    %v5472 = vpop.f32.mrf.mxu0
    %5473 = vdwg.mxu0
    %v5474 = vadd.f32 %v5350, %v5471
    %v5475 = vld [vmem:[%s5226] sm:$0x4]
    %v5476 = vld [vmem:[%s5226 + $0x70] sm:$0x4]
    %v5477 = vunpack.c.l.bf16 %v5475
    %v5478 = vunpack.c.l.bf16 %v5476
    %v5481 = vrot.slane %v5477, 1
    %v5482 = vrot.slane %v5478, 1
    %v5485 = vmax.f32 %v5477, %v5481
    %v5486 = vmax.f32 %v5478, %v5482
    %v5487 = vpack.c.bf16 %v5485, %v5485
    %v5488 = vpack.c.bf16 %v5486, %v5486
    %v5489 = vld [vmem:[%s5241] sm:$0x4]
    %v5490 = vld [vmem:[%s5241 + $0x70] sm:$0x4]
    %v5491 = vunpack.c.l.bf16 %v5489
    %v5492 = vunpack.c.l.bf16 %v5490
    %v5495 = vrot.slane %v5491, 1
    %v5496 = vrot.slane %v5492, 1
    %v5499 = vmax.f32 %v5491, %v5495
    %v5500 = vmax.f32 %v5492, %v5496
    %v5501 = vpack.c.bf16 %v5499, %v5499
    %v5502 = vpack.c.bf16 %v5500, %v5500
    %v5503 = vunpack.c.l.bf16 %v5487
    %v5504 = vunpack.c.l.bf16 %v5488
    %v5505 = vunpack.c.l.bf16 %v5501
    %v5506 = vunpack.c.l.bf16 %v5502
    %v5507 = vmax.f32 %v5503, %v5505
    %v5508 = vmax.f32 %v5504, %v5506
    %v5509 = vpack.c.bf16 %v5507, %v5507
    %v5510 = vpack.c.bf16 %v5508, %v5508
    %s5511 = scalar_lea.vmem %s1, 2816
    %v5512 = vld [vmem:[%s5511] sm:$0xf]
    %v5513 = vld [vmem:[%s5511 + $0x4] sm:$0xf]
    %v5514 = vld [vmem:[%s5511 + $0x8] sm:$0xf]
    %v5515 = vld [vmem:[%s5511 + $0xc] sm:$0xf]
    %v5516 = vld [vmem:[%s5511 + $0x10] sm:$0xf]
    %v5517 = vld [vmem:[%s5511 + $0x14] sm:$0xf]
    %v5518 = vld [vmem:[%s5511 + $0x18] sm:$0xf]
    %v5519 = vld [vmem:[%s5511 + $0x1c] sm:$0xf]
    %v5520 = vld [vmem:[%s5511 + $0x20] sm:$0xf]
    %v5521 = vld [vmem:[%s5511 + $0x24] sm:$0xf]
    %v5522 = vld [vmem:[%s5511 + $0x28] sm:$0xf]
    %v5523 = vld [vmem:[%s5511 + $0x2c] sm:$0xf]
    %v5524 = vld [vmem:[%s5511 + $0x30] sm:$0xf]
    %v5525 = vld [vmem:[%s5511 + $0x34] sm:$0xf]
    %v5526 = vld [vmem:[%s5511 + $0x38] sm:$0xf]
    %v5527 = vld [vmem:[%s5511 + $0x3c] sm:$0xf]
    %v5530 = vunpack.c.l.b16 %v5509
    %v5531 = vunpack.c.l.b16 %v5510
    %v5532 = vrot.slane %v5530, 4
    %v5533 = vrot.slane %v5531, 3
    %v5534 = vsel %vm133, %v5533, %v5532
    %v5535 = vpack.c.b16 %v5534, %v5534
    %v5553 = vunpack.c.l.b16 %v5512
    %v5554 = vunpack.c.l.b16 %v5513
    %v5555 = vunpack.c.l.b16 %v5514
    %v5556 = vunpack.c.l.b16 %v5515
    %v5557 = vunpack.c.l.b16 %v5516
    %v5558 = vunpack.c.l.b16 %v5517
    %v5559 = vunpack.c.l.b16 %v5518
    %v5560 = vunpack.c.l.b16 %v5519
    %v5561 = vunpack.c.l.b16 %v5520
    %v5562 = vunpack.c.l.b16 %v5521
    %v5563 = vunpack.c.l.b16 %v5522
    %v5564 = vunpack.c.l.b16 %v5523
    %v5565 = vunpack.c.l.b16 %v5524
    %v5566 = vunpack.c.l.b16 %v5525
    %v5567 = vunpack.c.l.b16 %v5526
    %v5568 = vunpack.c.l.b16 %v5527
    %v5569 = vpack.c.b16 %v5554, %v5553
    %v5570 = vpack.c.b16 %v5556, %v5555
    %v5571 = vpack.c.b16 %v5558, %v5557
    %v5572 = vpack.c.b16 %v5560, %v5559
    %v5573 = vpack.c.b16 %v5562, %v5561
    %v5574 = vpack.c.b16 %v5564, %v5563
    %v5575 = vpack.c.b16 %v5566, %v5565
    %v5576 = vpack.c.b16 %v5568, %v5567
    %5585 = vmatpush.bf16.msra.mxu0 %v5576
    %5586 = vmatpush.bf16.msra.mxu0 %v5575
    %5587 = vmatpush.bf16.msra.mxu0 %v5574
    %5588 = vmatpush.bf16.msra.mxu0 %v5573
    %5589 = vmatpush.bf16.msra.mxu0 %v5572
    %5590 = vmatpush.bf16.msra.mxu0 %v5571
    %5591 = vmatpush.bf16.msra.mxu0 %v5570
    %5592 = vmatpush.bf16.msra.mxu0 %v5569
    %5593 = vmatmul.bf16.gmra.mxu0 %v5535
    %v5594 = vpop.f32.mrf.mxu0
    %v5595 = vadd.f32 0.0, %v5594
    %v5596 = vpop.f32.mrf.mxu0
    %5597 = vdwg.mxu0
    %v5598 = vadd.f32 %v5474, %v5595
    %v5599 = vld [vmem:[%s5226] sm:$0x8]
    %v5600 = vld [vmem:[%s5226 + $0x70] sm:$0x8]
    %v5601 = vunpack.c.l.bf16 %v5599
    %v5602 = vunpack.c.l.bf16 %v5600
    %v5605 = vrot.slane %v5601, 1
    %v5606 = vrot.slane %v5602, 1
    %v5609 = vmax.f32 %v5601, %v5605
    %v5610 = vmax.f32 %v5602, %v5606
    %v5611 = vpack.c.bf16 %v5609, %v5609
    %v5612 = vpack.c.bf16 %v5610, %v5610
    %v5613 = vld [vmem:[%s5241] sm:$0x8]
    %v5614 = vld [vmem:[%s5241 + $0x70] sm:$0x8]
    %v5615 = vunpack.c.l.bf16 %v5613
    %v5616 = vunpack.c.l.bf16 %v5614
    %v5619 = vrot.slane %v5615, 1
    %v5620 = vrot.slane %v5616, 1
    %v5623 = vmax.f32 %v5615, %v5619
    %v5624 = vmax.f32 %v5616, %v5620
    %v5625 = vpack.c.bf16 %v5623, %v5623
    %v5626 = vpack.c.bf16 %v5624, %v5624
    %v5627 = vunpack.c.l.bf16 %v5611
    %v5628 = vunpack.c.l.bf16 %v5612
    %v5629 = vunpack.c.l.bf16 %v5625
    %v5630 = vunpack.c.l.bf16 %v5626
    %v5631 = vmax.f32 %v5627, %v5629
    %v5632 = vmax.f32 %v5628, %v5630
    %v5633 = vpack.c.bf16 %v5631, %v5631
    %v5634 = vpack.c.bf16 %v5632, %v5632
    %s5635 = scalar_lea.vmem %s1, 2880
    %v5636 = vld [vmem:[%s5635] sm:$0xf]
    %v5637 = vld [vmem:[%s5635 + $0x4] sm:$0xf]
    %v5638 = vld [vmem:[%s5635 + $0x8] sm:$0xf]
    %v5639 = vld [vmem:[%s5635 + $0xc] sm:$0xf]
    %v5640 = vld [vmem:[%s5635 + $0x10] sm:$0xf]
    %v5641 = vld [vmem:[%s5635 + $0x14] sm:$0xf]
    %v5642 = vld [vmem:[%s5635 + $0x18] sm:$0xf]
    %v5643 = vld [vmem:[%s5635 + $0x1c] sm:$0xf]
    %v5644 = vld [vmem:[%s5635 + $0x20] sm:$0xf]
    %v5645 = vld [vmem:[%s5635 + $0x24] sm:$0xf]
    %v5646 = vld [vmem:[%s5635 + $0x28] sm:$0xf]
    %v5647 = vld [vmem:[%s5635 + $0x2c] sm:$0xf]
    %v5648 = vld [vmem:[%s5635 + $0x30] sm:$0xf]
    %v5649 = vld [vmem:[%s5635 + $0x34] sm:$0xf]
    %v5650 = vld [vmem:[%s5635 + $0x38] sm:$0xf]
    %v5651 = vld [vmem:[%s5635 + $0x3c] sm:$0xf]
    %v5654 = vunpack.c.l.b16 %v5633
    %v5655 = vunpack.c.l.b16 %v5634
    %v5656 = vrot.slane %v5654, 6
    %v5657 = vrot.slane %v5655, 5
    %v5658 = vsel %vm133, %v5657, %v5656
    %v5659 = vpack.c.b16 %v5658, %v5658
    %v5677 = vunpack.c.l.b16 %v5636
    %v5678 = vunpack.c.l.b16 %v5637
    %v5679 = vunpack.c.l.b16 %v5638
    %v5680 = vunpack.c.l.b16 %v5639
    %v5681 = vunpack.c.l.b16 %v5640
    %v5682 = vunpack.c.l.b16 %v5641
    %v5683 = vunpack.c.l.b16 %v5642
    %v5684 = vunpack.c.l.b16 %v5643
    %v5685 = vunpack.c.l.b16 %v5644
    %v5686 = vunpack.c.l.b16 %v5645
    %v5687 = vunpack.c.l.b16 %v5646
    %v5688 = vunpack.c.l.b16 %v5647
    %v5689 = vunpack.c.l.b16 %v5648
    %v5690 = vunpack.c.l.b16 %v5649
    %v5691 = vunpack.c.l.b16 %v5650
    %v5692 = vunpack.c.l.b16 %v5651
    %v5693 = vpack.c.b16 %v5678, %v5677
    %v5694 = vpack.c.b16 %v5680, %v5679
    %v5695 = vpack.c.b16 %v5682, %v5681
    %v5696 = vpack.c.b16 %v5684, %v5683
    %v5697 = vpack.c.b16 %v5686, %v5685
    %v5698 = vpack.c.b16 %v5688, %v5687
    %v5699 = vpack.c.b16 %v5690, %v5689
    %v5700 = vpack.c.b16 %v5692, %v5691
    %5709 = vmatpush.bf16.msra.mxu0 %v5700
    %5710 = vmatpush.bf16.msra.mxu0 %v5699
    %5711 = vmatpush.bf16.msra.mxu0 %v5698
    %5712 = vmatpush.bf16.msra.mxu0 %v5697
    %5713 = vmatpush.bf16.msra.mxu0 %v5696
    %5714 = vmatpush.bf16.msra.mxu0 %v5695
    %5715 = vmatpush.bf16.msra.mxu0 %v5694
    %5716 = vmatpush.bf16.msra.mxu0 %v5693
    %5717 = vmatmul.bf16.gmra.mxu0 %v5659
    %v5718 = vpop.f32.mrf.mxu0
    %v5719 = vadd.f32 0.0, %v5718
    %v5720 = vpop.f32.mrf.mxu0
    %5721 = vdwg.mxu0
    %v5722 = vadd.f32 %v5598, %v5719
    %v5723 = vld [vmem:[%s5226 + $0x4] sm:$0x1]
    %v5724 = vld [vmem:[%s5226 + $0x74] sm:$0x1]
    %v5725 = vunpack.c.l.bf16 %v5723
    %v5726 = vunpack.c.l.bf16 %v5724
    %v5729 = vrot.slane %v5725, 1
    %v5730 = vrot.slane %v5726, 1
    %v5733 = vmax.f32 %v5725, %v5729
    %v5734 = vmax.f32 %v5726, %v5730
    %v5735 = vpack.c.bf16 %v5733, %v5733
    %v5736 = vpack.c.bf16 %v5734, %v5734
    %v5737 = vld [vmem:[%s5241 + $0x4] sm:$0x1]
    %v5738 = vld [vmem:[%s5241 + $0x74] sm:$0x1]
    %v5739 = vunpack.c.l.bf16 %v5737
    %v5740 = vunpack.c.l.bf16 %v5738
    %v5743 = vrot.slane %v5739, 1
    %v5744 = vrot.slane %v5740, 1
    %v5747 = vmax.f32 %v5739, %v5743
    %v5748 = vmax.f32 %v5740, %v5744
    %v5749 = vpack.c.bf16 %v5747, %v5747
    %v5750 = vpack.c.bf16 %v5748, %v5748
    %v5751 = vunpack.c.l.bf16 %v5735
    %v5752 = vunpack.c.l.bf16 %v5736
    %v5753 = vunpack.c.l.bf16 %v5749
    %v5754 = vunpack.c.l.bf16 %v5750
    %v5755 = vmax.f32 %v5751, %v5753
    %v5756 = vmax.f32 %v5752, %v5754
    %v5757 = vpack.c.bf16 %v5755, %v5755
    %v5758 = vpack.c.bf16 %v5756, %v5756
    %s5759 = scalar_lea.vmem %s1, 2944
    %v5760 = vld [vmem:[%s5759] sm:$0xf]
    %v5761 = vld [vmem:[%s5759 + $0x4] sm:$0xf]
    %v5762 = vld [vmem:[%s5759 + $0x8] sm:$0xf]
    %v5763 = vld [vmem:[%s5759 + $0xc] sm:$0xf]
    %v5764 = vld [vmem:[%s5759 + $0x10] sm:$0xf]
    %v5765 = vld [vmem:[%s5759 + $0x14] sm:$0xf]
    %v5766 = vld [vmem:[%s5759 + $0x18] sm:$0xf]
    %v5767 = vld [vmem:[%s5759 + $0x1c] sm:$0xf]
    %v5768 = vld [vmem:[%s5759 + $0x20] sm:$0xf]
    %v5769 = vld [vmem:[%s5759 + $0x24] sm:$0xf]
    %v5770 = vld [vmem:[%s5759 + $0x28] sm:$0xf]
    %v5771 = vld [vmem:[%s5759 + $0x2c] sm:$0xf]
    %v5772 = vld [vmem:[%s5759 + $0x30] sm:$0xf]
    %v5773 = vld [vmem:[%s5759 + $0x34] sm:$0xf]
    %v5774 = vld [vmem:[%s5759 + $0x38] sm:$0xf]
    %v5775 = vld [vmem:[%s5759 + $0x3c] sm:$0xf]
    %v5778 = vunpack.c.l.b16 %v5757
    %v5779 = vunpack.c.l.b16 %v5758
    %v5780 = vrot.slane %v5779, 7
    %v5781 = vsel %vm133, %v5780, %v5778
    %v5782 = vpack.c.b16 %v5781, %v5781
    %v5800 = vunpack.c.l.b16 %v5760
    %v5801 = vunpack.c.l.b16 %v5761
    %v5802 = vunpack.c.l.b16 %v5762
    %v5803 = vunpack.c.l.b16 %v5763
    %v5804 = vunpack.c.l.b16 %v5764
    %v5805 = vunpack.c.l.b16 %v5765
    %v5806 = vunpack.c.l.b16 %v5766
    %v5807 = vunpack.c.l.b16 %v5767
    %v5808 = vunpack.c.l.b16 %v5768
    %v5809 = vunpack.c.l.b16 %v5769
    %v5810 = vunpack.c.l.b16 %v5770
    %v5811 = vunpack.c.l.b16 %v5771
    %v5812 = vunpack.c.l.b16 %v5772
    %v5813 = vunpack.c.l.b16 %v5773
    %v5814 = vunpack.c.l.b16 %v5774
    %v5815 = vunpack.c.l.b16 %v5775
    %v5816 = vpack.c.b16 %v5801, %v5800
    %v5817 = vpack.c.b16 %v5803, %v5802
    %v5818 = vpack.c.b16 %v5805, %v5804
    %v5819 = vpack.c.b16 %v5807, %v5806
    %v5820 = vpack.c.b16 %v5809, %v5808
    %v5821 = vpack.c.b16 %v5811, %v5810
    %v5822 = vpack.c.b16 %v5813, %v5812
    %v5823 = vpack.c.b16 %v5815, %v5814
    %5832 = vmatpush.bf16.msra.mxu0 %v5823
    %5833 = vmatpush.bf16.msra.mxu0 %v5822
    %5834 = vmatpush.bf16.msra.mxu0 %v5821
    %5835 = vmatpush.bf16.msra.mxu0 %v5820
    %5836 = vmatpush.bf16.msra.mxu0 %v5819
    %5837 = vmatpush.bf16.msra.mxu0 %v5818
    %5838 = vmatpush.bf16.msra.mxu0 %v5817
    %5839 = vmatpush.bf16.msra.mxu0 %v5816
    %5840 = vmatmul.bf16.gmra.mxu0 %v5782
    %v5841 = vpop.f32.mrf.mxu0
    %v5842 = vadd.f32 0.0, %v5841
    %v5843 = vpop.f32.mrf.mxu0
    %5844 = vdwg.mxu0
    %v5845 = vadd.f32 %v5722, %v5842
    %v5846 = vld [vmem:[%s5226 + $0x4] sm:$0x2]
    %v5847 = vld [vmem:[%s5226 + $0x74] sm:$0x2]
    %v5848 = vunpack.c.l.bf16 %v5846
    %v5849 = vunpack.c.l.bf16 %v5847
    %v5852 = vrot.slane %v5848, 1
    %v5853 = vrot.slane %v5849, 1
    %v5856 = vmax.f32 %v5848, %v5852
    %v5857 = vmax.f32 %v5849, %v5853
    %v5858 = vpack.c.bf16 %v5856, %v5856
    %v5859 = vpack.c.bf16 %v5857, %v5857
    %v5860 = vld [vmem:[%s5241 + $0x4] sm:$0x2]
    %v5861 = vld [vmem:[%s5241 + $0x74] sm:$0x2]
    %v5862 = vunpack.c.l.bf16 %v5860
    %v5863 = vunpack.c.l.bf16 %v5861
    %v5866 = vrot.slane %v5862, 1
    %v5867 = vrot.slane %v5863, 1
    %v5870 = vmax.f32 %v5862, %v5866
    %v5871 = vmax.f32 %v5863, %v5867
    %v5872 = vpack.c.bf16 %v5870, %v5870
    %v5873 = vpack.c.bf16 %v5871, %v5871
    %v5874 = vunpack.c.l.bf16 %v5858
    %v5875 = vunpack.c.l.bf16 %v5859
    %v5876 = vunpack.c.l.bf16 %v5872
    %v5877 = vunpack.c.l.bf16 %v5873
    %v5878 = vmax.f32 %v5874, %v5876
    %v5879 = vmax.f32 %v5875, %v5877
    %v5880 = vpack.c.bf16 %v5878, %v5878
    %v5881 = vpack.c.bf16 %v5879, %v5879
    %s5882 = scalar_lea.vmem %s1, 3008
    %v5883 = vld [vmem:[%s5882] sm:$0xf]
    %v5884 = vld [vmem:[%s5882 + $0x4] sm:$0xf]
    %v5885 = vld [vmem:[%s5882 + $0x8] sm:$0xf]
    %v5886 = vld [vmem:[%s5882 + $0xc] sm:$0xf]
    %v5887 = vld [vmem:[%s5882 + $0x10] sm:$0xf]
    %v5888 = vld [vmem:[%s5882 + $0x14] sm:$0xf]
    %v5889 = vld [vmem:[%s5882 + $0x18] sm:$0xf]
    %v5890 = vld [vmem:[%s5882 + $0x1c] sm:$0xf]
    %v5891 = vld [vmem:[%s5882 + $0x20] sm:$0xf]
    %v5892 = vld [vmem:[%s5882 + $0x24] sm:$0xf]
    %v5893 = vld [vmem:[%s5882 + $0x28] sm:$0xf]
    %v5894 = vld [vmem:[%s5882 + $0x2c] sm:$0xf]
    %v5895 = vld [vmem:[%s5882 + $0x30] sm:$0xf]
    %v5896 = vld [vmem:[%s5882 + $0x34] sm:$0xf]
    %v5897 = vld [vmem:[%s5882 + $0x38] sm:$0xf]
    %v5898 = vld [vmem:[%s5882 + $0x3c] sm:$0xf]
    %v5901 = vunpack.c.l.b16 %v5880
    %v5902 = vunpack.c.l.b16 %v5881
    %v5903 = vrot.slane %v5901, 2
    %v5904 = vrot.slane %v5902, 1
    %v5905 = vsel %vm133, %v5904, %v5903
    %v5906 = vpack.c.b16 %v5905, %v5905
    %v5924 = vunpack.c.l.b16 %v5883
    %v5925 = vunpack.c.l.b16 %v5884
    %v5926 = vunpack.c.l.b16 %v5885
    %v5927 = vunpack.c.l.b16 %v5886
    %v5928 = vunpack.c.l.b16 %v5887
    %v5929 = vunpack.c.l.b16 %v5888
    %v5930 = vunpack.c.l.b16 %v5889
    %v5931 = vunpack.c.l.b16 %v5890
    %v5932 = vunpack.c.l.b16 %v5891
    %v5933 = vunpack.c.l.b16 %v5892
    %v5934 = vunpack.c.l.b16 %v5893
    %v5935 = vunpack.c.l.b16 %v5894
    %v5936 = vunpack.c.l.b16 %v5895
    %v5937 = vunpack.c.l.b16 %v5896
    %v5938 = vunpack.c.l.b16 %v5897
    %v5939 = vunpack.c.l.b16 %v5898
    %v5940 = vpack.c.b16 %v5925, %v5924
    %v5941 = vpack.c.b16 %v5927, %v5926
    %v5942 = vpack.c.b16 %v5929, %v5928
    %v5943 = vpack.c.b16 %v5931, %v5930
    %v5944 = vpack.c.b16 %v5933, %v5932
    %v5945 = vpack.c.b16 %v5935, %v5934
    %v5946 = vpack.c.b16 %v5937, %v5936
    %v5947 = vpack.c.b16 %v5939, %v5938
    %5956 = vmatpush.bf16.msra.mxu0 %v5947
    %5957 = vmatpush.bf16.msra.mxu0 %v5946
    %5958 = vmatpush.bf16.msra.mxu0 %v5945
    %5959 = vmatpush.bf16.msra.mxu0 %v5944
    %5960 = vmatpush.bf16.msra.mxu0 %v5943
    %5961 = vmatpush.bf16.msra.mxu0 %v5942
    %5962 = vmatpush.bf16.msra.mxu0 %v5941
    %5963 = vmatpush.bf16.msra.mxu0 %v5940
    %5964 = vmatmul.bf16.gmra.mxu0 %v5906
    %v5965 = vpop.f32.mrf.mxu0
    %v5966 = vadd.f32 0.0, %v5965
    %v5967 = vpop.f32.mrf.mxu0
    %5968 = vdwg.mxu0
    %v5969 = vadd.f32 %v5845, %v5966
    %v5970 = vld [vmem:[%s5226 + $0x4] sm:$0x4]
    %v5971 = vld [vmem:[%s5226 + $0x74] sm:$0x4]
    %v5972 = vunpack.c.l.bf16 %v5970
    %v5973 = vunpack.c.l.bf16 %v5971
    %v5976 = vrot.slane %v5972, 1
    %v5977 = vrot.slane %v5973, 1
    %v5980 = vmax.f32 %v5972, %v5976
    %v5981 = vmax.f32 %v5973, %v5977
    %v5982 = vpack.c.bf16 %v5980, %v5980
    %v5983 = vpack.c.bf16 %v5981, %v5981
    %v5984 = vld [vmem:[%s5241 + $0x4] sm:$0x4]
    %v5985 = vld [vmem:[%s5241 + $0x74] sm:$0x4]
    %v5986 = vunpack.c.l.bf16 %v5984
    %v5987 = vunpack.c.l.bf16 %v5985
    %v5990 = vrot.slane %v5986, 1
    %v5991 = vrot.slane %v5987, 1
    %v5994 = vmax.f32 %v5986, %v5990
    %v5995 = vmax.f32 %v5987, %v5991
    %v5996 = vpack.c.bf16 %v5994, %v5994
    %v5997 = vpack.c.bf16 %v5995, %v5995
    %v5998 = vunpack.c.l.bf16 %v5982
    %v5999 = vunpack.c.l.bf16 %v5983
    %v6000 = vunpack.c.l.bf16 %v5996
    %v6001 = vunpack.c.l.bf16 %v5997
    %v6002 = vmax.f32 %v5998, %v6000
    %v6003 = vmax.f32 %v5999, %v6001
    %v6004 = vpack.c.bf16 %v6002, %v6002
    %v6005 = vpack.c.bf16 %v6003, %v6003
    %s6006 = scalar_lea.vmem %s1, 3072
    %v6007 = vld [vmem:[%s6006] sm:$0xf]
    %v6008 = vld [vmem:[%s6006 + $0x4] sm:$0xf]
    %v6009 = vld [vmem:[%s6006 + $0x8] sm:$0xf]
    %v6010 = vld [vmem:[%s6006 + $0xc] sm:$0xf]
    %v6011 = vld [vmem:[%s6006 + $0x10] sm:$0xf]
    %v6012 = vld [vmem:[%s6006 + $0x14] sm:$0xf]
    %v6013 = vld [vmem:[%s6006 + $0x18] sm:$0xf]
    %v6014 = vld [vmem:[%s6006 + $0x1c] sm:$0xf]
    %v6015 = vld [vmem:[%s6006 + $0x20] sm:$0xf]
    %v6016 = vld [vmem:[%s6006 + $0x24] sm:$0xf]
    %v6017 = vld [vmem:[%s6006 + $0x28] sm:$0xf]
    %v6018 = vld [vmem:[%s6006 + $0x2c] sm:$0xf]
    %v6019 = vld [vmem:[%s6006 + $0x30] sm:$0xf]
    %v6020 = vld [vmem:[%s6006 + $0x34] sm:$0xf]
    %v6021 = vld [vmem:[%s6006 + $0x38] sm:$0xf]
    %v6022 = vld [vmem:[%s6006 + $0x3c] sm:$0xf]
    %v6025 = vunpack.c.l.b16 %v6004
    %v6026 = vunpack.c.l.b16 %v6005
    %v6027 = vrot.slane %v6025, 4
    %v6028 = vrot.slane %v6026, 3
    %v6029 = vsel %vm133, %v6028, %v6027
    %v6030 = vpack.c.b16 %v6029, %v6029
    %v6048 = vunpack.c.l.b16 %v6007
    %v6049 = vunpack.c.l.b16 %v6008
    %v6050 = vunpack.c.l.b16 %v6009
    %v6051 = vunpack.c.l.b16 %v6010
    %v6052 = vunpack.c.l.b16 %v6011
    %v6053 = vunpack.c.l.b16 %v6012
    %v6054 = vunpack.c.l.b16 %v6013
    %v6055 = vunpack.c.l.b16 %v6014
    %v6056 = vunpack.c.l.b16 %v6015
    %v6057 = vunpack.c.l.b16 %v6016
    %v6058 = vunpack.c.l.b16 %v6017
    %v6059 = vunpack.c.l.b16 %v6018
    %v6060 = vunpack.c.l.b16 %v6019
    %v6061 = vunpack.c.l.b16 %v6020
    %v6062 = vunpack.c.l.b16 %v6021
    %v6063 = vunpack.c.l.b16 %v6022
    %v6064 = vpack.c.b16 %v6049, %v6048
    %v6065 = vpack.c.b16 %v6051, %v6050
    %v6066 = vpack.c.b16 %v6053, %v6052
    %v6067 = vpack.c.b16 %v6055, %v6054
    %v6068 = vpack.c.b16 %v6057, %v6056
    %v6069 = vpack.c.b16 %v6059, %v6058
    %v6070 = vpack.c.b16 %v6061, %v6060
    %v6071 = vpack.c.b16 %v6063, %v6062
    %6080 = vmatpush.bf16.msra.mxu0 %v6071
    %6081 = vmatpush.bf16.msra.mxu0 %v6070
    %6082 = vmatpush.bf16.msra.mxu0 %v6069
    %6083 = vmatpush.bf16.msra.mxu0 %v6068
    %6084 = vmatpush.bf16.msra.mxu0 %v6067
    %6085 = vmatpush.bf16.msra.mxu0 %v6066
    %6086 = vmatpush.bf16.msra.mxu0 %v6065
    %6087 = vmatpush.bf16.msra.mxu0 %v6064
    %6088 = vmatmul.bf16.gmra.mxu0 %v6030
    %v6089 = vpop.f32.mrf.mxu0
    %v6090 = vadd.f32 0.0, %v6089
    %v6091 = vpop.f32.mrf.mxu0
    %6092 = vdwg.mxu0
    %v6093 = vadd.f32 %v5969, %v6090
    %v6094 = vld [vmem:[%s2] sm:$0x1]
    %v6096 = vperm.slane %v6094, 0
    %v6098 = vadd.f32 %v6093, %v6096
    %v6099 = vmax.f32 %v6098, 0.0
    %v6100 = vpack.c.bf16 %v6099, %v6099
    %v6101 = vld [vmem:[%s3] sm:$0xf]
    %v6102 = vld [vmem:[%s3 + $0x4] sm:$0xf]
    %v6103 = vld [vmem:[%s3 + $0x8] sm:$0xf]
    %v6104 = vld [vmem:[%s3 + $0xc] sm:$0xf]
    %v6105 = vld [vmem:[%s3 + $0x10] sm:$0xf]
    %v6106 = vld [vmem:[%s3 + $0x14] sm:$0xf]
    %v6107 = vld [vmem:[%s3 + $0x18] sm:$0xf]
    %v6108 = vld [vmem:[%s3 + $0x1c] sm:$0xf]
    %v6109 = vld [vmem:[%s3 + $0x20] sm:$0xf]
    %v6110 = vld [vmem:[%s3 + $0x24] sm:$0xf]
    %v6111 = vld [vmem:[%s3 + $0x28] sm:$0xf]
    %v6112 = vld [vmem:[%s3 + $0x2c] sm:$0xf]
    %v6113 = vld [vmem:[%s3 + $0x30] sm:$0xf]
    %v6114 = vld [vmem:[%s3 + $0x34] sm:$0xf]
    %v6115 = vld [vmem:[%s3 + $0x38] sm:$0xf]
    %v6116 = vld [vmem:[%s3 + $0x3c] sm:$0xf]
    %v6117 = vld [vmem:[%s4] sm:$0x1]
    %v6119 = vperm.slane %v6117, 0
    %v6137 = vunpack.c.l.b16 %v6101
    %v6138 = vunpack.c.l.b16 %v6102
    %v6139 = vunpack.c.l.b16 %v6103
    %v6140 = vunpack.c.l.b16 %v6104
    %v6141 = vunpack.c.l.b16 %v6105
    %v6142 = vunpack.c.l.b16 %v6106
    %v6143 = vunpack.c.l.b16 %v6107
    %v6144 = vunpack.c.l.b16 %v6108
    %v6145 = vunpack.c.l.b16 %v6109
    %v6146 = vunpack.c.l.b16 %v6110
    %v6147 = vunpack.c.l.b16 %v6111
    %v6148 = vunpack.c.l.b16 %v6112
    %v6149 = vunpack.c.l.b16 %v6113
    %v6150 = vunpack.c.l.b16 %v6114
    %v6151 = vunpack.c.l.b16 %v6115
    %v6152 = vunpack.c.l.b16 %v6116
    %v6153 = vpack.c.b16 %v6138, %v6137
    %v6154 = vpack.c.b16 %v6140, %v6139
    %v6155 = vpack.c.b16 %v6142, %v6141
    %v6156 = vpack.c.b16 %v6144, %v6143
    %v6157 = vpack.c.b16 %v6146, %v6145
    %v6158 = vpack.c.b16 %v6148, %v6147
    %v6159 = vpack.c.b16 %v6150, %v6149
    %v6160 = vpack.c.b16 %v6152, %v6151
    %6169 = vmatpush.bf16.msra.mxu0 %v6160
    %6170 = vmatpush.bf16.msra.mxu0 %v6159
    %6171 = vmatpush.bf16.msra.mxu0 %v6158
    %6172 = vmatpush.bf16.msra.mxu0 %v6157
    %6173 = vmatpush.bf16.msra.mxu0 %v6156
    %6174 = vmatpush.bf16.msra.mxu0 %v6155
    %6175 = vmatpush.bf16.msra.mxu0 %v6154
    %6176 = vmatpush.bf16.msra.mxu0 %v6153
    %6177 = vmatmul.bf16.gmra.mxu0 %v6100
    %v6178 = vpop.f32.mrf.mxu0
    %v6179 = vadd.f32 %v6119, %v6178
    %v6180 = vpop.f32.mrf.mxu0
    %6181 = vdwg.mxu0
    %6182 = vst [vmem:[#allocation2] sm:$0x3] %v6179
    // Predicated region
    $region22: #{cnn_net_forward.5} parent=1 // pred_check
      _
    $region23: #{cnn_net_forward.5} parent=1 // pred_check_branch
      %6184 = sbr.rel (0) target = $region25
    $region24: #{cnn_net_forward.5} parent=1 // pred_region
      %6186 = vsyncadd [#allocation3], 0
      %s6188 = sshll.u32 [#allocation2], 4
      %s6189 = int_to_ptr.vmem [resolvable:$true] %s6188
      %s6190 = sshll.u32 %s5, 4
      %s6191 = int_to_ptr.hbm [resolvable:$true] %s6190
      %6193 = dma.vmem_to_hbm [thread:$0]  %s6189, 32, %s6191, [#allocation3]
    $region25: #{cnn_net_forward.5} parent=1 // pred_fallthru
      _
    // Predicated region
    $region26: #{cnn_net_forward.5} parent=1 // pred_check
      _
    $region27: #{cnn_net_forward.5} parent=1 // pred_check_branch
      %6195 = sbr.rel (0) target = $region29
    $region28: #{cnn_net_forward.5} parent=1 // pred_region
      %6197 = dma.done [#allocation3], 32
    $region29: #{cnn_net_forward.5} parent=1 // pred_fallthru
      _
    %6198 = vsyncpa [#allocation3], 1

</llo_original>
